<compile_context>
chip_gen: v5e
topology: v5e:2x2
jax: 0.10.0
libtpu: 0.0.40
codegen_flags: <defaults>
</compile_context>

<pallas_src>
import functools

import jax
import jax.numpy as jnp
from jax import lax
from jax.experimental import pallas as pl
from jax.experimental.pallas import tpu as pltpu

LANE = 128
VMEM_LIMIT = 32 * 1024 * 1024  # fits v5e/v6e (128 MiB) and v7x (64 MiB) VMEM


def _round_up(x, m):
    return (x + m - 1) // m * m


def conv3x3_bn_stats_kernel(x_ref, scale_ref, bias_ref, w_ref,
                            y_ref, stats_ref, xpad_scr, col_scr,
                            *, apply_preact):
    """Per-batch-element fused kernel:
        (optional) pre-activation BN+ReLU  ->  zero-pad in VMEM  ->
        im2col  ->  single MXU matmul (K = 9*Cin_pad)  ->
        raw conv output + per-channel [sum, sum_sq] partial BN stats.

    x_ref    : (1, H, W, Cpi)   unpadded NHWC activation (lane-padded channels)
    scale_ref: (1, Cpi)         pre-activation BN scale  (unused if !apply_preact)
    bias_ref : (1, Cpi)         pre-activation BN bias   (unused if !apply_preact)
    w_ref    : (9*Cpi, Cpo)     conv weight, im2col-flattened HWIO
    y_ref    : (1, H, W, Cpo)   raw conv output (pre-BN)
    stats_ref: (1, 2, Cpo)      [sum, sum_sq] over this batch element
    xpad_scr : VMEM (H+2, W+2, Cpi)   zero-padded activation tile
    col_scr  : VMEM (H*W, 9*Cpi)      im2col patch matrix
    """
    _, H, W, Cpi = x_ref.shape
    Cpo = w_ref.shape[-1]

    x = x_ref[0]                                              # (H, W, Cpi)
    if apply_preact:
        # Fused BN+ReLU of the previous stage (scale/bias already folded).
        scale = scale_ref[...].reshape(1, 1, Cpi)
        bias = bias_ref[...].reshape(1, 1, Cpi)
        x = jnp.maximum(x * scale + bias, 0.0)

    # Zero-padded tile lives only in VMEM -> no HBM pad round trip.
    # (Zeroing the whole 166 KB tile per step is negligible and keeps the
    #  kernel safe under 'parallel' megacore grid sharding.)
    xpad_scr[...] = jnp.zeros_like(xpad_scr)
    xpad_scr[1:H + 1, 1:W + 1, :] = x

    # im2col: each of the 9 taps fills a lane-aligned 128*k column block.
    for kh in range(3):
        for kw in range(3):
            k = kh * 3 + kw
            col_scr[:, k * Cpi:(k + 1) * Cpi] = (
                xpad_scr[kh:kh + H, kw:kw + W, :].reshape(H * W, Cpi))

    # Single big-K matmul on the MXU (f32 accumulation).
    acc = jnp.dot(col_scr[...], w_ref[...],
                  preferred_element_type=jnp.float32)          # (H*W, Cpo)

    y_ref[...] = acc.reshape(1, H, W, Cpo)

    # Per-channel partial BN statistics for this batch element.
    stats_ref[:, 0:1, :] = jnp.sum(acc, axis=0, keepdims=True).reshape(1, 1, Cpo)
    stats_ref[:, 1:2, :] = jnp.sum(acc * acc, axis=0, keepdims=True).reshape(1, 1, Cpo)


def conv3x3_bn_stats(x, scale, bias, w_flat, *, apply_preact):
    """x: (N, H, W, Cpi) lane-padded NHWC; w_flat: (9*Cpi, Cpo)."""
    N, H, W, Cpi = x.shape
    K9, Cpo = w_flat.shape
    kern = functools.partial(conv3x3_bn_stats_kernel, apply_preact=apply_preact)
    # TODO(synk): for large H*W (early ResNet layers) add an H-tile grid axis
    # with a 2-row halo via manual make_async_copy DMA; batch-level tiling is
    # sufficient for these shapes and keeps every block VMEM-resident.
    return pl.pallas_call(
        kern,
        out_shape=(
            jax.ShapeDtypeStruct((N, H, W, Cpo), jnp.float32),
            jax.ShapeDtypeStruct((N, 2, Cpo), jnp.float32),
        ),
        grid=(N,),
        in_specs=[
            pl.BlockSpec((1, H, W, Cpi), lambda n: (n, 0, 0, 0)),
            pl.BlockSpec((1, Cpi), lambda n: (0, 0)),
            pl.BlockSpec((1, Cpi), lambda n: (0, 0)),
            pl.BlockSpec((K9, Cpo), lambda n: (0, 0)),
        ],
        out_specs=(
            pl.BlockSpec((1, H, W, Cpo), lambda n: (n, 0, 0, 0)),
            pl.BlockSpec((1, 2, Cpo), lambda n: (n, 0, 0)),
        ),
        scratch_shapes=[
            pltpu.VMEM((H + 2, W + 2, Cpi), jnp.float32),
            pltpu.VMEM((H * W, K9), jnp.float32),
        ],
        compiler_params=pltpu.CompilerParams(
            dimension_semantics=("parallel",),
            vmem_limit_bytes=VMEM_LIMIT),
    )(x, scale, bias, w_flat)


def bn_relu_kernel(y_ref, scale_ref, bias_ref, o_ref):
    """Final fused BN+ReLU: y = max(x*scale + bias, 0) with folded scale/bias."""
    C = y_ref.shape[-1]
    scale = scale_ref[...].reshape(1, 1, 1, C)
    bias = bias_ref[...].reshape(1, 1, 1, C)
    o_ref[...] = jnp.maximum(y_ref[...] * scale + bias, 0.0)


def bn_relu(y, scale, bias):
    N, H, W, C = y.shape
    return pl.pallas_call(
        bn_relu_kernel,
        out_shape=jax.ShapeDtypeStruct((N, H, W, C), jnp.float32),
        grid=(N,),
        in_specs=[
            pl.BlockSpec((1, H, W, C), lambda n: (n, 0, 0, 0)),
            pl.BlockSpec((1, C), lambda n: (0, 0)),
            pl.BlockSpec((1, C), lambda n: (0, 0)),
        ],
        out_specs=pl.BlockSpec((1, H, W, C), lambda n: (n, 0, 0, 0)),
        compiler_params=pltpu.CompilerParams(
            dimension_semantics=("parallel",),
            vmem_limit_bytes=VMEM_LIMIT),
    )(y, scale, bias)


def _bn_scale_bias(stats, gamma, beta, count, eps=1e-5):
    """Fold training-mode BN (biased variance) into one scale and one bias.
    stats: (N, 2, C) per-batch-element [sum, sum_sq]."""
    s = jnp.sum(stats[:, 0, :], axis=0)                       # (C,)
    sq = jnp.sum(stats[:, 1, :], axis=0)                      # (C,)
    mean = s / count
    var = jnp.maximum(sq / count - mean * mean, 0.0)          # E[x^2] - mean^2
    scale = gamma.reshape(-1) * lax.rsqrt(var + eps)
    bias = beta.reshape(-1) - mean * scale
    return scale.reshape(1, -1), bias.reshape(1, -1)


@jax.jit
def basic_block_forward(x_nchw, params):
    """BasicBlock.forward with stride=1, downsample=None (identity unused)."""
    N, Cin, H, W = x_nchw.shape
    Cout = params["w1"].shape[-1]
    Cpi = _round_up(Cin, LANE)
    Cpo = _round_up(Cout, LANE)

    # NCHW -> NHWC, channels zero-padded to a lane-dense multiple of 128.
    x = jnp.transpose(x_nchw, (0, 2, 3, 1))
    x = jnp.pad(x, ((0, 0), (0, 0), (0, 0), (0, Cpi - Cin)))

    # Conv weights (HWIO) -> channel-padded -> im2col-flattened (9*Cin_pad, Cout_pad).
    w1 = jnp.pad(params["w1"],
                 ((0, 0), (0, 0), (0, Cpi - Cin), (0, Cpo - Cout))).reshape(9 * Cpi, Cpo)
    w2 = jnp.pad(params["w2"],
                 ((0, 0), (0, 0), (0, Cpo - Cout), (0, Cpo - Cout))).reshape(9 * Cpo, Cpo)

    def pad_gb(p, fill):
        return jnp.pad(p.reshape(-1), (0, Cpo - Cout),
                       constant_values=fill).reshape(1, Cpo)

    g1, b1 = pad_gb(params["g1"], 1.0), pad_gb(params["b1"], 0.0)
    g2, b2 = pad_gb(params["g2"], 1.0), pad_gb(params["b2"], 0.0)

    count = N * H * W  # BN training-mode statistic count

    one = jnp.ones((1, Cpi), jnp.float32)
    zero = jnp.zeros((1, Cpi), jnp.float32)

    # Stage 1: conv1 + partial BN1 stats.
    y1, stats1 = conv3x3_bn_stats(x, one, zero, w1, apply_preact=False)
    scale1, bias1 = _bn_scale_bias(stats1, g1, b1, count)

    # Stage 2: fused (bn1 + relu) pre-activation + conv2 + partial BN2 stats.
    y2, stats2 = conv3x3_bn_stats(y1, scale1, bias1, w2, apply_preact=True)
    scale2, bias2 = _bn_scale_bias(stats2, g2, b2, count)

    # Stage 3: bn2 + relu.
    out = bn_relu(y2, scale2, bias2)

    # TODO(synk): the reference forward computes `identity = downsample(x)` but
    # never adds it, so (faithfully) there is no residual add here.
    out = out[..., :Cout]                                     # drop lane padding
    return jnp.transpose(out, (0, 3, 1, 2))                   # NHWC -> NCHW


def reference_forward(x_nchw, params):
    """Pure-JAX reference (lax.conv) for correctness checking."""
    def conv(x, w_hwio):
        return lax.conv_general_dilated(
            x, w_hwio, window_strides=(1, 1), padding="SAME",
            dimension_numbers=("NCHW", "HWIO", "NCHW"),
            precision=lax.Precision.HIGHEST)

    def bn(x, g, b):
        mean = jnp.mean(x, axis=(0, 2, 3), keepdims=True)
        var = jnp.mean((x - mean) ** 2, axis=(0, 2, 3), keepdims=True)
        return ((x - mean) * lax.rsqrt(var + 1e-5) * g.reshape(1, -1, 1, 1)
                + b.reshape(1, -1, 1, 1))

    y = jnp.maximum(bn(conv(x_nchw, params["w1"]), params["g1"], params["b1"]), 0.0)
    y = jnp.maximum(bn(conv(y, params["w2"]), params["g2"], params["b2"]), 0.0)
    return y


if __name__ == "__main__":
    key = jax.random.PRNGKey(0)
    N, Cin, Cout, H, W = 2, 4, 8, 16, 16

    k = jax.random.split(key, 6)
    # Conv weights in HWIO (PyTorch stores OIHW; shapes are equivalent).
    params = {
        "w1": 0.1 * jax.random.normal(k[0], (3, 3, Cin, Cout), jnp.float32),
        "w2": 0.1 * jax.random.normal(k[1], (3, 3, Cout, Cout), jnp.float32),
        # BN affine params (PyTorch default init is ones/zeros; perturb so the
        # affine path is actually exercised, still deterministic).
        "g1": 1.0 + 0.1 * jax.random.normal(k[2], (1, Cout), jnp.float32),
        "b1": 0.1 * jax.random.normal(k[3], (1, Cout), jnp.float32),
        "g2": 1.0 + 0.1 * jax.random.normal(k[4], (1, Cout), jnp.float32),
        "b2": 0.1 * jax.random.normal(k[5], (1, Cout), jnp.float32),
    }

    x = jax.random.normal(key, (N, Cin, H, W), jnp.float32)   # NCHW like PyTorch

    out = jax.block_until_ready(basic_block_forward(x, params))
    ref = jax.block_until_ready(reference_forward(x, params))

    assert out.shape == (N, Cout, H, W), out.shape
    assert jnp.allclose(out, ref, atol=1e-3, rtol=1e-3), (
        float(jnp.max(jnp.abs(out - ref))))
    print("KERNEL_OK")
</pallas_src>

<mosaic_0001>
module attributes {stable_mosaic.version = 11 : i64} {
  func.func @conv3x3_bn_stats_kernel(%arg0: i32, %arg1: memref<1x16x16x128xf32, #tpu.memory_space<vmem>>, %arg2: memref<1x128xf32, #tpu.memory_space<vmem>>, %arg3: memref<1x128xf32, #tpu.memory_space<vmem>>, %arg4: memref<1152x128xf32, #tpu.memory_space<vmem>>, %arg5: memref<1x16x16x128xf32, #tpu.memory_space<vmem>>, %arg6: memref<1x2x128xf32, #tpu.memory_space<vmem>>, %arg7: memref<18x18x128xf32, #tpu.memory_space<vmem>>, %arg8: memref<256x1152xf32, #tpu.memory_space<vmem>>) attributes {dimension_semantics = [#tpu.dimension_semantics<parallel>], iteration_bounds = array<i64: 2>, scalar_prefetch = 0 : i64, scratch_operands = 2 : i64, tpu.core_type = #tpu.core_type<tc>, window_params = [{transform_indices = @transform_0, window_bounds = array<i64: 1, 16, 16, 128>}, {pipeline_mode = #tpu.pipeline_mode<synchronous>, transform_indices = @transform_1, window_bounds = array<i64: 1, 128>}, {pipeline_mode = #tpu.pipeline_mode<synchronous>, transform_indices = @transform_2, window_bounds = array<i64: 1, 128>}, {pipeline_mode = #tpu.pipeline_mode<synchronous>, transform_indices = @transform_3, window_bounds = array<i64: 1152, 128>}, {transform_indices = @transform_4, window_bounds = array<i64: 1, 16, 16, 128>}, {transform_indices = @transform_5, window_bounds = array<i64: 1, 2, 128>}]} {
    %c0 = arith.constant 0 : index
    %c0_0 = arith.constant 0 : index
    %c0_1 = arith.constant 0 : index
    %c0_2 = arith.constant 0 : index
    %0 = vector.load %arg1[%c0, %c0_0, %c0_1, %c0_2] : memref<1x16x16x128xf32, #tpu.memory_space<vmem>>, vector<1x16x16x128xf32>
    %1 = vector.shape_cast %0 : vector<1x16x16x128xf32> to vector<16x16x128xf32>
    %cst = arith.constant 0.000000e+00 : f32
    %2 = vector.broadcast %cst : f32 to vector<18x18x128xf32>
    %c0_3 = arith.constant 0 : index
    %c0_4 = arith.constant 0 : index
    %c0_5 = arith.constant 0 : index
    %3 = vector.load %arg7[%c0_3, %c0_4, %c0_5] : memref<18x18x128xf32, #tpu.memory_space<vmem>>, vector<18x18x128xf32>
    tpu.vector_store %arg7[%c0_3, %c0_4, %c0_5], %2 {strides = array<i32>} : memref<18x18x128xf32, #tpu.memory_space<vmem>>, vector<18x18x128xf32>,
    %c1 = arith.constant 1 : index
    %c1_6 = arith.constant 1 : index
    %c0_7 = arith.constant 0 : index
    %4 = vector.load %arg7[%c1, %c1_6, %c0_7] : memref<18x18x128xf32, #tpu.memory_space<vmem>>, vector<16x16x128xf32>
    tpu.vector_store %arg7[%c1, %c1_6, %c0_7], %1 {strides = array<i32>} : memref<18x18x128xf32, #tpu.memory_space<vmem>>, vector<16x16x128xf32>,
    %c0_8 = arith.constant 0 : index
    %c0_9 = arith.constant 0 : index
    %c0_10 = arith.constant 0 : index
    %5 = vector.load %arg7[%c0_8, %c0_9, %c0_10] : memref<18x18x128xf32, #tpu.memory_space<vmem>>, vector<16x16x128xf32>
    %6 = vector.shape_cast %5 : vector<16x16x128xf32> to vector<256x128xf32>
    %c0_11 = arith.constant 0 : index
    %c0_12 = arith.constant 0 : index
    %7 = vector.load %arg8[%c0_11, %c0_12] : memref<256x1152xf32, #tpu.memory_space<vmem>>, vector<256x128xf32>
    tpu.vector_store %arg8[%c0_11, %c0_12], %6 {strides = array<i32>} : memref<256x1152xf32, #tpu.memory_space<vmem>>, vector<256x128xf32>,
    %c0_13 = arith.constant 0 : index
    %c1_14 = arith.constant 1 : index
    %c0_15 = arith.constant 0 : index
    %8 = vector.load %arg7[%c0_13, %c1_14, %c0_15] : memref<18x18x128xf32, #tpu.memory_space<vmem>>, vector<16x16x128xf32>
    %9 = vector.shape_cast %8 : vector<16x16x128xf32> to vector<256x128xf32>
    %c0_16 = arith.constant 0 : index
    %c128 = arith.constant 128 : index
    %10 = vector.load %arg8[%c0_16, %c128] : memref<256x1152xf32, #tpu.memory_space<vmem>>, vector<256x128xf32>
    tpu.vector_store %arg8[%c0_16, %c128], %9 {strides = array<i32>} : memref<256x1152xf32, #tpu.memory_space<vmem>>, vector<256x128xf32>,
    %c0_17 = arith.constant 0 : index
    %c2 = arith.constant 2 : index
    %c0_18 = arith.constant 0 : index
    %11 = vector.load %arg7[%c0_17, %c2, %c0_18] : memref<18x18x128xf32, #tpu.memory_space<vmem>>, vector<16x16x128xf32>
    %12 = vector.shape_cast %11 : vector<16x16x128xf32> to vector<256x128xf32>
    %c0_19 = arith.constant 0 : index
    %c256 = arith.constant 256 : index
    %13 = vector.load %arg8[%c0_19, %c256] : memref<256x1152xf32, #tpu.memory_space<vmem>>, vector<256x128xf32>
    tpu.vector_store %arg8[%c0_19, %c256], %12 {strides = array<i32>} : memref<256x1152xf32, #tpu.memory_space<vmem>>, vector<256x128xf32>,
    %c1_20 = arith.constant 1 : index
    %c0_21 = arith.constant 0 : index
    %c0_22 = arith.constant 0 : index
    %14 = vector.load %arg7[%c1_20, %c0_21, %c0_22] : memref<18x18x128xf32, #tpu.memory_space<vmem>>, vector<16x16x128xf32>
    %15 = vector.shape_cast %14 : vector<16x16x128xf32> to vector<256x128xf32>
    %c0_23 = arith.constant 0 : index
    %c384 = arith.constant 384 : index
    %16 = vector.load %arg8[%c0_23, %c384] : memref<256x1152xf32, #tpu.memory_space<vmem>>, vector<256x128xf32>
    tpu.vector_store %arg8[%c0_23, %c384], %15 {strides = array<i32>} : memref<256x1152xf32, #tpu.memory_space<vmem>>, vector<256x128xf32>,
    %c1_24 = arith.constant 1 : index
    %c1_25 = arith.constant 1 : index
    %c0_26 = arith.constant 0 : index
    %17 = vector.load %arg7[%c1_24, %c1_25, %c0_26] : memref<18x18x128xf32, #tpu.memory_space<vmem>>, vector<16x16x128xf32>
    %18 = vector.shape_cast %17 : vector<16x16x128xf32> to vector<256x128xf32>
    %c0_27 = arith.constant 0 : index
    %c512 = arith.constant 512 : index
    %19 = vector.load %arg8[%c0_27, %c512] : memref<256x1152xf32, #tpu.memory_space<vmem>>, vector<256x128xf32>
    tpu.vector_store %arg8[%c0_27, %c512], %18 {strides = array<i32>} : memref<256x1152xf32, #tpu.memory_space<vmem>>, vector<256x128xf32>,
    %c1_28 = arith.constant 1 : index
    %c2_29 = arith.constant 2 : index
    %c0_30 = arith.constant 0 : index
    %20 = vector.load %arg7[%c1_28, %c2_29, %c0_30] : memref<18x18x128xf32, #tpu.memory_space<vmem>>, vector<16x16x128xf32>
    %21 = vector.shape_cast %20 : vector<16x16x128xf32> to vector<256x128xf32>
    %c0_31 = arith.constant 0 : index
    %c640 = arith.constant 640 : index
    %22 = vector.load %arg8[%c0_31, %c640] : memref<256x1152xf32, #tpu.memory_space<vmem>>, vector<256x128xf32>
    tpu.vector_store %arg8[%c0_31, %c640], %21 {strides = array<i32>} : memref<256x1152xf32, #tpu.memory_space<vmem>>, vector<256x128xf32>,
    %c2_32 = arith.constant 2 : index
    %c0_33 = arith.constant 0 : index
    %c0_34 = arith.constant 0 : index
    %23 = vector.load %arg7[%c2_32, %c0_33, %c0_34] : memref<18x18x128xf32, #tpu.memory_space<vmem>>, vector<16x16x128xf32>
    %24 = vector.shape_cast %23 : vector<16x16x128xf32> to vector<256x128xf32>
    %c0_35 = arith.constant 0 : index
    %c768 = arith.constant 768 : index
    %25 = vector.load %arg8[%c0_35, %c768] : memref<256x1152xf32, #tpu.memory_space<vmem>>, vector<256x128xf32>
    tpu.vector_store %arg8[%c0_35, %c768], %24 {strides = array<i32>} : memref<256x1152xf32, #tpu.memory_space<vmem>>, vector<256x128xf32>,
    %c2_36 = arith.constant 2 : index
    %c1_37 = arith.constant 1 : index
    %c0_38 = arith.constant 0 : index
    %26 = vector.load %arg7[%c2_36, %c1_37, %c0_38] : memref<18x18x128xf32, #tpu.memory_space<vmem>>, vector<16x16x128xf32>
    %27 = vector.shape_cast %26 : vector<16x16x128xf32> to vector<256x128xf32>
    %c0_39 = arith.constant 0 : index
    %c896 = arith.constant 896 : index
    %28 = vector.load %arg8[%c0_39, %c896] : memref<256x1152xf32, #tpu.memory_space<vmem>>, vector<256x128xf32>
    tpu.vector_store %arg8[%c0_39, %c896], %27 {strides = array<i32>} : memref<256x1152xf32, #tpu.memory_space<vmem>>, vector<256x128xf32>,
    %c2_40 = arith.constant 2 : index
    %c2_41 = arith.constant 2 : index
    %c0_42 = arith.constant 0 : index
    %29 = vector.load %arg7[%c2_40, %c2_41, %c0_42] : memref<18x18x128xf32, #tpu.memory_space<vmem>>, vector<16x16x128xf32>
    %30 = vector.shape_cast %29 : vector<16x16x128xf32> to vector<256x128xf32>
    %c0_43 = arith.constant 0 : index
    %c1024 = arith.constant 1024 : index
    %31 = vector.load %arg8[%c0_43, %c1024] : memref<256x1152xf32, #tpu.memory_space<vmem>>, vector<256x128xf32>
    tpu.vector_store %arg8[%c0_43, %c1024], %30 {strides = array<i32>} : memref<256x1152xf32, #tpu.memory_space<vmem>>, vector<256x128xf32>,
    %c0_44 = arith.constant 0 : index
    %c0_45 = arith.constant 0 : index
    %32 = vector.load %arg8[%c0_44, %c0_45] : memref<256x1152xf32, #tpu.memory_space<vmem>>, vector<256x1152xf32>
    %c0_46 = arith.constant 0 : index
    %c0_47 = arith.constant 0 : index
    %33 = vector.load %arg4[%c0_46, %c0_47] : memref<1152x128xf32, #tpu.memory_space<vmem>>, vector<1152x128xf32>
    %cst_48 = arith.constant dense<0.000000e+00> : vector<256x128xf32>
    %34 = tpu.matmul %32, %33, %cst_48 {dimension_numbers = #tpu.dot_dimension_numbers<[1], [0], [0], [1], [0, 0, 1, 1], [], []>} : vector<256x1152xf32>, vector<1152x128xf32>, vector<256x128xf32> -> vector<256x128xf32>
    %35 = vector.shape_cast %34 : vector<256x128xf32> to vector<1x16x16x128xf32>
    %c0_49 = arith.constant 0 : index
    %c0_50 = arith.constant 0 : index
    %c0_51 = arith.constant 0 : index
    %c0_52 = arith.constant 0 : index
    %36 = vector.load %arg5[%c0_49, %c0_50, %c0_51, %c0_52] : memref<1x16x16x128xf32, #tpu.memory_space<vmem>>, vector<1x16x16x128xf32>
    tpu.vector_store %arg5[%c0_49, %c0_50, %c0_51, %c0_52], %35 {strides = array<i32>} : memref<1x16x16x128xf32, #tpu.memory_space<vmem>>, vector<1x16x16x128xf32>,
    %cst_53 = arith.constant dense<0.000000e+00> : vector<128xf32>
    %37 = vector.multi_reduction <add>, %34, %cst_53 [0] : vector<256x128xf32> to vector<128xf32>
    %38 = vector.shape_cast %37 : vector<128xf32> to vector<1x128xf32>
    %39 = vector.shape_cast %38 : vector<1x128xf32> to vector<1x1x128xf32>
    %c0_54 = arith.constant 0 : index
    %c0_55 = arith.constant 0 : index
    %c0_56 = arith.constant 0 : index
    %40 = vector.load %arg6[%c0_54, %c0_55, %c0_56] : memref<1x2x128xf32, #tpu.memory_space<vmem>>, vector<1x1x128xf32>
    tpu.vector_store %arg6[%c0_54, %c0_55, %c0_56], %39 {strides = array<i32>} : memref<1x2x128xf32, #tpu.memory_space<vmem>>, vector<1x1x128xf32>,
    %41 = arith.mulf %34, %34 : vector<256x128xf32>
    %cst_57 = arith.constant dense<0.000000e+00> : vector<128xf32>
    %42 = vector.multi_reduction <add>, %41, %cst_57 [0] : vector<256x128xf32> to vector<128xf32>
    %43 = vector.shape_cast %42 : vector<128xf32> to vector<1x128xf32>
    %44 = vector.shape_cast %43 : vector<1x128xf32> to vector<1x1x128xf32>
    %c0_58 = arith.constant 0 : index
    %c1_59 = arith.constant 1 : index
    %c0_60 = arith.constant 0 : index
    %45 = vector.load %arg6[%c0_58, %c1_59, %c0_60] : memref<1x2x128xf32, #tpu.memory_space<vmem>>, vector<1x1x128xf32>
    tpu.vector_store %arg6[%c0_58, %c1_59, %c0_60], %44 {strides = array<i32>} : memref<1x2x128xf32, #tpu.memory_space<vmem>>, vector<1x1x128xf32>,
    return
  }
  func.func @transform_0(%arg0: i32) -> (i32, i32, i32, i32) {
    %c0_i32 = arith.constant 0 : i32
    %c0_i32_0 = arith.constant 0 : i32
    %c0_i32_1 = arith.constant 0 : i32
    %c0_i32_2 = arith.constant 0 : i32
    return %arg0, %c0_i32, %c0_i32_0, %c0_i32_1 : i32, i32, i32, i32
  }
  func.func @transform_1(%arg0: i32) -> (i32, i32) {
    %c0_i32 = arith.constant 0 : i32
    %c0_i32_0 = arith.constant 0 : i32
    %c0_i32_1 = arith.constant 0 : i32
    return %c0_i32, %c0_i32_0 : i32, i32
  }
  func.func @transform_2(%arg0: i32) -> (i32, i32) {
    %c0_i32 = arith.constant 0 : i32
    %c0_i32_0 = arith.constant 0 : i32
    %c0_i32_1 = arith.constant 0 : i32
    return %c0_i32, %c0_i32_0 : i32, i32
  }
  func.func @transform_3(%arg0: i32) -> (i32, i32) {
    %c0_i32 = arith.constant 0 : i32
    %c0_i32_0 = arith.constant 0 : i32
    %c0_i32_1 = arith.constant 0 : i32
    return %c0_i32, %c0_i32_0 : i32, i32
  }
  func.func @transform_4(%arg0: i32) -> (i32, i32, i32, i32) {
    %c0_i32 = arith.constant 0 : i32
    %c0_i32_0 = arith.constant 0 : i32
    %c0_i32_1 = arith.constant 0 : i32
    %c0_i32_2 = arith.constant 0 : i32
    return %arg0, %c0_i32, %c0_i32_0, %c0_i32_1 : i32, i32, i32, i32
  }
  func.func @transform_5(%arg0: i32) -> (i32, i32, i32) {
    %c0_i32 = arith.constant 0 : i32
    %c0_i32_0 = arith.constant 0 : i32
    %c0_i32_1 = arith.constant 0 : i32
    return %arg0, %c0_i32, %c0_i32_0 : i32, i32, i32
  }
}

module attributes {stable_mosaic.version = 11 : i64} {
  func.func @bn_relu_kernel(%arg0: i32, %arg1: memref<1x16x16x128xf32, #tpu.memory_space<vmem>>, %arg2: memref<1x128xf32, #tpu.memory_space<vmem>>, %arg3: memref<1x128xf32, #tpu.memory_space<vmem>>, %arg4: memref<1x16x16x128xf32, #tpu.memory_space<vmem>>) attributes {dimension_semantics = [#tpu.dimension_semantics<parallel>], iteration_bounds = array<i64: 2>, scalar_prefetch = 0 : i64, scratch_operands = 0 : i64, tpu.core_type = #tpu.core_type<tc>, window_params = [{transform_indices = @transform_0, window_bounds = array<i64: 1, 16, 16, 128>}, {pipeline_mode = #tpu.pipeline_mode<synchronous>, transform_indices = @transform_1, window_bounds = array<i64: 1, 128>}, {pipeline_mode = #tpu.pipeline_mode<synchronous>, transform_indices = @transform_2, window_bounds = array<i64: 1, 128>}, {transform_indices = @transform_3, window_bounds = array<i64: 1, 16, 16, 128>}]} {
    %c0 = arith.constant 0 : index
    %c0_0 = arith.constant 0 : index
    %0 = vector.load %arg2[%c0, %c0_0] : memref<1x128xf32, #tpu.memory_space<vmem>>, vector<1x128xf32>
    %1 = vector.shape_cast %0 : vector<1x128xf32> to vector<1x1x1x128xf32>
    %c0_1 = arith.constant 0 : index
    %c0_2 = arith.constant 0 : index
    %2 = vector.load %arg3[%c0_1, %c0_2] : memref<1x128xf32, #tpu.memory_space<vmem>>, vector<1x128xf32>
    %3 = vector.shape_cast %2 : vector<1x128xf32> to vector<1x1x1x128xf32>
    %c0_3 = arith.constant 0 : index
    %c0_4 = arith.constant 0 : index
    %c0_5 = arith.constant 0 : index
    %c0_6 = arith.constant 0 : index
    %4 = vector.load %arg1[%c0_3, %c0_4, %c0_5, %c0_6] : memref<1x16x16x128xf32, #tpu.memory_space<vmem>>, vector<1x16x16x128xf32>
    %5 = vector.broadcast %1 : vector<1x1x1x128xf32> to vector<1x16x16x128xf32>
    %6 = arith.mulf %4, %5 : vector<1x16x16x128xf32>
    %7 = vector.broadcast %3 : vector<1x1x1x128xf32> to vector<1x16x16x128xf32>
    %8 = arith.addf %6, %7 : vector<1x16x16x128xf32>
    %cst = arith.constant 0.000000e+00 : f32
    %9 = vector.broadcast %cst : f32 to vector<1x16x16x128xf32>
    %10 = arith.maximumf %8, %9 : vector<1x16x16x128xf32>
    %c0_7 = arith.constant 0 : index
    %c0_8 = arith.constant 0 : index
    %c0_9 = arith.constant 0 : index
    %c0_10 = arith.constant 0 : index
    %11 = vector.load %arg4[%c0_7, %c0_8, %c0_9, %c0_10] : memref<1x16x16x128xf32, #tpu.memory_space<vmem>>, vector<1x16x16x128xf32>
    tpu.vector_store %arg4[%c0_7, %c0_8, %c0_9, %c0_10], %10 {strides = array<i32>} : memref<1x16x16x128xf32, #tpu.memory_space<vmem>>, vector<1x16x16x128xf32>,
    return
  }
  func.func @transform_0(%arg0: i32) -> (i32, i32, i32, i32) {
    %c0_i32 = arith.constant 0 : i32
    %c0_i32_0 = arith.constant 0 : i32
    %c0_i32_1 = arith.constant 0 : i32
    %c0_i32_2 = arith.constant 0 : i32
    return %arg0, %c0_i32, %c0_i32_0, %c0_i32_1 : i32, i32, i32, i32
  }
  func.func @transform_1(%arg0: i32) -> (i32, i32) {
    %c0_i32 = arith.constant 0 : i32
    %c0_i32_0 = arith.constant 0 : i32
    %c0_i32_1 = arith.constant 0 : i32
    return %c0_i32, %c0_i32_0 : i32, i32
  }
  func.func @transform_2(%arg0: i32) -> (i32, i32) {
    %c0_i32 = arith.constant 0 : i32
    %c0_i32_0 = arith.constant 0 : i32
    %c0_i32_1 = arith.constant 0 : i32
    return %c0_i32, %c0_i32_0 : i32, i32
  }
  func.func @transform_3(%arg0: i32) -> (i32, i32, i32, i32) {
    %c0_i32 = arith.constant 0 : i32
    %c0_i32_0 = arith.constant 0 : i32
    %c0_i32_1 = arith.constant 0 : i32
    %c0_i32_2 = arith.constant 0 : i32
    return %arg0, %c0_i32, %c0_i32_0, %c0_i32_1 : i32, i32, i32, i32
  }
}

module attributes {stable_mosaic.version = 11 : i64} {
  func.func @conv3x3_bn_stats_kernel(%arg0: i32, %arg1: memref<1x16x16x128xf32, #tpu.memory_space<vmem>>, %arg2: memref<1x128xf32, #tpu.memory_space<vmem>>, %arg3: memref<1x128xf32, #tpu.memory_space<vmem>>, %arg4: memref<1152x128xf32, #tpu.memory_space<vmem>>, %arg5: memref<1x16x16x128xf32, #tpu.memory_space<vmem>>, %arg6: memref<1x2x128xf32, #tpu.memory_space<vmem>>, %arg7: memref<18x18x128xf32, #tpu.memory_space<vmem>>, %arg8: memref<256x1152xf32, #tpu.memory_space<vmem>>) attributes {dimension_semantics = [#tpu.dimension_semantics<parallel>], iteration_bounds = array<i64: 2>, scalar_prefetch = 0 : i64, scratch_operands = 2 : i64, tpu.core_type = #tpu.core_type<tc>, window_params = [{transform_indices = @transform_0, window_bounds = array<i64: 1, 16, 16, 128>}, {pipeline_mode = #tpu.pipeline_mode<synchronous>, transform_indices = @transform_1, window_bounds = array<i64: 1, 128>}, {pipeline_mode = #tpu.pipeline_mode<synchronous>, transform_indices = @transform_2, window_bounds = array<i64: 1, 128>}, {pipeline_mode = #tpu.pipeline_mode<synchronous>, transform_indices = @transform_3, window_bounds = array<i64: 1152, 128>}, {transform_indices = @transform_4, window_bounds = array<i64: 1, 16, 16, 128>}, {transform_indices = @transform_5, window_bounds = array<i64: 1, 2, 128>}]} {
    %c0 = arith.constant 0 : index
    %c0_0 = arith.constant 0 : index
    %c0_1 = arith.constant 0 : index
    %c0_2 = arith.constant 0 : index
    %0 = vector.load %arg1[%c0, %c0_0, %c0_1, %c0_2] : memref<1x16x16x128xf32, #tpu.memory_space<vmem>>, vector<1x16x16x128xf32>
    %1 = vector.shape_cast %0 : vector<1x16x16x128xf32> to vector<16x16x128xf32>
    %c0_3 = arith.constant 0 : index
    %c0_4 = arith.constant 0 : index
    %2 = vector.load %arg2[%c0_3, %c0_4] : memref<1x128xf32, #tpu.memory_space<vmem>>, vector<1x128xf32>
    %3 = vector.shape_cast %2 : vector<1x128xf32> to vector<1x1x128xf32>
    %c0_5 = arith.constant 0 : index
    %c0_6 = arith.constant 0 : index
    %4 = vector.load %arg3[%c0_5, %c0_6] : memref<1x128xf32, #tpu.memory_space<vmem>>, vector<1x128xf32>
    %5 = vector.shape_cast %4 : vector<1x128xf32> to vector<1x1x128xf32>
    %6 = vector.broadcast %3 : vector<1x1x128xf32> to vector<16x16x128xf32>
    %7 = arith.mulf %1, %6 : vector<16x16x128xf32>
    %8 = vector.broadcast %5 : vector<1x1x128xf32> to vector<16x16x128xf32>
    %9 = arith.addf %7, %8 : vector<16x16x128xf32>
    %cst = arith.constant 0.000000e+00 : f32
    %10 = vector.broadcast %cst : f32 to vector<16x16x128xf32>
    %11 = arith.maximumf %9, %10 : vector<16x16x128xf32>
    %cst_7 = arith.constant 0.000000e+00 : f32
    %12 = vector.broadcast %cst_7 : f32 to vector<18x18x128xf32>
    %c0_8 = arith.constant 0 : index
    %c0_9 = arith.constant 0 : index
    %c0_10 = arith.constant 0 : index
    %13 = vector.load %arg7[%c0_8, %c0_9, %c0_10] : memref<18x18x128xf32, #tpu.memory_space<vmem>>, vector<18x18x128xf32>
    tpu.vector_store %arg7[%c0_8, %c0_9, %c0_10], %12 {strides = array<i32>} : memref<18x18x128xf32, #tpu.memory_space<vmem>>, vector<18x18x128xf32>,
    %c1 = arith.constant 1 : index
    %c1_11 = arith.constant 1 : index
    %c0_12 = arith.constant 0 : index
    %14 = vector.load %arg7[%c1, %c1_11, %c0_12] : memref<18x18x128xf32, #tpu.memory_space<vmem>>, vector<16x16x128xf32>
    tpu.vector_store %arg7[%c1, %c1_11, %c0_12], %11 {strides = array<i32>} : memref<18x18x128xf32, #tpu.memory_space<vmem>>, vector<16x16x128xf32>,
    %c0_13 = arith.constant 0 : index
    %c0_14 = arith.constant 0 : index
    %c0_15 = arith.constant 0 : index
    %15 = vector.load %arg7[%c0_13, %c0_14, %c0_15] : memref<18x18x128xf32, #tpu.memory_space<vmem>>, vector<16x16x128xf32>
    %16 = vector.shape_cast %15 : vector<16x16x128xf32> to vector<256x128xf32>
    %c0_16 = arith.constant 0 : index
    %c0_17 = arith.constant 0 : index
    %17 = vector.load %arg8[%c0_16, %c0_17] : memref<256x1152xf32, #tpu.memory_space<vmem>>, vector<256x128xf32>
    tpu.vector_store %arg8[%c0_16, %c0_17], %16 {strides = array<i32>} : memref<256x1152xf32, #tpu.memory_space<vmem>>, vector<256x128xf32>,
    %c0_18 = arith.constant 0 : index
    %c1_19 = arith.constant 1 : index
    %c0_20 = arith.constant 0 : index
    %18 = vector.load %arg7[%c0_18, %c1_19, %c0_20] : memref<18x18x128xf32, #tpu.memory_space<vmem>>, vector<16x16x128xf32>
    %19 = vector.shape_cast %18 : vector<16x16x128xf32> to vector<256x128xf32>
    %c0_21 = arith.constant 0 : index
    %c128 = arith.constant 128 : index
    %20 = vector.load %arg8[%c0_21, %c128] : memref<256x1152xf32, #tpu.memory_space<vmem>>, vector<256x128xf32>
    tpu.vector_store %arg8[%c0_21, %c128], %19 {strides = array<i32>} : memref<256x1152xf32, #tpu.memory_space<vmem>>, vector<256x128xf32>,
    %c0_22 = arith.constant 0 : index
    %c2 = arith.constant 2 : index
    %c0_23 = arith.constant 0 : index
    %21 = vector.load %arg7[%c0_22, %c2, %c0_23] : memref<18x18x128xf32, #tpu.memory_space<vmem>>, vector<16x16x128xf32>
    %22 = vector.shape_cast %21 : vector<16x16x128xf32> to vector<256x128xf32>
    %c0_24 = arith.constant 0 : index
    %c256 = arith.constant 256 : index
    %23 = vector.load %arg8[%c0_24, %c256] : memref<256x1152xf32, #tpu.memory_space<vmem>>, vector<256x128xf32>
    tpu.vector_store %arg8[%c0_24, %c256], %22 {strides = array<i32>} : memref<256x1152xf32, #tpu.memory_space<vmem>>, vector<256x128xf32>,
    %c1_25 = arith.constant 1 : index
    %c0_26 = arith.constant 0 : index
    %c0_27 = arith.constant 0 : index
    %24 = vector.load %arg7[%c1_25, %c0_26, %c0_27] : memref<18x18x128xf32, #tpu.memory_space<vmem>>, vector<16x16x128xf32>
    %25 = vector.shape_cast %24 : vector<16x16x128xf32> to vector<256x128xf32>
    %c0_28 = arith.constant 0 : index
    %c384 = arith.constant 384 : index
    %26 = vector.load %arg8[%c0_28, %c384] : memref<256x1152xf32, #tpu.memory_space<vmem>>, vector<256x128xf32>
    tpu.vector_store %arg8[%c0_28, %c384], %25 {strides = array<i32>} : memref<256x1152xf32, #tpu.memory_space<vmem>>, vector<256x128xf32>,
    %c1_29 = arith.constant 1 : index
    %c1_30 = arith.constant 1 : index
    %c0_31 = arith.constant 0 : index
    %27 = vector.load %arg7[%c1_29, %c1_30, %c0_31] : memref<18x18x128xf32, #tpu.memory_space<vmem>>, vector<16x16x128xf32>
    %28 = vector.shape_cast %27 : vector<16x16x128xf32> to vector<256x128xf32>
    %c0_32 = arith.constant 0 : index
    %c512 = arith.constant 512 : index
    %29 = vector.load %arg8[%c0_32, %c512] : memref<256x1152xf32, #tpu.memory_space<vmem>>, vector<256x128xf32>
    tpu.vector_store %arg8[%c0_32, %c512], %28 {strides = array<i32>} : memref<256x1152xf32, #tpu.memory_space<vmem>>, vector<256x128xf32>,
    %c1_33 = arith.constant 1 : index
    %c2_34 = arith.constant 2 : index
    %c0_35 = arith.constant 0 : index
    %30 = vector.load %arg7[%c1_33, %c2_34, %c0_35] : memref<18x18x128xf32, #tpu.memory_space<vmem>>, vector<16x16x128xf32>
    %31 = vector.shape_cast %30 : vector<16x16x128xf32> to vector<256x128xf32>
    %c0_36 = arith.constant 0 : index
    %c640 = arith.constant 640 : index
    %32 = vector.load %arg8[%c0_36, %c640] : memref<256x1152xf32, #tpu.memory_space<vmem>>, vector<256x128xf32>
    tpu.vector_store %arg8[%c0_36, %c640], %31 {strides = array<i32>} : memref<256x1152xf32, #tpu.memory_space<vmem>>, vector<256x128xf32>,
    %c2_37 = arith.constant 2 : index
    %c0_38 = arith.constant 0 : index
    %c0_39 = arith.constant 0 : index
    %33 = vector.load %arg7[%c2_37, %c0_38, %c0_39] : memref<18x18x128xf32, #tpu.memory_space<vmem>>, vector<16x16x128xf32>
    %34 = vector.shape_cast %33 : vector<16x16x128xf32> to vector<256x128xf32>
    %c0_40 = arith.constant 0 : index
    %c768 = arith.constant 768 : index
    %35 = vector.load %arg8[%c0_40, %c768] : memref<256x1152xf32, #tpu.memory_space<vmem>>, vector<256x128xf32>
    tpu.vector_store %arg8[%c0_40, %c768], %34 {strides = array<i32>} : memref<256x1152xf32, #tpu.memory_space<vmem>>, vector<256x128xf32>,
    %c2_41 = arith.constant 2 : index
    %c1_42 = arith.constant 1 : index
    %c0_43 = arith.constant 0 : index
    %36 = vector.load %arg7[%c2_41, %c1_42, %c0_43] : memref<18x18x128xf32, #tpu.memory_space<vmem>>, vector<16x16x128xf32>
    %37 = vector.shape_cast %36 : vector<16x16x128xf32> to vector<256x128xf32>
    %c0_44 = arith.constant 0 : index
    %c896 = arith.constant 896 : index
    %38 = vector.load %arg8[%c0_44, %c896] : memref<256x1152xf32, #tpu.memory_space<vmem>>, vector<256x128xf32>
    tpu.vector_store %arg8[%c0_44, %c896], %37 {strides = array<i32>} : memref<256x1152xf32, #tpu.memory_space<vmem>>, vector<256x128xf32>,
    %c2_45 = arith.constant 2 : index
    %c2_46 = arith.constant 2 : index
    %c0_47 = arith.constant 0 : index
    %39 = vector.load %arg7[%c2_45, %c2_46, %c0_47] : memref<18x18x128xf32, #tpu.memory_space<vmem>>, vector<16x16x128xf32>
    %40 = vector.shape_cast %39 : vector<16x16x128xf32> to vector<256x128xf32>
    %c0_48 = arith.constant 0 : index
    %c1024 = arith.constant 1024 : index
    %41 = vector.load %arg8[%c0_48, %c1024] : memref<256x1152xf32, #tpu.memory_space<vmem>>, vector<256x128xf32>
    tpu.vector_store %arg8[%c0_48, %c1024], %40 {strides = array<i32>} : memref<256x1152xf32, #tpu.memory_space<vmem>>, vector<256x128xf32>,
    %c0_49 = arith.constant 0 : index
    %c0_50 = arith.constant 0 : index
    %42 = vector.load %arg8[%c0_49, %c0_50] : memref<256x1152xf32, #tpu.memory_space<vmem>>, vector<256x1152xf32>
    %c0_51 = arith.constant 0 : index
    %c0_52 = arith.constant 0 : index
    %43 = vector.load %arg4[%c0_51, %c0_52] : memref<1152x128xf32, #tpu.memory_space<vmem>>, vector<1152x128xf32>
    %cst_53 = arith.constant dense<0.000000e+00> : vector<256x128xf32>
    %44 = tpu.matmul %42, %43, %cst_53 {dimension_numbers = #tpu.dot_dimension_numbers<[1], [0], [0], [1], [0, 0, 1, 1], [], []>} : vector<256x1152xf32>, vector<1152x128xf32>, vector<256x128xf32> -> vector<256x128xf32>
    %45 = vector.shape_cast %44 : vector<256x128xf32> to vector<1x16x16x128xf32>
    %c0_54 = arith.constant 0 : index
    %c0_55 = arith.constant 0 : index
    %c0_56 = arith.constant 0 : index
    %c0_57 = arith.constant 0 : index
    %46 = vector.load %arg5[%c0_54, %c0_55, %c0_56, %c0_57] : memref<1x16x16x128xf32, #tpu.memory_space<vmem>>, vector<1x16x16x128xf32>
    tpu.vector_store %arg5[%c0_54, %c0_55, %c0_56, %c0_57], %45 {strides = array<i32>} : memref<1x16x16x128xf32, #tpu.memory_space<vmem>>, vector<1x16x16x128xf32>,
    %cst_58 = arith.constant dense<0.000000e+00> : vector<128xf32>
    %47 = vector.multi_reduction <add>, %44, %cst_58 [0] : vector<256x128xf32> to vector<128xf32>
    %48 = vector.shape_cast %47 : vector<128xf32> to vector<1x128xf32>
    %49 = vector.shape_cast %48 : vector<1x128xf32> to vector<1x1x128xf32>
    %c0_59 = arith.constant 0 : index
    %c0_60 = arith.constant 0 : index
    %c0_61 = arith.constant 0 : index
    %50 = vector.load %arg6[%c0_59, %c0_60, %c0_61] : memref<1x2x128xf32, #tpu.memory_space<vmem>>, vector<1x1x128xf32>
    tpu.vector_store %arg6[%c0_59, %c0_60, %c0_61], %49 {strides = array<i32>} : memref<1x2x128xf32, #tpu.memory_space<vmem>>, vector<1x1x128xf32>,
    %51 = arith.mulf %44, %44 : vector<256x128xf32>
    %cst_62 = arith.constant dense<0.000000e+00> : vector<128xf32>
    %52 = vector.multi_reduction <add>, %51, %cst_62 [0] : vector<256x128xf32> to vector<128xf32>
    %53 = vector.shape_cast %52 : vector<128xf32> to vector<1x128xf32>
    %54 = vector.shape_cast %53 : vector<1x128xf32> to vector<1x1x128xf32>
    %c0_63 = arith.constant 0 : index
    %c1_64 = arith.constant 1 : index
    %c0_65 = arith.constant 0 : index
    %55 = vector.load %arg6[%c0_63, %c1_64, %c0_65] : memref<1x2x128xf32, #tpu.memory_space<vmem>>, vector<1x1x128xf32>
    tpu.vector_store %arg6[%c0_63, %c1_64, %c0_65], %54 {strides = array<i32>} : memref<1x2x128xf32, #tpu.memory_space<vmem>>, vector<1x1x128xf32>,
    return
  }
  func.func @transform_0(%arg0: i32) -> (i32, i32, i32, i32) {
    %c0_i32 = arith.constant 0 : i32
    %c0_i32_0 = arith.constant 0 : i32
    %c0_i32_1 = arith.constant 0 : i32
    %c0_i32_2 = arith.constant 0 : i32
    return %arg0, %c0_i32, %c0_i32_0, %c0_i32_1 : i32, i32, i32, i32
  }
  func.func @transform_1(%arg0: i32) -> (i32, i32) {
    %c0_i32 = arith.constant 0 : i32
    %c0_i32_0 = arith.constant 0 : i32
    %c0_i32_1 = arith.constant 0 : i32
    return %c0_i32, %c0_i32_0 : i32, i32
  }
  func.func @transform_2(%arg0: i32) -> (i32, i32) {
    %c0_i32 = arith.constant 0 : i32
    %c0_i32_0 = arith.constant 0 : i32
    %c0_i32_1 = arith.constant 0 : i32
    return %c0_i32, %c0_i32_0 : i32, i32
  }
  func.func @transform_3(%arg0: i32) -> (i32, i32) {
    %c0_i32 = arith.constant 0 : i32
    %c0_i32_0 = arith.constant 0 : i32
    %c0_i32_1 = arith.constant 0 : i32
    return %c0_i32, %c0_i32_0 : i32, i32
  }
  func.func @transform_4(%arg0: i32) -> (i32, i32, i32, i32) {
    %c0_i32 = arith.constant 0 : i32
    %c0_i32_0 = arith.constant 0 : i32
    %c0_i32_1 = arith.constant 0 : i32
    %c0_i32_2 = arith.constant 0 : i32
    return %arg0, %c0_i32, %c0_i32_0, %c0_i32_1 : i32, i32, i32, i32
  }
  func.func @transform_5(%arg0: i32) -> (i32, i32, i32) {
    %c0_i32 = arith.constant 0 : i32
    %c0_i32_0 = arith.constant 0 : i32
    %c0_i32_1 = arith.constant 0 : i32
    return %arg0, %c0_i32, %c0_i32_0 : i32, i32, i32
  }
}

</mosaic_0001>

<llo_original>
// kernel: basic_block_forward.5
$region0: #{basic_block_forward.5}
  #allocation0 [shape = 'u32[]', space=smem, size = 0x4, offset = 0x4, fixed_abs, tag = 'smem constant byte address 0x4 - core index']
  #allocation1 [shape = 'u32[72,128]{1,0:T(1,128)}', space=vmem, size = 0x9000, scoped, tag = 'internal scratch']
  %s0 = inlined_call_operand.vmem [shape: f32[2,16,16,128], index: 0, kind: input, shape index: {}]
  %s1 = inlined_call_operand.vmem [shape: f32[1,128], index: 1, kind: input, shape index: {}]
  %s2 = inlined_call_operand.vmem [shape: f32[1,128], index: 2, kind: input, shape index: {}]
  %s3 = inlined_call_operand.vmem [shape: f32[2,16,16,128], index: 3, kind: output, shape index: {}]
  %s4 = sld [smem:[#allocation0]]
  $region45: #{basic_block_forward.5} parent=0
    _
  %s6 = ssub.s32 1, %s4
  %s7 = scalar_select 0, %s6, %s4
  loop: start=0, step=1, limit=4
  $region2: #{basic_block_forward.5} parent=0 // loop_pre_header
    _
  $region3: #{basic_block_forward.5} parent=0 // loop_header
    %s9 = sphi 0, %s13
    %p10 = scmp.ge.s32.totalorder %s9, 4
    %s19 = sphi 0, %s21
    %s22 = sphi 0, %s19
    %s23 = sphi 0, %s22
    %s39 = sphi 0, %s23
    %s43 = sphi 0, %s43
    %s45 = sphi 0, %s43
    %s46 = sphi 0, %s45
    %s60 = sphi 0, %s46
    %s64 = sphi 0, %s64
    %s66 = sphi 0, %s64
    %s67 = sphi 0, %s66
    %s81 = sphi 0, %s67
    %s87 = sphi 0, %s89
    %s90 = sphi 0, %s87
    %s91 = sphi 0, %s90
    %s107 = sphi 0, %s91
  $region4: #{basic_block_forward.5} parent=0 // loop_header_branch
    %12 = sbr.rel (%p10) target = $region8
  $region5: #{basic_block_forward.5} parent=0 // loop_body
    %s14 = ssub.s32 %s9, 1
    %s15 = ssub.s32 %s9, 2
    %s16 = sadd.s32 %s9, 1
    %s17 = ssub.s32 %s9, %s16
    %p18 = scmp.eq.s32.totalorder %s17, 0
    %s20 = sadd.s32 %s19, 1
    %s21 = scalar_select %p18, %s19, %s20
    %p24 = pneg %p18
    %p25 = scmp.eq.s32.totalorder %s9, 1
    %p26 = por %p24, %p25
    %p27 = scmp.ne.s32.totalorder %s19, %s22
    %p28 = scmp.eq.s32.totalorder %s9, 0
    %p29 = por %p27, %p28
    %p30 = scmp.ne.s32.totalorder %s19, %s22
    %p31 = scmp.eq.s32.totalorder %s14, 1
    %p32 = por %p30, %p31
    %p33 = scmp.ne.s32.totalorder %s22, %s23
    %p34 = scmp.eq.s32.totalorder %s14, 0
    %p35 = por %p33, %p34
    %p36 = scmp.ne.s32.totalorder %s22, %s23
    %p37 = scmp.eq.s32.totalorder %s15, 1
    %p38 = por %p36, %p37
    %p40 = scmp.ne.s32.totalorder %s23, %s39
    %p41 = scmp.eq.s32.totalorder %s15, 0
    %p42 = por %p40, %p41
    %s44 = sadd.s32 %s43, 1
    %p47 = scmp.eq.s32.totalorder %s9, 1
    %p48 = scmp.ne.s32.totalorder %s43, %s45
    %p49 = scmp.eq.s32.totalorder %s9, 0
    %p50 = por %p48, %p49
    %p51 = scmp.ne.s32.totalorder %s43, %s45
    %p52 = scmp.eq.s32.totalorder %s14, 1
    %p53 = por %p51, %p52
    %p54 = scmp.ne.s32.totalorder %s45, %s46
    %p55 = scmp.eq.s32.totalorder %s14, 0
    %p56 = por %p54, %p55
    %p57 = scmp.ne.s32.totalorder %s45, %s46
    %p58 = scmp.eq.s32.totalorder %s15, 1
    %p59 = por %p57, %p58
    %p61 = scmp.ne.s32.totalorder %s46, %s60
    %p62 = scmp.eq.s32.totalorder %s15, 0
    %p63 = por %p61, %p62
    %s65 = sadd.s32 %s64, 1
    %p68 = scmp.eq.s32.totalorder %s9, 1
    %p69 = scmp.ne.s32.totalorder %s64, %s66
    %p70 = scmp.eq.s32.totalorder %s9, 0
    %p71 = por %p69, %p70
    %p72 = scmp.ne.s32.totalorder %s64, %s66
    %p73 = scmp.eq.s32.totalorder %s14, 1
    %p74 = por %p72, %p73
    %p75 = scmp.ne.s32.totalorder %s66, %s67
    %p76 = scmp.eq.s32.totalorder %s14, 0
    %p77 = por %p75, %p76
    %p78 = scmp.ne.s32.totalorder %s66, %s67
    %p79 = scmp.eq.s32.totalorder %s15, 1
    %p80 = por %p78, %p79
    %p82 = scmp.ne.s32.totalorder %s67, %s81
    %p83 = scmp.eq.s32.totalorder %s15, 0
    %p84 = por %p82, %p83
    %s85 = ssub.s32 %s9, %s16
    %p86 = scmp.eq.s32.totalorder %s85, 0
    %s88 = sadd.s32 %s87, 1
    %s89 = scalar_select %p86, %s87, %s88
    %p92 = pneg %p86
    %p93 = scmp.eq.s32.totalorder %s9, 1
    %p94 = por %p92, %p93
    %p95 = scmp.ne.s32.totalorder %s87, %s90
    %p96 = scmp.eq.s32.totalorder %s9, 0
    %p97 = por %p95, %p96
    %p98 = scmp.ne.s32.totalorder %s87, %s90
    %p99 = scmp.eq.s32.totalorder %s14, 1
    %p100 = por %p98, %p99
    %p101 = scmp.ne.s32.totalorder %s90, %s91
    %p102 = scmp.eq.s32.totalorder %s14, 0
    %p103 = por %p101, %p102
    %p104 = scmp.ne.s32.totalorder %s90, %s91
    %p105 = scmp.eq.s32.totalorder %s15, 1
    %p106 = por %p104, %p105
    %p108 = scmp.ne.s32.totalorder %s91, %s107
    %p109 = scmp.eq.s32.totalorder %s15, 0
    %p110 = por %p108, %p109
    %p111 = scmp.le.s32.totalorder 1, %s9
    %p112 = scmp.lt.s32.totalorder %s9, 3
    %p113 = pnand %p111, %p112
    %p114 = pneg %p113
    // Predicated region
    $region9: #{basic_block_forward.5} parent=5 // pred_check
      _
    $region10: #{basic_block_forward.5} parent=5 // pred_check_branch
      %116 = sbr.rel (%p113) target = $region12
    $region11: #{basic_block_forward.5} parent=5 // pred_region
      %s117 = ssub.s32 %s9, 1
      // Predicated region
      $region13: #{basic_block_forward.5} parent=11 // pred_check
        %p118 = pneg %p56
      $region14: #{basic_block_forward.5} parent=11 // pred_check_branch
        %120 = sbr.rel (%p118) target = $region16
      $region15: #{basic_block_forward.5} parent=11 // pred_region
        _
      $region16: #{basic_block_forward.5} parent=11 // pred_fallthru
        _
      // Predicated region
      $region17: #{basic_block_forward.5} parent=11 // pred_check
        %p121 = pneg %p77
      $region18: #{basic_block_forward.5} parent=11 // pred_check_branch
        %123 = sbr.rel (%p121) target = $region20
      $region19: #{basic_block_forward.5} parent=11 // pred_region
        _
      $region20: #{basic_block_forward.5} parent=11 // pred_fallthru
        _
    $region12: #{basic_block_forward.5} parent=5 // pred_fallthru
      _
    %p124 = scmp.lt.s32.totalorder %s9, 2
    // Predicated region
    $region21: #{basic_block_forward.5} parent=5 // pred_check
      %p125 = pneg %p124
    $region22: #{basic_block_forward.5} parent=5 // pred_check_branch
      %127 = sbr.rel (%p125) target = $region24
    $region23: #{basic_block_forward.5} parent=5 // pred_region
      // Predicated region
      $region25: #{basic_block_forward.5} parent=23 // pred_check
        %p128 = pneg %p29
      $region26: #{basic_block_forward.5} parent=23 // pred_check_branch
        %130 = sbr.rel (%p128) target = $region28
      $region27: #{basic_block_forward.5} parent=23 // pred_region
        %p131 = scmp.lt.s32.totalorder %s9, 1
        %s132 = scalar_select %p131, %s9, 1
        %s133 = smul.addr %s132, 32
        %s134 = smul.addr %s133, 8
        %s135 = scalar_lea.vmem %s0, %s134
      $region28: #{basic_block_forward.5} parent=23 // pred_fallthru
        _
    $region24: #{basic_block_forward.5} parent=5 // pred_fallthru
      _
    %p136 = scmp.le.s32.totalorder 1, %s9
    %p137 = scmp.lt.s32.totalorder %s9, 3
    %p138 = pnand %p136, %p137
    %p139 = pneg %p138
    // Predicated region
    $region29: #{basic_block_forward.5} parent=5 // pred_check
      _
    $region30: #{basic_block_forward.5} parent=5 // pred_check_branch
      %141 = sbr.rel (%p138) target = $region32
    $region31: #{basic_block_forward.5} parent=5 // pred_region
      %s142 = ssub.s32 %s9, 1
      %p143 = scmp.lt.s32.totalorder %s14, 1
      %s144 = scalar_select %p143, %s14, 1
      %s145 = smul.addr %s144, 32
      %s146 = smul.addr %s145, 8
      %s147 = scalar_lea.vmem %s0, %s146
      %p148 = pneg %p35
      %p149 = pneg %p32
      %p150 = pneg %p56
      %p151 = pneg %p53
      %p152 = pneg %p77
      %p153 = pneg %p74
      %p154 = pneg %p103
      %p155 = pneg %p100
      %p156 = scmp.lt.s32.totalorder %s14, 1
      %s157 = scalar_select %p156, %s14, 1
      %s158 = smul.addr %s157, 32
      %s159 = smul.addr %s158, 8
      %s160 = scalar_lea.vmem %s3, %s159
      %p161 = scmp.lt.s32.totalorder %s14, 1
      %s162 = scalar_select %p161, %s14, 1
      %s163 = smul.addr %s162, 32
      %s164 = smul.addr %s163, 8
      %s165 = scalar_lea.vmem %s0, %s164
      %p166 = scmp.lt.s32.totalorder %s14, 1
      %s167 = scalar_select %p166, %s14, 1
      %s168 = smul.addr %s167, 32
      %s169 = smul.addr %s168, 8
      %s170 = scalar_lea.vmem %s3, %s169
      %v171 = vld [vmem:[%s1] sm:$0x1]
      %v172 = vld [vmem:[%s2] sm:$0x1]
      %v173 = vld [vmem:[%s165] sm:$0xff]
      %v174 = vld [vmem:[%s165 + $0x8] sm:$0xff]
      %v175 = vld [vmem:[%s165 + $0x10] sm:$0xff]
      %v176 = vld [vmem:[%s165 + $0x18] sm:$0xff]
      %v177 = vld [vmem:[%s165 + $0x20] sm:$0xff]
      %v178 = vld [vmem:[%s165 + $0x28] sm:$0xff]
      %v179 = vld [vmem:[%s165 + $0x30] sm:$0xff]
      %v180 = vld [vmem:[%s165 + $0x38] sm:$0xff]
      %v181 = vld [vmem:[%s165 + $0x40] sm:$0xff]
      %v182 = vld [vmem:[%s165 + $0x48] sm:$0xff]
      %v183 = vld [vmem:[%s165 + $0x50] sm:$0xff]
      %v184 = vld [vmem:[%s165 + $0x58] sm:$0xff]
      %v185 = vld [vmem:[%s165 + $0x60] sm:$0xff]
      %v186 = vld [vmem:[%s165 + $0x68] sm:$0xff]
      %v187 = vld [vmem:[%s165 + $0x70] sm:$0xff]
      %v188 = vld [vmem:[%s165 + $0x78] sm:$0xff]
      %v189 = vld [vmem:[%s165 + $0x80] sm:$0xff]
      %v190 = vld [vmem:[%s165 + $0x88] sm:$0xff]
      %v191 = vld [vmem:[%s165 + $0x90] sm:$0xff]
      %v192 = vld [vmem:[%s165 + $0x98] sm:$0xff]
      %v193 = vld [vmem:[%s165 + $0xa0] sm:$0xff]
      %v194 = vld [vmem:[%s165 + $0xa8] sm:$0xff]
      %v195 = vld [vmem:[%s165 + $0xb0] sm:$0xff]
      %v196 = vld [vmem:[%s165 + $0xb8] sm:$0xff]
      %v197 = vld [vmem:[%s165 + $0xc0] sm:$0xff]
      %v198 = vld [vmem:[%s165 + $0xc8] sm:$0xff]
      %v199 = vld [vmem:[%s165 + $0xd0] sm:$0xff]
      %v200 = vld [vmem:[%s165 + $0xd8] sm:$0xff]
      %v201 = vld [vmem:[%s165 + $0xe0] sm:$0xff]
      %v202 = vld [vmem:[%s165 + $0xe8] sm:$0xff]
      %v203 = vld [vmem:[%s165 + $0xf0] sm:$0xff]
      %v204 = vld [vmem:[%s165 + $0xf8] sm:$0xff]
      %v206 = vperm.slane %v171, 0
      %v208 = vmul.f32 %v173, %v206
      %v209 = vmul.f32 %v174, %v206
      %v210 = vmul.f32 %v175, %v206
      %v211 = vmul.f32 %v176, %v206
      %v212 = vmul.f32 %v177, %v206
      %v213 = vmul.f32 %v178, %v206
      %v214 = vmul.f32 %v179, %v206
      %v215 = vmul.f32 %v180, %v206
      %v216 = vmul.f32 %v181, %v206
      %v217 = vmul.f32 %v182, %v206
      %v218 = vmul.f32 %v183, %v206
      %v219 = vmul.f32 %v184, %v206
      %v220 = vmul.f32 %v185, %v206
      %v221 = vmul.f32 %v186, %v206
      %v222 = vmul.f32 %v187, %v206
      %v223 = vmul.f32 %v188, %v206
      %v224 = vmul.f32 %v189, %v206
      %v225 = vmul.f32 %v190, %v206
      %v226 = vmul.f32 %v191, %v206
      %v227 = vmul.f32 %v192, %v206
      %v228 = vmul.f32 %v193, %v206
      %v229 = vmul.f32 %v194, %v206
      %v230 = vmul.f32 %v195, %v206
      %v231 = vmul.f32 %v196, %v206
      %v232 = vmul.f32 %v197, %v206
      %v233 = vmul.f32 %v198, %v206
      %v234 = vmul.f32 %v199, %v206
      %v235 = vmul.f32 %v200, %v206
      %v236 = vmul.f32 %v201, %v206
      %v237 = vmul.f32 %v202, %v206
      %v238 = vmul.f32 %v203, %v206
      %v239 = vmul.f32 %v204, %v206
      %v241 = vperm.slane %v172, 0
      %v243 = vadd.f32 %v208, %v241
      %v244 = vadd.f32 %v209, %v241
      %v245 = vadd.f32 %v210, %v241
      %v246 = vadd.f32 %v211, %v241
      %v247 = vadd.f32 %v212, %v241
      %v248 = vadd.f32 %v213, %v241
      %v249 = vadd.f32 %v214, %v241
      %v250 = vadd.f32 %v215, %v241
      %v251 = vadd.f32 %v216, %v241
      %v252 = vadd.f32 %v217, %v241
      %v253 = vadd.f32 %v218, %v241
      %v254 = vadd.f32 %v219, %v241
      %v255 = vadd.f32 %v220, %v241
      %v256 = vadd.f32 %v221, %v241
      %v257 = vadd.f32 %v222, %v241
      %v258 = vadd.f32 %v223, %v241
      %v259 = vadd.f32 %v224, %v241
      %v260 = vadd.f32 %v225, %v241
      %v261 = vadd.f32 %v226, %v241
      %v262 = vadd.f32 %v227, %v241
      %v263 = vadd.f32 %v228, %v241
      %v264 = vadd.f32 %v229, %v241
      %v265 = vadd.f32 %v230, %v241
      %v266 = vadd.f32 %v231, %v241
      %v267 = vadd.f32 %v232, %v241
      %v268 = vadd.f32 %v233, %v241
      %v269 = vadd.f32 %v234, %v241
      %v270 = vadd.f32 %v235, %v241
      %v271 = vadd.f32 %v236, %v241
      %v272 = vadd.f32 %v237, %v241
      %v273 = vadd.f32 %v238, %v241
      %v274 = vadd.f32 %v239, %v241
      %v275 = vmax.f32 %v243, 0.0
      %v276 = vmax.f32 %v244, 0.0
      %v277 = vmax.f32 %v245, 0.0
      %v278 = vmax.f32 %v246, 0.0
      %v279 = vmax.f32 %v247, 0.0
      %v280 = vmax.f32 %v248, 0.0
      %v281 = vmax.f32 %v249, 0.0
      %v282 = vmax.f32 %v250, 0.0
      %v283 = vmax.f32 %v251, 0.0
      %v284 = vmax.f32 %v252, 0.0
      %v285 = vmax.f32 %v253, 0.0
      %v286 = vmax.f32 %v254, 0.0
      %v287 = vmax.f32 %v255, 0.0
      %v288 = vmax.f32 %v256, 0.0
      %v289 = vmax.f32 %v257, 0.0
      %v290 = vmax.f32 %v258, 0.0
      %v291 = vmax.f32 %v259, 0.0
      %v292 = vmax.f32 %v260, 0.0
      %v293 = vmax.f32 %v261, 0.0
      %v294 = vmax.f32 %v262, 0.0
      %v295 = vmax.f32 %v263, 0.0
      %v296 = vmax.f32 %v264, 0.0
      %v297 = vmax.f32 %v265, 0.0
      %v298 = vmax.f32 %v266, 0.0
      %v299 = vmax.f32 %v267, 0.0
      %v300 = vmax.f32 %v268, 0.0
      %v301 = vmax.f32 %v269, 0.0
      %v302 = vmax.f32 %v270, 0.0
      %v303 = vmax.f32 %v271, 0.0
      %v304 = vmax.f32 %v272, 0.0
      %v305 = vmax.f32 %v273, 0.0
      %v306 = vmax.f32 %v274, 0.0
      %307 = vst [vmem:[%s170] sm:$0xff] %v275
      %308 = vst [vmem:[%s170 + $0x8] sm:$0xff] %v276
      %309 = vst [vmem:[%s170 + $0x10] sm:$0xff] %v277
      %310 = vst [vmem:[%s170 + $0x18] sm:$0xff] %v278
      %311 = vst [vmem:[%s170 + $0x20] sm:$0xff] %v279
      %312 = vst [vmem:[%s170 + $0x28] sm:$0xff] %v280
      %313 = vst [vmem:[%s170 + $0x30] sm:$0xff] %v281
      %314 = vst [vmem:[%s170 + $0x38] sm:$0xff] %v282
      %315 = vst [vmem:[%s170 + $0x40] sm:$0xff] %v283
      %316 = vst [vmem:[%s170 + $0x48] sm:$0xff] %v284
      %317 = vst [vmem:[%s170 + $0x50] sm:$0xff] %v285
      %318 = vst [vmem:[%s170 + $0x58] sm:$0xff] %v286
      %319 = vst [vmem:[%s170 + $0x60] sm:$0xff] %v287
      %320 = vst [vmem:[%s170 + $0x68] sm:$0xff] %v288
      %321 = vst [vmem:[%s170 + $0x70] sm:$0xff] %v289
      %322 = vst [vmem:[%s170 + $0x78] sm:$0xff] %v290
      %323 = vst [vmem:[%s170 + $0x80] sm:$0xff] %v291
      %324 = vst [vmem:[%s170 + $0x88] sm:$0xff] %v292
      %325 = vst [vmem:[%s170 + $0x90] sm:$0xff] %v293
      %326 = vst [vmem:[%s170 + $0x98] sm:$0xff] %v294
      %327 = vst [vmem:[%s170 + $0xa0] sm:$0xff] %v295
      %328 = vst [vmem:[%s170 + $0xa8] sm:$0xff] %v296
      %329 = vst [vmem:[%s170 + $0xb0] sm:$0xff] %v297
      %330 = vst [vmem:[%s170 + $0xb8] sm:$0xff] %v298
      %331 = vst [vmem:[%s170 + $0xc0] sm:$0xff] %v299
      %332 = vst [vmem:[%s170 + $0xc8] sm:$0xff] %v300
      %333 = vst [vmem:[%s170 + $0xd0] sm:$0xff] %v301
      %334 = vst [vmem:[%s170 + $0xd8] sm:$0xff] %v302
      %335 = vst [vmem:[%s170 + $0xe0] sm:$0xff] %v303
      %336 = vst [vmem:[%s170 + $0xe8] sm:$0xff] %v304
      %337 = vst [vmem:[%s170 + $0xf0] sm:$0xff] %v305
      %338 = vst [vmem:[%s170 + $0xf8] sm:$0xff] %v306
      %p339 = scmp.lt.s32.totalorder %s14, 1
      %s340 = scalar_select %p339, %s14, 1
      %s341 = smul.addr %s340, 32
      %s342 = smul.addr %s341, 8
      %s343 = scalar_lea.vmem %s3, %s342
      // Predicated region
      $region33: #{basic_block_forward.5} parent=31 // pred_check
        %p344 = pneg %p100
      $region34: #{basic_block_forward.5} parent=31 // pred_check_branch
        %346 = sbr.rel (%p344) target = $region36
      $region35: #{basic_block_forward.5} parent=31 // pred_region
        _
      $region36: #{basic_block_forward.5} parent=31 // pred_fallthru
        _
    $region32: #{basic_block_forward.5} parent=5 // pred_fallthru
      _
    %p347 = scmp.le.s32.totalorder 2, %s9
    // Predicated region
    $region37: #{basic_block_forward.5} parent=5 // pred_check
      %p348 = pneg %p347
    $region38: #{basic_block_forward.5} parent=5 // pred_check_branch
      %350 = sbr.rel (%p348) target = $region40
    $region39: #{basic_block_forward.5} parent=5 // pred_region
      %s351 = ssub.s32 %s9, 2
      // Predicated region
      $region41: #{basic_block_forward.5} parent=39 // pred_check
        %p352 = pneg %p106
      $region42: #{basic_block_forward.5} parent=39 // pred_check_branch
        %354 = sbr.rel (%p352) target = $region44
      $region43: #{basic_block_forward.5} parent=39 // pred_region
        %p355 = scmp.lt.s32.totalorder %s15, 1
        %s356 = scalar_select %p355, %s15, 1
        %s357 = smul.addr %s356, 32
        %s358 = smul.addr %s357, 8
        %s359 = scalar_lea.vmem %s3, %s358
      $region44: #{basic_block_forward.5} parent=39 // pred_fallthru
        _
    $region40: #{basic_block_forward.5} parent=5 // pred_fallthru
      _
  $region6: #{basic_block_forward.5} parent=0 // loop_footer
    %s13 = sadd.s32 1, %s9
  $region7: #{basic_block_forward.5} parent=0 // loop_footer_branch
    %8 = sbr.rel target = $region3
  $region8: #{basic_block_forward.5} parent=0 // loop_exit
    _

// kernel: basic_block_forward.4
$region0: #{basic_block_forward.4}
  #allocation0 [shape = 'u32[]', space=smem, size = 0x4, offset = 0x4, fixed_abs, tag = 'smem constant byte address 0x4 - core index']
  #allocation1 [shape = 'u32[72,128]{1,0:T(1,128)}', space=vmem, size = 0x9000, scoped, tag = 'internal scratch']
  #allocation2 [shape = 'f32[18,18,128]{2,1,0:T(8,128)}', space=vmem, size = 0x36000, scoped, tag = 'scratch operand']
  #allocation3 [shape = 'f32[256,1152]{1,0:T(8,128)}', space=vmem, size = 0x120000, scoped, tag = 'scratch operand']
  %s0 = inlined_call_operand.vmem [shape: f32[2,16,16,128], index: 0, kind: input, shape index: {}]
  %s1 = inlined_call_operand.vmem [shape: f32[1,128], index: 1, kind: input, shape index: {}]
  %s2 = inlined_call_operand.vmem [shape: f32[1,128], index: 2, kind: input, shape index: {}]
  %s3 = inlined_call_operand.vmem [shape: f32[1152,128], index: 3, kind: input, shape index: {}]
  %s4 = inlined_call_operand.vmem [shape: f32[2,16,16,128], index: 4, kind: output, shape index: {0}]
  %s5 = inlined_call_operand.vmem [shape: f32[2,2,128], index: 5, kind: output, shape index: {1}]
  %6 = xla_tuple %s4, %s5
  %s7 = sld [smem:[#allocation0]]
  $region57: #{basic_block_forward.4} parent=0
    _
  %s9 = ssub.s32 1, %s7
  %s10 = scalar_select 0, %s9, %s7
  loop: start=0, step=1, limit=4
  $region2: #{basic_block_forward.4} parent=0 // loop_pre_header
    _
  $region3: #{basic_block_forward.4} parent=0 // loop_header
    %s12 = sphi 0, %s16
    %p13 = scmp.ge.s32.totalorder %s12, 4
    %s22 = sphi 0, %s24
    %s25 = sphi 0, %s22
    %s26 = sphi 0, %s25
    %s42 = sphi 0, %s26
    %s46 = sphi 0, %s46
    %s48 = sphi 0, %s46
    %s49 = sphi 0, %s48
    %s63 = sphi 0, %s49
    %s67 = sphi 0, %s67
    %s69 = sphi 0, %s67
    %s70 = sphi 0, %s69
    %s84 = sphi 0, %s70
    %s88 = sphi 0, %s88
    %s90 = sphi 0, %s88
    %s91 = sphi 0, %s90
    %s105 = sphi 0, %s91
    %s111 = sphi 0, %s113
    %s114 = sphi 0, %s111
    %s115 = sphi 0, %s114
    %s131 = sphi 0, %s115
    %s137 = sphi 0, %s139
    %s140 = sphi 0, %s137
    %s141 = sphi 0, %s140
    %s157 = sphi 0, %s141
  $region4: #{basic_block_forward.4} parent=0 // loop_header_branch
    %15 = sbr.rel (%p13) target = $region8
  $region5: #{basic_block_forward.4} parent=0 // loop_body
    %s17 = ssub.s32 %s12, 1
    %s18 = ssub.s32 %s12, 2
    %s19 = sadd.s32 %s12, 1
    %s20 = ssub.s32 %s12, %s19
    %p21 = scmp.eq.s32.totalorder %s20, 0
    %s23 = sadd.s32 %s22, 1
    %s24 = scalar_select %p21, %s22, %s23
    %p27 = pneg %p21
    %p28 = scmp.eq.s32.totalorder %s12, 1
    %p29 = por %p27, %p28
    %p30 = scmp.ne.s32.totalorder %s22, %s25
    %p31 = scmp.eq.s32.totalorder %s12, 0
    %p32 = por %p30, %p31
    %p33 = scmp.ne.s32.totalorder %s22, %s25
    %p34 = scmp.eq.s32.totalorder %s17, 1
    %p35 = por %p33, %p34
    %p36 = scmp.ne.s32.totalorder %s25, %s26
    %p37 = scmp.eq.s32.totalorder %s17, 0
    %p38 = por %p36, %p37
    %p39 = scmp.ne.s32.totalorder %s25, %s26
    %p40 = scmp.eq.s32.totalorder %s18, 1
    %p41 = por %p39, %p40
    %p43 = scmp.ne.s32.totalorder %s26, %s42
    %p44 = scmp.eq.s32.totalorder %s18, 0
    %p45 = por %p43, %p44
    %s47 = sadd.s32 %s46, 1
    %p50 = scmp.eq.s32.totalorder %s12, 1
    %p51 = scmp.ne.s32.totalorder %s46, %s48
    %p52 = scmp.eq.s32.totalorder %s12, 0
    %p53 = por %p51, %p52
    %p54 = scmp.ne.s32.totalorder %s46, %s48
    %p55 = scmp.eq.s32.totalorder %s17, 1
    %p56 = por %p54, %p55
    %p57 = scmp.ne.s32.totalorder %s48, %s49
    %p58 = scmp.eq.s32.totalorder %s17, 0
    %p59 = por %p57, %p58
    %p60 = scmp.ne.s32.totalorder %s48, %s49
    %p61 = scmp.eq.s32.totalorder %s18, 1
    %p62 = por %p60, %p61
    %p64 = scmp.ne.s32.totalorder %s49, %s63
    %p65 = scmp.eq.s32.totalorder %s18, 0
    %p66 = por %p64, %p65
    %s68 = sadd.s32 %s67, 1
    %p71 = scmp.eq.s32.totalorder %s12, 1
    %p72 = scmp.ne.s32.totalorder %s67, %s69
    %p73 = scmp.eq.s32.totalorder %s12, 0
    %p74 = por %p72, %p73
    %p75 = scmp.ne.s32.totalorder %s67, %s69
    %p76 = scmp.eq.s32.totalorder %s17, 1
    %p77 = por %p75, %p76
    %p78 = scmp.ne.s32.totalorder %s69, %s70
    %p79 = scmp.eq.s32.totalorder %s17, 0
    %p80 = por %p78, %p79
    %p81 = scmp.ne.s32.totalorder %s69, %s70
    %p82 = scmp.eq.s32.totalorder %s18, 1
    %p83 = por %p81, %p82
    %p85 = scmp.ne.s32.totalorder %s70, %s84
    %p86 = scmp.eq.s32.totalorder %s18, 0
    %p87 = por %p85, %p86
    %s89 = sadd.s32 %s88, 1
    %p92 = scmp.eq.s32.totalorder %s12, 1
    %p93 = scmp.ne.s32.totalorder %s88, %s90
    %p94 = scmp.eq.s32.totalorder %s12, 0
    %p95 = por %p93, %p94
    %p96 = scmp.ne.s32.totalorder %s88, %s90
    %p97 = scmp.eq.s32.totalorder %s17, 1
    %p98 = por %p96, %p97
    %p99 = scmp.ne.s32.totalorder %s90, %s91
    %p100 = scmp.eq.s32.totalorder %s17, 0
    %p101 = por %p99, %p100
    %p102 = scmp.ne.s32.totalorder %s90, %s91
    %p103 = scmp.eq.s32.totalorder %s18, 1
    %p104 = por %p102, %p103
    %p106 = scmp.ne.s32.totalorder %s91, %s105
    %p107 = scmp.eq.s32.totalorder %s18, 0
    %p108 = por %p106, %p107
    %s109 = ssub.s32 %s12, %s19
    %p110 = scmp.eq.s32.totalorder %s109, 0
    %s112 = sadd.s32 %s111, 1
    %s113 = scalar_select %p110, %s111, %s112
    %p116 = pneg %p110
    %p117 = scmp.eq.s32.totalorder %s12, 1
    %p118 = por %p116, %p117
    %p119 = scmp.ne.s32.totalorder %s111, %s114
    %p120 = scmp.eq.s32.totalorder %s12, 0
    %p121 = por %p119, %p120
    %p122 = scmp.ne.s32.totalorder %s111, %s114
    %p123 = scmp.eq.s32.totalorder %s17, 1
    %p124 = por %p122, %p123
    %p125 = scmp.ne.s32.totalorder %s114, %s115
    %p126 = scmp.eq.s32.totalorder %s17, 0
    %p127 = por %p125, %p126
    %p128 = scmp.ne.s32.totalorder %s114, %s115
    %p129 = scmp.eq.s32.totalorder %s18, 1
    %p130 = por %p128, %p129
    %p132 = scmp.ne.s32.totalorder %s115, %s131
    %p133 = scmp.eq.s32.totalorder %s18, 0
    %p134 = por %p132, %p133
    %s135 = ssub.s32 %s12, %s19
    %p136 = scmp.eq.s32.totalorder %s135, 0
    %s138 = sadd.s32 %s137, 1
    %s139 = scalar_select %p136, %s137, %s138
    %p142 = pneg %p136
    %p143 = scmp.eq.s32.totalorder %s12, 1
    %p144 = por %p142, %p143
    %p145 = scmp.ne.s32.totalorder %s137, %s140
    %p146 = scmp.eq.s32.totalorder %s12, 0
    %p147 = por %p145, %p146
    %p148 = scmp.ne.s32.totalorder %s137, %s140
    %p149 = scmp.eq.s32.totalorder %s17, 1
    %p150 = por %p148, %p149
    %p151 = scmp.ne.s32.totalorder %s140, %s141
    %p152 = scmp.eq.s32.totalorder %s17, 0
    %p153 = por %p151, %p152
    %p154 = scmp.ne.s32.totalorder %s140, %s141
    %p155 = scmp.eq.s32.totalorder %s18, 1
    %p156 = por %p154, %p155
    %p158 = scmp.ne.s32.totalorder %s141, %s157
    %p159 = scmp.eq.s32.totalorder %s18, 0
    %p160 = por %p158, %p159
    %p161 = scmp.le.s32.totalorder 1, %s12
    %p162 = scmp.lt.s32.totalorder %s12, 3
    %p163 = pnand %p161, %p162
    %p164 = pneg %p163
    // Predicated region
    $region9: #{basic_block_forward.4} parent=5 // pred_check
      _
    $region10: #{basic_block_forward.4} parent=5 // pred_check_branch
      %166 = sbr.rel (%p163) target = $region12
    $region11: #{basic_block_forward.4} parent=5 // pred_region
      %s167 = ssub.s32 %s12, 1
      // Predicated region
      $region13: #{basic_block_forward.4} parent=11 // pred_check
        %p168 = pneg %p59
      $region14: #{basic_block_forward.4} parent=11 // pred_check_branch
        %170 = sbr.rel (%p168) target = $region16
      $region15: #{basic_block_forward.4} parent=11 // pred_region
        _
      $region16: #{basic_block_forward.4} parent=11 // pred_fallthru
        _
      // Predicated region
      $region17: #{basic_block_forward.4} parent=11 // pred_check
        %p171 = pneg %p80
      $region18: #{basic_block_forward.4} parent=11 // pred_check_branch
        %173 = sbr.rel (%p171) target = $region20
      $region19: #{basic_block_forward.4} parent=11 // pred_region
        _
      $region20: #{basic_block_forward.4} parent=11 // pred_fallthru
        _
      // Predicated region
      $region21: #{basic_block_forward.4} parent=11 // pred_check
        %p174 = pneg %p101
      $region22: #{basic_block_forward.4} parent=11 // pred_check_branch
        %176 = sbr.rel (%p174) target = $region24
      $region23: #{basic_block_forward.4} parent=11 // pred_region
        _
      $region24: #{basic_block_forward.4} parent=11 // pred_fallthru
        _
    $region12: #{basic_block_forward.4} parent=5 // pred_fallthru
      _
    %p177 = scmp.lt.s32.totalorder %s12, 2
    // Predicated region
    $region25: #{basic_block_forward.4} parent=5 // pred_check
      %p178 = pneg %p177
    $region26: #{basic_block_forward.4} parent=5 // pred_check_branch
      %180 = sbr.rel (%p178) target = $region28
    $region27: #{basic_block_forward.4} parent=5 // pred_region
      // Predicated region
      $region29: #{basic_block_forward.4} parent=27 // pred_check
        %p181 = pneg %p32
      $region30: #{basic_block_forward.4} parent=27 // pred_check_branch
        %183 = sbr.rel (%p181) target = $region32
      $region31: #{basic_block_forward.4} parent=27 // pred_region
        %p184 = scmp.lt.s32.totalorder %s12, 1
        %s185 = scalar_select %p184, %s12, 1
        %s186 = smul.addr %s185, 32
        %s187 = smul.addr %s186, 8
        %s188 = scalar_lea.vmem %s0, %s187
      $region32: #{basic_block_forward.4} parent=27 // pred_fallthru
        _
    $region28: #{basic_block_forward.4} parent=5 // pred_fallthru
      _
    %p189 = scmp.le.s32.totalorder 1, %s12
    %p190 = scmp.lt.s32.totalorder %s12, 3
    %p191 = pnand %p189, %p190
    %p192 = pneg %p191
    // Predicated region
    $region33: #{basic_block_forward.4} parent=5 // pred_check
      _
    $region34: #{basic_block_forward.4} parent=5 // pred_check_branch
      %194 = sbr.rel (%p191) target = $region36
    $region35: #{basic_block_forward.4} parent=5 // pred_region
      %s195 = ssub.s32 %s12, 1
      %p196 = scmp.lt.s32.totalorder %s17, 1
      %s197 = scalar_select %p196, %s17, 1
      %s198 = smul.addr %s197, 32
      %s199 = smul.addr %s198, 8
      %s200 = scalar_lea.vmem %s0, %s199
      %p201 = pneg %p38
      %p202 = pneg %p35
      %p203 = pneg %p59
      %p204 = pneg %p56
      %p205 = pneg %p80
      %p206 = pneg %p77
      %p207 = pneg %p101
      %p208 = pneg %p98
      %p209 = pneg %p127
      %p210 = pneg %p124
      %p211 = scmp.lt.s32.totalorder %s17, 1
      %s212 = scalar_select %p211, %s17, 1
      %s213 = smul.addr %s212, 32
      %s214 = smul.addr %s213, 8
      %s215 = scalar_lea.vmem %s4, %s214
      %p216 = pneg %p153
      %p217 = pneg %p150
      %p218 = scmp.lt.s32.totalorder %s17, 1
      %s219 = scalar_select %p218, %s17, 1
      %s220 = smul.addr %s219, 2
      %s221 = scalar_lea.vmem %s5, %s220
      %p222 = scmp.lt.s32.totalorder %s17, 1
      %s223 = scalar_select %p222, %s17, 1
      %s224 = smul.addr %s223, 32
      %s225 = smul.addr %s224, 8
      %s226 = scalar_lea.vmem %s0, %s225
      %p227 = scmp.lt.s32.totalorder %s17, 1
      %s228 = scalar_select %p227, %s17, 1
      %s229 = smul.addr %s228, 32
      %s230 = smul.addr %s229, 8
      %s231 = scalar_lea.vmem %s4, %s230
      %p232 = scmp.lt.s32.totalorder %s17, 1
      %s233 = scalar_select %p232, %s17, 1
      %s234 = smul.addr %s233, 2
      %s235 = scalar_lea.vmem %s5, %s234
      %v236 = vld [vmem:[%s226] sm:$0xff]
      %v237 = vld [vmem:[%s226 + $0x8] sm:$0xff]
      %v238 = vld [vmem:[%s226 + $0x10] sm:$0xff]
      %v239 = vld [vmem:[%s226 + $0x18] sm:$0xff]
      %v240 = vld [vmem:[%s226 + $0x20] sm:$0xff]
      %v241 = vld [vmem:[%s226 + $0x28] sm:$0xff]
      %v242 = vld [vmem:[%s226 + $0x30] sm:$0xff]
      %v243 = vld [vmem:[%s226 + $0x38] sm:$0xff]
      %v244 = vld [vmem:[%s226 + $0x40] sm:$0xff]
      %v245 = vld [vmem:[%s226 + $0x48] sm:$0xff]
      %v246 = vld [vmem:[%s226 + $0x50] sm:$0xff]
      %v247 = vld [vmem:[%s226 + $0x58] sm:$0xff]
      %v248 = vld [vmem:[%s226 + $0x60] sm:$0xff]
      %v249 = vld [vmem:[%s226 + $0x68] sm:$0xff]
      %v250 = vld [vmem:[%s226 + $0x70] sm:$0xff]
      %v251 = vld [vmem:[%s226 + $0x78] sm:$0xff]
      %v252 = vld [vmem:[%s226 + $0x80] sm:$0xff]
      %v253 = vld [vmem:[%s226 + $0x88] sm:$0xff]
      %v254 = vld [vmem:[%s226 + $0x90] sm:$0xff]
      %v255 = vld [vmem:[%s226 + $0x98] sm:$0xff]
      %v256 = vld [vmem:[%s226 + $0xa0] sm:$0xff]
      %v257 = vld [vmem:[%s226 + $0xa8] sm:$0xff]
      %v258 = vld [vmem:[%s226 + $0xb0] sm:$0xff]
      %v259 = vld [vmem:[%s226 + $0xb8] sm:$0xff]
      %v260 = vld [vmem:[%s226 + $0xc0] sm:$0xff]
      %v261 = vld [vmem:[%s226 + $0xc8] sm:$0xff]
      %v262 = vld [vmem:[%s226 + $0xd0] sm:$0xff]
      %v263 = vld [vmem:[%s226 + $0xd8] sm:$0xff]
      %v264 = vld [vmem:[%s226 + $0xe0] sm:$0xff]
      %v265 = vld [vmem:[%s226 + $0xe8] sm:$0xff]
      %v266 = vld [vmem:[%s226 + $0xf0] sm:$0xff]
      %v267 = vld [vmem:[%s226 + $0xf8] sm:$0xff]
      %v268 = vld [vmem:[%s1] sm:$0x1]
      %v269 = vld [vmem:[%s2] sm:$0x1]
      %v271 = vperm.slane %v268, 0
      %v273 = vmul.f32 %v236, %v271
      %v274 = vmul.f32 %v237, %v271
      %v275 = vmul.f32 %v238, %v271
      %v276 = vmul.f32 %v239, %v271
      %v277 = vmul.f32 %v240, %v271
      %v278 = vmul.f32 %v241, %v271
      %v279 = vmul.f32 %v242, %v271
      %v280 = vmul.f32 %v243, %v271
      %v281 = vmul.f32 %v244, %v271
      %v282 = vmul.f32 %v245, %v271
      %v283 = vmul.f32 %v246, %v271
      %v284 = vmul.f32 %v247, %v271
      %v285 = vmul.f32 %v248, %v271
      %v286 = vmul.f32 %v249, %v271
      %v287 = vmul.f32 %v250, %v271
      %v288 = vmul.f32 %v251, %v271
      %v289 = vmul.f32 %v252, %v271
      %v290 = vmul.f32 %v253, %v271
      %v291 = vmul.f32 %v254, %v271
      %v292 = vmul.f32 %v255, %v271
      %v293 = vmul.f32 %v256, %v271
      %v294 = vmul.f32 %v257, %v271
      %v295 = vmul.f32 %v258, %v271
      %v296 = vmul.f32 %v259, %v271
      %v297 = vmul.f32 %v260, %v271
      %v298 = vmul.f32 %v261, %v271
      %v299 = vmul.f32 %v262, %v271
      %v300 = vmul.f32 %v263, %v271
      %v301 = vmul.f32 %v264, %v271
      %v302 = vmul.f32 %v265, %v271
      %v303 = vmul.f32 %v266, %v271
      %v304 = vmul.f32 %v267, %v271
      %v306 = vperm.slane %v269, 0
      %v308 = vadd.f32 %v273, %v306
      %v309 = vadd.f32 %v274, %v306
      %v310 = vadd.f32 %v275, %v306
      %v311 = vadd.f32 %v276, %v306
      %v312 = vadd.f32 %v277, %v306
      %v313 = vadd.f32 %v278, %v306
      %v314 = vadd.f32 %v279, %v306
      %v315 = vadd.f32 %v280, %v306
      %v316 = vadd.f32 %v281, %v306
      %v317 = vadd.f32 %v282, %v306
      %v318 = vadd.f32 %v283, %v306
      %v319 = vadd.f32 %v284, %v306
      %v320 = vadd.f32 %v285, %v306
      %v321 = vadd.f32 %v286, %v306
      %v322 = vadd.f32 %v287, %v306
      %v323 = vadd.f32 %v288, %v306
      %v324 = vadd.f32 %v289, %v306
      %v325 = vadd.f32 %v290, %v306
      %v326 = vadd.f32 %v291, %v306
      %v327 = vadd.f32 %v292, %v306
      %v328 = vadd.f32 %v293, %v306
      %v329 = vadd.f32 %v294, %v306
      %v330 = vadd.f32 %v295, %v306
      %v331 = vadd.f32 %v296, %v306
      %v332 = vadd.f32 %v297, %v306
      %v333 = vadd.f32 %v298, %v306
      %v334 = vadd.f32 %v299, %v306
      %v335 = vadd.f32 %v300, %v306
      %v336 = vadd.f32 %v301, %v306
      %v337 = vadd.f32 %v302, %v306
      %v338 = vadd.f32 %v303, %v306
      %v339 = vadd.f32 %v304, %v306
      %v340 = vmax.f32 %v308, 0.0
      %v341 = vmax.f32 %v309, 0.0
      %v342 = vmax.f32 %v310, 0.0
      %v343 = vmax.f32 %v311, 0.0
      %v344 = vmax.f32 %v312, 0.0
      %v345 = vmax.f32 %v313, 0.0
      %v346 = vmax.f32 %v314, 0.0
      %v347 = vmax.f32 %v315, 0.0
      %v348 = vmax.f32 %v316, 0.0
      %v349 = vmax.f32 %v317, 0.0
      %v350 = vmax.f32 %v318, 0.0
      %v351 = vmax.f32 %v319, 0.0
      %v352 = vmax.f32 %v320, 0.0
      %v353 = vmax.f32 %v321, 0.0
      %v354 = vmax.f32 %v322, 0.0
      %v355 = vmax.f32 %v323, 0.0
      %v356 = vmax.f32 %v324, 0.0
      %v357 = vmax.f32 %v325, 0.0
      %v358 = vmax.f32 %v326, 0.0
      %v359 = vmax.f32 %v327, 0.0
      %v360 = vmax.f32 %v328, 0.0
      %v361 = vmax.f32 %v329, 0.0
      %v362 = vmax.f32 %v330, 0.0
      %v363 = vmax.f32 %v331, 0.0
      %v364 = vmax.f32 %v332, 0.0
      %v365 = vmax.f32 %v333, 0.0
      %v366 = vmax.f32 %v334, 0.0
      %v367 = vmax.f32 %v335, 0.0
      %v368 = vmax.f32 %v336, 0.0
      %v369 = vmax.f32 %v337, 0.0
      %v370 = vmax.f32 %v338, 0.0
      %v371 = vmax.f32 %v339, 0.0
      %372 = vst [vmem:[#allocation2] sm:$0xff] 0.0
      %373 = vst [vmem:[#allocation2 + $0x8] sm:$0xff] 0.0
      %374 = vst [vmem:[#allocation2 + $0x10] sm:$0x3] 0.0
      %375 = vst [vmem:[#allocation2 + $0x18] sm:$0xff] 0.0
      %376 = vst [vmem:[#allocation2 + $0x20] sm:$0xff] 0.0
      %377 = vst [vmem:[#allocation2 + $0x28] sm:$0x3] 0.0
      %378 = vst [vmem:[#allocation2 + $0x30] sm:$0xff] 0.0
      %379 = vst [vmem:[#allocation2 + $0x38] sm:$0xff] 0.0
      %380 = vst [vmem:[#allocation2 + $0x40] sm:$0x3] 0.0
      %381 = vst [vmem:[#allocation2 + $0x48] sm:$0xff] 0.0
      %382 = vst [vmem:[#allocation2 + $0x50] sm:$0xff] 0.0
      %383 = vst [vmem:[#allocation2 + $0x58] sm:$0x3] 0.0
      %384 = vst [vmem:[#allocation2 + $0x60] sm:$0xff] 0.0
      %385 = vst [vmem:[#allocation2 + $0x68] sm:$0xff] 0.0
      %386 = vst [vmem:[#allocation2 + $0x70] sm:$0x3] 0.0
      %387 = vst [vmem:[#allocation2 + $0x78] sm:$0xff] 0.0
      %388 = vst [vmem:[#allocation2 + $0x80] sm:$0xff] 0.0
      %389 = vst [vmem:[#allocation2 + $0x88] sm:$0x3] 0.0
      %390 = vst [vmem:[#allocation2 + $0x90] sm:$0xff] 0.0
      %391 = vst [vmem:[#allocation2 + $0x98] sm:$0xff] 0.0
      %392 = vst [vmem:[#allocation2 + $0xa0] sm:$0x3] 0.0
      %393 = vst [vmem:[#allocation2 + $0xa8] sm:$0xff] 0.0
      %394 = vst [vmem:[#allocation2 + $0xb0] sm:$0xff] 0.0
      %395 = vst [vmem:[#allocation2 + $0xb8] sm:$0x3] 0.0
      %396 = vst [vmem:[#allocation2 + $0xc0] sm:$0xff] 0.0
      %397 = vst [vmem:[#allocation2 + $0xc8] sm:$0xff] 0.0
      %398 = vst [vmem:[#allocation2 + $0xd0] sm:$0x3] 0.0
      %399 = vst [vmem:[#allocation2 + $0xd8] sm:$0xff] 0.0
      %400 = vst [vmem:[#allocation2 + $0xe0] sm:$0xff] 0.0
      %401 = vst [vmem:[#allocation2 + $0xe8] sm:$0x3] 0.0
      %402 = vst [vmem:[#allocation2 + $0xf0] sm:$0xff] 0.0
      %403 = vst [vmem:[#allocation2 + $0xf8] sm:$0xff] 0.0
      %404 = vst [vmem:[#allocation2 + $0x100] sm:$0x3] 0.0
      %405 = vst [vmem:[#allocation2 + $0x108] sm:$0xff] 0.0
      %406 = vst [vmem:[#allocation2 + $0x110] sm:$0xff] 0.0
      %407 = vst [vmem:[#allocation2 + $0x118] sm:$0x3] 0.0
      %408 = vst [vmem:[#allocation2 + $0x120] sm:$0xff] 0.0
      %409 = vst [vmem:[#allocation2 + $0x128] sm:$0xff] 0.0
      %410 = vst [vmem:[#allocation2 + $0x130] sm:$0x3] 0.0
      %411 = vst [vmem:[#allocation2 + $0x138] sm:$0xff] 0.0
      %412 = vst [vmem:[#allocation2 + $0x140] sm:$0xff] 0.0
      %413 = vst [vmem:[#allocation2 + $0x148] sm:$0x3] 0.0
      %414 = vst [vmem:[#allocation2 + $0x150] sm:$0xff] 0.0
      %415 = vst [vmem:[#allocation2 + $0x158] sm:$0xff] 0.0
      %416 = vst [vmem:[#allocation2 + $0x160] sm:$0x3] 0.0
      %417 = vst [vmem:[#allocation2 + $0x168] sm:$0xff] 0.0
      %418 = vst [vmem:[#allocation2 + $0x170] sm:$0xff] 0.0
      %419 = vst [vmem:[#allocation2 + $0x178] sm:$0x3] 0.0
      %420 = vst [vmem:[#allocation2 + $0x180] sm:$0xff] 0.0
      %421 = vst [vmem:[#allocation2 + $0x188] sm:$0xff] 0.0
      %422 = vst [vmem:[#allocation2 + $0x190] sm:$0x3] 0.0
      %423 = vst [vmem:[#allocation2 + $0x198] sm:$0xff] 0.0
      %424 = vst [vmem:[#allocation2 + $0x1a0] sm:$0xff] 0.0
      %425 = vst [vmem:[#allocation2 + $0x1a8] sm:$0x3] 0.0
      %s426 = scalar_lea.vmem [#allocation2], 24
      %427 = vst [vmem:[%s426 + $0x1] sm:$0xff] %v340
      %428 = vst [vmem:[%s426 + $0x9] sm:$0xff] %v341
      %429 = vst [vmem:[%s426 + $0x19] sm:$0xff] %v342
      %430 = vst [vmem:[%s426 + $0x21] sm:$0xff] %v343
      %431 = vst [vmem:[%s426 + $0x31] sm:$0xff] %v344
      %432 = vst [vmem:[%s426 + $0x39] sm:$0xff] %v345
      %433 = vst [vmem:[%s426 + $0x49] sm:$0xff] %v346
      %434 = vst [vmem:[%s426 + $0x51] sm:$0xff] %v347
      %435 = vst [vmem:[%s426 + $0x61] sm:$0xff] %v348
      %436 = vst [vmem:[%s426 + $0x69] sm:$0xff] %v349
      %437 = vst [vmem:[%s426 + $0x79] sm:$0xff] %v350
      %438 = vst [vmem:[%s426 + $0x81] sm:$0xff] %v351
      %439 = vst [vmem:[%s426 + $0x91] sm:$0xff] %v352
      %440 = vst [vmem:[%s426 + $0x99] sm:$0xff] %v353
      %441 = vst [vmem:[%s426 + $0xa9] sm:$0xff] %v354
      %442 = vst [vmem:[%s426 + $0xb1] sm:$0xff] %v355
      %443 = vst [vmem:[%s426 + $0xc1] sm:$0xff] %v356
      %444 = vst [vmem:[%s426 + $0xc9] sm:$0xff] %v357
      %445 = vst [vmem:[%s426 + $0xd9] sm:$0xff] %v358
      %446 = vst [vmem:[%s426 + $0xe1] sm:$0xff] %v359
      %447 = vst [vmem:[%s426 + $0xf1] sm:$0xff] %v360
      %448 = vst [vmem:[%s426 + $0xf9] sm:$0xff] %v361
      %449 = vst [vmem:[%s426 + $0x109] sm:$0xff] %v362
      %450 = vst [vmem:[%s426 + $0x111] sm:$0xff] %v363
      %451 = vst [vmem:[%s426 + $0x121] sm:$0xff] %v364
      %452 = vst [vmem:[%s426 + $0x129] sm:$0xff] %v365
      %453 = vst [vmem:[%s426 + $0x139] sm:$0xff] %v366
      %454 = vst [vmem:[%s426 + $0x141] sm:$0xff] %v367
      %455 = vst [vmem:[%s426 + $0x151] sm:$0xff] %v368
      %456 = vst [vmem:[%s426 + $0x159] sm:$0xff] %v369
      %457 = vst [vmem:[%s426 + $0x169] sm:$0xff] %v370
      %458 = vst [vmem:[%s426 + $0x171] sm:$0xff] %v371
      %v459 = vld [vmem:[#allocation2] sm:$0xff]
      %v460 = vld [vmem:[#allocation2 + $0x8] sm:$0xff]
      %v461 = vld [vmem:[#allocation2 + $0x18] sm:$0xff]
      %v462 = vld [vmem:[#allocation2 + $0x20] sm:$0xff]
      %v463 = vld [vmem:[#allocation2 + $0x30] sm:$0xff]
      %v464 = vld [vmem:[#allocation2 + $0x38] sm:$0xff]
      %v465 = vld [vmem:[#allocation2 + $0x48] sm:$0xff]
      %v466 = vld [vmem:[#allocation2 + $0x50] sm:$0xff]
      %v467 = vld [vmem:[#allocation2 + $0x60] sm:$0xff]
      %v468 = vld [vmem:[#allocation2 + $0x68] sm:$0xff]
      %v469 = vld [vmem:[#allocation2 + $0x78] sm:$0xff]
      %v470 = vld [vmem:[#allocation2 + $0x80] sm:$0xff]
      %v471 = vld [vmem:[#allocation2 + $0x90] sm:$0xff]
      %v472 = vld [vmem:[#allocation2 + $0x98] sm:$0xff]
      %v473 = vld [vmem:[#allocation2 + $0xa8] sm:$0xff]
      %v474 = vld [vmem:[#allocation2 + $0xb0] sm:$0xff]
      %v475 = vld [vmem:[#allocation2 + $0xc0] sm:$0xff]
      %v476 = vld [vmem:[#allocation2 + $0xc8] sm:$0xff]
      %v477 = vld [vmem:[#allocation2 + $0xd8] sm:$0xff]
      %v478 = vld [vmem:[#allocation2 + $0xe0] sm:$0xff]
      %v479 = vld [vmem:[#allocation2 + $0xf0] sm:$0xff]
      %v480 = vld [vmem:[#allocation2 + $0xf8] sm:$0xff]
      %v481 = vld [vmem:[#allocation2 + $0x108] sm:$0xff]
      %v482 = vld [vmem:[#allocation2 + $0x110] sm:$0xff]
      %v483 = vld [vmem:[#allocation2 + $0x120] sm:$0xff]
      %v484 = vld [vmem:[#allocation2 + $0x128] sm:$0xff]
      %v485 = vld [vmem:[#allocation2 + $0x138] sm:$0xff]
      %v486 = vld [vmem:[#allocation2 + $0x140] sm:$0xff]
      %v487 = vld [vmem:[#allocation2 + $0x150] sm:$0xff]
      %v488 = vld [vmem:[#allocation2 + $0x158] sm:$0xff]
      %v489 = vld [vmem:[#allocation2 + $0x168] sm:$0xff]
      %v490 = vld [vmem:[#allocation2 + $0x170] sm:$0xff]
      %491 = vst [vmem:[#allocation3] sm:$0xff] %v459
      %492 = vst [vmem:[#allocation3 + $0x48] sm:$0xff] %v460
      %493 = vst [vmem:[#allocation3 + $0x90] sm:$0xff] %v461
      %494 = vst [vmem:[#allocation3 + $0xd8] sm:$0xff] %v462
      %495 = vst [vmem:[#allocation3 + $0x120] sm:$0xff] %v463
      %496 = vst [vmem:[#allocation3 + $0x168] sm:$0xff] %v464
      %497 = vst [vmem:[#allocation3 + $0x1b0] sm:$0xff] %v465
      %498 = vst [vmem:[#allocation3 + $0x1f8] sm:$0xff] %v466
      %499 = vst [vmem:[#allocation3 + $0x240] sm:$0xff] %v467
      %500 = vst [vmem:[#allocation3 + $0x288] sm:$0xff] %v468
      %501 = vst [vmem:[#allocation3 + $0x2d0] sm:$0xff] %v469
      %502 = vst [vmem:[#allocation3 + $0x318] sm:$0xff] %v470
      %503 = vst [vmem:[#allocation3 + $0x360] sm:$0xff] %v471
      %504 = vst [vmem:[#allocation3 + $0x3a8] sm:$0xff] %v472
      %505 = vst [vmem:[#allocation3 + $0x3f0] sm:$0xff] %v473
      %506 = vst [vmem:[#allocation3 + $0x438] sm:$0xff] %v474
      %507 = vst [vmem:[#allocation3 + $0x480] sm:$0xff] %v475
      %508 = vst [vmem:[#allocation3 + $0x4c8] sm:$0xff] %v476
      %509 = vst [vmem:[#allocation3 + $0x510] sm:$0xff] %v477
      %510 = vst [vmem:[#allocation3 + $0x558] sm:$0xff] %v478
      %511 = vst [vmem:[#allocation3 + $0x5a0] sm:$0xff] %v479
      %512 = vst [vmem:[#allocation3 + $0x5e8] sm:$0xff] %v480
      %513 = vst [vmem:[#allocation3 + $0x630] sm:$0xff] %v481
      %514 = vst [vmem:[#allocation3 + $0x678] sm:$0xff] %v482
      %515 = vst [vmem:[#allocation3 + $0x6c0] sm:$0xff] %v483
      %516 = vst [vmem:[#allocation3 + $0x708] sm:$0xff] %v484
      %517 = vst [vmem:[#allocation3 + $0x750] sm:$0xff] %v485
      %518 = vst [vmem:[#allocation3 + $0x798] sm:$0xff] %v486
      %519 = vst [vmem:[#allocation3 + $0x7e0] sm:$0xff] %v487
      %520 = vst [vmem:[#allocation3 + $0x828] sm:$0xff] %v488
      %521 = vst [vmem:[#allocation3 + $0x870] sm:$0xff] %v489
      %522 = vst [vmem:[#allocation3 + $0x8b8] sm:$0xff] %v490
      %v523 = vld [vmem:[#allocation2 + $0x1] sm:$0xff]
      %v524 = vld [vmem:[#allocation2 + $0x9] sm:$0xff]
      %v525 = vld [vmem:[#allocation2 + $0x19] sm:$0xff]
      %v526 = vld [vmem:[#allocation2 + $0x21] sm:$0xff]
      %v527 = vld [vmem:[#allocation2 + $0x31] sm:$0xff]
      %v528 = vld [vmem:[#allocation2 + $0x39] sm:$0xff]
      %v529 = vld [vmem:[#allocation2 + $0x49] sm:$0xff]
      %v530 = vld [vmem:[#allocation2 + $0x51] sm:$0xff]
      %v531 = vld [vmem:[#allocation2 + $0x61] sm:$0xff]
      %v532 = vld [vmem:[#allocation2 + $0x69] sm:$0xff]
      %v533 = vld [vmem:[#allocation2 + $0x79] sm:$0xff]
      %v534 = vld [vmem:[#allocation2 + $0x81] sm:$0xff]
      %v535 = vld [vmem:[#allocation2 + $0x91] sm:$0xff]
      %v536 = vld [vmem:[#allocation2 + $0x99] sm:$0xff]
      %v537 = vld [vmem:[#allocation2 + $0xa9] sm:$0xff]
      %v538 = vld [vmem:[#allocation2 + $0xb1] sm:$0xff]
      %v539 = vld [vmem:[#allocation2 + $0xc1] sm:$0xff]
      %v540 = vld [vmem:[#allocation2 + $0xc9] sm:$0xff]
      %v541 = vld [vmem:[#allocation2 + $0xd9] sm:$0xff]
      %v542 = vld [vmem:[#allocation2 + $0xe1] sm:$0xff]
      %v543 = vld [vmem:[#allocation2 + $0xf1] sm:$0xff]
      %v544 = vld [vmem:[#allocation2 + $0xf9] sm:$0xff]
      %v545 = vld [vmem:[#allocation2 + $0x109] sm:$0xff]
      %v546 = vld [vmem:[#allocation2 + $0x111] sm:$0xff]
      %v547 = vld [vmem:[#allocation2 + $0x121] sm:$0xff]
      %v548 = vld [vmem:[#allocation2 + $0x129] sm:$0xff]
      %v549 = vld [vmem:[#allocation2 + $0x139] sm:$0xff]
      %v550 = vld [vmem:[#allocation2 + $0x141] sm:$0xff]
      %v551 = vld [vmem:[#allocation2 + $0x151] sm:$0xff]
      %v552 = vld [vmem:[#allocation2 + $0x159] sm:$0xff]
      %v553 = vld [vmem:[#allocation2 + $0x169] sm:$0xff]
      %v554 = vld [vmem:[#allocation2 + $0x171] sm:$0xff]
      %555 = vst [vmem:[#allocation3 + $0x8] sm:$0xff] %v523
      %556 = vst [vmem:[#allocation3 + $0x50] sm:$0xff] %v524
      %557 = vst [vmem:[#allocation3 + $0x98] sm:$0xff] %v525
      %558 = vst [vmem:[#allocation3 + $0xe0] sm:$0xff] %v526
      %559 = vst [vmem:[#allocation3 + $0x128] sm:$0xff] %v527
      %560 = vst [vmem:[#allocation3 + $0x170] sm:$0xff] %v528
      %561 = vst [vmem:[#allocation3 + $0x1b8] sm:$0xff] %v529
      %562 = vst [vmem:[#allocation3 + $0x200] sm:$0xff] %v530
      %563 = vst [vmem:[#allocation3 + $0x248] sm:$0xff] %v531
      %564 = vst [vmem:[#allocation3 + $0x290] sm:$0xff] %v532
      %565 = vst [vmem:[#allocation3 + $0x2d8] sm:$0xff] %v533
      %566 = vst [vmem:[#allocation3 + $0x320] sm:$0xff] %v534
      %567 = vst [vmem:[#allocation3 + $0x368] sm:$0xff] %v535
      %568 = vst [vmem:[#allocation3 + $0x3b0] sm:$0xff] %v536
      %569 = vst [vmem:[#allocation3 + $0x3f8] sm:$0xff] %v537
      %570 = vst [vmem:[#allocation3 + $0x440] sm:$0xff] %v538
      %571 = vst [vmem:[#allocation3 + $0x488] sm:$0xff] %v539
      %572 = vst [vmem:[#allocation3 + $0x4d0] sm:$0xff] %v540
      %573 = vst [vmem:[#allocation3 + $0x518] sm:$0xff] %v541
      %574 = vst [vmem:[#allocation3 + $0x560] sm:$0xff] %v542
      %575 = vst [vmem:[#allocation3 + $0x5a8] sm:$0xff] %v543
      %576 = vst [vmem:[#allocation3 + $0x5f0] sm:$0xff] %v544
      %577 = vst [vmem:[#allocation3 + $0x638] sm:$0xff] %v545
      %578 = vst [vmem:[#allocation3 + $0x680] sm:$0xff] %v546
      %579 = vst [vmem:[#allocation3 + $0x6c8] sm:$0xff] %v547
      %580 = vst [vmem:[#allocation3 + $0x710] sm:$0xff] %v548
      %581 = vst [vmem:[#allocation3 + $0x758] sm:$0xff] %v549
      %582 = vst [vmem:[#allocation3 + $0x7a0] sm:$0xff] %v550
      %583 = vst [vmem:[#allocation3 + $0x7e8] sm:$0xff] %v551
      %584 = vst [vmem:[#allocation3 + $0x830] sm:$0xff] %v552
      %585 = vst [vmem:[#allocation3 + $0x878] sm:$0xff] %v553
      %586 = vst [vmem:[#allocation3 + $0x8c0] sm:$0xff] %v554
      %v587 = vld [vmem:[#allocation2 + $0x2] sm:$0xff]
      %v588 = vld [vmem:[#allocation2 + $0xa] sm:$0xff]
      %v589 = vld [vmem:[#allocation2 + $0x1a] sm:$0xff]
      %v590 = vld [vmem:[#allocation2 + $0x22] sm:$0xff]
      %v591 = vld [vmem:[#allocation2 + $0x32] sm:$0xff]
      %v592 = vld [vmem:[#allocation2 + $0x3a] sm:$0xff]
      %v593 = vld [vmem:[#allocation2 + $0x4a] sm:$0xff]
      %v594 = vld [vmem:[#allocation2 + $0x52] sm:$0xff]
      %v595 = vld [vmem:[#allocation2 + $0x62] sm:$0xff]
      %v596 = vld [vmem:[#allocation2 + $0x6a] sm:$0xff]
      %v597 = vld [vmem:[#allocation2 + $0x7a] sm:$0xff]
      %v598 = vld [vmem:[#allocation2 + $0x82] sm:$0xff]
      %v599 = vld [vmem:[#allocation2 + $0x92] sm:$0xff]
      %v600 = vld [vmem:[#allocation2 + $0x9a] sm:$0xff]
      %v601 = vld [vmem:[#allocation2 + $0xaa] sm:$0xff]
      %v602 = vld [vmem:[#allocation2 + $0xb2] sm:$0xff]
      %v603 = vld [vmem:[#allocation2 + $0xc2] sm:$0xff]
      %v604 = vld [vmem:[#allocation2 + $0xca] sm:$0xff]
      %v605 = vld [vmem:[#allocation2 + $0xda] sm:$0xff]
      %v606 = vld [vmem:[#allocation2 + $0xe2] sm:$0xff]
      %v607 = vld [vmem:[#allocation2 + $0xf2] sm:$0xff]
      %v608 = vld [vmem:[#allocation2 + $0xfa] sm:$0xff]
      %v609 = vld [vmem:[#allocation2 + $0x10a] sm:$0xff]
      %v610 = vld [vmem:[#allocation2 + $0x112] sm:$0xff]
      %v611 = vld [vmem:[#allocation2 + $0x122] sm:$0xff]
      %v612 = vld [vmem:[#allocation2 + $0x12a] sm:$0xff]
      %v613 = vld [vmem:[#allocation2 + $0x13a] sm:$0xff]
      %v614 = vld [vmem:[#allocation2 + $0x142] sm:$0xff]
      %v615 = vld [vmem:[#allocation2 + $0x152] sm:$0xff]
      %v616 = vld [vmem:[#allocation2 + $0x15a] sm:$0xff]
      %v617 = vld [vmem:[#allocation2 + $0x16a] sm:$0xff]
      %v618 = vld [vmem:[#allocation2 + $0x172] sm:$0xff]
      %619 = vst [vmem:[#allocation3 + $0x10] sm:$0xff] %v587
      %620 = vst [vmem:[#allocation3 + $0x58] sm:$0xff] %v588
      %621 = vst [vmem:[#allocation3 + $0xa0] sm:$0xff] %v589
      %622 = vst [vmem:[#allocation3 + $0xe8] sm:$0xff] %v590
      %623 = vst [vmem:[#allocation3 + $0x130] sm:$0xff] %v591
      %624 = vst [vmem:[#allocation3 + $0x178] sm:$0xff] %v592
      %625 = vst [vmem:[#allocation3 + $0x1c0] sm:$0xff] %v593
      %626 = vst [vmem:[#allocation3 + $0x208] sm:$0xff] %v594
      %627 = vst [vmem:[#allocation3 + $0x250] sm:$0xff] %v595
      %628 = vst [vmem:[#allocation3 + $0x298] sm:$0xff] %v596
      %629 = vst [vmem:[#allocation3 + $0x2e0] sm:$0xff] %v597
      %630 = vst [vmem:[#allocation3 + $0x328] sm:$0xff] %v598
      %631 = vst [vmem:[#allocation3 + $0x370] sm:$0xff] %v599
      %632 = vst [vmem:[#allocation3 + $0x3b8] sm:$0xff] %v600
      %633 = vst [vmem:[#allocation3 + $0x400] sm:$0xff] %v601
      %634 = vst [vmem:[#allocation3 + $0x448] sm:$0xff] %v602
      %635 = vst [vmem:[#allocation3 + $0x490] sm:$0xff] %v603
      %636 = vst [vmem:[#allocation3 + $0x4d8] sm:$0xff] %v604
      %637 = vst [vmem:[#allocation3 + $0x520] sm:$0xff] %v605
      %638 = vst [vmem:[#allocation3 + $0x568] sm:$0xff] %v606
      %639 = vst [vmem:[#allocation3 + $0x5b0] sm:$0xff] %v607
      %640 = vst [vmem:[#allocation3 + $0x5f8] sm:$0xff] %v608
      %641 = vst [vmem:[#allocation3 + $0x640] sm:$0xff] %v609
      %642 = vst [vmem:[#allocation3 + $0x688] sm:$0xff] %v610
      %643 = vst [vmem:[#allocation3 + $0x6d0] sm:$0xff] %v611
      %644 = vst [vmem:[#allocation3 + $0x718] sm:$0xff] %v612
      %645 = vst [vmem:[#allocation3 + $0x760] sm:$0xff] %v613
      %646 = vst [vmem:[#allocation3 + $0x7a8] sm:$0xff] %v614
      %647 = vst [vmem:[#allocation3 + $0x7f0] sm:$0xff] %v615
      %648 = vst [vmem:[#allocation3 + $0x838] sm:$0xff] %v616
      %649 = vst [vmem:[#allocation3 + $0x880] sm:$0xff] %v617
      %650 = vst [vmem:[#allocation3 + $0x8c8] sm:$0xff] %v618
      %v651 = vld [vmem:[%s426] sm:$0xff]
      %v652 = vld [vmem:[%s426 + $0x8] sm:$0xff]
      %v653 = vld [vmem:[%s426 + $0x18] sm:$0xff]
      %v654 = vld [vmem:[%s426 + $0x20] sm:$0xff]
      %v655 = vld [vmem:[%s426 + $0x30] sm:$0xff]
      %v656 = vld [vmem:[%s426 + $0x38] sm:$0xff]
      %v657 = vld [vmem:[%s426 + $0x48] sm:$0xff]
      %v658 = vld [vmem:[%s426 + $0x50] sm:$0xff]
      %v659 = vld [vmem:[%s426 + $0x60] sm:$0xff]
      %v660 = vld [vmem:[%s426 + $0x68] sm:$0xff]
      %v661 = vld [vmem:[%s426 + $0x78] sm:$0xff]
      %v662 = vld [vmem:[%s426 + $0x80] sm:$0xff]
      %v663 = vld [vmem:[%s426 + $0x90] sm:$0xff]
      %v664 = vld [vmem:[%s426 + $0x98] sm:$0xff]
      %v665 = vld [vmem:[%s426 + $0xa8] sm:$0xff]
      %v666 = vld [vmem:[%s426 + $0xb0] sm:$0xff]
      %v667 = vld [vmem:[%s426 + $0xc0] sm:$0xff]
      %v668 = vld [vmem:[%s426 + $0xc8] sm:$0xff]
      %v669 = vld [vmem:[%s426 + $0xd8] sm:$0xff]
      %v670 = vld [vmem:[%s426 + $0xe0] sm:$0xff]
      %v671 = vld [vmem:[%s426 + $0xf0] sm:$0xff]
      %v672 = vld [vmem:[%s426 + $0xf8] sm:$0xff]
      %v673 = vld [vmem:[%s426 + $0x108] sm:$0xff]
      %v674 = vld [vmem:[%s426 + $0x110] sm:$0xff]
      %v675 = vld [vmem:[%s426 + $0x120] sm:$0xff]
      %v676 = vld [vmem:[%s426 + $0x128] sm:$0xff]
      %v677 = vld [vmem:[%s426 + $0x138] sm:$0xff]
      %v678 = vld [vmem:[%s426 + $0x140] sm:$0xff]
      %v679 = vld [vmem:[%s426 + $0x150] sm:$0xff]
      %v680 = vld [vmem:[%s426 + $0x158] sm:$0xff]
      %v681 = vld [vmem:[%s426 + $0x168] sm:$0xff]
      %v682 = vld [vmem:[%s426 + $0x170] sm:$0xff]
      %683 = vst [vmem:[#allocation3 + $0x18] sm:$0xff] %v651
      %684 = vst [vmem:[#allocation3 + $0x60] sm:$0xff] %v652
      %685 = vst [vmem:[#allocation3 + $0xa8] sm:$0xff] %v653
      %686 = vst [vmem:[#allocation3 + $0xf0] sm:$0xff] %v654
      %687 = vst [vmem:[#allocation3 + $0x138] sm:$0xff] %v655
      %688 = vst [vmem:[#allocation3 + $0x180] sm:$0xff] %v656
      %689 = vst [vmem:[#allocation3 + $0x1c8] sm:$0xff] %v657
      %690 = vst [vmem:[#allocation3 + $0x210] sm:$0xff] %v658
      %691 = vst [vmem:[#allocation3 + $0x258] sm:$0xff] %v659
      %692 = vst [vmem:[#allocation3 + $0x2a0] sm:$0xff] %v660
      %693 = vst [vmem:[#allocation3 + $0x2e8] sm:$0xff] %v661
      %694 = vst [vmem:[#allocation3 + $0x330] sm:$0xff] %v662
      %695 = vst [vmem:[#allocation3 + $0x378] sm:$0xff] %v663
      %696 = vst [vmem:[#allocation3 + $0x3c0] sm:$0xff] %v664
      %697 = vst [vmem:[#allocation3 + $0x408] sm:$0xff] %v665
      %698 = vst [vmem:[#allocation3 + $0x450] sm:$0xff] %v666
      %699 = vst [vmem:[#allocation3 + $0x498] sm:$0xff] %v667
      %700 = vst [vmem:[#allocation3 + $0x4e0] sm:$0xff] %v668
      %701 = vst [vmem:[#allocation3 + $0x528] sm:$0xff] %v669
      %702 = vst [vmem:[#allocation3 + $0x570] sm:$0xff] %v670
      %703 = vst [vmem:[#allocation3 + $0x5b8] sm:$0xff] %v671
      %704 = vst [vmem:[#allocation3 + $0x600] sm:$0xff] %v672
      %705 = vst [vmem:[#allocation3 + $0x648] sm:$0xff] %v673
      %706 = vst [vmem:[#allocation3 + $0x690] sm:$0xff] %v674
      %707 = vst [vmem:[#allocation3 + $0x6d8] sm:$0xff] %v675
      %708 = vst [vmem:[#allocation3 + $0x720] sm:$0xff] %v676
      %709 = vst [vmem:[#allocation3 + $0x768] sm:$0xff] %v677
      %710 = vst [vmem:[#allocation3 + $0x7b0] sm:$0xff] %v678
      %711 = vst [vmem:[#allocation3 + $0x7f8] sm:$0xff] %v679
      %712 = vst [vmem:[#allocation3 + $0x840] sm:$0xff] %v680
      %713 = vst [vmem:[#allocation3 + $0x888] sm:$0xff] %v681
      %714 = vst [vmem:[#allocation3 + $0x8d0] sm:$0xff] %v682
      %v715 = vld [vmem:[%s426 + $0x1] sm:$0xff]
      %v716 = vld [vmem:[%s426 + $0x9] sm:$0xff]
      %v717 = vld [vmem:[%s426 + $0x19] sm:$0xff]
      %v718 = vld [vmem:[%s426 + $0x21] sm:$0xff]
      %v719 = vld [vmem:[%s426 + $0x31] sm:$0xff]
      %v720 = vld [vmem:[%s426 + $0x39] sm:$0xff]
      %v721 = vld [vmem:[%s426 + $0x49] sm:$0xff]
      %v722 = vld [vmem:[%s426 + $0x51] sm:$0xff]
      %v723 = vld [vmem:[%s426 + $0x61] sm:$0xff]
      %v724 = vld [vmem:[%s426 + $0x69] sm:$0xff]
      %v725 = vld [vmem:[%s426 + $0x79] sm:$0xff]
      %v726 = vld [vmem:[%s426 + $0x81] sm:$0xff]
      %v727 = vld [vmem:[%s426 + $0x91] sm:$0xff]
      %v728 = vld [vmem:[%s426 + $0x99] sm:$0xff]
      %v729 = vld [vmem:[%s426 + $0xa9] sm:$0xff]
      %v730 = vld [vmem:[%s426 + $0xb1] sm:$0xff]
      %v731 = vld [vmem:[%s426 + $0xc1] sm:$0xff]
      %v732 = vld [vmem:[%s426 + $0xc9] sm:$0xff]
      %v733 = vld [vmem:[%s426 + $0xd9] sm:$0xff]
      %v734 = vld [vmem:[%s426 + $0xe1] sm:$0xff]
      %v735 = vld [vmem:[%s426 + $0xf1] sm:$0xff]
      %v736 = vld [vmem:[%s426 + $0xf9] sm:$0xff]
      %v737 = vld [vmem:[%s426 + $0x109] sm:$0xff]
      %v738 = vld [vmem:[%s426 + $0x111] sm:$0xff]
      %v739 = vld [vmem:[%s426 + $0x121] sm:$0xff]
      %v740 = vld [vmem:[%s426 + $0x129] sm:$0xff]
      %v741 = vld [vmem:[%s426 + $0x139] sm:$0xff]
      %v742 = vld [vmem:[%s426 + $0x141] sm:$0xff]
      %v743 = vld [vmem:[%s426 + $0x151] sm:$0xff]
      %v744 = vld [vmem:[%s426 + $0x159] sm:$0xff]
      %v745 = vld [vmem:[%s426 + $0x169] sm:$0xff]
      %v746 = vld [vmem:[%s426 + $0x171] sm:$0xff]
      %747 = vst [vmem:[#allocation3 + $0x20] sm:$0xff] %v715
      %748 = vst [vmem:[#allocation3 + $0x68] sm:$0xff] %v716
      %749 = vst [vmem:[#allocation3 + $0xb0] sm:$0xff] %v717
      %750 = vst [vmem:[#allocation3 + $0xf8] sm:$0xff] %v718
      %751 = vst [vmem:[#allocation3 + $0x140] sm:$0xff] %v719
      %752 = vst [vmem:[#allocation3 + $0x188] sm:$0xff] %v720
      %753 = vst [vmem:[#allocation3 + $0x1d0] sm:$0xff] %v721
      %754 = vst [vmem:[#allocation3 + $0x218] sm:$0xff] %v722
      %755 = vst [vmem:[#allocation3 + $0x260] sm:$0xff] %v723
      %756 = vst [vmem:[#allocation3 + $0x2a8] sm:$0xff] %v724
      %757 = vst [vmem:[#allocation3 + $0x2f0] sm:$0xff] %v725
      %758 = vst [vmem:[#allocation3 + $0x338] sm:$0xff] %v726
      %759 = vst [vmem:[#allocation3 + $0x380] sm:$0xff] %v727
      %760 = vst [vmem:[#allocation3 + $0x3c8] sm:$0xff] %v728
      %761 = vst [vmem:[#allocation3 + $0x410] sm:$0xff] %v729
      %762 = vst [vmem:[#allocation3 + $0x458] sm:$0xff] %v730
      %763 = vst [vmem:[#allocation3 + $0x4a0] sm:$0xff] %v731
      %764 = vst [vmem:[#allocation3 + $0x4e8] sm:$0xff] %v732
      %765 = vst [vmem:[#allocation3 + $0x530] sm:$0xff] %v733
      %766 = vst [vmem:[#allocation3 + $0x578] sm:$0xff] %v734
      %767 = vst [vmem:[#allocation3 + $0x5c0] sm:$0xff] %v735
      %768 = vst [vmem:[#allocation3 + $0x608] sm:$0xff] %v736
      %769 = vst [vmem:[#allocation3 + $0x650] sm:$0xff] %v737
      %770 = vst [vmem:[#allocation3 + $0x698] sm:$0xff] %v738
      %771 = vst [vmem:[#allocation3 + $0x6e0] sm:$0xff] %v739
      %772 = vst [vmem:[#allocation3 + $0x728] sm:$0xff] %v740
      %773 = vst [vmem:[#allocation3 + $0x770] sm:$0xff] %v741
      %774 = vst [vmem:[#allocation3 + $0x7b8] sm:$0xff] %v742
      %775 = vst [vmem:[#allocation3 + $0x800] sm:$0xff] %v743
      %776 = vst [vmem:[#allocation3 + $0x848] sm:$0xff] %v744
      %777 = vst [vmem:[#allocation3 + $0x890] sm:$0xff] %v745
      %778 = vst [vmem:[#allocation3 + $0x8d8] sm:$0xff] %v746
      %v779 = vld [vmem:[%s426 + $0x2] sm:$0xff]
      %v780 = vld [vmem:[%s426 + $0xa] sm:$0xff]
      %v781 = vld [vmem:[%s426 + $0x1a] sm:$0xff]
      %v782 = vld [vmem:[%s426 + $0x22] sm:$0xff]
      %v783 = vld [vmem:[%s426 + $0x32] sm:$0xff]
      %v784 = vld [vmem:[%s426 + $0x3a] sm:$0xff]
      %v785 = vld [vmem:[%s426 + $0x4a] sm:$0xff]
      %v786 = vld [vmem:[%s426 + $0x52] sm:$0xff]
      %v787 = vld [vmem:[%s426 + $0x62] sm:$0xff]
      %v788 = vld [vmem:[%s426 + $0x6a] sm:$0xff]
      %v789 = vld [vmem:[%s426 + $0x7a] sm:$0xff]
      %v790 = vld [vmem:[%s426 + $0x82] sm:$0xff]
      %v791 = vld [vmem:[%s426 + $0x92] sm:$0xff]
      %v792 = vld [vmem:[%s426 + $0x9a] sm:$0xff]
      %v793 = vld [vmem:[%s426 + $0xaa] sm:$0xff]
      %v794 = vld [vmem:[%s426 + $0xb2] sm:$0xff]
      %v795 = vld [vmem:[%s426 + $0xc2] sm:$0xff]
      %v796 = vld [vmem:[%s426 + $0xca] sm:$0xff]
      %v797 = vld [vmem:[%s426 + $0xda] sm:$0xff]
      %v798 = vld [vmem:[%s426 + $0xe2] sm:$0xff]
      %v799 = vld [vmem:[%s426 + $0xf2] sm:$0xff]
      %v800 = vld [vmem:[%s426 + $0xfa] sm:$0xff]
      %v801 = vld [vmem:[%s426 + $0x10a] sm:$0xff]
      %v802 = vld [vmem:[%s426 + $0x112] sm:$0xff]
      %v803 = vld [vmem:[%s426 + $0x122] sm:$0xff]
      %v804 = vld [vmem:[%s426 + $0x12a] sm:$0xff]
      %v805 = vld [vmem:[%s426 + $0x13a] sm:$0xff]
      %v806 = vld [vmem:[%s426 + $0x142] sm:$0xff]
      %v807 = vld [vmem:[%s426 + $0x152] sm:$0xff]
      %v808 = vld [vmem:[%s426 + $0x15a] sm:$0xff]
      %v809 = vld [vmem:[%s426 + $0x16a] sm:$0xff]
      %v810 = vld [vmem:[%s426 + $0x172] sm:$0xff]
      %811 = vst [vmem:[#allocation3 + $0x28] sm:$0xff] %v779
      %812 = vst [vmem:[#allocation3 + $0x70] sm:$0xff] %v780
      %813 = vst [vmem:[#allocation3 + $0xb8] sm:$0xff] %v781
      %814 = vst [vmem:[#allocation3 + $0x100] sm:$0xff] %v782
      %815 = vst [vmem:[#allocation3 + $0x148] sm:$0xff] %v783
      %816 = vst [vmem:[#allocation3 + $0x190] sm:$0xff] %v784
      %817 = vst [vmem:[#allocation3 + $0x1d8] sm:$0xff] %v785
      %818 = vst [vmem:[#allocation3 + $0x220] sm:$0xff] %v786
      %819 = vst [vmem:[#allocation3 + $0x268] sm:$0xff] %v787
      %820 = vst [vmem:[#allocation3 + $0x2b0] sm:$0xff] %v788
      %821 = vst [vmem:[#allocation3 + $0x2f8] sm:$0xff] %v789
      %822 = vst [vmem:[#allocation3 + $0x340] sm:$0xff] %v790
      %823 = vst [vmem:[#allocation3 + $0x388] sm:$0xff] %v791
      %824 = vst [vmem:[#allocation3 + $0x3d0] sm:$0xff] %v792
      %825 = vst [vmem:[#allocation3 + $0x418] sm:$0xff] %v793
      %826 = vst [vmem:[#allocation3 + $0x460] sm:$0xff] %v794
      %827 = vst [vmem:[#allocation3 + $0x4a8] sm:$0xff] %v795
      %828 = vst [vmem:[#allocation3 + $0x4f0] sm:$0xff] %v796
      %829 = vst [vmem:[#allocation3 + $0x538] sm:$0xff] %v797
      %830 = vst [vmem:[#allocation3 + $0x580] sm:$0xff] %v798
      %831 = vst [vmem:[#allocation3 + $0x5c8] sm:$0xff] %v799
      %832 = vst [vmem:[#allocation3 + $0x610] sm:$0xff] %v800
      %833 = vst [vmem:[#allocation3 + $0x658] sm:$0xff] %v801
      %834 = vst [vmem:[#allocation3 + $0x6a0] sm:$0xff] %v802
      %835 = vst [vmem:[#allocation3 + $0x6e8] sm:$0xff] %v803
      %836 = vst [vmem:[#allocation3 + $0x730] sm:$0xff] %v804
      %837 = vst [vmem:[#allocation3 + $0x778] sm:$0xff] %v805
      %838 = vst [vmem:[#allocation3 + $0x7c0] sm:$0xff] %v806
      %839 = vst [vmem:[#allocation3 + $0x808] sm:$0xff] %v807
      %840 = vst [vmem:[#allocation3 + $0x850] sm:$0xff] %v808
      %841 = vst [vmem:[#allocation3 + $0x898] sm:$0xff] %v809
      %842 = vst [vmem:[#allocation3 + $0x8e0] sm:$0xff] %v810
      %s843 = scalar_lea.vmem [#allocation2], 48
      %v844 = vld [vmem:[%s843] sm:$0xff]
      %v845 = vld [vmem:[%s843 + $0x8] sm:$0xff]
      %v846 = vld [vmem:[%s843 + $0x18] sm:$0xff]
      %v847 = vld [vmem:[%s843 + $0x20] sm:$0xff]
      %v848 = vld [vmem:[%s843 + $0x30] sm:$0xff]
      %v849 = vld [vmem:[%s843 + $0x38] sm:$0xff]
      %v850 = vld [vmem:[%s843 + $0x48] sm:$0xff]
      %v851 = vld [vmem:[%s843 + $0x50] sm:$0xff]
      %v852 = vld [vmem:[%s843 + $0x60] sm:$0xff]
      %v853 = vld [vmem:[%s843 + $0x68] sm:$0xff]
      %v854 = vld [vmem:[%s843 + $0x78] sm:$0xff]
      %v855 = vld [vmem:[%s843 + $0x80] sm:$0xff]
      %v856 = vld [vmem:[%s843 + $0x90] sm:$0xff]
      %v857 = vld [vmem:[%s843 + $0x98] sm:$0xff]
      %v858 = vld [vmem:[%s843 + $0xa8] sm:$0xff]
      %v859 = vld [vmem:[%s843 + $0xb0] sm:$0xff]
      %v860 = vld [vmem:[%s843 + $0xc0] sm:$0xff]
      %v861 = vld [vmem:[%s843 + $0xc8] sm:$0xff]
      %v862 = vld [vmem:[%s843 + $0xd8] sm:$0xff]
      %v863 = vld [vmem:[%s843 + $0xe0] sm:$0xff]
      %v864 = vld [vmem:[%s843 + $0xf0] sm:$0xff]
      %v865 = vld [vmem:[%s843 + $0xf8] sm:$0xff]
      %v866 = vld [vmem:[%s843 + $0x108] sm:$0xff]
      %v867 = vld [vmem:[%s843 + $0x110] sm:$0xff]
      %v868 = vld [vmem:[%s843 + $0x120] sm:$0xff]
      %v869 = vld [vmem:[%s843 + $0x128] sm:$0xff]
      %v870 = vld [vmem:[%s843 + $0x138] sm:$0xff]
      %v871 = vld [vmem:[%s843 + $0x140] sm:$0xff]
      %v872 = vld [vmem:[%s843 + $0x150] sm:$0xff]
      %v873 = vld [vmem:[%s843 + $0x158] sm:$0xff]
      %v874 = vld [vmem:[%s843 + $0x168] sm:$0xff]
      %v875 = vld [vmem:[%s843 + $0x170] sm:$0xff]
      %876 = vst [vmem:[#allocation3 + $0x30] sm:$0xff] %v844
      %877 = vst [vmem:[#allocation3 + $0x78] sm:$0xff] %v845
      %878 = vst [vmem:[#allocation3 + $0xc0] sm:$0xff] %v846
      %879 = vst [vmem:[#allocation3 + $0x108] sm:$0xff] %v847
      %880 = vst [vmem:[#allocation3 + $0x150] sm:$0xff] %v848
      %881 = vst [vmem:[#allocation3 + $0x198] sm:$0xff] %v849
      %882 = vst [vmem:[#allocation3 + $0x1e0] sm:$0xff] %v850
      %883 = vst [vmem:[#allocation3 + $0x228] sm:$0xff] %v851
      %884 = vst [vmem:[#allocation3 + $0x270] sm:$0xff] %v852
      %885 = vst [vmem:[#allocation3 + $0x2b8] sm:$0xff] %v853
      %886 = vst [vmem:[#allocation3 + $0x300] sm:$0xff] %v854
      %887 = vst [vmem:[#allocation3 + $0x348] sm:$0xff] %v855
      %888 = vst [vmem:[#allocation3 + $0x390] sm:$0xff] %v856
      %889 = vst [vmem:[#allocation3 + $0x3d8] sm:$0xff] %v857
      %890 = vst [vmem:[#allocation3 + $0x420] sm:$0xff] %v858
      %891 = vst [vmem:[#allocation3 + $0x468] sm:$0xff] %v859
      %892 = vst [vmem:[#allocation3 + $0x4b0] sm:$0xff] %v860
      %893 = vst [vmem:[#allocation3 + $0x4f8] sm:$0xff] %v861
      %894 = vst [vmem:[#allocation3 + $0x540] sm:$0xff] %v862
      %895 = vst [vmem:[#allocation3 + $0x588] sm:$0xff] %v863
      %896 = vst [vmem:[#allocation3 + $0x5d0] sm:$0xff] %v864
      %897 = vst [vmem:[#allocation3 + $0x618] sm:$0xff] %v865
      %898 = vst [vmem:[#allocation3 + $0x660] sm:$0xff] %v866
      %899 = vst [vmem:[#allocation3 + $0x6a8] sm:$0xff] %v867
      %900 = vst [vmem:[#allocation3 + $0x6f0] sm:$0xff] %v868
      %901 = vst [vmem:[#allocation3 + $0x738] sm:$0xff] %v869
      %902 = vst [vmem:[#allocation3 + $0x780] sm:$0xff] %v870
      %903 = vst [vmem:[#allocation3 + $0x7c8] sm:$0xff] %v871
      %904 = vst [vmem:[#allocation3 + $0x810] sm:$0xff] %v872
      %905 = vst [vmem:[#allocation3 + $0x858] sm:$0xff] %v873
      %906 = vst [vmem:[#allocation3 + $0x8a0] sm:$0xff] %v874
      %907 = vst [vmem:[#allocation3 + $0x8e8] sm:$0xff] %v875
      %v908 = vld [vmem:[%s843 + $0x1] sm:$0xff]
      %v909 = vld [vmem:[%s843 + $0x9] sm:$0xff]
      %v910 = vld [vmem:[%s843 + $0x19] sm:$0xff]
      %v911 = vld [vmem:[%s843 + $0x21] sm:$0xff]
      %v912 = vld [vmem:[%s843 + $0x31] sm:$0xff]
      %v913 = vld [vmem:[%s843 + $0x39] sm:$0xff]
      %v914 = vld [vmem:[%s843 + $0x49] sm:$0xff]
      %v915 = vld [vmem:[%s843 + $0x51] sm:$0xff]
      %v916 = vld [vmem:[%s843 + $0x61] sm:$0xff]
      %v917 = vld [vmem:[%s843 + $0x69] sm:$0xff]
      %v918 = vld [vmem:[%s843 + $0x79] sm:$0xff]
      %v919 = vld [vmem:[%s843 + $0x81] sm:$0xff]
      %v920 = vld [vmem:[%s843 + $0x91] sm:$0xff]
      %v921 = vld [vmem:[%s843 + $0x99] sm:$0xff]
      %v922 = vld [vmem:[%s843 + $0xa9] sm:$0xff]
      %v923 = vld [vmem:[%s843 + $0xb1] sm:$0xff]
      %v924 = vld [vmem:[%s843 + $0xc1] sm:$0xff]
      %v925 = vld [vmem:[%s843 + $0xc9] sm:$0xff]
      %v926 = vld [vmem:[%s843 + $0xd9] sm:$0xff]
      %v927 = vld [vmem:[%s843 + $0xe1] sm:$0xff]
      %v928 = vld [vmem:[%s843 + $0xf1] sm:$0xff]
      %v929 = vld [vmem:[%s843 + $0xf9] sm:$0xff]
      %v930 = vld [vmem:[%s843 + $0x109] sm:$0xff]
      %v931 = vld [vmem:[%s843 + $0x111] sm:$0xff]
      %v932 = vld [vmem:[%s843 + $0x121] sm:$0xff]
      %v933 = vld [vmem:[%s843 + $0x129] sm:$0xff]
      %v934 = vld [vmem:[%s843 + $0x139] sm:$0xff]
      %v935 = vld [vmem:[%s843 + $0x141] sm:$0xff]
      %v936 = vld [vmem:[%s843 + $0x151] sm:$0xff]
      %v937 = vld [vmem:[%s843 + $0x159] sm:$0xff]
      %v938 = vld [vmem:[%s843 + $0x169] sm:$0xff]
      %v939 = vld [vmem:[%s843 + $0x171] sm:$0xff]
      %940 = vst [vmem:[#allocation3 + $0x38] sm:$0xff] %v908
      %941 = vst [vmem:[#allocation3 + $0x80] sm:$0xff] %v909
      %942 = vst [vmem:[#allocation3 + $0xc8] sm:$0xff] %v910
      %943 = vst [vmem:[#allocation3 + $0x110] sm:$0xff] %v911
      %944 = vst [vmem:[#allocation3 + $0x158] sm:$0xff] %v912
      %945 = vst [vmem:[#allocation3 + $0x1a0] sm:$0xff] %v913
      %946 = vst [vmem:[#allocation3 + $0x1e8] sm:$0xff] %v914
      %947 = vst [vmem:[#allocation3 + $0x230] sm:$0xff] %v915
      %948 = vst [vmem:[#allocation3 + $0x278] sm:$0xff] %v916
      %949 = vst [vmem:[#allocation3 + $0x2c0] sm:$0xff] %v917
      %950 = vst [vmem:[#allocation3 + $0x308] sm:$0xff] %v918
      %951 = vst [vmem:[#allocation3 + $0x350] sm:$0xff] %v919
      %952 = vst [vmem:[#allocation3 + $0x398] sm:$0xff] %v920
      %953 = vst [vmem:[#allocation3 + $0x3e0] sm:$0xff] %v921
      %954 = vst [vmem:[#allocation3 + $0x428] sm:$0xff] %v922
      %955 = vst [vmem:[#allocation3 + $0x470] sm:$0xff] %v923
      %956 = vst [vmem:[#allocation3 + $0x4b8] sm:$0xff] %v924
      %957 = vst [vmem:[#allocation3 + $0x500] sm:$0xff] %v925
      %958 = vst [vmem:[#allocation3 + $0x548] sm:$0xff] %v926
      %959 = vst [vmem:[#allocation3 + $0x590] sm:$0xff] %v927
      %960 = vst [vmem:[#allocation3 + $0x5d8] sm:$0xff] %v928
      %961 = vst [vmem:[#allocation3 + $0x620] sm:$0xff] %v929
      %962 = vst [vmem:[#allocation3 + $0x668] sm:$0xff] %v930
      %963 = vst [vmem:[#allocation3 + $0x6b0] sm:$0xff] %v931
      %964 = vst [vmem:[#allocation3 + $0x6f8] sm:$0xff] %v932
      %965 = vst [vmem:[#allocation3 + $0x740] sm:$0xff] %v933
      %966 = vst [vmem:[#allocation3 + $0x788] sm:$0xff] %v934
      %967 = vst [vmem:[#allocation3 + $0x7d0] sm:$0xff] %v935
      %968 = vst [vmem:[#allocation3 + $0x818] sm:$0xff] %v936
      %969 = vst [vmem:[#allocation3 + $0x860] sm:$0xff] %v937
      %970 = vst [vmem:[#allocation3 + $0x8a8] sm:$0xff] %v938
      %971 = vst [vmem:[#allocation3 + $0x8f0] sm:$0xff] %v939
      %v972 = vld [vmem:[%s843 + $0x2] sm:$0xff]
      %v973 = vld [vmem:[%s843 + $0xa] sm:$0xff]
      %v974 = vld [vmem:[%s843 + $0x1a] sm:$0xff]
      %v975 = vld [vmem:[%s843 + $0x22] sm:$0xff]
      %v976 = vld [vmem:[%s843 + $0x32] sm:$0xff]
      %v977 = vld [vmem:[%s843 + $0x3a] sm:$0xff]
      %v978 = vld [vmem:[%s843 + $0x4a] sm:$0xff]
      %v979 = vld [vmem:[%s843 + $0x52] sm:$0xff]
      %v980 = vld [vmem:[%s843 + $0x62] sm:$0xff]
      %v981 = vld [vmem:[%s843 + $0x6a] sm:$0xff]
      %v982 = vld [vmem:[%s843 + $0x7a] sm:$0xff]
      %v983 = vld [vmem:[%s843 + $0x82] sm:$0xff]
      %v984 = vld [vmem:[%s843 + $0x92] sm:$0xff]
      %v985 = vld [vmem:[%s843 + $0x9a] sm:$0xff]
      %v986 = vld [vmem:[%s843 + $0xaa] sm:$0xff]
      %v987 = vld [vmem:[%s843 + $0xb2] sm:$0xff]
      %v988 = vld [vmem:[%s843 + $0xc2] sm:$0xff]
      %v989 = vld [vmem:[%s843 + $0xca] sm:$0xff]
      %v990 = vld [vmem:[%s843 + $0xda] sm:$0xff]
      %v991 = vld [vmem:[%s843 + $0xe2] sm:$0xff]
      %v992 = vld [vmem:[%s843 + $0xf2] sm:$0xff]
      %v993 = vld [vmem:[%s843 + $0xfa] sm:$0xff]
      %v994 = vld [vmem:[%s843 + $0x10a] sm:$0xff]
      %v995 = vld [vmem:[%s843 + $0x112] sm:$0xff]
      %v996 = vld [vmem:[%s843 + $0x122] sm:$0xff]
      %v997 = vld [vmem:[%s843 + $0x12a] sm:$0xff]
      %v998 = vld [vmem:[%s843 + $0x13a] sm:$0xff]
      %v999 = vld [vmem:[%s843 + $0x142] sm:$0xff]
      %v1000 = vld [vmem:[%s843 + $0x152] sm:$0xff]
      %v1001 = vld [vmem:[%s843 + $0x15a] sm:$0xff]
      %v1002 = vld [vmem:[%s843 + $0x16a] sm:$0xff]
      %v1003 = vld [vmem:[%s843 + $0x172] sm:$0xff]
      %1004 = vst [vmem:[#allocation3 + $0x40] sm:$0xff] %v972
      %1005 = vst [vmem:[#allocation3 + $0x88] sm:$0xff] %v973
      %1006 = vst [vmem:[#allocation3 + $0xd0] sm:$0xff] %v974
      %1007 = vst [vmem:[#allocation3 + $0x118] sm:$0xff] %v975
      %1008 = vst [vmem:[#allocation3 + $0x160] sm:$0xff] %v976
      %1009 = vst [vmem:[#allocation3 + $0x1a8] sm:$0xff] %v977
      %1010 = vst [vmem:[#allocation3 + $0x1f0] sm:$0xff] %v978
      %1011 = vst [vmem:[#allocation3 + $0x238] sm:$0xff] %v979
      %1012 = vst [vmem:[#allocation3 + $0x280] sm:$0xff] %v980
      %1013 = vst [vmem:[#allocation3 + $0x2c8] sm:$0xff] %v981
      %1014 = vst [vmem:[#allocation3 + $0x310] sm:$0xff] %v982
      %1015 = vst [vmem:[#allocation3 + $0x358] sm:$0xff] %v983
      %1016 = vst [vmem:[#allocation3 + $0x3a0] sm:$0xff] %v984
      %1017 = vst [vmem:[#allocation3 + $0x3e8] sm:$0xff] %v985
      %1018 = vst [vmem:[#allocation3 + $0x430] sm:$0xff] %v986
      %1019 = vst [vmem:[#allocation3 + $0x478] sm:$0xff] %v987
      %1020 = vst [vmem:[#allocation3 + $0x4c0] sm:$0xff] %v988
      %1021 = vst [vmem:[#allocation3 + $0x508] sm:$0xff] %v989
      %1022 = vst [vmem:[#allocation3 + $0x550] sm:$0xff] %v990
      %1023 = vst [vmem:[#allocation3 + $0x598] sm:$0xff] %v991
      %1024 = vst [vmem:[#allocation3 + $0x5e0] sm:$0xff] %v992
      %1025 = vst [vmem:[#allocation3 + $0x628] sm:$0xff] %v993
      %1026 = vst [vmem:[#allocation3 + $0x670] sm:$0xff] %v994
      %1027 = vst [vmem:[#allocation3 + $0x6b8] sm:$0xff] %v995
      %1028 = vst [vmem:[#allocation3 + $0x700] sm:$0xff] %v996
      %1029 = vst [vmem:[#allocation3 + $0x748] sm:$0xff] %v997
      %1030 = vst [vmem:[#allocation3 + $0x790] sm:$0xff] %v998
      %1031 = vst [vmem:[#allocation3 + $0x7d8] sm:$0xff] %v999
      %1032 = vst [vmem:[#allocation3 + $0x820] sm:$0xff] %v1000
      %1033 = vst [vmem:[#allocation3 + $0x868] sm:$0xff] %v1001
      %1034 = vst [vmem:[#allocation3 + $0x8b0] sm:$0xff] %v1002
      %1035 = vst [vmem:[#allocation3 + $0x8f8] sm:$0xff] %v1003
      %v1036 = vld [vmem:[#allocation3] sm:$0xff]
      %v1037 = vld [vmem:[#allocation3 + $0x8] sm:$0xff]
      %v1038 = vld [vmem:[#allocation3 + $0x10] sm:$0xff]
      %v1039 = vld [vmem:[#allocation3 + $0x18] sm:$0xff]
      %v1040 = vld [vmem:[#allocation3 + $0x20] sm:$0xff]
      %v1041 = vld [vmem:[#allocation3 + $0x28] sm:$0xff]
      %v1042 = vld [vmem:[#allocation3 + $0x30] sm:$0xff]
      %v1043 = vld [vmem:[#allocation3 + $0x38] sm:$0xff]
      %v1044 = vld [vmem:[#allocation3 + $0x40] sm:$0xff]
      %v1045 = vld [vmem:[#allocation3 + $0x48] sm:$0xff]
      %v1046 = vld [vmem:[#allocation3 + $0x50] sm:$0xff]
      %v1047 = vld [vmem:[#allocation3 + $0x58] sm:$0xff]
      %v1048 = vld [vmem:[#allocation3 + $0x60] sm:$0xff]
      %v1049 = vld [vmem:[#allocation3 + $0x68] sm:$0xff]
      %v1050 = vld [vmem:[#allocation3 + $0x70] sm:$0xff]
      %v1051 = vld [vmem:[#allocation3 + $0x78] sm:$0xff]
      %v1052 = vld [vmem:[#allocation3 + $0x80] sm:$0xff]
      %v1053 = vld [vmem:[#allocation3 + $0x88] sm:$0xff]
      %v1054 = vld [vmem:[#allocation3 + $0x90] sm:$0xff]
      %v1055 = vld [vmem:[#allocation3 + $0x98] sm:$0xff]
      %v1056 = vld [vmem:[#allocation3 + $0xa0] sm:$0xff]
      %v1057 = vld [vmem:[#allocation3 + $0xa8] sm:$0xff]
      %v1058 = vld [vmem:[#allocation3 + $0xb0] sm:$0xff]
      %v1059 = vld [vmem:[#allocation3 + $0xb8] sm:$0xff]
      %v1060 = vld [vmem:[#allocation3 + $0xc0] sm:$0xff]
      %v1061 = vld [vmem:[#allocation3 + $0xc8] sm:$0xff]
      %v1062 = vld [vmem:[#allocation3 + $0xd0] sm:$0xff]
      %v1063 = vld [vmem:[#allocation3 + $0xd8] sm:$0xff]
      %v1064 = vld [vmem:[#allocation3 + $0xe0] sm:$0xff]
      %v1065 = vld [vmem:[#allocation3 + $0xe8] sm:$0xff]
      %v1066 = vld [vmem:[#allocation3 + $0xf0] sm:$0xff]
      %v1067 = vld [vmem:[#allocation3 + $0xf8] sm:$0xff]
      %v1068 = vld [vmem:[#allocation3 + $0x100] sm:$0xff]
      %v1069 = vld [vmem:[#allocation3 + $0x108] sm:$0xff]
      %v1070 = vld [vmem:[#allocation3 + $0x110] sm:$0xff]
      %v1071 = vld [vmem:[#allocation3 + $0x118] sm:$0xff]
      %v1072 = vld [vmem:[#allocation3 + $0x120] sm:$0xff]
      %v1073 = vld [vmem:[#allocation3 + $0x128] sm:$0xff]
      %v1074 = vld [vmem:[#allocation3 + $0x130] sm:$0xff]
      %v1075 = vld [vmem:[#allocation3 + $0x138] sm:$0xff]
      %v1076 = vld [vmem:[#allocation3 + $0x140] sm:$0xff]
      %v1077 = vld [vmem:[#allocation3 + $0x148] sm:$0xff]
      %v1078 = vld [vmem:[#allocation3 + $0x150] sm:$0xff]
      %v1079 = vld [vmem:[#allocation3 + $0x158] sm:$0xff]
      %v1080 = vld [vmem:[#allocation3 + $0x160] sm:$0xff]
      %v1081 = vld [vmem:[#allocation3 + $0x168] sm:$0xff]
      %v1082 = vld [vmem:[#allocation3 + $0x170] sm:$0xff]
      %v1083 = vld [vmem:[#allocation3 + $0x178] sm:$0xff]
      %v1084 = vld [vmem:[#allocation3 + $0x180] sm:$0xff]
      %v1085 = vld [vmem:[#allocation3 + $0x188] sm:$0xff]
      %v1086 = vld [vmem:[#allocation3 + $0x190] sm:$0xff]
      %v1087 = vld [vmem:[#allocation3 + $0x198] sm:$0xff]
      %v1088 = vld [vmem:[#allocation3 + $0x1a0] sm:$0xff]
      %v1089 = vld [vmem:[#allocation3 + $0x1a8] sm:$0xff]
      %v1090 = vld [vmem:[#allocation3 + $0x1b0] sm:$0xff]
      %v1091 = vld [vmem:[#allocation3 + $0x1b8] sm:$0xff]
      %v1092 = vld [vmem:[#allocation3 + $0x1c0] sm:$0xff]
      %v1093 = vld [vmem:[#allocation3 + $0x1c8] sm:$0xff]
      %v1094 = vld [vmem:[#allocation3 + $0x1d0] sm:$0xff]
      %v1095 = vld [vmem:[#allocation3 + $0x1d8] sm:$0xff]
      %v1096 = vld [vmem:[#allocation3 + $0x1e0] sm:$0xff]
      %v1097 = vld [vmem:[#allocation3 + $0x1e8] sm:$0xff]
      %v1098 = vld [vmem:[#allocation3 + $0x1f0] sm:$0xff]
      %v1099 = vld [vmem:[#allocation3 + $0x1f8] sm:$0xff]
      %v1100 = vld [vmem:[#allocation3 + $0x200] sm:$0xff]
      %v1101 = vld [vmem:[#allocation3 + $0x208] sm:$0xff]
      %v1102 = vld [vmem:[#allocation3 + $0x210] sm:$0xff]
      %v1103 = vld [vmem:[#allocation3 + $0x218] sm:$0xff]
      %v1104 = vld [vmem:[#allocation3 + $0x220] sm:$0xff]
      %v1105 = vld [vmem:[#allocation3 + $0x228] sm:$0xff]
      %v1106 = vld [vmem:[#allocation3 + $0x230] sm:$0xff]
      %v1107 = vld [vmem:[#allocation3 + $0x238] sm:$0xff]
      %v1108 = vld [vmem:[#allocation3 + $0x240] sm:$0xff]
      %v1109 = vld [vmem:[#allocation3 + $0x248] sm:$0xff]
      %v1110 = vld [vmem:[#allocation3 + $0x250] sm:$0xff]
      %v1111 = vld [vmem:[#allocation3 + $0x258] sm:$0xff]
      %v1112 = vld [vmem:[#allocation3 + $0x260] sm:$0xff]
      %v1113 = vld [vmem:[#allocation3 + $0x268] sm:$0xff]
      %v1114 = vld [vmem:[#allocation3 + $0x270] sm:$0xff]
      %v1115 = vld [vmem:[#allocation3 + $0x278] sm:$0xff]
      %v1116 = vld [vmem:[#allocation3 + $0x280] sm:$0xff]
      %v1117 = vld [vmem:[#allocation3 + $0x288] sm:$0xff]
      %v1118 = vld [vmem:[#allocation3 + $0x290] sm:$0xff]
      %v1119 = vld [vmem:[#allocation3 + $0x298] sm:$0xff]
      %v1120 = vld [vmem:[#allocation3 + $0x2a0] sm:$0xff]
      %v1121 = vld [vmem:[#allocation3 + $0x2a8] sm:$0xff]
      %v1122 = vld [vmem:[#allocation3 + $0x2b0] sm:$0xff]
      %v1123 = vld [vmem:[#allocation3 + $0x2b8] sm:$0xff]
      %v1124 = vld [vmem:[#allocation3 + $0x2c0] sm:$0xff]
      %v1125 = vld [vmem:[#allocation3 + $0x2c8] sm:$0xff]
      %v1126 = vld [vmem:[#allocation3 + $0x2d0] sm:$0xff]
      %v1127 = vld [vmem:[#allocation3 + $0x2d8] sm:$0xff]
      %v1128 = vld [vmem:[#allocation3 + $0x2e0] sm:$0xff]
      %v1129 = vld [vmem:[#allocation3 + $0x2e8] sm:$0xff]
      %v1130 = vld [vmem:[#allocation3 + $0x2f0] sm:$0xff]
      %v1131 = vld [vmem:[#allocation3 + $0x2f8] sm:$0xff]
      %v1132 = vld [vmem:[#allocation3 + $0x300] sm:$0xff]
      %v1133 = vld [vmem:[#allocation3 + $0x308] sm:$0xff]
      %v1134 = vld [vmem:[#allocation3 + $0x310] sm:$0xff]
      %v1135 = vld [vmem:[#allocation3 + $0x318] sm:$0xff]
      %v1136 = vld [vmem:[#allocation3 + $0x320] sm:$0xff]
      %v1137 = vld [vmem:[#allocation3 + $0x328] sm:$0xff]
      %v1138 = vld [vmem:[#allocation3 + $0x330] sm:$0xff]
      %v1139 = vld [vmem:[#allocation3 + $0x338] sm:$0xff]
      %v1140 = vld [vmem:[#allocation3 + $0x340] sm:$0xff]
      %v1141 = vld [vmem:[#allocation3 + $0x348] sm:$0xff]
      %v1142 = vld [vmem:[#allocation3 + $0x350] sm:$0xff]
      %v1143 = vld [vmem:[#allocation3 + $0x358] sm:$0xff]
      %v1144 = vld [vmem:[#allocation3 + $0x360] sm:$0xff]
      %v1145 = vld [vmem:[#allocation3 + $0x368] sm:$0xff]
      %v1146 = vld [vmem:[#allocation3 + $0x370] sm:$0xff]
      %v1147 = vld [vmem:[#allocation3 + $0x378] sm:$0xff]
      %v1148 = vld [vmem:[#allocation3 + $0x380] sm:$0xff]
      %v1149 = vld [vmem:[#allocation3 + $0x388] sm:$0xff]
      %v1150 = vld [vmem:[#allocation3 + $0x390] sm:$0xff]
      %v1151 = vld [vmem:[#allocation3 + $0x398] sm:$0xff]
      %v1152 = vld [vmem:[#allocation3 + $0x3a0] sm:$0xff]
      %v1153 = vld [vmem:[#allocation3 + $0x3a8] sm:$0xff]
      %v1154 = vld [vmem:[#allocation3 + $0x3b0] sm:$0xff]
      %v1155 = vld [vmem:[#allocation3 + $0x3b8] sm:$0xff]
      %v1156 = vld [vmem:[#allocation3 + $0x3c0] sm:$0xff]
      %v1157 = vld [vmem:[#allocation3 + $0x3c8] sm:$0xff]
      %v1158 = vld [vmem:[#allocation3 + $0x3d0] sm:$0xff]
      %v1159 = vld [vmem:[#allocation3 + $0x3d8] sm:$0xff]
      %v1160 = vld [vmem:[#allocation3 + $0x3e0] sm:$0xff]
      %v1161 = vld [vmem:[#allocation3 + $0x3e8] sm:$0xff]
      %v1162 = vld [vmem:[#allocation3 + $0x3f0] sm:$0xff]
      %v1163 = vld [vmem:[#allocation3 + $0x3f8] sm:$0xff]
      %v1164 = vld [vmem:[#allocation3 + $0x400] sm:$0xff]
      %v1165 = vld [vmem:[#allocation3 + $0x408] sm:$0xff]
      %v1166 = vld [vmem:[#allocation3 + $0x410] sm:$0xff]
      %v1167 = vld [vmem:[#allocation3 + $0x418] sm:$0xff]
      %v1168 = vld [vmem:[#allocation3 + $0x420] sm:$0xff]
      %v1169 = vld [vmem:[#allocation3 + $0x428] sm:$0xff]
      %v1170 = vld [vmem:[#allocation3 + $0x430] sm:$0xff]
      %v1171 = vld [vmem:[#allocation3 + $0x438] sm:$0xff]
      %v1172 = vld [vmem:[#allocation3 + $0x440] sm:$0xff]
      %v1173 = vld [vmem:[#allocation3 + $0x448] sm:$0xff]
      %v1174 = vld [vmem:[#allocation3 + $0x450] sm:$0xff]
      %v1175 = vld [vmem:[#allocation3 + $0x458] sm:$0xff]
      %v1176 = vld [vmem:[#allocation3 + $0x460] sm:$0xff]
      %v1177 = vld [vmem:[#allocation3 + $0x468] sm:$0xff]
      %v1178 = vld [vmem:[#allocation3 + $0x470] sm:$0xff]
      %v1179 = vld [vmem:[#allocation3 + $0x478] sm:$0xff]
      %v1180 = vld [vmem:[#allocation3 + $0x480] sm:$0xff]
      %v1181 = vld [vmem:[#allocation3 + $0x488] sm:$0xff]
      %v1182 = vld [vmem:[#allocation3 + $0x490] sm:$0xff]
      %v1183 = vld [vmem:[#allocation3 + $0x498] sm:$0xff]
      %v1184 = vld [vmem:[#allocation3 + $0x4a0] sm:$0xff]
      %v1185 = vld [vmem:[#allocation3 + $0x4a8] sm:$0xff]
      %v1186 = vld [vmem:[#allocation3 + $0x4b0] sm:$0xff]
      %v1187 = vld [vmem:[#allocation3 + $0x4b8] sm:$0xff]
      %v1188 = vld [vmem:[#allocation3 + $0x4c0] sm:$0xff]
      %v1189 = vld [vmem:[#allocation3 + $0x4c8] sm:$0xff]
      %v1190 = vld [vmem:[#allocation3 + $0x4d0] sm:$0xff]
      %v1191 = vld [vmem:[#allocation3 + $0x4d8] sm:$0xff]
      %v1192 = vld [vmem:[#allocation3 + $0x4e0] sm:$0xff]
      %v1193 = vld [vmem:[#allocation3 + $0x4e8] sm:$0xff]
      %v1194 = vld [vmem:[#allocation3 + $0x4f0] sm:$0xff]
      %v1195 = vld [vmem:[#allocation3 + $0x4f8] sm:$0xff]
      %v1196 = vld [vmem:[#allocation3 + $0x500] sm:$0xff]
      %v1197 = vld [vmem:[#allocation3 + $0x508] sm:$0xff]
      %v1198 = vld [vmem:[#allocation3 + $0x510] sm:$0xff]
      %v1199 = vld [vmem:[#allocation3 + $0x518] sm:$0xff]
      %v1200 = vld [vmem:[#allocation3 + $0x520] sm:$0xff]
      %v1201 = vld [vmem:[#allocation3 + $0x528] sm:$0xff]
      %v1202 = vld [vmem:[#allocation3 + $0x530] sm:$0xff]
      %v1203 = vld [vmem:[#allocation3 + $0x538] sm:$0xff]
      %v1204 = vld [vmem:[#allocation3 + $0x540] sm:$0xff]
      %v1205 = vld [vmem:[#allocation3 + $0x548] sm:$0xff]
      %v1206 = vld [vmem:[#allocation3 + $0x550] sm:$0xff]
      %v1207 = vld [vmem:[#allocation3 + $0x558] sm:$0xff]
      %v1208 = vld [vmem:[#allocation3 + $0x560] sm:$0xff]
      %v1209 = vld [vmem:[#allocation3 + $0x568] sm:$0xff]
      %v1210 = vld [vmem:[#allocation3 + $0x570] sm:$0xff]
      %v1211 = vld [vmem:[#allocation3 + $0x578] sm:$0xff]
      %v1212 = vld [vmem:[#allocation3 + $0x580] sm:$0xff]
      %v1213 = vld [vmem:[#allocation3 + $0x588] sm:$0xff]
      %v1214 = vld [vmem:[#allocation3 + $0x590] sm:$0xff]
      %v1215 = vld [vmem:[#allocation3 + $0x598] sm:$0xff]
      %v1216 = vld [vmem:[#allocation3 + $0x5a0] sm:$0xff]
      %v1217 = vld [vmem:[#allocation3 + $0x5a8] sm:$0xff]
      %v1218 = vld [vmem:[#allocation3 + $0x5b0] sm:$0xff]
      %v1219 = vld [vmem:[#allocation3 + $0x5b8] sm:$0xff]
      %v1220 = vld [vmem:[#allocation3 + $0x5c0] sm:$0xff]
      %v1221 = vld [vmem:[#allocation3 + $0x5c8] sm:$0xff]
      %v1222 = vld [vmem:[#allocation3 + $0x5d0] sm:$0xff]
      %v1223 = vld [vmem:[#allocation3 + $0x5d8] sm:$0xff]
      %v1224 = vld [vmem:[#allocation3 + $0x5e0] sm:$0xff]
      %v1225 = vld [vmem:[#allocation3 + $0x5e8] sm:$0xff]
      %v1226 = vld [vmem:[#allocation3 + $0x5f0] sm:$0xff]
      %v1227 = vld [vmem:[#allocation3 + $0x5f8] sm:$0xff]
      %v1228 = vld [vmem:[#allocation3 + $0x600] sm:$0xff]
      %v1229 = vld [vmem:[#allocation3 + $0x608] sm:$0xff]
      %v1230 = vld [vmem:[#allocation3 + $0x610] sm:$0xff]
      %v1231 = vld [vmem:[#allocation3 + $0x618] sm:$0xff]
      %v1232 = vld [vmem:[#allocation3 + $0x620] sm:$0xff]
      %v1233 = vld [vmem:[#allocation3 + $0x628] sm:$0xff]
      %v1234 = vld [vmem:[#allocation3 + $0x630] sm:$0xff]
      %v1235 = vld [vmem:[#allocation3 + $0x638] sm:$0xff]
      %v1236 = vld [vmem:[#allocation3 + $0x640] sm:$0xff]
      %v1237 = vld [vmem:[#allocation3 + $0x648] sm:$0xff]
      %v1238 = vld [vmem:[#allocation3 + $0x650] sm:$0xff]
      %v1239 = vld [vmem:[#allocation3 + $0x658] sm:$0xff]
      %v1240 = vld [vmem:[#allocation3 + $0x660] sm:$0xff]
      %v1241 = vld [vmem:[#allocation3 + $0x668] sm:$0xff]
      %v1242 = vld [vmem:[#allocation3 + $0x670] sm:$0xff]
      %v1243 = vld [vmem:[#allocation3 + $0x678] sm:$0xff]
      %v1244 = vld [vmem:[#allocation3 + $0x680] sm:$0xff]
      %v1245 = vld [vmem:[#allocation3 + $0x688] sm:$0xff]
      %v1246 = vld [vmem:[#allocation3 + $0x690] sm:$0xff]
      %v1247 = vld [vmem:[#allocation3 + $0x698] sm:$0xff]
      %v1248 = vld [vmem:[#allocation3 + $0x6a0] sm:$0xff]
      %v1249 = vld [vmem:[#allocation3 + $0x6a8] sm:$0xff]
      %v1250 = vld [vmem:[#allocation3 + $0x6b0] sm:$0xff]
      %v1251 = vld [vmem:[#allocation3 + $0x6b8] sm:$0xff]
      %v1252 = vld [vmem:[#allocation3 + $0x6c0] sm:$0xff]
      %v1253 = vld [vmem:[#allocation3 + $0x6c8] sm:$0xff]
      %v1254 = vld [vmem:[#allocation3 + $0x6d0] sm:$0xff]
      %v1255 = vld [vmem:[#allocation3 + $0x6d8] sm:$0xff]
      %v1256 = vld [vmem:[#allocation3 + $0x6e0] sm:$0xff]
      %v1257 = vld [vmem:[#allocation3 + $0x6e8] sm:$0xff]
      %v1258 = vld [vmem:[#allocation3 + $0x6f0] sm:$0xff]
      %v1259 = vld [vmem:[#allocation3 + $0x6f8] sm:$0xff]
      %v1260 = vld [vmem:[#allocation3 + $0x700] sm:$0xff]
      %v1261 = vld [vmem:[#allocation3 + $0x708] sm:$0xff]
      %v1262 = vld [vmem:[#allocation3 + $0x710] sm:$0xff]
      %v1263 = vld [vmem:[#allocation3 + $0x718] sm:$0xff]
      %v1264 = vld [vmem:[#allocation3 + $0x720] sm:$0xff]
      %v1265 = vld [vmem:[#allocation3 + $0x728] sm:$0xff]
      %v1266 = vld [vmem:[#allocation3 + $0x730] sm:$0xff]
      %v1267 = vld [vmem:[#allocation3 + $0x738] sm:$0xff]
      %v1268 = vld [vmem:[#allocation3 + $0x740] sm:$0xff]
      %v1269 = vld [vmem:[#allocation3 + $0x748] sm:$0xff]
      %v1270 = vld [vmem:[#allocation3 + $0x750] sm:$0xff]
      %v1271 = vld [vmem:[#allocation3 + $0x758] sm:$0xff]
      %v1272 = vld [vmem:[#allocation3 + $0x760] sm:$0xff]
      %v1273 = vld [vmem:[#allocation3 + $0x768] sm:$0xff]
      %v1274 = vld [vmem:[#allocation3 + $0x770] sm:$0xff]
      %v1275 = vld [vmem:[#allocation3 + $0x778] sm:$0xff]
      %v1276 = vld [vmem:[#allocation3 + $0x780] sm:$0xff]
      %v1277 = vld [vmem:[#allocation3 + $0x788] sm:$0xff]
      %v1278 = vld [vmem:[#allocation3 + $0x790] sm:$0xff]
      %v1279 = vld [vmem:[#allocation3 + $0x798] sm:$0xff]
      %v1280 = vld [vmem:[#allocation3 + $0x7a0] sm:$0xff]
      %v1281 = vld [vmem:[#allocation3 + $0x7a8] sm:$0xff]
      %v1282 = vld [vmem:[#allocation3 + $0x7b0] sm:$0xff]
      %v1283 = vld [vmem:[#allocation3 + $0x7b8] sm:$0xff]
      %v1284 = vld [vmem:[#allocation3 + $0x7c0] sm:$0xff]
      %v1285 = vld [vmem:[#allocation3 + $0x7c8] sm:$0xff]
      %v1286 = vld [vmem:[#allocation3 + $0x7d0] sm:$0xff]
      %v1287 = vld [vmem:[#allocation3 + $0x7d8] sm:$0xff]
      %v1288 = vld [vmem:[#allocation3 + $0x7e0] sm:$0xff]
      %v1289 = vld [vmem:[#allocation3 + $0x7e8] sm:$0xff]
      %v1290 = vld [vmem:[#allocation3 + $0x7f0] sm:$0xff]
      %v1291 = vld [vmem:[#allocation3 + $0x7f8] sm:$0xff]
      %v1292 = vld [vmem:[#allocation3 + $0x800] sm:$0xff]
      %v1293 = vld [vmem:[#allocation3 + $0x808] sm:$0xff]
      %v1294 = vld [vmem:[#allocation3 + $0x810] sm:$0xff]
      %v1295 = vld [vmem:[#allocation3 + $0x818] sm:$0xff]
      %v1296 = vld [vmem:[#allocation3 + $0x820] sm:$0xff]
      %v1297 = vld [vmem:[#allocation3 + $0x828] sm:$0xff]
      %v1298 = vld [vmem:[#allocation3 + $0x830] sm:$0xff]
      %v1299 = vld [vmem:[#allocation3 + $0x838] sm:$0xff]
      %v1300 = vld [vmem:[#allocation3 + $0x840] sm:$0xff]
      %v1301 = vld [vmem:[#allocation3 + $0x848] sm:$0xff]
      %v1302 = vld [vmem:[#allocation3 + $0x850] sm:$0xff]
      %v1303 = vld [vmem:[#allocation3 + $0x858] sm:$0xff]
      %v1304 = vld [vmem:[#allocation3 + $0x860] sm:$0xff]
      %v1305 = vld [vmem:[#allocation3 + $0x868] sm:$0xff]
      %v1306 = vld [vmem:[#allocation3 + $0x870] sm:$0xff]
      %v1307 = vld [vmem:[#allocation3 + $0x878] sm:$0xff]
      %v1308 = vld [vmem:[#allocation3 + $0x880] sm:$0xff]
      %v1309 = vld [vmem:[#allocation3 + $0x888] sm:$0xff]
      %v1310 = vld [vmem:[#allocation3 + $0x890] sm:$0xff]
      %v1311 = vld [vmem:[#allocation3 + $0x898] sm:$0xff]
      %v1312 = vld [vmem:[#allocation3 + $0x8a0] sm:$0xff]
      %v1313 = vld [vmem:[#allocation3 + $0x8a8] sm:$0xff]
      %v1314 = vld [vmem:[#allocation3 + $0x8b0] sm:$0xff]
      %v1315 = vld [vmem:[#allocation3 + $0x8b8] sm:$0xff]
      %v1316 = vld [vmem:[#allocation3 + $0x8c0] sm:$0xff]
      %v1317 = vld [vmem:[#allocation3 + $0x8c8] sm:$0xff]
      %v1318 = vld [vmem:[#allocation3 + $0x8d0] sm:$0xff]
      %v1319 = vld [vmem:[#allocation3 + $0x8d8] sm:$0xff]
      %v1320 = vld [vmem:[#allocation3 + $0x8e0] sm:$0xff]
      %v1321 = vld [vmem:[#allocation3 + $0x8e8] sm:$0xff]
      %v1322 = vld [vmem:[#allocation3 + $0x8f0] sm:$0xff]
      %v1323 = vld [vmem:[#allocation3 + $0x8f8] sm:$0xff]
      %v1324 = vld [vmem:[%s3] sm:$0xff]
      %v1325 = vld [vmem:[%s3 + $0x8] sm:$0xff]
      %v1326 = vld [vmem:[%s3 + $0x10] sm:$0xff]
      %v1327 = vld [vmem:[%s3 + $0x18] sm:$0xff]
      %v1328 = vld [vmem:[%s3 + $0x20] sm:$0xff]
      %v1329 = vld [vmem:[%s3 + $0x28] sm:$0xff]
      %v1330 = vld [vmem:[%s3 + $0x30] sm:$0xff]
      %v1331 = vld [vmem:[%s3 + $0x38] sm:$0xff]
      %v1332 = vld [vmem:[%s3 + $0x40] sm:$0xff]
      %v1333 = vld [vmem:[%s3 + $0x48] sm:$0xff]
      %v1334 = vld [vmem:[%s3 + $0x50] sm:$0xff]
      %v1335 = vld [vmem:[%s3 + $0x58] sm:$0xff]
      %v1336 = vld [vmem:[%s3 + $0x60] sm:$0xff]
      %v1337 = vld [vmem:[%s3 + $0x68] sm:$0xff]
      %v1338 = vld [vmem:[%s3 + $0x70] sm:$0xff]
      %v1339 = vld [vmem:[%s3 + $0x78] sm:$0xff]
      %v1340 = vld [vmem:[%s3 + $0x80] sm:$0xff]
      %v1341 = vld [vmem:[%s3 + $0x88] sm:$0xff]
      %v1342 = vld [vmem:[%s3 + $0x90] sm:$0xff]
      %v1343 = vld [vmem:[%s3 + $0x98] sm:$0xff]
      %v1344 = vld [vmem:[%s3 + $0xa0] sm:$0xff]
      %v1345 = vld [vmem:[%s3 + $0xa8] sm:$0xff]
      %v1346 = vld [vmem:[%s3 + $0xb0] sm:$0xff]
      %v1347 = vld [vmem:[%s3 + $0xb8] sm:$0xff]
      %v1348 = vld [vmem:[%s3 + $0xc0] sm:$0xff]
      %v1349 = vld [vmem:[%s3 + $0xc8] sm:$0xff]
      %v1350 = vld [vmem:[%s3 + $0xd0] sm:$0xff]
      %v1351 = vld [vmem:[%s3 + $0xd8] sm:$0xff]
      %v1352 = vld [vmem:[%s3 + $0xe0] sm:$0xff]
      %v1353 = vld [vmem:[%s3 + $0xe8] sm:$0xff]
      %v1354 = vld [vmem:[%s3 + $0xf0] sm:$0xff]
      %v1355 = vld [vmem:[%s3 + $0xf8] sm:$0xff]
      %v1356 = vld [vmem:[%s3 + $0x100] sm:$0xff]
      %v1357 = vld [vmem:[%s3 + $0x108] sm:$0xff]
      %v1358 = vld [vmem:[%s3 + $0x110] sm:$0xff]
      %v1359 = vld [vmem:[%s3 + $0x118] sm:$0xff]
      %v1360 = vld [vmem:[%s3 + $0x120] sm:$0xff]
      %v1361 = vld [vmem:[%s3 + $0x128] sm:$0xff]
      %v1362 = vld [vmem:[%s3 + $0x130] sm:$0xff]
      %v1363 = vld [vmem:[%s3 + $0x138] sm:$0xff]
      %v1364 = vld [vmem:[%s3 + $0x140] sm:$0xff]
      %v1365 = vld [vmem:[%s3 + $0x148] sm:$0xff]
      %v1366 = vld [vmem:[%s3 + $0x150] sm:$0xff]
      %v1367 = vld [vmem:[%s3 + $0x158] sm:$0xff]
      %v1368 = vld [vmem:[%s3 + $0x160] sm:$0xff]
      %v1369 = vld [vmem:[%s3 + $0x168] sm:$0xff]
      %v1370 = vld [vmem:[%s3 + $0x170] sm:$0xff]
      %v1371 = vld [vmem:[%s3 + $0x178] sm:$0xff]
      %v1372 = vld [vmem:[%s3 + $0x180] sm:$0xff]
      %v1373 = vld [vmem:[%s3 + $0x188] sm:$0xff]
      %v1374 = vld [vmem:[%s3 + $0x190] sm:$0xff]
      %v1375 = vld [vmem:[%s3 + $0x198] sm:$0xff]
      %v1376 = vld [vmem:[%s3 + $0x1a0] sm:$0xff]
      %v1377 = vld [vmem:[%s3 + $0x1a8] sm:$0xff]
      %v1378 = vld [vmem:[%s3 + $0x1b0] sm:$0xff]
      %v1379 = vld [vmem:[%s3 + $0x1b8] sm:$0xff]
      %v1380 = vld [vmem:[%s3 + $0x1c0] sm:$0xff]
      %v1381 = vld [vmem:[%s3 + $0x1c8] sm:$0xff]
      %v1382 = vld [vmem:[%s3 + $0x1d0] sm:$0xff]
      %v1383 = vld [vmem:[%s3 + $0x1d8] sm:$0xff]
      %v1384 = vld [vmem:[%s3 + $0x1e0] sm:$0xff]
      %v1385 = vld [vmem:[%s3 + $0x1e8] sm:$0xff]
      %v1386 = vld [vmem:[%s3 + $0x1f0] sm:$0xff]
      %v1387 = vld [vmem:[%s3 + $0x1f8] sm:$0xff]
      %v1388 = vld [vmem:[%s3 + $0x200] sm:$0xff]
      %v1389 = vld [vmem:[%s3 + $0x208] sm:$0xff]
      %v1390 = vld [vmem:[%s3 + $0x210] sm:$0xff]
      %v1391 = vld [vmem:[%s3 + $0x218] sm:$0xff]
      %v1392 = vld [vmem:[%s3 + $0x220] sm:$0xff]
      %v1393 = vld [vmem:[%s3 + $0x228] sm:$0xff]
      %v1394 = vld [vmem:[%s3 + $0x230] sm:$0xff]
      %v1395 = vld [vmem:[%s3 + $0x238] sm:$0xff]
      %v1396 = vld [vmem:[%s3 + $0x240] sm:$0xff]
      %v1397 = vld [vmem:[%s3 + $0x248] sm:$0xff]
      %v1398 = vld [vmem:[%s3 + $0x250] sm:$0xff]
      %v1399 = vld [vmem:[%s3 + $0x258] sm:$0xff]
      %v1400 = vld [vmem:[%s3 + $0x260] sm:$0xff]
      %v1401 = vld [vmem:[%s3 + $0x268] sm:$0xff]
      %v1402 = vld [vmem:[%s3 + $0x270] sm:$0xff]
      %v1403 = vld [vmem:[%s3 + $0x278] sm:$0xff]
      %v1404 = vld [vmem:[%s3 + $0x280] sm:$0xff]
      %v1405 = vld [vmem:[%s3 + $0x288] sm:$0xff]
      %v1406 = vld [vmem:[%s3 + $0x290] sm:$0xff]
      %v1407 = vld [vmem:[%s3 + $0x298] sm:$0xff]
      %v1408 = vld [vmem:[%s3 + $0x2a0] sm:$0xff]
      %v1409 = vld [vmem:[%s3 + $0x2a8] sm:$0xff]
      %v1410 = vld [vmem:[%s3 + $0x2b0] sm:$0xff]
      %v1411 = vld [vmem:[%s3 + $0x2b8] sm:$0xff]
      %v1412 = vld [vmem:[%s3 + $0x2c0] sm:$0xff]
      %v1413 = vld [vmem:[%s3 + $0x2c8] sm:$0xff]
      %v1414 = vld [vmem:[%s3 + $0x2d0] sm:$0xff]
      %v1415 = vld [vmem:[%s3 + $0x2d8] sm:$0xff]
      %v1416 = vld [vmem:[%s3 + $0x2e0] sm:$0xff]
      %v1417 = vld [vmem:[%s3 + $0x2e8] sm:$0xff]
      %v1418 = vld [vmem:[%s3 + $0x2f0] sm:$0xff]
      %v1419 = vld [vmem:[%s3 + $0x2f8] sm:$0xff]
      %v1420 = vld [vmem:[%s3 + $0x300] sm:$0xff]
      %v1421 = vld [vmem:[%s3 + $0x308] sm:$0xff]
      %v1422 = vld [vmem:[%s3 + $0x310] sm:$0xff]
      %v1423 = vld [vmem:[%s3 + $0x318] sm:$0xff]
      %v1424 = vld [vmem:[%s3 + $0x320] sm:$0xff]
      %v1425 = vld [vmem:[%s3 + $0x328] sm:$0xff]
      %v1426 = vld [vmem:[%s3 + $0x330] sm:$0xff]
      %v1427 = vld [vmem:[%s3 + $0x338] sm:$0xff]
      %v1428 = vld [vmem:[%s3 + $0x340] sm:$0xff]
      %v1429 = vld [vmem:[%s3 + $0x348] sm:$0xff]
      %v1430 = vld [vmem:[%s3 + $0x350] sm:$0xff]
      %v1431 = vld [vmem:[%s3 + $0x358] sm:$0xff]
      %v1432 = vld [vmem:[%s3 + $0x360] sm:$0xff]
      %v1433 = vld [vmem:[%s3 + $0x368] sm:$0xff]
      %v1434 = vld [vmem:[%s3 + $0x370] sm:$0xff]
      %v1435 = vld [vmem:[%s3 + $0x378] sm:$0xff]
      %v1436 = vld [vmem:[%s3 + $0x380] sm:$0xff]
      %v1437 = vld [vmem:[%s3 + $0x388] sm:$0xff]
      %v1438 = vld [vmem:[%s3 + $0x390] sm:$0xff]
      %v1439 = vld [vmem:[%s3 + $0x398] sm:$0xff]
      %v1440 = vld [vmem:[%s3 + $0x3a0] sm:$0xff]
      %v1441 = vld [vmem:[%s3 + $0x3a8] sm:$0xff]
      %v1442 = vld [vmem:[%s3 + $0x3b0] sm:$0xff]
      %v1443 = vld [vmem:[%s3 + $0x3b8] sm:$0xff]
      %v1444 = vld [vmem:[%s3 + $0x3c0] sm:$0xff]
      %v1445 = vld [vmem:[%s3 + $0x3c8] sm:$0xff]
      %v1446 = vld [vmem:[%s3 + $0x3d0] sm:$0xff]
      %v1447 = vld [vmem:[%s3 + $0x3d8] sm:$0xff]
      %v1448 = vld [vmem:[%s3 + $0x3e0] sm:$0xff]
      %v1449 = vld [vmem:[%s3 + $0x3e8] sm:$0xff]
      %v1450 = vld [vmem:[%s3 + $0x3f0] sm:$0xff]
      %v1451 = vld [vmem:[%s3 + $0x3f8] sm:$0xff]
      %v1452 = vld [vmem:[%s3 + $0x400] sm:$0xff]
      %v1453 = vld [vmem:[%s3 + $0x408] sm:$0xff]
      %v1454 = vld [vmem:[%s3 + $0x410] sm:$0xff]
      %v1455 = vld [vmem:[%s3 + $0x418] sm:$0xff]
      %v1456 = vld [vmem:[%s3 + $0x420] sm:$0xff]
      %v1457 = vld [vmem:[%s3 + $0x428] sm:$0xff]
      %v1458 = vld [vmem:[%s3 + $0x430] sm:$0xff]
      %v1459 = vld [vmem:[%s3 + $0x438] sm:$0xff]
      %v1460 = vld [vmem:[%s3 + $0x440] sm:$0xff]
      %v1461 = vld [vmem:[%s3 + $0x448] sm:$0xff]
      %v1462 = vld [vmem:[%s3 + $0x450] sm:$0xff]
      %v1463 = vld [vmem:[%s3 + $0x458] sm:$0xff]
      %v1464 = vld [vmem:[%s3 + $0x460] sm:$0xff]
      %v1465 = vld [vmem:[%s3 + $0x468] sm:$0xff]
      %v1466 = vld [vmem:[%s3 + $0x470] sm:$0xff]
      %v1467 = vld [vmem:[%s3 + $0x478] sm:$0xff]
      %1468 = vmatpush.msra.mxu0 %v1339
      %1469 = vmatpush.msra.mxu0 %v1338
      %1470 = vmatpush.msra.mxu0 %v1337
      %1471 = vmatpush.msra.mxu0 %v1336
      %1472 = vmatpush.msra.mxu0 %v1335
      %1473 = vmatpush.msra.mxu0 %v1334
      %1474 = vmatpush.msra.mxu0 %v1333
      %1475 = vmatpush.msra.mxu0 %v1332
      %1476 = vmatpush.msra.mxu0 %v1331
      %1477 = vmatpush.msra.mxu0 %v1330
      %1478 = vmatpush.msra.mxu0 %v1329
      %1479 = vmatpush.msra.mxu0 %v1328
      %1480 = vmatpush.msra.mxu0 %v1327
      %1481 = vmatpush.msra.mxu0 %v1326
      %1482 = vmatpush.msra.mxu0 %v1325
      %1483 = vmatpush.msra.mxu0 %v1324
      %1484 = vmatmul.f32.gmra.mxu0 %v1036
      %v1485 = vpop.f32.mrf.mxu0
      %v1486 = vadd.f32 0.0, %v1485
      %1487 = vmatmul.f32.gmra.mxu0 %v1045
      %v1488 = vpop.f32.mrf.mxu0
      %v1489 = vadd.f32 0.0, %v1488
      %1490 = vmatmul.f32.gmra.mxu0 %v1054
      %v1491 = vpop.f32.mrf.mxu0
      %v1492 = vadd.f32 0.0, %v1491
      %1493 = vmatmul.f32.gmra.mxu0 %v1063
      %v1494 = vpop.f32.mrf.mxu0
      %v1495 = vadd.f32 0.0, %v1494
      %1496 = vmatmul.f32.gmra.mxu0 %v1072
      %v1497 = vpop.f32.mrf.mxu0
      %v1498 = vadd.f32 0.0, %v1497
      %1499 = vmatmul.f32.gmra.mxu0 %v1081
      %v1500 = vpop.f32.mrf.mxu0
      %v1501 = vadd.f32 0.0, %v1500
      %1502 = vmatmul.f32.gmra.mxu0 %v1090
      %v1503 = vpop.f32.mrf.mxu0
      %v1504 = vadd.f32 0.0, %v1503
      %1505 = vmatmul.f32.gmra.mxu0 %v1099
      %v1506 = vpop.f32.mrf.mxu0
      %v1507 = vadd.f32 0.0, %v1506
      %1508 = vmatmul.f32.gmra.mxu0 %v1108
      %v1509 = vpop.f32.mrf.mxu0
      %v1510 = vadd.f32 0.0, %v1509
      %1511 = vmatmul.f32.gmra.mxu0 %v1117
      %v1512 = vpop.f32.mrf.mxu0
      %v1513 = vadd.f32 0.0, %v1512
      %1514 = vmatmul.f32.gmra.mxu0 %v1126
      %v1515 = vpop.f32.mrf.mxu0
      %v1516 = vadd.f32 0.0, %v1515
      %1517 = vmatmul.f32.gmra.mxu0 %v1135
      %v1518 = vpop.f32.mrf.mxu0
      %v1519 = vadd.f32 0.0, %v1518
      %1520 = vmatmul.f32.gmra.mxu0 %v1144
      %v1521 = vpop.f32.mrf.mxu0
      %v1522 = vadd.f32 0.0, %v1521
      %1523 = vmatmul.f32.gmra.mxu0 %v1153
      %v1524 = vpop.f32.mrf.mxu0
      %v1525 = vadd.f32 0.0, %v1524
      %1526 = vmatmul.f32.gmra.mxu0 %v1162
      %v1527 = vpop.f32.mrf.mxu0
      %v1528 = vadd.f32 0.0, %v1527
      %1529 = vmatmul.f32.gmra.mxu0 %v1171
      %v1530 = vpop.f32.mrf.mxu0
      %v1531 = vadd.f32 0.0, %v1530
      %1532 = vmatmul.f32.gmra.mxu0 %v1180
      %v1533 = vpop.f32.mrf.mxu0
      %v1534 = vadd.f32 0.0, %v1533
      %1535 = vmatmul.f32.gmra.mxu0 %v1189
      %v1536 = vpop.f32.mrf.mxu0
      %v1537 = vadd.f32 0.0, %v1536
      %1538 = vmatmul.f32.gmra.mxu0 %v1198
      %v1539 = vpop.f32.mrf.mxu0
      %v1540 = vadd.f32 0.0, %v1539
      %1541 = vmatmul.f32.gmra.mxu0 %v1207
      %v1542 = vpop.f32.mrf.mxu0
      %v1543 = vadd.f32 0.0, %v1542
      %1544 = vmatmul.f32.gmra.mxu0 %v1216
      %v1545 = vpop.f32.mrf.mxu0
      %v1546 = vadd.f32 0.0, %v1545
      %1547 = vmatmul.f32.gmra.mxu0 %v1225
      %v1548 = vpop.f32.mrf.mxu0
      %v1549 = vadd.f32 0.0, %v1548
      %1550 = vmatmul.f32.gmra.mxu0 %v1234
      %v1551 = vpop.f32.mrf.mxu0
      %v1552 = vadd.f32 0.0, %v1551
      %1553 = vmatmul.f32.gmra.mxu0 %v1243
      %v1554 = vpop.f32.mrf.mxu0
      %v1555 = vadd.f32 0.0, %v1554
      %1556 = vmatmul.f32.gmra.mxu0 %v1252
      %v1557 = vpop.f32.mrf.mxu0
      %v1558 = vadd.f32 0.0, %v1557
      %1559 = vmatmul.f32.gmra.mxu0 %v1261
      %v1560 = vpop.f32.mrf.mxu0
      %v1561 = vadd.f32 0.0, %v1560
      %1562 = vmatmul.f32.gmra.mxu0 %v1270
      %v1563 = vpop.f32.mrf.mxu0
      %v1564 = vadd.f32 0.0, %v1563
      %1565 = vmatmul.f32.gmra.mxu0 %v1279
      %v1566 = vpop.f32.mrf.mxu0
      %v1567 = vadd.f32 0.0, %v1566
      %1568 = vmatmul.f32.gmra.mxu0 %v1288
      %v1569 = vpop.f32.mrf.mxu0
      %v1570 = vadd.f32 0.0, %v1569
      %1571 = vmatmul.f32.gmra.mxu0 %v1297
      %v1572 = vpop.f32.mrf.mxu0
      %v1573 = vadd.f32 0.0, %v1572
      %1574 = vmatmul.f32.gmra.mxu0 %v1306
      %v1575 = vpop.f32.mrf.mxu0
      %v1576 = vadd.f32 0.0, %v1575
      %1577 = vmatmul.f32.gmra.mxu0 %v1315
      %v1578 = vpop.f32.mrf.mxu0
      %v1579 = vadd.f32 0.0, %v1578
      %1580 = vdwg.mxu0
      %1581 = vmatpush.msra.mxu0 %v1355
      %1582 = vmatpush.msra.mxu0 %v1354
      %1583 = vmatpush.msra.mxu0 %v1353
      %1584 = vmatpush.msra.mxu0 %v1352
      %1585 = vmatpush.msra.mxu0 %v1351
      %1586 = vmatpush.msra.mxu0 %v1350
      %1587 = vmatpush.msra.mxu0 %v1349
      %1588 = vmatpush.msra.mxu0 %v1348
      %1589 = vmatpush.msra.mxu0 %v1347
      %1590 = vmatpush.msra.mxu0 %v1346
      %1591 = vmatpush.msra.mxu0 %v1345
      %1592 = vmatpush.msra.mxu0 %v1344
      %1593 = vmatpush.msra.mxu0 %v1343
      %1594 = vmatpush.msra.mxu0 %v1342
      %1595 = vmatpush.msra.mxu0 %v1341
      %1596 = vmatpush.msra.mxu0 %v1340
      %1597 = vmatmul.f32.gmra.mxu0 %v1037
      %v1598 = vpop.f32.mrf.mxu0
      %v1599 = vadd.f32 %v1486, %v1598
      %1600 = vmatmul.f32.gmra.mxu0 %v1046
      %v1601 = vpop.f32.mrf.mxu0
      %v1602 = vadd.f32 %v1489, %v1601
      %1603 = vmatmul.f32.gmra.mxu0 %v1055
      %v1604 = vpop.f32.mrf.mxu0
      %v1605 = vadd.f32 %v1492, %v1604
      %1606 = vmatmul.f32.gmra.mxu0 %v1064
      %v1607 = vpop.f32.mrf.mxu0
      %v1608 = vadd.f32 %v1495, %v1607
      %1609 = vmatmul.f32.gmra.mxu0 %v1073
      %v1610 = vpop.f32.mrf.mxu0
      %v1611 = vadd.f32 %v1498, %v1610
      %1612 = vmatmul.f32.gmra.mxu0 %v1082
      %v1613 = vpop.f32.mrf.mxu0
      %v1614 = vadd.f32 %v1501, %v1613
      %1615 = vmatmul.f32.gmra.mxu0 %v1091
      %v1616 = vpop.f32.mrf.mxu0
      %v1617 = vadd.f32 %v1504, %v1616
      %1618 = vmatmul.f32.gmra.mxu0 %v1100
      %v1619 = vpop.f32.mrf.mxu0
      %v1620 = vadd.f32 %v1507, %v1619
      %1621 = vmatmul.f32.gmra.mxu0 %v1109
      %v1622 = vpop.f32.mrf.mxu0
      %v1623 = vadd.f32 %v1510, %v1622
      %1624 = vmatmul.f32.gmra.mxu0 %v1118
      %v1625 = vpop.f32.mrf.mxu0
      %v1626 = vadd.f32 %v1513, %v1625
      %1627 = vmatmul.f32.gmra.mxu0 %v1127
      %v1628 = vpop.f32.mrf.mxu0
      %v1629 = vadd.f32 %v1516, %v1628
      %1630 = vmatmul.f32.gmra.mxu0 %v1136
      %v1631 = vpop.f32.mrf.mxu0
      %v1632 = vadd.f32 %v1519, %v1631
      %1633 = vmatmul.f32.gmra.mxu0 %v1145
      %v1634 = vpop.f32.mrf.mxu0
      %v1635 = vadd.f32 %v1522, %v1634
      %1636 = vmatmul.f32.gmra.mxu0 %v1154
      %v1637 = vpop.f32.mrf.mxu0
      %v1638 = vadd.f32 %v1525, %v1637
      %1639 = vmatmul.f32.gmra.mxu0 %v1163
      %v1640 = vpop.f32.mrf.mxu0
      %v1641 = vadd.f32 %v1528, %v1640
      %1642 = vmatmul.f32.gmra.mxu0 %v1172
      %v1643 = vpop.f32.mrf.mxu0
      %v1644 = vadd.f32 %v1531, %v1643
      %1645 = vmatmul.f32.gmra.mxu0 %v1181
      %v1646 = vpop.f32.mrf.mxu0
      %v1647 = vadd.f32 %v1534, %v1646
      %1648 = vmatmul.f32.gmra.mxu0 %v1190
      %v1649 = vpop.f32.mrf.mxu0
      %v1650 = vadd.f32 %v1537, %v1649
      %1651 = vmatmul.f32.gmra.mxu0 %v1199
      %v1652 = vpop.f32.mrf.mxu0
      %v1653 = vadd.f32 %v1540, %v1652
      %1654 = vmatmul.f32.gmra.mxu0 %v1208
      %v1655 = vpop.f32.mrf.mxu0
      %v1656 = vadd.f32 %v1543, %v1655
      %1657 = vmatmul.f32.gmra.mxu0 %v1217
      %v1658 = vpop.f32.mrf.mxu0
      %v1659 = vadd.f32 %v1546, %v1658
      %1660 = vmatmul.f32.gmra.mxu0 %v1226
      %v1661 = vpop.f32.mrf.mxu0
      %v1662 = vadd.f32 %v1549, %v1661
      %1663 = vmatmul.f32.gmra.mxu0 %v1235
      %v1664 = vpop.f32.mrf.mxu0
      %v1665 = vadd.f32 %v1552, %v1664
      %1666 = vmatmul.f32.gmra.mxu0 %v1244
      %v1667 = vpop.f32.mrf.mxu0
      %v1668 = vadd.f32 %v1555, %v1667
      %1669 = vmatmul.f32.gmra.mxu0 %v1253
      %v1670 = vpop.f32.mrf.mxu0
      %v1671 = vadd.f32 %v1558, %v1670
      %1672 = vmatmul.f32.gmra.mxu0 %v1262
      %v1673 = vpop.f32.mrf.mxu0
      %v1674 = vadd.f32 %v1561, %v1673
      %1675 = vmatmul.f32.gmra.mxu0 %v1271
      %v1676 = vpop.f32.mrf.mxu0
      %v1677 = vadd.f32 %v1564, %v1676
      %1678 = vmatmul.f32.gmra.mxu0 %v1280
      %v1679 = vpop.f32.mrf.mxu0
      %v1680 = vadd.f32 %v1567, %v1679
      %1681 = vmatmul.f32.gmra.mxu0 %v1289
      %v1682 = vpop.f32.mrf.mxu0
      %v1683 = vadd.f32 %v1570, %v1682
      %1684 = vmatmul.f32.gmra.mxu0 %v1298
      %v1685 = vpop.f32.mrf.mxu0
      %v1686 = vadd.f32 %v1573, %v1685
      %1687 = vmatmul.f32.gmra.mxu0 %v1307
      %v1688 = vpop.f32.mrf.mxu0
      %v1689 = vadd.f32 %v1576, %v1688
      %1690 = vmatmul.f32.gmra.mxu0 %v1316
      %v1691 = vpop.f32.mrf.mxu0
      %v1692 = vadd.f32 %v1579, %v1691
      %1693 = vdwg.mxu0
      %1694 = vmatpush.msra.mxu0 %v1371
      %1695 = vmatpush.msra.mxu0 %v1370
      %1696 = vmatpush.msra.mxu0 %v1369
      %1697 = vmatpush.msra.mxu0 %v1368
      %1698 = vmatpush.msra.mxu0 %v1367
      %1699 = vmatpush.msra.mxu0 %v1366
      %1700 = vmatpush.msra.mxu0 %v1365
      %1701 = vmatpush.msra.mxu0 %v1364
      %1702 = vmatpush.msra.mxu0 %v1363
      %1703 = vmatpush.msra.mxu0 %v1362
      %1704 = vmatpush.msra.mxu0 %v1361
      %1705 = vmatpush.msra.mxu0 %v1360
      %1706 = vmatpush.msra.mxu0 %v1359
      %1707 = vmatpush.msra.mxu0 %v1358
      %1708 = vmatpush.msra.mxu0 %v1357
      %1709 = vmatpush.msra.mxu0 %v1356
      %1710 = vmatmul.f32.gmra.mxu0 %v1038
      %v1711 = vpop.f32.mrf.mxu0
      %v1712 = vadd.f32 %v1599, %v1711
      %1713 = vmatmul.f32.gmra.mxu0 %v1047
      %v1714 = vpop.f32.mrf.mxu0
      %v1715 = vadd.f32 %v1602, %v1714
      %1716 = vmatmul.f32.gmra.mxu0 %v1056
      %v1717 = vpop.f32.mrf.mxu0
      %v1718 = vadd.f32 %v1605, %v1717
      %1719 = vmatmul.f32.gmra.mxu0 %v1065
      %v1720 = vpop.f32.mrf.mxu0
      %v1721 = vadd.f32 %v1608, %v1720
      %1722 = vmatmul.f32.gmra.mxu0 %v1074
      %v1723 = vpop.f32.mrf.mxu0
      %v1724 = vadd.f32 %v1611, %v1723
      %1725 = vmatmul.f32.gmra.mxu0 %v1083
      %v1726 = vpop.f32.mrf.mxu0
      %v1727 = vadd.f32 %v1614, %v1726
      %1728 = vmatmul.f32.gmra.mxu0 %v1092
      %v1729 = vpop.f32.mrf.mxu0
      %v1730 = vadd.f32 %v1617, %v1729
      %1731 = vmatmul.f32.gmra.mxu0 %v1101
      %v1732 = vpop.f32.mrf.mxu0
      %v1733 = vadd.f32 %v1620, %v1732
      %1734 = vmatmul.f32.gmra.mxu0 %v1110
      %v1735 = vpop.f32.mrf.mxu0
      %v1736 = vadd.f32 %v1623, %v1735
      %1737 = vmatmul.f32.gmra.mxu0 %v1119
      %v1738 = vpop.f32.mrf.mxu0
      %v1739 = vadd.f32 %v1626, %v1738
      %1740 = vmatmul.f32.gmra.mxu0 %v1128
      %v1741 = vpop.f32.mrf.mxu0
      %v1742 = vadd.f32 %v1629, %v1741
      %1743 = vmatmul.f32.gmra.mxu0 %v1137
      %v1744 = vpop.f32.mrf.mxu0
      %v1745 = vadd.f32 %v1632, %v1744
      %1746 = vmatmul.f32.gmra.mxu0 %v1146
      %v1747 = vpop.f32.mrf.mxu0
      %v1748 = vadd.f32 %v1635, %v1747
      %1749 = vmatmul.f32.gmra.mxu0 %v1155
      %v1750 = vpop.f32.mrf.mxu0
      %v1751 = vadd.f32 %v1638, %v1750
      %1752 = vmatmul.f32.gmra.mxu0 %v1164
      %v1753 = vpop.f32.mrf.mxu0
      %v1754 = vadd.f32 %v1641, %v1753
      %1755 = vmatmul.f32.gmra.mxu0 %v1173
      %v1756 = vpop.f32.mrf.mxu0
      %v1757 = vadd.f32 %v1644, %v1756
      %1758 = vmatmul.f32.gmra.mxu0 %v1182
      %v1759 = vpop.f32.mrf.mxu0
      %v1760 = vadd.f32 %v1647, %v1759
      %1761 = vmatmul.f32.gmra.mxu0 %v1191
      %v1762 = vpop.f32.mrf.mxu0
      %v1763 = vadd.f32 %v1650, %v1762
      %1764 = vmatmul.f32.gmra.mxu0 %v1200
      %v1765 = vpop.f32.mrf.mxu0
      %v1766 = vadd.f32 %v1653, %v1765
      %1767 = vmatmul.f32.gmra.mxu0 %v1209
      %v1768 = vpop.f32.mrf.mxu0
      %v1769 = vadd.f32 %v1656, %v1768
      %1770 = vmatmul.f32.gmra.mxu0 %v1218
      %v1771 = vpop.f32.mrf.mxu0
      %v1772 = vadd.f32 %v1659, %v1771
      %1773 = vmatmul.f32.gmra.mxu0 %v1227
      %v1774 = vpop.f32.mrf.mxu0
      %v1775 = vadd.f32 %v1662, %v1774
      %1776 = vmatmul.f32.gmra.mxu0 %v1236
      %v1777 = vpop.f32.mrf.mxu0
      %v1778 = vadd.f32 %v1665, %v1777
      %1779 = vmatmul.f32.gmra.mxu0 %v1245
      %v1780 = vpop.f32.mrf.mxu0
      %v1781 = vadd.f32 %v1668, %v1780
      %1782 = vmatmul.f32.gmra.mxu0 %v1254
      %v1783 = vpop.f32.mrf.mxu0
      %v1784 = vadd.f32 %v1671, %v1783
      %1785 = vmatmul.f32.gmra.mxu0 %v1263
      %v1786 = vpop.f32.mrf.mxu0
      %v1787 = vadd.f32 %v1674, %v1786
      %1788 = vmatmul.f32.gmra.mxu0 %v1272
      %v1789 = vpop.f32.mrf.mxu0
      %v1790 = vadd.f32 %v1677, %v1789
      %1791 = vmatmul.f32.gmra.mxu0 %v1281
      %v1792 = vpop.f32.mrf.mxu0
      %v1793 = vadd.f32 %v1680, %v1792
      %1794 = vmatmul.f32.gmra.mxu0 %v1290
      %v1795 = vpop.f32.mrf.mxu0
      %v1796 = vadd.f32 %v1683, %v1795
      %1797 = vmatmul.f32.gmra.mxu0 %v1299
      %v1798 = vpop.f32.mrf.mxu0
      %v1799 = vadd.f32 %v1686, %v1798
      %1800 = vmatmul.f32.gmra.mxu0 %v1308
      %v1801 = vpop.f32.mrf.mxu0
      %v1802 = vadd.f32 %v1689, %v1801
      %1803 = vmatmul.f32.gmra.mxu0 %v1317
      %v1804 = vpop.f32.mrf.mxu0
      %v1805 = vadd.f32 %v1692, %v1804
      %1806 = vdwg.mxu0
      %1807 = vmatpush.msra.mxu0 %v1387
      %1808 = vmatpush.msra.mxu0 %v1386
      %1809 = vmatpush.msra.mxu0 %v1385
      %1810 = vmatpush.msra.mxu0 %v1384
      %1811 = vmatpush.msra.mxu0 %v1383
      %1812 = vmatpush.msra.mxu0 %v1382
      %1813 = vmatpush.msra.mxu0 %v1381
      %1814 = vmatpush.msra.mxu0 %v1380
      %1815 = vmatpush.msra.mxu0 %v1379
      %1816 = vmatpush.msra.mxu0 %v1378
      %1817 = vmatpush.msra.mxu0 %v1377
      %1818 = vmatpush.msra.mxu0 %v1376
      %1819 = vmatpush.msra.mxu0 %v1375
      %1820 = vmatpush.msra.mxu0 %v1374
      %1821 = vmatpush.msra.mxu0 %v1373
      %1822 = vmatpush.msra.mxu0 %v1372
      %1823 = vmatmul.f32.gmra.mxu0 %v1039
      %v1824 = vpop.f32.mrf.mxu0
      %v1825 = vadd.f32 %v1712, %v1824
      %1826 = vmatmul.f32.gmra.mxu0 %v1048
      %v1827 = vpop.f32.mrf.mxu0
      %v1828 = vadd.f32 %v1715, %v1827
      %1829 = vmatmul.f32.gmra.mxu0 %v1057
      %v1830 = vpop.f32.mrf.mxu0
      %v1831 = vadd.f32 %v1718, %v1830
      %1832 = vmatmul.f32.gmra.mxu0 %v1066
      %v1833 = vpop.f32.mrf.mxu0
      %v1834 = vadd.f32 %v1721, %v1833
      %1835 = vmatmul.f32.gmra.mxu0 %v1075
      %v1836 = vpop.f32.mrf.mxu0
      %v1837 = vadd.f32 %v1724, %v1836
      %1838 = vmatmul.f32.gmra.mxu0 %v1084
      %v1839 = vpop.f32.mrf.mxu0
      %v1840 = vadd.f32 %v1727, %v1839
      %1841 = vmatmul.f32.gmra.mxu0 %v1093
      %v1842 = vpop.f32.mrf.mxu0
      %v1843 = vadd.f32 %v1730, %v1842
      %1844 = vmatmul.f32.gmra.mxu0 %v1102
      %v1845 = vpop.f32.mrf.mxu0
      %v1846 = vadd.f32 %v1733, %v1845
      %1847 = vmatmul.f32.gmra.mxu0 %v1111
      %v1848 = vpop.f32.mrf.mxu0
      %v1849 = vadd.f32 %v1736, %v1848
      %1850 = vmatmul.f32.gmra.mxu0 %v1120
      %v1851 = vpop.f32.mrf.mxu0
      %v1852 = vadd.f32 %v1739, %v1851
      %1853 = vmatmul.f32.gmra.mxu0 %v1129
      %v1854 = vpop.f32.mrf.mxu0
      %v1855 = vadd.f32 %v1742, %v1854
      %1856 = vmatmul.f32.gmra.mxu0 %v1138
      %v1857 = vpop.f32.mrf.mxu0
      %v1858 = vadd.f32 %v1745, %v1857
      %1859 = vmatmul.f32.gmra.mxu0 %v1147
      %v1860 = vpop.f32.mrf.mxu0
      %v1861 = vadd.f32 %v1748, %v1860
      %1862 = vmatmul.f32.gmra.mxu0 %v1156
      %v1863 = vpop.f32.mrf.mxu0
      %v1864 = vadd.f32 %v1751, %v1863
      %1865 = vmatmul.f32.gmra.mxu0 %v1165
      %v1866 = vpop.f32.mrf.mxu0
      %v1867 = vadd.f32 %v1754, %v1866
      %1868 = vmatmul.f32.gmra.mxu0 %v1174
      %v1869 = vpop.f32.mrf.mxu0
      %v1870 = vadd.f32 %v1757, %v1869
      %1871 = vmatmul.f32.gmra.mxu0 %v1183
      %v1872 = vpop.f32.mrf.mxu0
      %v1873 = vadd.f32 %v1760, %v1872
      %1874 = vmatmul.f32.gmra.mxu0 %v1192
      %v1875 = vpop.f32.mrf.mxu0
      %v1876 = vadd.f32 %v1763, %v1875
      %1877 = vmatmul.f32.gmra.mxu0 %v1201
      %v1878 = vpop.f32.mrf.mxu0
      %v1879 = vadd.f32 %v1766, %v1878
      %1880 = vmatmul.f32.gmra.mxu0 %v1210
      %v1881 = vpop.f32.mrf.mxu0
      %v1882 = vadd.f32 %v1769, %v1881
      %1883 = vmatmul.f32.gmra.mxu0 %v1219
      %v1884 = vpop.f32.mrf.mxu0
      %v1885 = vadd.f32 %v1772, %v1884
      %1886 = vmatmul.f32.gmra.mxu0 %v1228
      %v1887 = vpop.f32.mrf.mxu0
      %v1888 = vadd.f32 %v1775, %v1887
      %1889 = vmatmul.f32.gmra.mxu0 %v1237
      %v1890 = vpop.f32.mrf.mxu0
      %v1891 = vadd.f32 %v1778, %v1890
      %1892 = vmatmul.f32.gmra.mxu0 %v1246
      %v1893 = vpop.f32.mrf.mxu0
      %v1894 = vadd.f32 %v1781, %v1893
      %1895 = vmatmul.f32.gmra.mxu0 %v1255
      %v1896 = vpop.f32.mrf.mxu0
      %v1897 = vadd.f32 %v1784, %v1896
      %1898 = vmatmul.f32.gmra.mxu0 %v1264
      %v1899 = vpop.f32.mrf.mxu0
      %v1900 = vadd.f32 %v1787, %v1899
      %1901 = vmatmul.f32.gmra.mxu0 %v1273
      %v1902 = vpop.f32.mrf.mxu0
      %v1903 = vadd.f32 %v1790, %v1902
      %1904 = vmatmul.f32.gmra.mxu0 %v1282
      %v1905 = vpop.f32.mrf.mxu0
      %v1906 = vadd.f32 %v1793, %v1905
      %1907 = vmatmul.f32.gmra.mxu0 %v1291
      %v1908 = vpop.f32.mrf.mxu0
      %v1909 = vadd.f32 %v1796, %v1908
      %1910 = vmatmul.f32.gmra.mxu0 %v1300
      %v1911 = vpop.f32.mrf.mxu0
      %v1912 = vadd.f32 %v1799, %v1911
      %1913 = vmatmul.f32.gmra.mxu0 %v1309
      %v1914 = vpop.f32.mrf.mxu0
      %v1915 = vadd.f32 %v1802, %v1914
      %1916 = vmatmul.f32.gmra.mxu0 %v1318
      %v1917 = vpop.f32.mrf.mxu0
      %v1918 = vadd.f32 %v1805, %v1917
      %1919 = vdwg.mxu0
      %1920 = vmatpush.msra.mxu0 %v1403
      %1921 = vmatpush.msra.mxu0 %v1402
      %1922 = vmatpush.msra.mxu0 %v1401
      %1923 = vmatpush.msra.mxu0 %v1400
      %1924 = vmatpush.msra.mxu0 %v1399
      %1925 = vmatpush.msra.mxu0 %v1398
      %1926 = vmatpush.msra.mxu0 %v1397
      %1927 = vmatpush.msra.mxu0 %v1396
      %1928 = vmatpush.msra.mxu0 %v1395
      %1929 = vmatpush.msra.mxu0 %v1394
      %1930 = vmatpush.msra.mxu0 %v1393
      %1931 = vmatpush.msra.mxu0 %v1392
      %1932 = vmatpush.msra.mxu0 %v1391
      %1933 = vmatpush.msra.mxu0 %v1390
      %1934 = vmatpush.msra.mxu0 %v1389
      %1935 = vmatpush.msra.mxu0 %v1388
      %1936 = vmatmul.f32.gmra.mxu0 %v1040
      %v1937 = vpop.f32.mrf.mxu0
      %v1938 = vadd.f32 %v1825, %v1937
      %1939 = vmatmul.f32.gmra.mxu0 %v1049
      %v1940 = vpop.f32.mrf.mxu0
      %v1941 = vadd.f32 %v1828, %v1940
      %1942 = vmatmul.f32.gmra.mxu0 %v1058
      %v1943 = vpop.f32.mrf.mxu0
      %v1944 = vadd.f32 %v1831, %v1943
      %1945 = vmatmul.f32.gmra.mxu0 %v1067
      %v1946 = vpop.f32.mrf.mxu0
      %v1947 = vadd.f32 %v1834, %v1946
      %1948 = vmatmul.f32.gmra.mxu0 %v1076
      %v1949 = vpop.f32.mrf.mxu0
      %v1950 = vadd.f32 %v1837, %v1949
      %1951 = vmatmul.f32.gmra.mxu0 %v1085
      %v1952 = vpop.f32.mrf.mxu0
      %v1953 = vadd.f32 %v1840, %v1952
      %1954 = vmatmul.f32.gmra.mxu0 %v1094
      %v1955 = vpop.f32.mrf.mxu0
      %v1956 = vadd.f32 %v1843, %v1955
      %1957 = vmatmul.f32.gmra.mxu0 %v1103
      %v1958 = vpop.f32.mrf.mxu0
      %v1959 = vadd.f32 %v1846, %v1958
      %1960 = vmatmul.f32.gmra.mxu0 %v1112
      %v1961 = vpop.f32.mrf.mxu0
      %v1962 = vadd.f32 %v1849, %v1961
      %1963 = vmatmul.f32.gmra.mxu0 %v1121
      %v1964 = vpop.f32.mrf.mxu0
      %v1965 = vadd.f32 %v1852, %v1964
      %1966 = vmatmul.f32.gmra.mxu0 %v1130
      %v1967 = vpop.f32.mrf.mxu0
      %v1968 = vadd.f32 %v1855, %v1967
      %1969 = vmatmul.f32.gmra.mxu0 %v1139
      %v1970 = vpop.f32.mrf.mxu0
      %v1971 = vadd.f32 %v1858, %v1970
      %1972 = vmatmul.f32.gmra.mxu0 %v1148
      %v1973 = vpop.f32.mrf.mxu0
      %v1974 = vadd.f32 %v1861, %v1973
      %1975 = vmatmul.f32.gmra.mxu0 %v1157
      %v1976 = vpop.f32.mrf.mxu0
      %v1977 = vadd.f32 %v1864, %v1976
      %1978 = vmatmul.f32.gmra.mxu0 %v1166
      %v1979 = vpop.f32.mrf.mxu0
      %v1980 = vadd.f32 %v1867, %v1979
      %1981 = vmatmul.f32.gmra.mxu0 %v1175
      %v1982 = vpop.f32.mrf.mxu0
      %v1983 = vadd.f32 %v1870, %v1982
      %1984 = vmatmul.f32.gmra.mxu0 %v1184
      %v1985 = vpop.f32.mrf.mxu0
      %v1986 = vadd.f32 %v1873, %v1985
      %1987 = vmatmul.f32.gmra.mxu0 %v1193
      %v1988 = vpop.f32.mrf.mxu0
      %v1989 = vadd.f32 %v1876, %v1988
      %1990 = vmatmul.f32.gmra.mxu0 %v1202
      %v1991 = vpop.f32.mrf.mxu0
      %v1992 = vadd.f32 %v1879, %v1991
      %1993 = vmatmul.f32.gmra.mxu0 %v1211
      %v1994 = vpop.f32.mrf.mxu0
      %v1995 = vadd.f32 %v1882, %v1994
      %1996 = vmatmul.f32.gmra.mxu0 %v1220
      %v1997 = vpop.f32.mrf.mxu0
      %v1998 = vadd.f32 %v1885, %v1997
      %1999 = vmatmul.f32.gmra.mxu0 %v1229
      %v2000 = vpop.f32.mrf.mxu0
      %v2001 = vadd.f32 %v1888, %v2000
      %2002 = vmatmul.f32.gmra.mxu0 %v1238
      %v2003 = vpop.f32.mrf.mxu0
      %v2004 = vadd.f32 %v1891, %v2003
      %2005 = vmatmul.f32.gmra.mxu0 %v1247
      %v2006 = vpop.f32.mrf.mxu0
      %v2007 = vadd.f32 %v1894, %v2006
      %2008 = vmatmul.f32.gmra.mxu0 %v1256
      %v2009 = vpop.f32.mrf.mxu0
      %v2010 = vadd.f32 %v1897, %v2009
      %2011 = vmatmul.f32.gmra.mxu0 %v1265
      %v2012 = vpop.f32.mrf.mxu0
      %v2013 = vadd.f32 %v1900, %v2012
      %2014 = vmatmul.f32.gmra.mxu0 %v1274
      %v2015 = vpop.f32.mrf.mxu0
      %v2016 = vadd.f32 %v1903, %v2015
      %2017 = vmatmul.f32.gmra.mxu0 %v1283
      %v2018 = vpop.f32.mrf.mxu0
      %v2019 = vadd.f32 %v1906, %v2018
      %2020 = vmatmul.f32.gmra.mxu0 %v1292
      %v2021 = vpop.f32.mrf.mxu0
      %v2022 = vadd.f32 %v1909, %v2021
      %2023 = vmatmul.f32.gmra.mxu0 %v1301
      %v2024 = vpop.f32.mrf.mxu0
      %v2025 = vadd.f32 %v1912, %v2024
      %2026 = vmatmul.f32.gmra.mxu0 %v1310
      %v2027 = vpop.f32.mrf.mxu0
      %v2028 = vadd.f32 %v1915, %v2027
      %2029 = vmatmul.f32.gmra.mxu0 %v1319
      %v2030 = vpop.f32.mrf.mxu0
      %v2031 = vadd.f32 %v1918, %v2030
      %2032 = vdwg.mxu0
      %2033 = vmatpush.msra.mxu0 %v1419
      %2034 = vmatpush.msra.mxu0 %v1418
      %2035 = vmatpush.msra.mxu0 %v1417
      %2036 = vmatpush.msra.mxu0 %v1416
      %2037 = vmatpush.msra.mxu0 %v1415
      %2038 = vmatpush.msra.mxu0 %v1414
      %2039 = vmatpush.msra.mxu0 %v1413
      %2040 = vmatpush.msra.mxu0 %v1412
      %2041 = vmatpush.msra.mxu0 %v1411
      %2042 = vmatpush.msra.mxu0 %v1410
      %2043 = vmatpush.msra.mxu0 %v1409
      %2044 = vmatpush.msra.mxu0 %v1408
      %2045 = vmatpush.msra.mxu0 %v1407
      %2046 = vmatpush.msra.mxu0 %v1406
      %2047 = vmatpush.msra.mxu0 %v1405
      %2048 = vmatpush.msra.mxu0 %v1404
      %2049 = vmatmul.f32.gmra.mxu0 %v1041
      %v2050 = vpop.f32.mrf.mxu0
      %v2051 = vadd.f32 %v1938, %v2050
      %2052 = vmatmul.f32.gmra.mxu0 %v1050
      %v2053 = vpop.f32.mrf.mxu0
      %v2054 = vadd.f32 %v1941, %v2053
      %2055 = vmatmul.f32.gmra.mxu0 %v1059
      %v2056 = vpop.f32.mrf.mxu0
      %v2057 = vadd.f32 %v1944, %v2056
      %2058 = vmatmul.f32.gmra.mxu0 %v1068
      %v2059 = vpop.f32.mrf.mxu0
      %v2060 = vadd.f32 %v1947, %v2059
      %2061 = vmatmul.f32.gmra.mxu0 %v1077
      %v2062 = vpop.f32.mrf.mxu0
      %v2063 = vadd.f32 %v1950, %v2062
      %2064 = vmatmul.f32.gmra.mxu0 %v1086
      %v2065 = vpop.f32.mrf.mxu0
      %v2066 = vadd.f32 %v1953, %v2065
      %2067 = vmatmul.f32.gmra.mxu0 %v1095
      %v2068 = vpop.f32.mrf.mxu0
      %v2069 = vadd.f32 %v1956, %v2068
      %2070 = vmatmul.f32.gmra.mxu0 %v1104
      %v2071 = vpop.f32.mrf.mxu0
      %v2072 = vadd.f32 %v1959, %v2071
      %2073 = vmatmul.f32.gmra.mxu0 %v1113
      %v2074 = vpop.f32.mrf.mxu0
      %v2075 = vadd.f32 %v1962, %v2074
      %2076 = vmatmul.f32.gmra.mxu0 %v1122
      %v2077 = vpop.f32.mrf.mxu0
      %v2078 = vadd.f32 %v1965, %v2077
      %2079 = vmatmul.f32.gmra.mxu0 %v1131
      %v2080 = vpop.f32.mrf.mxu0
      %v2081 = vadd.f32 %v1968, %v2080
      %2082 = vmatmul.f32.gmra.mxu0 %v1140
      %v2083 = vpop.f32.mrf.mxu0
      %v2084 = vadd.f32 %v1971, %v2083
      %2085 = vmatmul.f32.gmra.mxu0 %v1149
      %v2086 = vpop.f32.mrf.mxu0
      %v2087 = vadd.f32 %v1974, %v2086
      %2088 = vmatmul.f32.gmra.mxu0 %v1158
      %v2089 = vpop.f32.mrf.mxu0
      %v2090 = vadd.f32 %v1977, %v2089
      %2091 = vmatmul.f32.gmra.mxu0 %v1167
      %v2092 = vpop.f32.mrf.mxu0
      %v2093 = vadd.f32 %v1980, %v2092
      %2094 = vmatmul.f32.gmra.mxu0 %v1176
      %v2095 = vpop.f32.mrf.mxu0
      %v2096 = vadd.f32 %v1983, %v2095
      %2097 = vmatmul.f32.gmra.mxu0 %v1185
      %v2098 = vpop.f32.mrf.mxu0
      %v2099 = vadd.f32 %v1986, %v2098
      %2100 = vmatmul.f32.gmra.mxu0 %v1194
      %v2101 = vpop.f32.mrf.mxu0
      %v2102 = vadd.f32 %v1989, %v2101
      %2103 = vmatmul.f32.gmra.mxu0 %v1203
      %v2104 = vpop.f32.mrf.mxu0
      %v2105 = vadd.f32 %v1992, %v2104
      %2106 = vmatmul.f32.gmra.mxu0 %v1212
      %v2107 = vpop.f32.mrf.mxu0
      %v2108 = vadd.f32 %v1995, %v2107
      %2109 = vmatmul.f32.gmra.mxu0 %v1221
      %v2110 = vpop.f32.mrf.mxu0
      %v2111 = vadd.f32 %v1998, %v2110
      %2112 = vmatmul.f32.gmra.mxu0 %v1230
      %v2113 = vpop.f32.mrf.mxu0
      %v2114 = vadd.f32 %v2001, %v2113
      %2115 = vmatmul.f32.gmra.mxu0 %v1239
      %v2116 = vpop.f32.mrf.mxu0
      %v2117 = vadd.f32 %v2004, %v2116
      %2118 = vmatmul.f32.gmra.mxu0 %v1248
      %v2119 = vpop.f32.mrf.mxu0
      %v2120 = vadd.f32 %v2007, %v2119
      %2121 = vmatmul.f32.gmra.mxu0 %v1257
      %v2122 = vpop.f32.mrf.mxu0
      %v2123 = vadd.f32 %v2010, %v2122
      %2124 = vmatmul.f32.gmra.mxu0 %v1266
      %v2125 = vpop.f32.mrf.mxu0
      %v2126 = vadd.f32 %v2013, %v2125
      %2127 = vmatmul.f32.gmra.mxu0 %v1275
      %v2128 = vpop.f32.mrf.mxu0
      %v2129 = vadd.f32 %v2016, %v2128
      %2130 = vmatmul.f32.gmra.mxu0 %v1284
      %v2131 = vpop.f32.mrf.mxu0
      %v2132 = vadd.f32 %v2019, %v2131
      %2133 = vmatmul.f32.gmra.mxu0 %v1293
      %v2134 = vpop.f32.mrf.mxu0
      %v2135 = vadd.f32 %v2022, %v2134
      %2136 = vmatmul.f32.gmra.mxu0 %v1302
      %v2137 = vpop.f32.mrf.mxu0
      %v2138 = vadd.f32 %v2025, %v2137
      %2139 = vmatmul.f32.gmra.mxu0 %v1311
      %v2140 = vpop.f32.mrf.mxu0
      %v2141 = vadd.f32 %v2028, %v2140
      %2142 = vmatmul.f32.gmra.mxu0 %v1320
      %v2143 = vpop.f32.mrf.mxu0
      %v2144 = vadd.f32 %v2031, %v2143
      %2145 = vdwg.mxu0
      %2146 = vmatpush.msra.mxu0 %v1435
      %2147 = vmatpush.msra.mxu0 %v1434
      %2148 = vmatpush.msra.mxu0 %v1433
      %2149 = vmatpush.msra.mxu0 %v1432
      %2150 = vmatpush.msra.mxu0 %v1431
      %2151 = vmatpush.msra.mxu0 %v1430
      %2152 = vmatpush.msra.mxu0 %v1429
      %2153 = vmatpush.msra.mxu0 %v1428
      %2154 = vmatpush.msra.mxu0 %v1427
      %2155 = vmatpush.msra.mxu0 %v1426
      %2156 = vmatpush.msra.mxu0 %v1425
      %2157 = vmatpush.msra.mxu0 %v1424
      %2158 = vmatpush.msra.mxu0 %v1423
      %2159 = vmatpush.msra.mxu0 %v1422
      %2160 = vmatpush.msra.mxu0 %v1421
      %2161 = vmatpush.msra.mxu0 %v1420
      %2162 = vmatmul.f32.gmra.mxu0 %v1042
      %v2163 = vpop.f32.mrf.mxu0
      %v2164 = vadd.f32 %v2051, %v2163
      %2165 = vmatmul.f32.gmra.mxu0 %v1051
      %v2166 = vpop.f32.mrf.mxu0
      %v2167 = vadd.f32 %v2054, %v2166
      %2168 = vmatmul.f32.gmra.mxu0 %v1060
      %v2169 = vpop.f32.mrf.mxu0
      %v2170 = vadd.f32 %v2057, %v2169
      %2171 = vmatmul.f32.gmra.mxu0 %v1069
      %v2172 = vpop.f32.mrf.mxu0
      %v2173 = vadd.f32 %v2060, %v2172
      %2174 = vmatmul.f32.gmra.mxu0 %v1078
      %v2175 = vpop.f32.mrf.mxu0
      %v2176 = vadd.f32 %v2063, %v2175
      %2177 = vmatmul.f32.gmra.mxu0 %v1087
      %v2178 = vpop.f32.mrf.mxu0
      %v2179 = vadd.f32 %v2066, %v2178
      %2180 = vmatmul.f32.gmra.mxu0 %v1096
      %v2181 = vpop.f32.mrf.mxu0
      %v2182 = vadd.f32 %v2069, %v2181
      %2183 = vmatmul.f32.gmra.mxu0 %v1105
      %v2184 = vpop.f32.mrf.mxu0
      %v2185 = vadd.f32 %v2072, %v2184
      %2186 = vmatmul.f32.gmra.mxu0 %v1114
      %v2187 = vpop.f32.mrf.mxu0
      %v2188 = vadd.f32 %v2075, %v2187
      %2189 = vmatmul.f32.gmra.mxu0 %v1123
      %v2190 = vpop.f32.mrf.mxu0
      %v2191 = vadd.f32 %v2078, %v2190
      %2192 = vmatmul.f32.gmra.mxu0 %v1132
      %v2193 = vpop.f32.mrf.mxu0
      %v2194 = vadd.f32 %v2081, %v2193
      %2195 = vmatmul.f32.gmra.mxu0 %v1141
      %v2196 = vpop.f32.mrf.mxu0
      %v2197 = vadd.f32 %v2084, %v2196
      %2198 = vmatmul.f32.gmra.mxu0 %v1150
      %v2199 = vpop.f32.mrf.mxu0
      %v2200 = vadd.f32 %v2087, %v2199
      %2201 = vmatmul.f32.gmra.mxu0 %v1159
      %v2202 = vpop.f32.mrf.mxu0
      %v2203 = vadd.f32 %v2090, %v2202
      %2204 = vmatmul.f32.gmra.mxu0 %v1168
      %v2205 = vpop.f32.mrf.mxu0
      %v2206 = vadd.f32 %v2093, %v2205
      %2207 = vmatmul.f32.gmra.mxu0 %v1177
      %v2208 = vpop.f32.mrf.mxu0
      %v2209 = vadd.f32 %v2096, %v2208
      %2210 = vmatmul.f32.gmra.mxu0 %v1186
      %v2211 = vpop.f32.mrf.mxu0
      %v2212 = vadd.f32 %v2099, %v2211
      %2213 = vmatmul.f32.gmra.mxu0 %v1195
      %v2214 = vpop.f32.mrf.mxu0
      %v2215 = vadd.f32 %v2102, %v2214
      %2216 = vmatmul.f32.gmra.mxu0 %v1204
      %v2217 = vpop.f32.mrf.mxu0
      %v2218 = vadd.f32 %v2105, %v2217
      %2219 = vmatmul.f32.gmra.mxu0 %v1213
      %v2220 = vpop.f32.mrf.mxu0
      %v2221 = vadd.f32 %v2108, %v2220
      %2222 = vmatmul.f32.gmra.mxu0 %v1222
      %v2223 = vpop.f32.mrf.mxu0
      %v2224 = vadd.f32 %v2111, %v2223
      %2225 = vmatmul.f32.gmra.mxu0 %v1231
      %v2226 = vpop.f32.mrf.mxu0
      %v2227 = vadd.f32 %v2114, %v2226
      %2228 = vmatmul.f32.gmra.mxu0 %v1240
      %v2229 = vpop.f32.mrf.mxu0
      %v2230 = vadd.f32 %v2117, %v2229
      %2231 = vmatmul.f32.gmra.mxu0 %v1249
      %v2232 = vpop.f32.mrf.mxu0
      %v2233 = vadd.f32 %v2120, %v2232
      %2234 = vmatmul.f32.gmra.mxu0 %v1258
      %v2235 = vpop.f32.mrf.mxu0
      %v2236 = vadd.f32 %v2123, %v2235
      %2237 = vmatmul.f32.gmra.mxu0 %v1267
      %v2238 = vpop.f32.mrf.mxu0
      %v2239 = vadd.f32 %v2126, %v2238
      %2240 = vmatmul.f32.gmra.mxu0 %v1276
      %v2241 = vpop.f32.mrf.mxu0
      %v2242 = vadd.f32 %v2129, %v2241
      %2243 = vmatmul.f32.gmra.mxu0 %v1285
      %v2244 = vpop.f32.mrf.mxu0
      %v2245 = vadd.f32 %v2132, %v2244
      %2246 = vmatmul.f32.gmra.mxu0 %v1294
      %v2247 = vpop.f32.mrf.mxu0
      %v2248 = vadd.f32 %v2135, %v2247
      %2249 = vmatmul.f32.gmra.mxu0 %v1303
      %v2250 = vpop.f32.mrf.mxu0
      %v2251 = vadd.f32 %v2138, %v2250
      %2252 = vmatmul.f32.gmra.mxu0 %v1312
      %v2253 = vpop.f32.mrf.mxu0
      %v2254 = vadd.f32 %v2141, %v2253
      %2255 = vmatmul.f32.gmra.mxu0 %v1321
      %v2256 = vpop.f32.mrf.mxu0
      %v2257 = vadd.f32 %v2144, %v2256
      %2258 = vdwg.mxu0
      %2259 = vmatpush.msra.mxu0 %v1451
      %2260 = vmatpush.msra.mxu0 %v1450
      %2261 = vmatpush.msra.mxu0 %v1449
      %2262 = vmatpush.msra.mxu0 %v1448
      %2263 = vmatpush.msra.mxu0 %v1447
      %2264 = vmatpush.msra.mxu0 %v1446
      %2265 = vmatpush.msra.mxu0 %v1445
      %2266 = vmatpush.msra.mxu0 %v1444
      %2267 = vmatpush.msra.mxu0 %v1443
      %2268 = vmatpush.msra.mxu0 %v1442
      %2269 = vmatpush.msra.mxu0 %v1441
      %2270 = vmatpush.msra.mxu0 %v1440
      %2271 = vmatpush.msra.mxu0 %v1439
      %2272 = vmatpush.msra.mxu0 %v1438
      %2273 = vmatpush.msra.mxu0 %v1437
      %2274 = vmatpush.msra.mxu0 %v1436
      %2275 = vmatmul.f32.gmra.mxu0 %v1043
      %v2276 = vpop.f32.mrf.mxu0
      %v2277 = vadd.f32 %v2164, %v2276
      %2278 = vmatmul.f32.gmra.mxu0 %v1052
      %v2279 = vpop.f32.mrf.mxu0
      %v2280 = vadd.f32 %v2167, %v2279
      %2281 = vmatmul.f32.gmra.mxu0 %v1061
      %v2282 = vpop.f32.mrf.mxu0
      %v2283 = vadd.f32 %v2170, %v2282
      %2284 = vmatmul.f32.gmra.mxu0 %v1070
      %v2285 = vpop.f32.mrf.mxu0
      %v2286 = vadd.f32 %v2173, %v2285
      %2287 = vmatmul.f32.gmra.mxu0 %v1079
      %v2288 = vpop.f32.mrf.mxu0
      %v2289 = vadd.f32 %v2176, %v2288
      %2290 = vmatmul.f32.gmra.mxu0 %v1088
      %v2291 = vpop.f32.mrf.mxu0
      %v2292 = vadd.f32 %v2179, %v2291
      %2293 = vmatmul.f32.gmra.mxu0 %v1097
      %v2294 = vpop.f32.mrf.mxu0
      %v2295 = vadd.f32 %v2182, %v2294
      %2296 = vmatmul.f32.gmra.mxu0 %v1106
      %v2297 = vpop.f32.mrf.mxu0
      %v2298 = vadd.f32 %v2185, %v2297
      %2299 = vmatmul.f32.gmra.mxu0 %v1115
      %v2300 = vpop.f32.mrf.mxu0
      %v2301 = vadd.f32 %v2188, %v2300
      %2302 = vmatmul.f32.gmra.mxu0 %v1124
      %v2303 = vpop.f32.mrf.mxu0
      %v2304 = vadd.f32 %v2191, %v2303
      %2305 = vmatmul.f32.gmra.mxu0 %v1133
      %v2306 = vpop.f32.mrf.mxu0
      %v2307 = vadd.f32 %v2194, %v2306
      %2308 = vmatmul.f32.gmra.mxu0 %v1142
      %v2309 = vpop.f32.mrf.mxu0
      %v2310 = vadd.f32 %v2197, %v2309
      %2311 = vmatmul.f32.gmra.mxu0 %v1151
      %v2312 = vpop.f32.mrf.mxu0
      %v2313 = vadd.f32 %v2200, %v2312
      %2314 = vmatmul.f32.gmra.mxu0 %v1160
      %v2315 = vpop.f32.mrf.mxu0
      %v2316 = vadd.f32 %v2203, %v2315
      %2317 = vmatmul.f32.gmra.mxu0 %v1169
      %v2318 = vpop.f32.mrf.mxu0
      %v2319 = vadd.f32 %v2206, %v2318
      %2320 = vmatmul.f32.gmra.mxu0 %v1178
      %v2321 = vpop.f32.mrf.mxu0
      %v2322 = vadd.f32 %v2209, %v2321
      %2323 = vmatmul.f32.gmra.mxu0 %v1187
      %v2324 = vpop.f32.mrf.mxu0
      %v2325 = vadd.f32 %v2212, %v2324
      %2326 = vmatmul.f32.gmra.mxu0 %v1196
      %v2327 = vpop.f32.mrf.mxu0
      %v2328 = vadd.f32 %v2215, %v2327
      %2329 = vmatmul.f32.gmra.mxu0 %v1205
      %v2330 = vpop.f32.mrf.mxu0
      %v2331 = vadd.f32 %v2218, %v2330
      %2332 = vmatmul.f32.gmra.mxu0 %v1214
      %v2333 = vpop.f32.mrf.mxu0
      %v2334 = vadd.f32 %v2221, %v2333
      %2335 = vmatmul.f32.gmra.mxu0 %v1223
      %v2336 = vpop.f32.mrf.mxu0
      %v2337 = vadd.f32 %v2224, %v2336
      %2338 = vmatmul.f32.gmra.mxu0 %v1232
      %v2339 = vpop.f32.mrf.mxu0
      %v2340 = vadd.f32 %v2227, %v2339
      %2341 = vmatmul.f32.gmra.mxu0 %v1241
      %v2342 = vpop.f32.mrf.mxu0
      %v2343 = vadd.f32 %v2230, %v2342
      %2344 = vmatmul.f32.gmra.mxu0 %v1250
      %v2345 = vpop.f32.mrf.mxu0
      %v2346 = vadd.f32 %v2233, %v2345
      %2347 = vmatmul.f32.gmra.mxu0 %v1259
      %v2348 = vpop.f32.mrf.mxu0
      %v2349 = vadd.f32 %v2236, %v2348
      %2350 = vmatmul.f32.gmra.mxu0 %v1268
      %v2351 = vpop.f32.mrf.mxu0
      %v2352 = vadd.f32 %v2239, %v2351
      %2353 = vmatmul.f32.gmra.mxu0 %v1277
      %v2354 = vpop.f32.mrf.mxu0
      %v2355 = vadd.f32 %v2242, %v2354
      %2356 = vmatmul.f32.gmra.mxu0 %v1286
      %v2357 = vpop.f32.mrf.mxu0
      %v2358 = vadd.f32 %v2245, %v2357
      %2359 = vmatmul.f32.gmra.mxu0 %v1295
      %v2360 = vpop.f32.mrf.mxu0
      %v2361 = vadd.f32 %v2248, %v2360
      %2362 = vmatmul.f32.gmra.mxu0 %v1304
      %v2363 = vpop.f32.mrf.mxu0
      %v2364 = vadd.f32 %v2251, %v2363
      %2365 = vmatmul.f32.gmra.mxu0 %v1313
      %v2366 = vpop.f32.mrf.mxu0
      %v2367 = vadd.f32 %v2254, %v2366
      %2368 = vmatmul.f32.gmra.mxu0 %v1322
      %v2369 = vpop.f32.mrf.mxu0
      %v2370 = vadd.f32 %v2257, %v2369
      %2371 = vdwg.mxu0
      %2372 = vmatpush.msra.mxu0 %v1467
      %2373 = vmatpush.msra.mxu0 %v1466
      %2374 = vmatpush.msra.mxu0 %v1465
      %2375 = vmatpush.msra.mxu0 %v1464
      %2376 = vmatpush.msra.mxu0 %v1463
      %2377 = vmatpush.msra.mxu0 %v1462
      %2378 = vmatpush.msra.mxu0 %v1461
      %2379 = vmatpush.msra.mxu0 %v1460
      %2380 = vmatpush.msra.mxu0 %v1459
      %2381 = vmatpush.msra.mxu0 %v1458
      %2382 = vmatpush.msra.mxu0 %v1457
      %2383 = vmatpush.msra.mxu0 %v1456
      %2384 = vmatpush.msra.mxu0 %v1455
      %2385 = vmatpush.msra.mxu0 %v1454
      %2386 = vmatpush.msra.mxu0 %v1453
      %2387 = vmatpush.msra.mxu0 %v1452
      %2388 = vmatmul.f32.gmra.mxu0 %v1044
      %v2389 = vpop.f32.mrf.mxu0
      %v2390 = vadd.f32 %v2277, %v2389
      %2391 = vmatmul.f32.gmra.mxu0 %v1053
      %v2392 = vpop.f32.mrf.mxu0
      %v2393 = vadd.f32 %v2280, %v2392
      %2394 = vmatmul.f32.gmra.mxu0 %v1062
      %v2395 = vpop.f32.mrf.mxu0
      %v2396 = vadd.f32 %v2283, %v2395
      %2397 = vmatmul.f32.gmra.mxu0 %v1071
      %v2398 = vpop.f32.mrf.mxu0
      %v2399 = vadd.f32 %v2286, %v2398
      %2400 = vmatmul.f32.gmra.mxu0 %v1080
      %v2401 = vpop.f32.mrf.mxu0
      %v2402 = vadd.f32 %v2289, %v2401
      %2403 = vmatmul.f32.gmra.mxu0 %v1089
      %v2404 = vpop.f32.mrf.mxu0
      %v2405 = vadd.f32 %v2292, %v2404
      %2406 = vmatmul.f32.gmra.mxu0 %v1098
      %v2407 = vpop.f32.mrf.mxu0
      %v2408 = vadd.f32 %v2295, %v2407
      %2409 = vmatmul.f32.gmra.mxu0 %v1107
      %v2410 = vpop.f32.mrf.mxu0
      %v2411 = vadd.f32 %v2298, %v2410
      %2412 = vmatmul.f32.gmra.mxu0 %v1116
      %v2413 = vpop.f32.mrf.mxu0
      %v2414 = vadd.f32 %v2301, %v2413
      %2415 = vmatmul.f32.gmra.mxu0 %v1125
      %v2416 = vpop.f32.mrf.mxu0
      %v2417 = vadd.f32 %v2304, %v2416
      %2418 = vmatmul.f32.gmra.mxu0 %v1134
      %v2419 = vpop.f32.mrf.mxu0
      %v2420 = vadd.f32 %v2307, %v2419
      %2421 = vmatmul.f32.gmra.mxu0 %v1143
      %v2422 = vpop.f32.mrf.mxu0
      %v2423 = vadd.f32 %v2310, %v2422
      %2424 = vmatmul.f32.gmra.mxu0 %v1152
      %v2425 = vpop.f32.mrf.mxu0
      %v2426 = vadd.f32 %v2313, %v2425
      %2427 = vmatmul.f32.gmra.mxu0 %v1161
      %v2428 = vpop.f32.mrf.mxu0
      %v2429 = vadd.f32 %v2316, %v2428
      %2430 = vmatmul.f32.gmra.mxu0 %v1170
      %v2431 = vpop.f32.mrf.mxu0
      %v2432 = vadd.f32 %v2319, %v2431
      %2433 = vmatmul.f32.gmra.mxu0 %v1179
      %v2434 = vpop.f32.mrf.mxu0
      %v2435 = vadd.f32 %v2322, %v2434
      %2436 = vmatmul.f32.gmra.mxu0 %v1188
      %v2437 = vpop.f32.mrf.mxu0
      %v2438 = vadd.f32 %v2325, %v2437
      %2439 = vmatmul.f32.gmra.mxu0 %v1197
      %v2440 = vpop.f32.mrf.mxu0
      %v2441 = vadd.f32 %v2328, %v2440
      %2442 = vmatmul.f32.gmra.mxu0 %v1206
      %v2443 = vpop.f32.mrf.mxu0
      %v2444 = vadd.f32 %v2331, %v2443
      %2445 = vmatmul.f32.gmra.mxu0 %v1215
      %v2446 = vpop.f32.mrf.mxu0
      %v2447 = vadd.f32 %v2334, %v2446
      %2448 = vmatmul.f32.gmra.mxu0 %v1224
      %v2449 = vpop.f32.mrf.mxu0
      %v2450 = vadd.f32 %v2337, %v2449
      %2451 = vmatmul.f32.gmra.mxu0 %v1233
      %v2452 = vpop.f32.mrf.mxu0
      %v2453 = vadd.f32 %v2340, %v2452
      %2454 = vmatmul.f32.gmra.mxu0 %v1242
      %v2455 = vpop.f32.mrf.mxu0
      %v2456 = vadd.f32 %v2343, %v2455
      %2457 = vmatmul.f32.gmra.mxu0 %v1251
      %v2458 = vpop.f32.mrf.mxu0
      %v2459 = vadd.f32 %v2346, %v2458
      %2460 = vmatmul.f32.gmra.mxu0 %v1260
      %v2461 = vpop.f32.mrf.mxu0
      %v2462 = vadd.f32 %v2349, %v2461
      %2463 = vmatmul.f32.gmra.mxu0 %v1269
      %v2464 = vpop.f32.mrf.mxu0
      %v2465 = vadd.f32 %v2352, %v2464
      %2466 = vmatmul.f32.gmra.mxu0 %v1278
      %v2467 = vpop.f32.mrf.mxu0
      %v2468 = vadd.f32 %v2355, %v2467
      %2469 = vmatmul.f32.gmra.mxu0 %v1287
      %v2470 = vpop.f32.mrf.mxu0
      %v2471 = vadd.f32 %v2358, %v2470
      %2472 = vmatmul.f32.gmra.mxu0 %v1296
      %v2473 = vpop.f32.mrf.mxu0
      %v2474 = vadd.f32 %v2361, %v2473
      %2475 = vmatmul.f32.gmra.mxu0 %v1305
      %v2476 = vpop.f32.mrf.mxu0
      %v2477 = vadd.f32 %v2364, %v2476
      %2478 = vmatmul.f32.gmra.mxu0 %v1314
      %v2479 = vpop.f32.mrf.mxu0
      %v2480 = vadd.f32 %v2367, %v2479
      %2481 = vmatmul.f32.gmra.mxu0 %v1323
      %v2482 = vpop.f32.mrf.mxu0
      %v2483 = vadd.f32 %v2370, %v2482
      %2484 = vdwg.mxu0
      %2485 = vst [vmem:[%s231] sm:$0xff] %v2390
      %2486 = vst [vmem:[%s231 + $0x8] sm:$0xff] %v2393
      %2487 = vst [vmem:[%s231 + $0x10] sm:$0xff] %v2396
      %2488 = vst [vmem:[%s231 + $0x18] sm:$0xff] %v2399
      %2489 = vst [vmem:[%s231 + $0x20] sm:$0xff] %v2402
      %2490 = vst [vmem:[%s231 + $0x28] sm:$0xff] %v2405
      %2491 = vst [vmem:[%s231 + $0x30] sm:$0xff] %v2408
      %2492 = vst [vmem:[%s231 + $0x38] sm:$0xff] %v2411
      %2493 = vst [vmem:[%s231 + $0x40] sm:$0xff] %v2414
      %2494 = vst [vmem:[%s231 + $0x48] sm:$0xff] %v2417
      %2495 = vst [vmem:[%s231 + $0x50] sm:$0xff] %v2420
      %2496 = vst [vmem:[%s231 + $0x58] sm:$0xff] %v2423
      %2497 = vst [vmem:[%s231 + $0x60] sm:$0xff] %v2426
      %2498 = vst [vmem:[%s231 + $0x68] sm:$0xff] %v2429
      %2499 = vst [vmem:[%s231 + $0x70] sm:$0xff] %v2432
      %2500 = vst [vmem:[%s231 + $0x78] sm:$0xff] %v2435
      %2501 = vst [vmem:[%s231 + $0x80] sm:$0xff] %v2438
      %2502 = vst [vmem:[%s231 + $0x88] sm:$0xff] %v2441
      %2503 = vst [vmem:[%s231 + $0x90] sm:$0xff] %v2444
      %2504 = vst [vmem:[%s231 + $0x98] sm:$0xff] %v2447
      %2505 = vst [vmem:[%s231 + $0xa0] sm:$0xff] %v2450
      %2506 = vst [vmem:[%s231 + $0xa8] sm:$0xff] %v2453
      %2507 = vst [vmem:[%s231 + $0xb0] sm:$0xff] %v2456
      %2508 = vst [vmem:[%s231 + $0xb8] sm:$0xff] %v2459
      %2509 = vst [vmem:[%s231 + $0xc0] sm:$0xff] %v2462
      %2510 = vst [vmem:[%s231 + $0xc8] sm:$0xff] %v2465
      %2511 = vst [vmem:[%s231 + $0xd0] sm:$0xff] %v2468
      %2512 = vst [vmem:[%s231 + $0xd8] sm:$0xff] %v2471
      %2513 = vst [vmem:[%s231 + $0xe0] sm:$0xff] %v2474
      %2514 = vst [vmem:[%s231 + $0xe8] sm:$0xff] %v2477
      %2515 = vst [vmem:[%s231 + $0xf0] sm:$0xff] %v2480
      %2516 = vst [vmem:[%s231 + $0xf8] sm:$0xff] %v2483
      %v2517 = vadd.f32 %v2390, %v2393
      %v2518 = vadd.f32 %v2517, %v2396
      %v2519 = vadd.f32 %v2518, %v2399
      %v2520 = vadd.f32 %v2519, %v2402
      %v2521 = vadd.f32 %v2520, %v2405
      %v2522 = vadd.f32 %v2521, %v2408
      %v2523 = vadd.f32 %v2522, %v2411
      %v2524 = vadd.f32 %v2523, %v2414
      %v2525 = vadd.f32 %v2524, %v2417
      %v2526 = vadd.f32 %v2525, %v2420
      %v2527 = vadd.f32 %v2526, %v2423
      %v2528 = vadd.f32 %v2527, %v2426
      %v2529 = vadd.f32 %v2528, %v2429
      %v2530 = vadd.f32 %v2529, %v2432
      %v2531 = vadd.f32 %v2530, %v2435
      %v2532 = vadd.f32 %v2531, %v2438
      %v2533 = vadd.f32 %v2532, %v2441
      %v2534 = vadd.f32 %v2533, %v2444
      %v2535 = vadd.f32 %v2534, %v2447
      %v2536 = vadd.f32 %v2535, %v2450
      %v2537 = vadd.f32 %v2536, %v2453
      %v2538 = vadd.f32 %v2537, %v2456
      %v2539 = vadd.f32 %v2538, %v2459
      %v2540 = vadd.f32 %v2539, %v2462
      %v2541 = vadd.f32 %v2540, %v2465
      %v2542 = vadd.f32 %v2541, %v2468
      %v2543 = vadd.f32 %v2542, %v2471
      %v2544 = vadd.f32 %v2543, %v2474
      %v2545 = vadd.f32 %v2544, %v2477
      %v2546 = vadd.f32 %v2545, %v2480
      %v2547 = vadd.f32 %v2546, %v2483
      %v2548 = vrot.slane %v2547, 4
      %v2549 = vadd.f32 %v2547, %v2548
      %v2550 = vrot.slane %v2549, 2
      %v2551 = vadd.f32 %v2549, %v2550
      %v2552 = vrot.slane %v2551, 1
      %v2553 = vadd.f32 %v2551, %v2552
      %2554 = vst [vmem:[%s235] sm:$0x1] %v2553
      %v2555 = vmul.f32 %v2390, %v2390
      %v2556 = vmul.f32 %v2393, %v2393
      %v2557 = vmul.f32 %v2396, %v2396
      %v2558 = vmul.f32 %v2399, %v2399
      %v2559 = vmul.f32 %v2402, %v2402
      %v2560 = vmul.f32 %v2405, %v2405
      %v2561 = vmul.f32 %v2408, %v2408
      %v2562 = vmul.f32 %v2411, %v2411
      %v2563 = vmul.f32 %v2414, %v2414
      %v2564 = vmul.f32 %v2417, %v2417
      %v2565 = vmul.f32 %v2420, %v2420
      %v2566 = vmul.f32 %v2423, %v2423
      %v2567 = vmul.f32 %v2426, %v2426
      %v2568 = vmul.f32 %v2429, %v2429
      %v2569 = vmul.f32 %v2432, %v2432
      %v2570 = vmul.f32 %v2435, %v2435
      %v2571 = vmul.f32 %v2438, %v2438
      %v2572 = vmul.f32 %v2441, %v2441
      %v2573 = vmul.f32 %v2444, %v2444
      %v2574 = vmul.f32 %v2447, %v2447
      %v2575 = vmul.f32 %v2450, %v2450
      %v2576 = vmul.f32 %v2453, %v2453
      %v2577 = vmul.f32 %v2456, %v2456
      %v2578 = vmul.f32 %v2459, %v2459
      %v2579 = vmul.f32 %v2462, %v2462
      %v2580 = vmul.f32 %v2465, %v2465
      %v2581 = vmul.f32 %v2468, %v2468
      %v2582 = vmul.f32 %v2471, %v2471
      %v2583 = vmul.f32 %v2474, %v2474
      %v2584 = vmul.f32 %v2477, %v2477
      %v2585 = vmul.f32 %v2480, %v2480
      %v2586 = vmul.f32 %v2483, %v2483
      %v2587 = vadd.f32 %v2555, %v2556
      %v2588 = vadd.f32 %v2587, %v2557
      %v2589 = vadd.f32 %v2588, %v2558
      %v2590 = vadd.f32 %v2589, %v2559
      %v2591 = vadd.f32 %v2590, %v2560
      %v2592 = vadd.f32 %v2591, %v2561
      %v2593 = vadd.f32 %v2592, %v2562
      %v2594 = vadd.f32 %v2593, %v2563
      %v2595 = vadd.f32 %v2594, %v2564
      %v2596 = vadd.f32 %v2595, %v2565
      %v2597 = vadd.f32 %v2596, %v2566
      %v2598 = vadd.f32 %v2597, %v2567
      %v2599 = vadd.f32 %v2598, %v2568
      %v2600 = vadd.f32 %v2599, %v2569
      %v2601 = vadd.f32 %v2600, %v2570
      %v2602 = vadd.f32 %v2601, %v2571
      %v2603 = vadd.f32 %v2602, %v2572
      %v2604 = vadd.f32 %v2603, %v2573
      %v2605 = vadd.f32 %v2604, %v2574
      %v2606 = vadd.f32 %v2605, %v2575
      %v2607 = vadd.f32 %v2606, %v2576
      %v2608 = vadd.f32 %v2607, %v2577
      %v2609 = vadd.f32 %v2608, %v2578
      %v2610 = vadd.f32 %v2609, %v2579
      %v2611 = vadd.f32 %v2610, %v2580
      %v2612 = vadd.f32 %v2611, %v2581
      %v2613 = vadd.f32 %v2612, %v2582
      %v2614 = vadd.f32 %v2613, %v2583
      %v2615 = vadd.f32 %v2614, %v2584
      %v2616 = vadd.f32 %v2615, %v2585
      %v2617 = vadd.f32 %v2616, %v2586
      %v2618 = vrot.slane %v2617, 4
      %v2619 = vadd.f32 %v2617, %v2618
      %v2620 = vrot.slane %v2619, 2
      %v2621 = vadd.f32 %v2619, %v2620
      %v2622 = vrot.slane %v2621, 1
      %v2623 = vadd.f32 %v2621, %v2622
      %2624 = vst [vmem:[%s235 + $0x1] sm:$0x1] %v2623
      %p2625 = scmp.lt.s32.totalorder %s17, 1
      %s2626 = scalar_select %p2625, %s17, 1
      %s2627 = smul.addr %s2626, 32
      %s2628 = smul.addr %s2627, 8
      %s2629 = scalar_lea.vmem %s4, %s2628
      %p2630 = scmp.lt.s32.totalorder %s17, 1
      %s2631 = scalar_select %p2630, %s17, 1
      %s2632 = smul.addr %s2631, 2
      %s2633 = scalar_lea.vmem %s5, %s2632
      // Predicated region
      $region37: #{basic_block_forward.4} parent=35 // pred_check
        %p2634 = pneg %p124
      $region38: #{basic_block_forward.4} parent=35 // pred_check_branch
        %2636 = sbr.rel (%p2634) target = $region40
      $region39: #{basic_block_forward.4} parent=35 // pred_region
        _
      $region40: #{basic_block_forward.4} parent=35 // pred_fallthru
        _
      // Predicated region
      $region41: #{basic_block_forward.4} parent=35 // pred_check
        %p2637 = pneg %p150
      $region42: #{basic_block_forward.4} parent=35 // pred_check_branch
        %2639 = sbr.rel (%p2637) target = $region44
      $region43: #{basic_block_forward.4} parent=35 // pred_region
        _
      $region44: #{basic_block_forward.4} parent=35 // pred_fallthru
        _
    $region36: #{basic_block_forward.4} parent=5 // pred_fallthru
      _
    %p2640 = scmp.le.s32.totalorder 2, %s12
    // Predicated region
    $region45: #{basic_block_forward.4} parent=5 // pred_check
      %p2641 = pneg %p2640
    $region46: #{basic_block_forward.4} parent=5 // pred_check_branch
      %2643 = sbr.rel (%p2641) target = $region48
    $region47: #{basic_block_forward.4} parent=5 // pred_region
      %s2644 = ssub.s32 %s12, 2
      // Predicated region
      $region49: #{basic_block_forward.4} parent=47 // pred_check
        %p2645 = pneg %p130
      $region50: #{basic_block_forward.4} parent=47 // pred_check_branch
        %2647 = sbr.rel (%p2645) target = $region52
      $region51: #{basic_block_forward.4} parent=47 // pred_region
        %p2648 = scmp.lt.s32.totalorder %s18, 1
        %s2649 = scalar_select %p2648, %s18, 1
        %s2650 = smul.addr %s2649, 32
        %s2651 = smul.addr %s2650, 8
        %s2652 = scalar_lea.vmem %s4, %s2651
      $region52: #{basic_block_forward.4} parent=47 // pred_fallthru
        _
      // Predicated region
      $region53: #{basic_block_forward.4} parent=47 // pred_check
        %p2653 = pneg %p156
      $region54: #{basic_block_forward.4} parent=47 // pred_check_branch
        %2655 = sbr.rel (%p2653) target = $region56
      $region55: #{basic_block_forward.4} parent=47 // pred_region
        %p2656 = scmp.lt.s32.totalorder %s18, 1
        %s2657 = scalar_select %p2656, %s18, 1
        %s2658 = smul.addr %s2657, 2
        %s2659 = scalar_lea.vmem %s5, %s2658
      $region56: #{basic_block_forward.4} parent=47 // pred_fallthru
        _
    $region48: #{basic_block_forward.4} parent=5 // pred_fallthru
      _
  $region6: #{basic_block_forward.4} parent=0 // loop_footer
    %s16 = sadd.s32 1, %s12
  $region7: #{basic_block_forward.4} parent=0 // loop_footer_branch
    %11 = sbr.rel target = $region3
  $region8: #{basic_block_forward.4} parent=0 // loop_exit
    _

// kernel: basic_block_forward.3
$region0: #{basic_block_forward.3}
  #allocation0 [shape = 'u32[]', space=smem, size = 0x4, offset = 0x4, fixed_abs, tag = 'smem constant byte address 0x4 - core index']
  #allocation1 [shape = 'u32[72,128]{1,0:T(1,128)}', space=vmem, size = 0x9000, scoped, tag = 'internal scratch']
  #allocation2 [shape = 'f32[18,18,128]{2,1,0:T(8,128)}', space=vmem, size = 0x36000, scoped, tag = 'scratch operand']
  #allocation3 [shape = 'f32[256,1152]{1,0:T(8,128)}', space=vmem, size = 0x120000, scoped, tag = 'scratch operand']
  %s0 = inlined_call_operand.vmem [shape: f32[2,16,16,128], index: 0, kind: input, shape index: {}]
  %s1 = inlined_call_operand.vmem [shape: f32[1,128], index: 1, kind: input, shape index: {}]
  %s2 = inlined_call_operand.vmem [shape: f32[1,128], index: 2, kind: input, shape index: {}]
  %s3 = inlined_call_operand.vmem [shape: f32[1152,128], index: 3, kind: input, shape index: {}]
  %s4 = inlined_call_operand.vmem [shape: f32[2,16,16,128], index: 4, kind: output, shape index: {0}]
  %s5 = inlined_call_operand.vmem [shape: f32[2,2,128], index: 5, kind: output, shape index: {1}]
  %6 = xla_tuple %s4, %s5
  %s7 = sld [smem:[#allocation0]]
  $region57: #{basic_block_forward.3} parent=0
    _
  %s9 = ssub.s32 1, %s7
  %s10 = scalar_select 0, %s9, %s7
  loop: start=0, step=1, limit=4
  $region2: #{basic_block_forward.3} parent=0 // loop_pre_header
    _
  $region3: #{basic_block_forward.3} parent=0 // loop_header
    %s12 = sphi 0, %s16
    %p13 = scmp.ge.s32.totalorder %s12, 4
    %s22 = sphi 0, %s24
    %s25 = sphi 0, %s22
    %s26 = sphi 0, %s25
    %s42 = sphi 0, %s26
    %s46 = sphi 0, %s46
    %s48 = sphi 0, %s46
    %s49 = sphi 0, %s48
    %s63 = sphi 0, %s49
    %s67 = sphi 0, %s67
    %s69 = sphi 0, %s67
    %s70 = sphi 0, %s69
    %s84 = sphi 0, %s70
    %s88 = sphi 0, %s88
    %s90 = sphi 0, %s88
    %s91 = sphi 0, %s90
    %s105 = sphi 0, %s91
    %s111 = sphi 0, %s113
    %s114 = sphi 0, %s111
    %s115 = sphi 0, %s114
    %s131 = sphi 0, %s115
    %s137 = sphi 0, %s139
    %s140 = sphi 0, %s137
    %s141 = sphi 0, %s140
    %s157 = sphi 0, %s141
  $region4: #{basic_block_forward.3} parent=0 // loop_header_branch
    %15 = sbr.rel (%p13) target = $region8
  $region5: #{basic_block_forward.3} parent=0 // loop_body
    %s17 = ssub.s32 %s12, 1
    %s18 = ssub.s32 %s12, 2
    %s19 = sadd.s32 %s12, 1
    %s20 = ssub.s32 %s12, %s19
    %p21 = scmp.eq.s32.totalorder %s20, 0
    %s23 = sadd.s32 %s22, 1
    %s24 = scalar_select %p21, %s22, %s23
    %p27 = pneg %p21
    %p28 = scmp.eq.s32.totalorder %s12, 1
    %p29 = por %p27, %p28
    %p30 = scmp.ne.s32.totalorder %s22, %s25
    %p31 = scmp.eq.s32.totalorder %s12, 0
    %p32 = por %p30, %p31
    %p33 = scmp.ne.s32.totalorder %s22, %s25
    %p34 = scmp.eq.s32.totalorder %s17, 1
    %p35 = por %p33, %p34
    %p36 = scmp.ne.s32.totalorder %s25, %s26
    %p37 = scmp.eq.s32.totalorder %s17, 0
    %p38 = por %p36, %p37
    %p39 = scmp.ne.s32.totalorder %s25, %s26
    %p40 = scmp.eq.s32.totalorder %s18, 1
    %p41 = por %p39, %p40
    %p43 = scmp.ne.s32.totalorder %s26, %s42
    %p44 = scmp.eq.s32.totalorder %s18, 0
    %p45 = por %p43, %p44
    %s47 = sadd.s32 %s46, 1
    %p50 = scmp.eq.s32.totalorder %s12, 1
    %p51 = scmp.ne.s32.totalorder %s46, %s48
    %p52 = scmp.eq.s32.totalorder %s12, 0
    %p53 = por %p51, %p52
    %p54 = scmp.ne.s32.totalorder %s46, %s48
    %p55 = scmp.eq.s32.totalorder %s17, 1
    %p56 = por %p54, %p55
    %p57 = scmp.ne.s32.totalorder %s48, %s49
    %p58 = scmp.eq.s32.totalorder %s17, 0
    %p59 = por %p57, %p58
    %p60 = scmp.ne.s32.totalorder %s48, %s49
    %p61 = scmp.eq.s32.totalorder %s18, 1
    %p62 = por %p60, %p61
    %p64 = scmp.ne.s32.totalorder %s49, %s63
    %p65 = scmp.eq.s32.totalorder %s18, 0
    %p66 = por %p64, %p65
    %s68 = sadd.s32 %s67, 1
    %p71 = scmp.eq.s32.totalorder %s12, 1
    %p72 = scmp.ne.s32.totalorder %s67, %s69
    %p73 = scmp.eq.s32.totalorder %s12, 0
    %p74 = por %p72, %p73
    %p75 = scmp.ne.s32.totalorder %s67, %s69
    %p76 = scmp.eq.s32.totalorder %s17, 1
    %p77 = por %p75, %p76
    %p78 = scmp.ne.s32.totalorder %s69, %s70
    %p79 = scmp.eq.s32.totalorder %s17, 0
    %p80 = por %p78, %p79
    %p81 = scmp.ne.s32.totalorder %s69, %s70
    %p82 = scmp.eq.s32.totalorder %s18, 1
    %p83 = por %p81, %p82
    %p85 = scmp.ne.s32.totalorder %s70, %s84
    %p86 = scmp.eq.s32.totalorder %s18, 0
    %p87 = por %p85, %p86
    %s89 = sadd.s32 %s88, 1
    %p92 = scmp.eq.s32.totalorder %s12, 1
    %p93 = scmp.ne.s32.totalorder %s88, %s90
    %p94 = scmp.eq.s32.totalorder %s12, 0
    %p95 = por %p93, %p94
    %p96 = scmp.ne.s32.totalorder %s88, %s90
    %p97 = scmp.eq.s32.totalorder %s17, 1
    %p98 = por %p96, %p97
    %p99 = scmp.ne.s32.totalorder %s90, %s91
    %p100 = scmp.eq.s32.totalorder %s17, 0
    %p101 = por %p99, %p100
    %p102 = scmp.ne.s32.totalorder %s90, %s91
    %p103 = scmp.eq.s32.totalorder %s18, 1
    %p104 = por %p102, %p103
    %p106 = scmp.ne.s32.totalorder %s91, %s105
    %p107 = scmp.eq.s32.totalorder %s18, 0
    %p108 = por %p106, %p107
    %s109 = ssub.s32 %s12, %s19
    %p110 = scmp.eq.s32.totalorder %s109, 0
    %s112 = sadd.s32 %s111, 1
    %s113 = scalar_select %p110, %s111, %s112
    %p116 = pneg %p110
    %p117 = scmp.eq.s32.totalorder %s12, 1
    %p118 = por %p116, %p117
    %p119 = scmp.ne.s32.totalorder %s111, %s114
    %p120 = scmp.eq.s32.totalorder %s12, 0
    %p121 = por %p119, %p120
    %p122 = scmp.ne.s32.totalorder %s111, %s114
    %p123 = scmp.eq.s32.totalorder %s17, 1
    %p124 = por %p122, %p123
    %p125 = scmp.ne.s32.totalorder %s114, %s115
    %p126 = scmp.eq.s32.totalorder %s17, 0
    %p127 = por %p125, %p126
    %p128 = scmp.ne.s32.totalorder %s114, %s115
    %p129 = scmp.eq.s32.totalorder %s18, 1
    %p130 = por %p128, %p129
    %p132 = scmp.ne.s32.totalorder %s115, %s131
    %p133 = scmp.eq.s32.totalorder %s18, 0
    %p134 = por %p132, %p133
    %s135 = ssub.s32 %s12, %s19
    %p136 = scmp.eq.s32.totalorder %s135, 0
    %s138 = sadd.s32 %s137, 1
    %s139 = scalar_select %p136, %s137, %s138
    %p142 = pneg %p136
    %p143 = scmp.eq.s32.totalorder %s12, 1
    %p144 = por %p142, %p143
    %p145 = scmp.ne.s32.totalorder %s137, %s140
    %p146 = scmp.eq.s32.totalorder %s12, 0
    %p147 = por %p145, %p146
    %p148 = scmp.ne.s32.totalorder %s137, %s140
    %p149 = scmp.eq.s32.totalorder %s17, 1
    %p150 = por %p148, %p149
    %p151 = scmp.ne.s32.totalorder %s140, %s141
    %p152 = scmp.eq.s32.totalorder %s17, 0
    %p153 = por %p151, %p152
    %p154 = scmp.ne.s32.totalorder %s140, %s141
    %p155 = scmp.eq.s32.totalorder %s18, 1
    %p156 = por %p154, %p155
    %p158 = scmp.ne.s32.totalorder %s141, %s157
    %p159 = scmp.eq.s32.totalorder %s18, 0
    %p160 = por %p158, %p159
    %p161 = scmp.le.s32.totalorder 1, %s12
    %p162 = scmp.lt.s32.totalorder %s12, 3
    %p163 = pnand %p161, %p162
    %p164 = pneg %p163
    // Predicated region
    $region9: #{basic_block_forward.3} parent=5 // pred_check
      _
    $region10: #{basic_block_forward.3} parent=5 // pred_check_branch
      %166 = sbr.rel (%p163) target = $region12
    $region11: #{basic_block_forward.3} parent=5 // pred_region
      %s167 = ssub.s32 %s12, 1
      // Predicated region
      $region13: #{basic_block_forward.3} parent=11 // pred_check
        %p168 = pneg %p59
      $region14: #{basic_block_forward.3} parent=11 // pred_check_branch
        %170 = sbr.rel (%p168) target = $region16
      $region15: #{basic_block_forward.3} parent=11 // pred_region
        _
      $region16: #{basic_block_forward.3} parent=11 // pred_fallthru
        _
      // Predicated region
      $region17: #{basic_block_forward.3} parent=11 // pred_check
        %p171 = pneg %p80
      $region18: #{basic_block_forward.3} parent=11 // pred_check_branch
        %173 = sbr.rel (%p171) target = $region20
      $region19: #{basic_block_forward.3} parent=11 // pred_region
        _
      $region20: #{basic_block_forward.3} parent=11 // pred_fallthru
        _
      // Predicated region
      $region21: #{basic_block_forward.3} parent=11 // pred_check
        %p174 = pneg %p101
      $region22: #{basic_block_forward.3} parent=11 // pred_check_branch
        %176 = sbr.rel (%p174) target = $region24
      $region23: #{basic_block_forward.3} parent=11 // pred_region
        _
      $region24: #{basic_block_forward.3} parent=11 // pred_fallthru
        _
    $region12: #{basic_block_forward.3} parent=5 // pred_fallthru
      _
    %p177 = scmp.lt.s32.totalorder %s12, 2
    // Predicated region
    $region25: #{basic_block_forward.3} parent=5 // pred_check
      %p178 = pneg %p177
    $region26: #{basic_block_forward.3} parent=5 // pred_check_branch
      %180 = sbr.rel (%p178) target = $region28
    $region27: #{basic_block_forward.3} parent=5 // pred_region
      // Predicated region
      $region29: #{basic_block_forward.3} parent=27 // pred_check
        %p181 = pneg %p32
      $region30: #{basic_block_forward.3} parent=27 // pred_check_branch
        %183 = sbr.rel (%p181) target = $region32
      $region31: #{basic_block_forward.3} parent=27 // pred_region
        %p184 = scmp.lt.s32.totalorder %s12, 1
        %s185 = scalar_select %p184, %s12, 1
        %s186 = smul.addr %s185, 32
        %s187 = smul.addr %s186, 8
        %s188 = scalar_lea.vmem %s0, %s187
      $region32: #{basic_block_forward.3} parent=27 // pred_fallthru
        _
    $region28: #{basic_block_forward.3} parent=5 // pred_fallthru
      _
    %p189 = scmp.le.s32.totalorder 1, %s12
    %p190 = scmp.lt.s32.totalorder %s12, 3
    %p191 = pnand %p189, %p190
    %p192 = pneg %p191
    // Predicated region
    $region33: #{basic_block_forward.3} parent=5 // pred_check
      _
    $region34: #{basic_block_forward.3} parent=5 // pred_check_branch
      %194 = sbr.rel (%p191) target = $region36
    $region35: #{basic_block_forward.3} parent=5 // pred_region
      %s195 = ssub.s32 %s12, 1
      %p196 = scmp.lt.s32.totalorder %s17, 1
      %s197 = scalar_select %p196, %s17, 1
      %s198 = smul.addr %s197, 32
      %s199 = smul.addr %s198, 8
      %s200 = scalar_lea.vmem %s0, %s199
      %p201 = pneg %p38
      %p202 = pneg %p35
      %p203 = pneg %p59
      %p204 = pneg %p56
      %p205 = pneg %p80
      %p206 = pneg %p77
      %p207 = pneg %p101
      %p208 = pneg %p98
      %p209 = pneg %p127
      %p210 = pneg %p124
      %p211 = scmp.lt.s32.totalorder %s17, 1
      %s212 = scalar_select %p211, %s17, 1
      %s213 = smul.addr %s212, 32
      %s214 = smul.addr %s213, 8
      %s215 = scalar_lea.vmem %s4, %s214
      %p216 = pneg %p153
      %p217 = pneg %p150
      %p218 = scmp.lt.s32.totalorder %s17, 1
      %s219 = scalar_select %p218, %s17, 1
      %s220 = smul.addr %s219, 2
      %s221 = scalar_lea.vmem %s5, %s220
      %p222 = scmp.lt.s32.totalorder %s17, 1
      %s223 = scalar_select %p222, %s17, 1
      %s224 = smul.addr %s223, 32
      %s225 = smul.addr %s224, 8
      %s226 = scalar_lea.vmem %s0, %s225
      %p227 = scmp.lt.s32.totalorder %s17, 1
      %s228 = scalar_select %p227, %s17, 1
      %s229 = smul.addr %s228, 32
      %s230 = smul.addr %s229, 8
      %s231 = scalar_lea.vmem %s4, %s230
      %p232 = scmp.lt.s32.totalorder %s17, 1
      %s233 = scalar_select %p232, %s17, 1
      %s234 = smul.addr %s233, 2
      %s235 = scalar_lea.vmem %s5, %s234
      %v236 = vld [vmem:[%s226] sm:$0xff]
      %v237 = vld [vmem:[%s226 + $0x8] sm:$0xff]
      %v238 = vld [vmem:[%s226 + $0x10] sm:$0xff]
      %v239 = vld [vmem:[%s226 + $0x18] sm:$0xff]
      %v240 = vld [vmem:[%s226 + $0x20] sm:$0xff]
      %v241 = vld [vmem:[%s226 + $0x28] sm:$0xff]
      %v242 = vld [vmem:[%s226 + $0x30] sm:$0xff]
      %v243 = vld [vmem:[%s226 + $0x38] sm:$0xff]
      %v244 = vld [vmem:[%s226 + $0x40] sm:$0xff]
      %v245 = vld [vmem:[%s226 + $0x48] sm:$0xff]
      %v246 = vld [vmem:[%s226 + $0x50] sm:$0xff]
      %v247 = vld [vmem:[%s226 + $0x58] sm:$0xff]
      %v248 = vld [vmem:[%s226 + $0x60] sm:$0xff]
      %v249 = vld [vmem:[%s226 + $0x68] sm:$0xff]
      %v250 = vld [vmem:[%s226 + $0x70] sm:$0xff]
      %v251 = vld [vmem:[%s226 + $0x78] sm:$0xff]
      %v252 = vld [vmem:[%s226 + $0x80] sm:$0xff]
      %v253 = vld [vmem:[%s226 + $0x88] sm:$0xff]
      %v254 = vld [vmem:[%s226 + $0x90] sm:$0xff]
      %v255 = vld [vmem:[%s226 + $0x98] sm:$0xff]
      %v256 = vld [vmem:[%s226 + $0xa0] sm:$0xff]
      %v257 = vld [vmem:[%s226 + $0xa8] sm:$0xff]
      %v258 = vld [vmem:[%s226 + $0xb0] sm:$0xff]
      %v259 = vld [vmem:[%s226 + $0xb8] sm:$0xff]
      %v260 = vld [vmem:[%s226 + $0xc0] sm:$0xff]
      %v261 = vld [vmem:[%s226 + $0xc8] sm:$0xff]
      %v262 = vld [vmem:[%s226 + $0xd0] sm:$0xff]
      %v263 = vld [vmem:[%s226 + $0xd8] sm:$0xff]
      %v264 = vld [vmem:[%s226 + $0xe0] sm:$0xff]
      %v265 = vld [vmem:[%s226 + $0xe8] sm:$0xff]
      %v266 = vld [vmem:[%s226 + $0xf0] sm:$0xff]
      %v267 = vld [vmem:[%s226 + $0xf8] sm:$0xff]
      %268 = vst [vmem:[#allocation2] sm:$0xff] 0.0
      %269 = vst [vmem:[#allocation2 + $0x8] sm:$0xff] 0.0
      %270 = vst [vmem:[#allocation2 + $0x10] sm:$0x3] 0.0
      %271 = vst [vmem:[#allocation2 + $0x18] sm:$0xff] 0.0
      %272 = vst [vmem:[#allocation2 + $0x20] sm:$0xff] 0.0
      %273 = vst [vmem:[#allocation2 + $0x28] sm:$0x3] 0.0
      %274 = vst [vmem:[#allocation2 + $0x30] sm:$0xff] 0.0
      %275 = vst [vmem:[#allocation2 + $0x38] sm:$0xff] 0.0
      %276 = vst [vmem:[#allocation2 + $0x40] sm:$0x3] 0.0
      %277 = vst [vmem:[#allocation2 + $0x48] sm:$0xff] 0.0
      %278 = vst [vmem:[#allocation2 + $0x50] sm:$0xff] 0.0
      %279 = vst [vmem:[#allocation2 + $0x58] sm:$0x3] 0.0
      %280 = vst [vmem:[#allocation2 + $0x60] sm:$0xff] 0.0
      %281 = vst [vmem:[#allocation2 + $0x68] sm:$0xff] 0.0
      %282 = vst [vmem:[#allocation2 + $0x70] sm:$0x3] 0.0
      %283 = vst [vmem:[#allocation2 + $0x78] sm:$0xff] 0.0
      %284 = vst [vmem:[#allocation2 + $0x80] sm:$0xff] 0.0
      %285 = vst [vmem:[#allocation2 + $0x88] sm:$0x3] 0.0
      %286 = vst [vmem:[#allocation2 + $0x90] sm:$0xff] 0.0
      %287 = vst [vmem:[#allocation2 + $0x98] sm:$0xff] 0.0
      %288 = vst [vmem:[#allocation2 + $0xa0] sm:$0x3] 0.0
      %289 = vst [vmem:[#allocation2 + $0xa8] sm:$0xff] 0.0
      %290 = vst [vmem:[#allocation2 + $0xb0] sm:$0xff] 0.0
      %291 = vst [vmem:[#allocation2 + $0xb8] sm:$0x3] 0.0
      %292 = vst [vmem:[#allocation2 + $0xc0] sm:$0xff] 0.0
      %293 = vst [vmem:[#allocation2 + $0xc8] sm:$0xff] 0.0
      %294 = vst [vmem:[#allocation2 + $0xd0] sm:$0x3] 0.0
      %295 = vst [vmem:[#allocation2 + $0xd8] sm:$0xff] 0.0
      %296 = vst [vmem:[#allocation2 + $0xe0] sm:$0xff] 0.0
      %297 = vst [vmem:[#allocation2 + $0xe8] sm:$0x3] 0.0
      %298 = vst [vmem:[#allocation2 + $0xf0] sm:$0xff] 0.0
      %299 = vst [vmem:[#allocation2 + $0xf8] sm:$0xff] 0.0
      %300 = vst [vmem:[#allocation2 + $0x100] sm:$0x3] 0.0
      %301 = vst [vmem:[#allocation2 + $0x108] sm:$0xff] 0.0
      %302 = vst [vmem:[#allocation2 + $0x110] sm:$0xff] 0.0
      %303 = vst [vmem:[#allocation2 + $0x118] sm:$0x3] 0.0
      %304 = vst [vmem:[#allocation2 + $0x120] sm:$0xff] 0.0
      %305 = vst [vmem:[#allocation2 + $0x128] sm:$0xff] 0.0
      %306 = vst [vmem:[#allocation2 + $0x130] sm:$0x3] 0.0
      %307 = vst [vmem:[#allocation2 + $0x138] sm:$0xff] 0.0
      %308 = vst [vmem:[#allocation2 + $0x140] sm:$0xff] 0.0
      %309 = vst [vmem:[#allocation2 + $0x148] sm:$0x3] 0.0
      %310 = vst [vmem:[#allocation2 + $0x150] sm:$0xff] 0.0
      %311 = vst [vmem:[#allocation2 + $0x158] sm:$0xff] 0.0
      %312 = vst [vmem:[#allocation2 + $0x160] sm:$0x3] 0.0
      %313 = vst [vmem:[#allocation2 + $0x168] sm:$0xff] 0.0
      %314 = vst [vmem:[#allocation2 + $0x170] sm:$0xff] 0.0
      %315 = vst [vmem:[#allocation2 + $0x178] sm:$0x3] 0.0
      %316 = vst [vmem:[#allocation2 + $0x180] sm:$0xff] 0.0
      %317 = vst [vmem:[#allocation2 + $0x188] sm:$0xff] 0.0
      %318 = vst [vmem:[#allocation2 + $0x190] sm:$0x3] 0.0
      %319 = vst [vmem:[#allocation2 + $0x198] sm:$0xff] 0.0
      %320 = vst [vmem:[#allocation2 + $0x1a0] sm:$0xff] 0.0
      %321 = vst [vmem:[#allocation2 + $0x1a8] sm:$0x3] 0.0
      %s322 = scalar_lea.vmem [#allocation2], 24
      %323 = vst [vmem:[%s322 + $0x1] sm:$0xff] %v236
      %324 = vst [vmem:[%s322 + $0x9] sm:$0xff] %v237
      %325 = vst [vmem:[%s322 + $0x19] sm:$0xff] %v238
      %326 = vst [vmem:[%s322 + $0x21] sm:$0xff] %v239
      %327 = vst [vmem:[%s322 + $0x31] sm:$0xff] %v240
      %328 = vst [vmem:[%s322 + $0x39] sm:$0xff] %v241
      %329 = vst [vmem:[%s322 + $0x49] sm:$0xff] %v242
      %330 = vst [vmem:[%s322 + $0x51] sm:$0xff] %v243
      %331 = vst [vmem:[%s322 + $0x61] sm:$0xff] %v244
      %332 = vst [vmem:[%s322 + $0x69] sm:$0xff] %v245
      %333 = vst [vmem:[%s322 + $0x79] sm:$0xff] %v246
      %334 = vst [vmem:[%s322 + $0x81] sm:$0xff] %v247
      %335 = vst [vmem:[%s322 + $0x91] sm:$0xff] %v248
      %336 = vst [vmem:[%s322 + $0x99] sm:$0xff] %v249
      %337 = vst [vmem:[%s322 + $0xa9] sm:$0xff] %v250
      %338 = vst [vmem:[%s322 + $0xb1] sm:$0xff] %v251
      %339 = vst [vmem:[%s322 + $0xc1] sm:$0xff] %v252
      %340 = vst [vmem:[%s322 + $0xc9] sm:$0xff] %v253
      %341 = vst [vmem:[%s322 + $0xd9] sm:$0xff] %v254
      %342 = vst [vmem:[%s322 + $0xe1] sm:$0xff] %v255
      %343 = vst [vmem:[%s322 + $0xf1] sm:$0xff] %v256
      %344 = vst [vmem:[%s322 + $0xf9] sm:$0xff] %v257
      %345 = vst [vmem:[%s322 + $0x109] sm:$0xff] %v258
      %346 = vst [vmem:[%s322 + $0x111] sm:$0xff] %v259
      %347 = vst [vmem:[%s322 + $0x121] sm:$0xff] %v260
      %348 = vst [vmem:[%s322 + $0x129] sm:$0xff] %v261
      %349 = vst [vmem:[%s322 + $0x139] sm:$0xff] %v262
      %350 = vst [vmem:[%s322 + $0x141] sm:$0xff] %v263
      %351 = vst [vmem:[%s322 + $0x151] sm:$0xff] %v264
      %352 = vst [vmem:[%s322 + $0x159] sm:$0xff] %v265
      %353 = vst [vmem:[%s322 + $0x169] sm:$0xff] %v266
      %354 = vst [vmem:[%s322 + $0x171] sm:$0xff] %v267
      %v355 = vld [vmem:[#allocation2] sm:$0xff]
      %v356 = vld [vmem:[#allocation2 + $0x8] sm:$0xff]
      %v357 = vld [vmem:[#allocation2 + $0x18] sm:$0xff]
      %v358 = vld [vmem:[#allocation2 + $0x20] sm:$0xff]
      %v359 = vld [vmem:[#allocation2 + $0x30] sm:$0xff]
      %v360 = vld [vmem:[#allocation2 + $0x38] sm:$0xff]
      %v361 = vld [vmem:[#allocation2 + $0x48] sm:$0xff]
      %v362 = vld [vmem:[#allocation2 + $0x50] sm:$0xff]
      %v363 = vld [vmem:[#allocation2 + $0x60] sm:$0xff]
      %v364 = vld [vmem:[#allocation2 + $0x68] sm:$0xff]
      %v365 = vld [vmem:[#allocation2 + $0x78] sm:$0xff]
      %v366 = vld [vmem:[#allocation2 + $0x80] sm:$0xff]
      %v367 = vld [vmem:[#allocation2 + $0x90] sm:$0xff]
      %v368 = vld [vmem:[#allocation2 + $0x98] sm:$0xff]
      %v369 = vld [vmem:[#allocation2 + $0xa8] sm:$0xff]
      %v370 = vld [vmem:[#allocation2 + $0xb0] sm:$0xff]
      %v371 = vld [vmem:[#allocation2 + $0xc0] sm:$0xff]
      %v372 = vld [vmem:[#allocation2 + $0xc8] sm:$0xff]
      %v373 = vld [vmem:[#allocation2 + $0xd8] sm:$0xff]
      %v374 = vld [vmem:[#allocation2 + $0xe0] sm:$0xff]
      %v375 = vld [vmem:[#allocation2 + $0xf0] sm:$0xff]
      %v376 = vld [vmem:[#allocation2 + $0xf8] sm:$0xff]
      %v377 = vld [vmem:[#allocation2 + $0x108] sm:$0xff]
      %v378 = vld [vmem:[#allocation2 + $0x110] sm:$0xff]
      %v379 = vld [vmem:[#allocation2 + $0x120] sm:$0xff]
      %v380 = vld [vmem:[#allocation2 + $0x128] sm:$0xff]
      %v381 = vld [vmem:[#allocation2 + $0x138] sm:$0xff]
      %v382 = vld [vmem:[#allocation2 + $0x140] sm:$0xff]
      %v383 = vld [vmem:[#allocation2 + $0x150] sm:$0xff]
      %v384 = vld [vmem:[#allocation2 + $0x158] sm:$0xff]
      %v385 = vld [vmem:[#allocation2 + $0x168] sm:$0xff]
      %v386 = vld [vmem:[#allocation2 + $0x170] sm:$0xff]
      %387 = vst [vmem:[#allocation3] sm:$0xff] %v355
      %388 = vst [vmem:[#allocation3 + $0x48] sm:$0xff] %v356
      %389 = vst [vmem:[#allocation3 + $0x90] sm:$0xff] %v357
      %390 = vst [vmem:[#allocation3 + $0xd8] sm:$0xff] %v358
      %391 = vst [vmem:[#allocation3 + $0x120] sm:$0xff] %v359
      %392 = vst [vmem:[#allocation3 + $0x168] sm:$0xff] %v360
      %393 = vst [vmem:[#allocation3 + $0x1b0] sm:$0xff] %v361
      %394 = vst [vmem:[#allocation3 + $0x1f8] sm:$0xff] %v362
      %395 = vst [vmem:[#allocation3 + $0x240] sm:$0xff] %v363
      %396 = vst [vmem:[#allocation3 + $0x288] sm:$0xff] %v364
      %397 = vst [vmem:[#allocation3 + $0x2d0] sm:$0xff] %v365
      %398 = vst [vmem:[#allocation3 + $0x318] sm:$0xff] %v366
      %399 = vst [vmem:[#allocation3 + $0x360] sm:$0xff] %v367
      %400 = vst [vmem:[#allocation3 + $0x3a8] sm:$0xff] %v368
      %401 = vst [vmem:[#allocation3 + $0x3f0] sm:$0xff] %v369
      %402 = vst [vmem:[#allocation3 + $0x438] sm:$0xff] %v370
      %403 = vst [vmem:[#allocation3 + $0x480] sm:$0xff] %v371
      %404 = vst [vmem:[#allocation3 + $0x4c8] sm:$0xff] %v372
      %405 = vst [vmem:[#allocation3 + $0x510] sm:$0xff] %v373
      %406 = vst [vmem:[#allocation3 + $0x558] sm:$0xff] %v374
      %407 = vst [vmem:[#allocation3 + $0x5a0] sm:$0xff] %v375
      %408 = vst [vmem:[#allocation3 + $0x5e8] sm:$0xff] %v376
      %409 = vst [vmem:[#allocation3 + $0x630] sm:$0xff] %v377
      %410 = vst [vmem:[#allocation3 + $0x678] sm:$0xff] %v378
      %411 = vst [vmem:[#allocation3 + $0x6c0] sm:$0xff] %v379
      %412 = vst [vmem:[#allocation3 + $0x708] sm:$0xff] %v380
      %413 = vst [vmem:[#allocation3 + $0x750] sm:$0xff] %v381
      %414 = vst [vmem:[#allocation3 + $0x798] sm:$0xff] %v382
      %415 = vst [vmem:[#allocation3 + $0x7e0] sm:$0xff] %v383
      %416 = vst [vmem:[#allocation3 + $0x828] sm:$0xff] %v384
      %417 = vst [vmem:[#allocation3 + $0x870] sm:$0xff] %v385
      %418 = vst [vmem:[#allocation3 + $0x8b8] sm:$0xff] %v386
      %v419 = vld [vmem:[#allocation2 + $0x1] sm:$0xff]
      %v420 = vld [vmem:[#allocation2 + $0x9] sm:$0xff]
      %v421 = vld [vmem:[#allocation2 + $0x19] sm:$0xff]
      %v422 = vld [vmem:[#allocation2 + $0x21] sm:$0xff]
      %v423 = vld [vmem:[#allocation2 + $0x31] sm:$0xff]
      %v424 = vld [vmem:[#allocation2 + $0x39] sm:$0xff]
      %v425 = vld [vmem:[#allocation2 + $0x49] sm:$0xff]
      %v426 = vld [vmem:[#allocation2 + $0x51] sm:$0xff]
      %v427 = vld [vmem:[#allocation2 + $0x61] sm:$0xff]
      %v428 = vld [vmem:[#allocation2 + $0x69] sm:$0xff]
      %v429 = vld [vmem:[#allocation2 + $0x79] sm:$0xff]
      %v430 = vld [vmem:[#allocation2 + $0x81] sm:$0xff]
      %v431 = vld [vmem:[#allocation2 + $0x91] sm:$0xff]
      %v432 = vld [vmem:[#allocation2 + $0x99] sm:$0xff]
      %v433 = vld [vmem:[#allocation2 + $0xa9] sm:$0xff]
      %v434 = vld [vmem:[#allocation2 + $0xb1] sm:$0xff]
      %v435 = vld [vmem:[#allocation2 + $0xc1] sm:$0xff]
      %v436 = vld [vmem:[#allocation2 + $0xc9] sm:$0xff]
      %v437 = vld [vmem:[#allocation2 + $0xd9] sm:$0xff]
      %v438 = vld [vmem:[#allocation2 + $0xe1] sm:$0xff]
      %v439 = vld [vmem:[#allocation2 + $0xf1] sm:$0xff]
      %v440 = vld [vmem:[#allocation2 + $0xf9] sm:$0xff]
      %v441 = vld [vmem:[#allocation2 + $0x109] sm:$0xff]
      %v442 = vld [vmem:[#allocation2 + $0x111] sm:$0xff]
      %v443 = vld [vmem:[#allocation2 + $0x121] sm:$0xff]
      %v444 = vld [vmem:[#allocation2 + $0x129] sm:$0xff]
      %v445 = vld [vmem:[#allocation2 + $0x139] sm:$0xff]
      %v446 = vld [vmem:[#allocation2 + $0x141] sm:$0xff]
      %v447 = vld [vmem:[#allocation2 + $0x151] sm:$0xff]
      %v448 = vld [vmem:[#allocation2 + $0x159] sm:$0xff]
      %v449 = vld [vmem:[#allocation2 + $0x169] sm:$0xff]
      %v450 = vld [vmem:[#allocation2 + $0x171] sm:$0xff]
      %451 = vst [vmem:[#allocation3 + $0x8] sm:$0xff] %v419
      %452 = vst [vmem:[#allocation3 + $0x50] sm:$0xff] %v420
      %453 = vst [vmem:[#allocation3 + $0x98] sm:$0xff] %v421
      %454 = vst [vmem:[#allocation3 + $0xe0] sm:$0xff] %v422
      %455 = vst [vmem:[#allocation3 + $0x128] sm:$0xff] %v423
      %456 = vst [vmem:[#allocation3 + $0x170] sm:$0xff] %v424
      %457 = vst [vmem:[#allocation3 + $0x1b8] sm:$0xff] %v425
      %458 = vst [vmem:[#allocation3 + $0x200] sm:$0xff] %v426
      %459 = vst [vmem:[#allocation3 + $0x248] sm:$0xff] %v427
      %460 = vst [vmem:[#allocation3 + $0x290] sm:$0xff] %v428
      %461 = vst [vmem:[#allocation3 + $0x2d8] sm:$0xff] %v429
      %462 = vst [vmem:[#allocation3 + $0x320] sm:$0xff] %v430
      %463 = vst [vmem:[#allocation3 + $0x368] sm:$0xff] %v431
      %464 = vst [vmem:[#allocation3 + $0x3b0] sm:$0xff] %v432
      %465 = vst [vmem:[#allocation3 + $0x3f8] sm:$0xff] %v433
      %466 = vst [vmem:[#allocation3 + $0x440] sm:$0xff] %v434
      %467 = vst [vmem:[#allocation3 + $0x488] sm:$0xff] %v435
      %468 = vst [vmem:[#allocation3 + $0x4d0] sm:$0xff] %v436
      %469 = vst [vmem:[#allocation3 + $0x518] sm:$0xff] %v437
      %470 = vst [vmem:[#allocation3 + $0x560] sm:$0xff] %v438
      %471 = vst [vmem:[#allocation3 + $0x5a8] sm:$0xff] %v439
      %472 = vst [vmem:[#allocation3 + $0x5f0] sm:$0xff] %v440
      %473 = vst [vmem:[#allocation3 + $0x638] sm:$0xff] %v441
      %474 = vst [vmem:[#allocation3 + $0x680] sm:$0xff] %v442
      %475 = vst [vmem:[#allocation3 + $0x6c8] sm:$0xff] %v443
      %476 = vst [vmem:[#allocation3 + $0x710] sm:$0xff] %v444
      %477 = vst [vmem:[#allocation3 + $0x758] sm:$0xff] %v445
      %478 = vst [vmem:[#allocation3 + $0x7a0] sm:$0xff] %v446
      %479 = vst [vmem:[#allocation3 + $0x7e8] sm:$0xff] %v447
      %480 = vst [vmem:[#allocation3 + $0x830] sm:$0xff] %v448
      %481 = vst [vmem:[#allocation3 + $0x878] sm:$0xff] %v449
      %482 = vst [vmem:[#allocation3 + $0x8c0] sm:$0xff] %v450
      %v483 = vld [vmem:[#allocation2 + $0x2] sm:$0xff]
      %v484 = vld [vmem:[#allocation2 + $0xa] sm:$0xff]
      %v485 = vld [vmem:[#allocation2 + $0x1a] sm:$0xff]
      %v486 = vld [vmem:[#allocation2 + $0x22] sm:$0xff]
      %v487 = vld [vmem:[#allocation2 + $0x32] sm:$0xff]
      %v488 = vld [vmem:[#allocation2 + $0x3a] sm:$0xff]
      %v489 = vld [vmem:[#allocation2 + $0x4a] sm:$0xff]
      %v490 = vld [vmem:[#allocation2 + $0x52] sm:$0xff]
      %v491 = vld [vmem:[#allocation2 + $0x62] sm:$0xff]
      %v492 = vld [vmem:[#allocation2 + $0x6a] sm:$0xff]
      %v493 = vld [vmem:[#allocation2 + $0x7a] sm:$0xff]
      %v494 = vld [vmem:[#allocation2 + $0x82] sm:$0xff]
      %v495 = vld [vmem:[#allocation2 + $0x92] sm:$0xff]
      %v496 = vld [vmem:[#allocation2 + $0x9a] sm:$0xff]
      %v497 = vld [vmem:[#allocation2 + $0xaa] sm:$0xff]
      %v498 = vld [vmem:[#allocation2 + $0xb2] sm:$0xff]
      %v499 = vld [vmem:[#allocation2 + $0xc2] sm:$0xff]
      %v500 = vld [vmem:[#allocation2 + $0xca] sm:$0xff]
      %v501 = vld [vmem:[#allocation2 + $0xda] sm:$0xff]
      %v502 = vld [vmem:[#allocation2 + $0xe2] sm:$0xff]
      %v503 = vld [vmem:[#allocation2 + $0xf2] sm:$0xff]
      %v504 = vld [vmem:[#allocation2 + $0xfa] sm:$0xff]
      %v505 = vld [vmem:[#allocation2 + $0x10a] sm:$0xff]
      %v506 = vld [vmem:[#allocation2 + $0x112] sm:$0xff]
      %v507 = vld [vmem:[#allocation2 + $0x122] sm:$0xff]
      %v508 = vld [vmem:[#allocation2 + $0x12a] sm:$0xff]
      %v509 = vld [vmem:[#allocation2 + $0x13a] sm:$0xff]
      %v510 = vld [vmem:[#allocation2 + $0x142] sm:$0xff]
      %v511 = vld [vmem:[#allocation2 + $0x152] sm:$0xff]
      %v512 = vld [vmem:[#allocation2 + $0x15a] sm:$0xff]
      %v513 = vld [vmem:[#allocation2 + $0x16a] sm:$0xff]
      %v514 = vld [vmem:[#allocation2 + $0x172] sm:$0xff]
      %515 = vst [vmem:[#allocation3 + $0x10] sm:$0xff] %v483
      %516 = vst [vmem:[#allocation3 + $0x58] sm:$0xff] %v484
      %517 = vst [vmem:[#allocation3 + $0xa0] sm:$0xff] %v485
      %518 = vst [vmem:[#allocation3 + $0xe8] sm:$0xff] %v486
      %519 = vst [vmem:[#allocation3 + $0x130] sm:$0xff] %v487
      %520 = vst [vmem:[#allocation3 + $0x178] sm:$0xff] %v488
      %521 = vst [vmem:[#allocation3 + $0x1c0] sm:$0xff] %v489
      %522 = vst [vmem:[#allocation3 + $0x208] sm:$0xff] %v490
      %523 = vst [vmem:[#allocation3 + $0x250] sm:$0xff] %v491
      %524 = vst [vmem:[#allocation3 + $0x298] sm:$0xff] %v492
      %525 = vst [vmem:[#allocation3 + $0x2e0] sm:$0xff] %v493
      %526 = vst [vmem:[#allocation3 + $0x328] sm:$0xff] %v494
      %527 = vst [vmem:[#allocation3 + $0x370] sm:$0xff] %v495
      %528 = vst [vmem:[#allocation3 + $0x3b8] sm:$0xff] %v496
      %529 = vst [vmem:[#allocation3 + $0x400] sm:$0xff] %v497
      %530 = vst [vmem:[#allocation3 + $0x448] sm:$0xff] %v498
      %531 = vst [vmem:[#allocation3 + $0x490] sm:$0xff] %v499
      %532 = vst [vmem:[#allocation3 + $0x4d8] sm:$0xff] %v500
      %533 = vst [vmem:[#allocation3 + $0x520] sm:$0xff] %v501
      %534 = vst [vmem:[#allocation3 + $0x568] sm:$0xff] %v502
      %535 = vst [vmem:[#allocation3 + $0x5b0] sm:$0xff] %v503
      %536 = vst [vmem:[#allocation3 + $0x5f8] sm:$0xff] %v504
      %537 = vst [vmem:[#allocation3 + $0x640] sm:$0xff] %v505
      %538 = vst [vmem:[#allocation3 + $0x688] sm:$0xff] %v506
      %539 = vst [vmem:[#allocation3 + $0x6d0] sm:$0xff] %v507
      %540 = vst [vmem:[#allocation3 + $0x718] sm:$0xff] %v508
      %541 = vst [vmem:[#allocation3 + $0x760] sm:$0xff] %v509
      %542 = vst [vmem:[#allocation3 + $0x7a8] sm:$0xff] %v510
      %543 = vst [vmem:[#allocation3 + $0x7f0] sm:$0xff] %v511
      %544 = vst [vmem:[#allocation3 + $0x838] sm:$0xff] %v512
      %545 = vst [vmem:[#allocation3 + $0x880] sm:$0xff] %v513
      %546 = vst [vmem:[#allocation3 + $0x8c8] sm:$0xff] %v514
      %v547 = vld [vmem:[%s322] sm:$0xff]
      %v548 = vld [vmem:[%s322 + $0x8] sm:$0xff]
      %v549 = vld [vmem:[%s322 + $0x18] sm:$0xff]
      %v550 = vld [vmem:[%s322 + $0x20] sm:$0xff]
      %v551 = vld [vmem:[%s322 + $0x30] sm:$0xff]
      %v552 = vld [vmem:[%s322 + $0x38] sm:$0xff]
      %v553 = vld [vmem:[%s322 + $0x48] sm:$0xff]
      %v554 = vld [vmem:[%s322 + $0x50] sm:$0xff]
      %v555 = vld [vmem:[%s322 + $0x60] sm:$0xff]
      %v556 = vld [vmem:[%s322 + $0x68] sm:$0xff]
      %v557 = vld [vmem:[%s322 + $0x78] sm:$0xff]
      %v558 = vld [vmem:[%s322 + $0x80] sm:$0xff]
      %v559 = vld [vmem:[%s322 + $0x90] sm:$0xff]
      %v560 = vld [vmem:[%s322 + $0x98] sm:$0xff]
      %v561 = vld [vmem:[%s322 + $0xa8] sm:$0xff]
      %v562 = vld [vmem:[%s322 + $0xb0] sm:$0xff]
      %v563 = vld [vmem:[%s322 + $0xc0] sm:$0xff]
      %v564 = vld [vmem:[%s322 + $0xc8] sm:$0xff]
      %v565 = vld [vmem:[%s322 + $0xd8] sm:$0xff]
      %v566 = vld [vmem:[%s322 + $0xe0] sm:$0xff]
      %v567 = vld [vmem:[%s322 + $0xf0] sm:$0xff]
      %v568 = vld [vmem:[%s322 + $0xf8] sm:$0xff]
      %v569 = vld [vmem:[%s322 + $0x108] sm:$0xff]
      %v570 = vld [vmem:[%s322 + $0x110] sm:$0xff]
      %v571 = vld [vmem:[%s322 + $0x120] sm:$0xff]
      %v572 = vld [vmem:[%s322 + $0x128] sm:$0xff]
      %v573 = vld [vmem:[%s322 + $0x138] sm:$0xff]
      %v574 = vld [vmem:[%s322 + $0x140] sm:$0xff]
      %v575 = vld [vmem:[%s322 + $0x150] sm:$0xff]
      %v576 = vld [vmem:[%s322 + $0x158] sm:$0xff]
      %v577 = vld [vmem:[%s322 + $0x168] sm:$0xff]
      %v578 = vld [vmem:[%s322 + $0x170] sm:$0xff]
      %579 = vst [vmem:[#allocation3 + $0x18] sm:$0xff] %v547
      %580 = vst [vmem:[#allocation3 + $0x60] sm:$0xff] %v548
      %581 = vst [vmem:[#allocation3 + $0xa8] sm:$0xff] %v549
      %582 = vst [vmem:[#allocation3 + $0xf0] sm:$0xff] %v550
      %583 = vst [vmem:[#allocation3 + $0x138] sm:$0xff] %v551
      %584 = vst [vmem:[#allocation3 + $0x180] sm:$0xff] %v552
      %585 = vst [vmem:[#allocation3 + $0x1c8] sm:$0xff] %v553
      %586 = vst [vmem:[#allocation3 + $0x210] sm:$0xff] %v554
      %587 = vst [vmem:[#allocation3 + $0x258] sm:$0xff] %v555
      %588 = vst [vmem:[#allocation3 + $0x2a0] sm:$0xff] %v556
      %589 = vst [vmem:[#allocation3 + $0x2e8] sm:$0xff] %v557
      %590 = vst [vmem:[#allocation3 + $0x330] sm:$0xff] %v558
      %591 = vst [vmem:[#allocation3 + $0x378] sm:$0xff] %v559
      %592 = vst [vmem:[#allocation3 + $0x3c0] sm:$0xff] %v560
      %593 = vst [vmem:[#allocation3 + $0x408] sm:$0xff] %v561
      %594 = vst [vmem:[#allocation3 + $0x450] sm:$0xff] %v562
      %595 = vst [vmem:[#allocation3 + $0x498] sm:$0xff] %v563
      %596 = vst [vmem:[#allocation3 + $0x4e0] sm:$0xff] %v564
      %597 = vst [vmem:[#allocation3 + $0x528] sm:$0xff] %v565
      %598 = vst [vmem:[#allocation3 + $0x570] sm:$0xff] %v566
      %599 = vst [vmem:[#allocation3 + $0x5b8] sm:$0xff] %v567
      %600 = vst [vmem:[#allocation3 + $0x600] sm:$0xff] %v568
      %601 = vst [vmem:[#allocation3 + $0x648] sm:$0xff] %v569
      %602 = vst [vmem:[#allocation3 + $0x690] sm:$0xff] %v570
      %603 = vst [vmem:[#allocation3 + $0x6d8] sm:$0xff] %v571
      %604 = vst [vmem:[#allocation3 + $0x720] sm:$0xff] %v572
      %605 = vst [vmem:[#allocation3 + $0x768] sm:$0xff] %v573
      %606 = vst [vmem:[#allocation3 + $0x7b0] sm:$0xff] %v574
      %607 = vst [vmem:[#allocation3 + $0x7f8] sm:$0xff] %v575
      %608 = vst [vmem:[#allocation3 + $0x840] sm:$0xff] %v576
      %609 = vst [vmem:[#allocation3 + $0x888] sm:$0xff] %v577
      %610 = vst [vmem:[#allocation3 + $0x8d0] sm:$0xff] %v578
      %v611 = vld [vmem:[%s322 + $0x1] sm:$0xff]
      %v612 = vld [vmem:[%s322 + $0x9] sm:$0xff]
      %v613 = vld [vmem:[%s322 + $0x19] sm:$0xff]
      %v614 = vld [vmem:[%s322 + $0x21] sm:$0xff]
      %v615 = vld [vmem:[%s322 + $0x31] sm:$0xff]
      %v616 = vld [vmem:[%s322 + $0x39] sm:$0xff]
      %v617 = vld [vmem:[%s322 + $0x49] sm:$0xff]
      %v618 = vld [vmem:[%s322 + $0x51] sm:$0xff]
      %v619 = vld [vmem:[%s322 + $0x61] sm:$0xff]
      %v620 = vld [vmem:[%s322 + $0x69] sm:$0xff]
      %v621 = vld [vmem:[%s322 + $0x79] sm:$0xff]
      %v622 = vld [vmem:[%s322 + $0x81] sm:$0xff]
      %v623 = vld [vmem:[%s322 + $0x91] sm:$0xff]
      %v624 = vld [vmem:[%s322 + $0x99] sm:$0xff]
      %v625 = vld [vmem:[%s322 + $0xa9] sm:$0xff]
      %v626 = vld [vmem:[%s322 + $0xb1] sm:$0xff]
      %v627 = vld [vmem:[%s322 + $0xc1] sm:$0xff]
      %v628 = vld [vmem:[%s322 + $0xc9] sm:$0xff]
      %v629 = vld [vmem:[%s322 + $0xd9] sm:$0xff]
      %v630 = vld [vmem:[%s322 + $0xe1] sm:$0xff]
      %v631 = vld [vmem:[%s322 + $0xf1] sm:$0xff]
      %v632 = vld [vmem:[%s322 + $0xf9] sm:$0xff]
      %v633 = vld [vmem:[%s322 + $0x109] sm:$0xff]
      %v634 = vld [vmem:[%s322 + $0x111] sm:$0xff]
      %v635 = vld [vmem:[%s322 + $0x121] sm:$0xff]
      %v636 = vld [vmem:[%s322 + $0x129] sm:$0xff]
      %v637 = vld [vmem:[%s322 + $0x139] sm:$0xff]
      %v638 = vld [vmem:[%s322 + $0x141] sm:$0xff]
      %v639 = vld [vmem:[%s322 + $0x151] sm:$0xff]
      %v640 = vld [vmem:[%s322 + $0x159] sm:$0xff]
      %v641 = vld [vmem:[%s322 + $0x169] sm:$0xff]
      %v642 = vld [vmem:[%s322 + $0x171] sm:$0xff]
      %643 = vst [vmem:[#allocation3 + $0x20] sm:$0xff] %v611
      %644 = vst [vmem:[#allocation3 + $0x68] sm:$0xff] %v612
      %645 = vst [vmem:[#allocation3 + $0xb0] sm:$0xff] %v613
      %646 = vst [vmem:[#allocation3 + $0xf8] sm:$0xff] %v614
      %647 = vst [vmem:[#allocation3 + $0x140] sm:$0xff] %v615
      %648 = vst [vmem:[#allocation3 + $0x188] sm:$0xff] %v616
      %649 = vst [vmem:[#allocation3 + $0x1d0] sm:$0xff] %v617
      %650 = vst [vmem:[#allocation3 + $0x218] sm:$0xff] %v618
      %651 = vst [vmem:[#allocation3 + $0x260] sm:$0xff] %v619
      %652 = vst [vmem:[#allocation3 + $0x2a8] sm:$0xff] %v620
      %653 = vst [vmem:[#allocation3 + $0x2f0] sm:$0xff] %v621
      %654 = vst [vmem:[#allocation3 + $0x338] sm:$0xff] %v622
      %655 = vst [vmem:[#allocation3 + $0x380] sm:$0xff] %v623
      %656 = vst [vmem:[#allocation3 + $0x3c8] sm:$0xff] %v624
      %657 = vst [vmem:[#allocation3 + $0x410] sm:$0xff] %v625
      %658 = vst [vmem:[#allocation3 + $0x458] sm:$0xff] %v626
      %659 = vst [vmem:[#allocation3 + $0x4a0] sm:$0xff] %v627
      %660 = vst [vmem:[#allocation3 + $0x4e8] sm:$0xff] %v628
      %661 = vst [vmem:[#allocation3 + $0x530] sm:$0xff] %v629
      %662 = vst [vmem:[#allocation3 + $0x578] sm:$0xff] %v630
      %663 = vst [vmem:[#allocation3 + $0x5c0] sm:$0xff] %v631
      %664 = vst [vmem:[#allocation3 + $0x608] sm:$0xff] %v632
      %665 = vst [vmem:[#allocation3 + $0x650] sm:$0xff] %v633
      %666 = vst [vmem:[#allocation3 + $0x698] sm:$0xff] %v634
      %667 = vst [vmem:[#allocation3 + $0x6e0] sm:$0xff] %v635
      %668 = vst [vmem:[#allocation3 + $0x728] sm:$0xff] %v636
      %669 = vst [vmem:[#allocation3 + $0x770] sm:$0xff] %v637
      %670 = vst [vmem:[#allocation3 + $0x7b8] sm:$0xff] %v638
      %671 = vst [vmem:[#allocation3 + $0x800] sm:$0xff] %v639
      %672 = vst [vmem:[#allocation3 + $0x848] sm:$0xff] %v640
      %673 = vst [vmem:[#allocation3 + $0x890] sm:$0xff] %v641
      %674 = vst [vmem:[#allocation3 + $0x8d8] sm:$0xff] %v642
      %v675 = vld [vmem:[%s322 + $0x2] sm:$0xff]
      %v676 = vld [vmem:[%s322 + $0xa] sm:$0xff]
      %v677 = vld [vmem:[%s322 + $0x1a] sm:$0xff]
      %v678 = vld [vmem:[%s322 + $0x22] sm:$0xff]
      %v679 = vld [vmem:[%s322 + $0x32] sm:$0xff]
      %v680 = vld [vmem:[%s322 + $0x3a] sm:$0xff]
      %v681 = vld [vmem:[%s322 + $0x4a] sm:$0xff]
      %v682 = vld [vmem:[%s322 + $0x52] sm:$0xff]
      %v683 = vld [vmem:[%s322 + $0x62] sm:$0xff]
      %v684 = vld [vmem:[%s322 + $0x6a] sm:$0xff]
      %v685 = vld [vmem:[%s322 + $0x7a] sm:$0xff]
      %v686 = vld [vmem:[%s322 + $0x82] sm:$0xff]
      %v687 = vld [vmem:[%s322 + $0x92] sm:$0xff]
      %v688 = vld [vmem:[%s322 + $0x9a] sm:$0xff]
      %v689 = vld [vmem:[%s322 + $0xaa] sm:$0xff]
      %v690 = vld [vmem:[%s322 + $0xb2] sm:$0xff]
      %v691 = vld [vmem:[%s322 + $0xc2] sm:$0xff]
      %v692 = vld [vmem:[%s322 + $0xca] sm:$0xff]
      %v693 = vld [vmem:[%s322 + $0xda] sm:$0xff]
      %v694 = vld [vmem:[%s322 + $0xe2] sm:$0xff]
      %v695 = vld [vmem:[%s322 + $0xf2] sm:$0xff]
      %v696 = vld [vmem:[%s322 + $0xfa] sm:$0xff]
      %v697 = vld [vmem:[%s322 + $0x10a] sm:$0xff]
      %v698 = vld [vmem:[%s322 + $0x112] sm:$0xff]
      %v699 = vld [vmem:[%s322 + $0x122] sm:$0xff]
      %v700 = vld [vmem:[%s322 + $0x12a] sm:$0xff]
      %v701 = vld [vmem:[%s322 + $0x13a] sm:$0xff]
      %v702 = vld [vmem:[%s322 + $0x142] sm:$0xff]
      %v703 = vld [vmem:[%s322 + $0x152] sm:$0xff]
      %v704 = vld [vmem:[%s322 + $0x15a] sm:$0xff]
      %v705 = vld [vmem:[%s322 + $0x16a] sm:$0xff]
      %v706 = vld [vmem:[%s322 + $0x172] sm:$0xff]
      %707 = vst [vmem:[#allocation3 + $0x28] sm:$0xff] %v675
      %708 = vst [vmem:[#allocation3 + $0x70] sm:$0xff] %v676
      %709 = vst [vmem:[#allocation3 + $0xb8] sm:$0xff] %v677
      %710 = vst [vmem:[#allocation3 + $0x100] sm:$0xff] %v678
      %711 = vst [vmem:[#allocation3 + $0x148] sm:$0xff] %v679
      %712 = vst [vmem:[#allocation3 + $0x190] sm:$0xff] %v680
      %713 = vst [vmem:[#allocation3 + $0x1d8] sm:$0xff] %v681
      %714 = vst [vmem:[#allocation3 + $0x220] sm:$0xff] %v682
      %715 = vst [vmem:[#allocation3 + $0x268] sm:$0xff] %v683
      %716 = vst [vmem:[#allocation3 + $0x2b0] sm:$0xff] %v684
      %717 = vst [vmem:[#allocation3 + $0x2f8] sm:$0xff] %v685
      %718 = vst [vmem:[#allocation3 + $0x340] sm:$0xff] %v686
      %719 = vst [vmem:[#allocation3 + $0x388] sm:$0xff] %v687
      %720 = vst [vmem:[#allocation3 + $0x3d0] sm:$0xff] %v688
      %721 = vst [vmem:[#allocation3 + $0x418] sm:$0xff] %v689
      %722 = vst [vmem:[#allocation3 + $0x460] sm:$0xff] %v690
      %723 = vst [vmem:[#allocation3 + $0x4a8] sm:$0xff] %v691
      %724 = vst [vmem:[#allocation3 + $0x4f0] sm:$0xff] %v692
      %725 = vst [vmem:[#allocation3 + $0x538] sm:$0xff] %v693
      %726 = vst [vmem:[#allocation3 + $0x580] sm:$0xff] %v694
      %727 = vst [vmem:[#allocation3 + $0x5c8] sm:$0xff] %v695
      %728 = vst [vmem:[#allocation3 + $0x610] sm:$0xff] %v696
      %729 = vst [vmem:[#allocation3 + $0x658] sm:$0xff] %v697
      %730 = vst [vmem:[#allocation3 + $0x6a0] sm:$0xff] %v698
      %731 = vst [vmem:[#allocation3 + $0x6e8] sm:$0xff] %v699
      %732 = vst [vmem:[#allocation3 + $0x730] sm:$0xff] %v700
      %733 = vst [vmem:[#allocation3 + $0x778] sm:$0xff] %v701
      %734 = vst [vmem:[#allocation3 + $0x7c0] sm:$0xff] %v702
      %735 = vst [vmem:[#allocation3 + $0x808] sm:$0xff] %v703
      %736 = vst [vmem:[#allocation3 + $0x850] sm:$0xff] %v704
      %737 = vst [vmem:[#allocation3 + $0x898] sm:$0xff] %v705
      %738 = vst [vmem:[#allocation3 + $0x8e0] sm:$0xff] %v706
      %s739 = scalar_lea.vmem [#allocation2], 48
      %v740 = vld [vmem:[%s739] sm:$0xff]
      %v741 = vld [vmem:[%s739 + $0x8] sm:$0xff]
      %v742 = vld [vmem:[%s739 + $0x18] sm:$0xff]
      %v743 = vld [vmem:[%s739 + $0x20] sm:$0xff]
      %v744 = vld [vmem:[%s739 + $0x30] sm:$0xff]
      %v745 = vld [vmem:[%s739 + $0x38] sm:$0xff]
      %v746 = vld [vmem:[%s739 + $0x48] sm:$0xff]
      %v747 = vld [vmem:[%s739 + $0x50] sm:$0xff]
      %v748 = vld [vmem:[%s739 + $0x60] sm:$0xff]
      %v749 = vld [vmem:[%s739 + $0x68] sm:$0xff]
      %v750 = vld [vmem:[%s739 + $0x78] sm:$0xff]
      %v751 = vld [vmem:[%s739 + $0x80] sm:$0xff]
      %v752 = vld [vmem:[%s739 + $0x90] sm:$0xff]
      %v753 = vld [vmem:[%s739 + $0x98] sm:$0xff]
      %v754 = vld [vmem:[%s739 + $0xa8] sm:$0xff]
      %v755 = vld [vmem:[%s739 + $0xb0] sm:$0xff]
      %v756 = vld [vmem:[%s739 + $0xc0] sm:$0xff]
      %v757 = vld [vmem:[%s739 + $0xc8] sm:$0xff]
      %v758 = vld [vmem:[%s739 + $0xd8] sm:$0xff]
      %v759 = vld [vmem:[%s739 + $0xe0] sm:$0xff]
      %v760 = vld [vmem:[%s739 + $0xf0] sm:$0xff]
      %v761 = vld [vmem:[%s739 + $0xf8] sm:$0xff]
      %v762 = vld [vmem:[%s739 + $0x108] sm:$0xff]
      %v763 = vld [vmem:[%s739 + $0x110] sm:$0xff]
      %v764 = vld [vmem:[%s739 + $0x120] sm:$0xff]
      %v765 = vld [vmem:[%s739 + $0x128] sm:$0xff]
      %v766 = vld [vmem:[%s739 + $0x138] sm:$0xff]
      %v767 = vld [vmem:[%s739 + $0x140] sm:$0xff]
      %v768 = vld [vmem:[%s739 + $0x150] sm:$0xff]
      %v769 = vld [vmem:[%s739 + $0x158] sm:$0xff]
      %v770 = vld [vmem:[%s739 + $0x168] sm:$0xff]
      %v771 = vld [vmem:[%s739 + $0x170] sm:$0xff]
      %772 = vst [vmem:[#allocation3 + $0x30] sm:$0xff] %v740
      %773 = vst [vmem:[#allocation3 + $0x78] sm:$0xff] %v741
      %774 = vst [vmem:[#allocation3 + $0xc0] sm:$0xff] %v742
      %775 = vst [vmem:[#allocation3 + $0x108] sm:$0xff] %v743
      %776 = vst [vmem:[#allocation3 + $0x150] sm:$0xff] %v744
      %777 = vst [vmem:[#allocation3 + $0x198] sm:$0xff] %v745
      %778 = vst [vmem:[#allocation3 + $0x1e0] sm:$0xff] %v746
      %779 = vst [vmem:[#allocation3 + $0x228] sm:$0xff] %v747
      %780 = vst [vmem:[#allocation3 + $0x270] sm:$0xff] %v748
      %781 = vst [vmem:[#allocation3 + $0x2b8] sm:$0xff] %v749
      %782 = vst [vmem:[#allocation3 + $0x300] sm:$0xff] %v750
      %783 = vst [vmem:[#allocation3 + $0x348] sm:$0xff] %v751
      %784 = vst [vmem:[#allocation3 + $0x390] sm:$0xff] %v752
      %785 = vst [vmem:[#allocation3 + $0x3d8] sm:$0xff] %v753
      %786 = vst [vmem:[#allocation3 + $0x420] sm:$0xff] %v754
      %787 = vst [vmem:[#allocation3 + $0x468] sm:$0xff] %v755
      %788 = vst [vmem:[#allocation3 + $0x4b0] sm:$0xff] %v756
      %789 = vst [vmem:[#allocation3 + $0x4f8] sm:$0xff] %v757
      %790 = vst [vmem:[#allocation3 + $0x540] sm:$0xff] %v758
      %791 = vst [vmem:[#allocation3 + $0x588] sm:$0xff] %v759
      %792 = vst [vmem:[#allocation3 + $0x5d0] sm:$0xff] %v760
      %793 = vst [vmem:[#allocation3 + $0x618] sm:$0xff] %v761
      %794 = vst [vmem:[#allocation3 + $0x660] sm:$0xff] %v762
      %795 = vst [vmem:[#allocation3 + $0x6a8] sm:$0xff] %v763
      %796 = vst [vmem:[#allocation3 + $0x6f0] sm:$0xff] %v764
      %797 = vst [vmem:[#allocation3 + $0x738] sm:$0xff] %v765
      %798 = vst [vmem:[#allocation3 + $0x780] sm:$0xff] %v766
      %799 = vst [vmem:[#allocation3 + $0x7c8] sm:$0xff] %v767
      %800 = vst [vmem:[#allocation3 + $0x810] sm:$0xff] %v768
      %801 = vst [vmem:[#allocation3 + $0x858] sm:$0xff] %v769
      %802 = vst [vmem:[#allocation3 + $0x8a0] sm:$0xff] %v770
      %803 = vst [vmem:[#allocation3 + $0x8e8] sm:$0xff] %v771
      %v804 = vld [vmem:[%s739 + $0x1] sm:$0xff]
      %v805 = vld [vmem:[%s739 + $0x9] sm:$0xff]
      %v806 = vld [vmem:[%s739 + $0x19] sm:$0xff]
      %v807 = vld [vmem:[%s739 + $0x21] sm:$0xff]
      %v808 = vld [vmem:[%s739 + $0x31] sm:$0xff]
      %v809 = vld [vmem:[%s739 + $0x39] sm:$0xff]
      %v810 = vld [vmem:[%s739 + $0x49] sm:$0xff]
      %v811 = vld [vmem:[%s739 + $0x51] sm:$0xff]
      %v812 = vld [vmem:[%s739 + $0x61] sm:$0xff]
      %v813 = vld [vmem:[%s739 + $0x69] sm:$0xff]
      %v814 = vld [vmem:[%s739 + $0x79] sm:$0xff]
      %v815 = vld [vmem:[%s739 + $0x81] sm:$0xff]
      %v816 = vld [vmem:[%s739 + $0x91] sm:$0xff]
      %v817 = vld [vmem:[%s739 + $0x99] sm:$0xff]
      %v818 = vld [vmem:[%s739 + $0xa9] sm:$0xff]
      %v819 = vld [vmem:[%s739 + $0xb1] sm:$0xff]
      %v820 = vld [vmem:[%s739 + $0xc1] sm:$0xff]
      %v821 = vld [vmem:[%s739 + $0xc9] sm:$0xff]
      %v822 = vld [vmem:[%s739 + $0xd9] sm:$0xff]
      %v823 = vld [vmem:[%s739 + $0xe1] sm:$0xff]
      %v824 = vld [vmem:[%s739 + $0xf1] sm:$0xff]
      %v825 = vld [vmem:[%s739 + $0xf9] sm:$0xff]
      %v826 = vld [vmem:[%s739 + $0x109] sm:$0xff]
      %v827 = vld [vmem:[%s739 + $0x111] sm:$0xff]
      %v828 = vld [vmem:[%s739 + $0x121] sm:$0xff]
      %v829 = vld [vmem:[%s739 + $0x129] sm:$0xff]
      %v830 = vld [vmem:[%s739 + $0x139] sm:$0xff]
      %v831 = vld [vmem:[%s739 + $0x141] sm:$0xff]
      %v832 = vld [vmem:[%s739 + $0x151] sm:$0xff]
      %v833 = vld [vmem:[%s739 + $0x159] sm:$0xff]
      %v834 = vld [vmem:[%s739 + $0x169] sm:$0xff]
      %v835 = vld [vmem:[%s739 + $0x171] sm:$0xff]
      %836 = vst [vmem:[#allocation3 + $0x38] sm:$0xff] %v804
      %837 = vst [vmem:[#allocation3 + $0x80] sm:$0xff] %v805
      %838 = vst [vmem:[#allocation3 + $0xc8] sm:$0xff] %v806
      %839 = vst [vmem:[#allocation3 + $0x110] sm:$0xff] %v807
      %840 = vst [vmem:[#allocation3 + $0x158] sm:$0xff] %v808
      %841 = vst [vmem:[#allocation3 + $0x1a0] sm:$0xff] %v809
      %842 = vst [vmem:[#allocation3 + $0x1e8] sm:$0xff] %v810
      %843 = vst [vmem:[#allocation3 + $0x230] sm:$0xff] %v811
      %844 = vst [vmem:[#allocation3 + $0x278] sm:$0xff] %v812
      %845 = vst [vmem:[#allocation3 + $0x2c0] sm:$0xff] %v813
      %846 = vst [vmem:[#allocation3 + $0x308] sm:$0xff] %v814
      %847 = vst [vmem:[#allocation3 + $0x350] sm:$0xff] %v815
      %848 = vst [vmem:[#allocation3 + $0x398] sm:$0xff] %v816
      %849 = vst [vmem:[#allocation3 + $0x3e0] sm:$0xff] %v817
      %850 = vst [vmem:[#allocation3 + $0x428] sm:$0xff] %v818
      %851 = vst [vmem:[#allocation3 + $0x470] sm:$0xff] %v819
      %852 = vst [vmem:[#allocation3 + $0x4b8] sm:$0xff] %v820
      %853 = vst [vmem:[#allocation3 + $0x500] sm:$0xff] %v821
      %854 = vst [vmem:[#allocation3 + $0x548] sm:$0xff] %v822
      %855 = vst [vmem:[#allocation3 + $0x590] sm:$0xff] %v823
      %856 = vst [vmem:[#allocation3 + $0x5d8] sm:$0xff] %v824
      %857 = vst [vmem:[#allocation3 + $0x620] sm:$0xff] %v825
      %858 = vst [vmem:[#allocation3 + $0x668] sm:$0xff] %v826
      %859 = vst [vmem:[#allocation3 + $0x6b0] sm:$0xff] %v827
      %860 = vst [vmem:[#allocation3 + $0x6f8] sm:$0xff] %v828
      %861 = vst [vmem:[#allocation3 + $0x740] sm:$0xff] %v829
      %862 = vst [vmem:[#allocation3 + $0x788] sm:$0xff] %v830
      %863 = vst [vmem:[#allocation3 + $0x7d0] sm:$0xff] %v831
      %864 = vst [vmem:[#allocation3 + $0x818] sm:$0xff] %v832
      %865 = vst [vmem:[#allocation3 + $0x860] sm:$0xff] %v833
      %866 = vst [vmem:[#allocation3 + $0x8a8] sm:$0xff] %v834
      %867 = vst [vmem:[#allocation3 + $0x8f0] sm:$0xff] %v835
      %v868 = vld [vmem:[%s739 + $0x2] sm:$0xff]
      %v869 = vld [vmem:[%s739 + $0xa] sm:$0xff]
      %v870 = vld [vmem:[%s739 + $0x1a] sm:$0xff]
      %v871 = vld [vmem:[%s739 + $0x22] sm:$0xff]
      %v872 = vld [vmem:[%s739 + $0x32] sm:$0xff]
      %v873 = vld [vmem:[%s739 + $0x3a] sm:$0xff]
      %v874 = vld [vmem:[%s739 + $0x4a] sm:$0xff]
      %v875 = vld [vmem:[%s739 + $0x52] sm:$0xff]
      %v876 = vld [vmem:[%s739 + $0x62] sm:$0xff]
      %v877 = vld [vmem:[%s739 + $0x6a] sm:$0xff]
      %v878 = vld [vmem:[%s739 + $0x7a] sm:$0xff]
      %v879 = vld [vmem:[%s739 + $0x82] sm:$0xff]
      %v880 = vld [vmem:[%s739 + $0x92] sm:$0xff]
      %v881 = vld [vmem:[%s739 + $0x9a] sm:$0xff]
      %v882 = vld [vmem:[%s739 + $0xaa] sm:$0xff]
      %v883 = vld [vmem:[%s739 + $0xb2] sm:$0xff]
      %v884 = vld [vmem:[%s739 + $0xc2] sm:$0xff]
      %v885 = vld [vmem:[%s739 + $0xca] sm:$0xff]
      %v886 = vld [vmem:[%s739 + $0xda] sm:$0xff]
      %v887 = vld [vmem:[%s739 + $0xe2] sm:$0xff]
      %v888 = vld [vmem:[%s739 + $0xf2] sm:$0xff]
      %v889 = vld [vmem:[%s739 + $0xfa] sm:$0xff]
      %v890 = vld [vmem:[%s739 + $0x10a] sm:$0xff]
      %v891 = vld [vmem:[%s739 + $0x112] sm:$0xff]
      %v892 = vld [vmem:[%s739 + $0x122] sm:$0xff]
      %v893 = vld [vmem:[%s739 + $0x12a] sm:$0xff]
      %v894 = vld [vmem:[%s739 + $0x13a] sm:$0xff]
      %v895 = vld [vmem:[%s739 + $0x142] sm:$0xff]
      %v896 = vld [vmem:[%s739 + $0x152] sm:$0xff]
      %v897 = vld [vmem:[%s739 + $0x15a] sm:$0xff]
      %v898 = vld [vmem:[%s739 + $0x16a] sm:$0xff]
      %v899 = vld [vmem:[%s739 + $0x172] sm:$0xff]
      %900 = vst [vmem:[#allocation3 + $0x40] sm:$0xff] %v868
      %901 = vst [vmem:[#allocation3 + $0x88] sm:$0xff] %v869
      %902 = vst [vmem:[#allocation3 + $0xd0] sm:$0xff] %v870
      %903 = vst [vmem:[#allocation3 + $0x118] sm:$0xff] %v871
      %904 = vst [vmem:[#allocation3 + $0x160] sm:$0xff] %v872
      %905 = vst [vmem:[#allocation3 + $0x1a8] sm:$0xff] %v873
      %906 = vst [vmem:[#allocation3 + $0x1f0] sm:$0xff] %v874
      %907 = vst [vmem:[#allocation3 + $0x238] sm:$0xff] %v875
      %908 = vst [vmem:[#allocation3 + $0x280] sm:$0xff] %v876
      %909 = vst [vmem:[#allocation3 + $0x2c8] sm:$0xff] %v877
      %910 = vst [vmem:[#allocation3 + $0x310] sm:$0xff] %v878
      %911 = vst [vmem:[#allocation3 + $0x358] sm:$0xff] %v879
      %912 = vst [vmem:[#allocation3 + $0x3a0] sm:$0xff] %v880
      %913 = vst [vmem:[#allocation3 + $0x3e8] sm:$0xff] %v881
      %914 = vst [vmem:[#allocation3 + $0x430] sm:$0xff] %v882
      %915 = vst [vmem:[#allocation3 + $0x478] sm:$0xff] %v883
      %916 = vst [vmem:[#allocation3 + $0x4c0] sm:$0xff] %v884
      %917 = vst [vmem:[#allocation3 + $0x508] sm:$0xff] %v885
      %918 = vst [vmem:[#allocation3 + $0x550] sm:$0xff] %v886
      %919 = vst [vmem:[#allocation3 + $0x598] sm:$0xff] %v887
      %920 = vst [vmem:[#allocation3 + $0x5e0] sm:$0xff] %v888
      %921 = vst [vmem:[#allocation3 + $0x628] sm:$0xff] %v889
      %922 = vst [vmem:[#allocation3 + $0x670] sm:$0xff] %v890
      %923 = vst [vmem:[#allocation3 + $0x6b8] sm:$0xff] %v891
      %924 = vst [vmem:[#allocation3 + $0x700] sm:$0xff] %v892
      %925 = vst [vmem:[#allocation3 + $0x748] sm:$0xff] %v893
      %926 = vst [vmem:[#allocation3 + $0x790] sm:$0xff] %v894
      %927 = vst [vmem:[#allocation3 + $0x7d8] sm:$0xff] %v895
      %928 = vst [vmem:[#allocation3 + $0x820] sm:$0xff] %v896
      %929 = vst [vmem:[#allocation3 + $0x868] sm:$0xff] %v897
      %930 = vst [vmem:[#allocation3 + $0x8b0] sm:$0xff] %v898
      %931 = vst [vmem:[#allocation3 + $0x8f8] sm:$0xff] %v899
      %v932 = vld [vmem:[#allocation3] sm:$0xff]
      %v933 = vld [vmem:[#allocation3 + $0x8] sm:$0xff]
      %v934 = vld [vmem:[#allocation3 + $0x10] sm:$0xff]
      %v935 = vld [vmem:[#allocation3 + $0x18] sm:$0xff]
      %v936 = vld [vmem:[#allocation3 + $0x20] sm:$0xff]
      %v937 = vld [vmem:[#allocation3 + $0x28] sm:$0xff]
      %v938 = vld [vmem:[#allocation3 + $0x30] sm:$0xff]
      %v939 = vld [vmem:[#allocation3 + $0x38] sm:$0xff]
      %v940 = vld [vmem:[#allocation3 + $0x40] sm:$0xff]
      %v941 = vld [vmem:[#allocation3 + $0x48] sm:$0xff]
      %v942 = vld [vmem:[#allocation3 + $0x50] sm:$0xff]
      %v943 = vld [vmem:[#allocation3 + $0x58] sm:$0xff]
      %v944 = vld [vmem:[#allocation3 + $0x60] sm:$0xff]
      %v945 = vld [vmem:[#allocation3 + $0x68] sm:$0xff]
      %v946 = vld [vmem:[#allocation3 + $0x70] sm:$0xff]
      %v947 = vld [vmem:[#allocation3 + $0x78] sm:$0xff]
      %v948 = vld [vmem:[#allocation3 + $0x80] sm:$0xff]
      %v949 = vld [vmem:[#allocation3 + $0x88] sm:$0xff]
      %v950 = vld [vmem:[#allocation3 + $0x90] sm:$0xff]
      %v951 = vld [vmem:[#allocation3 + $0x98] sm:$0xff]
      %v952 = vld [vmem:[#allocation3 + $0xa0] sm:$0xff]
      %v953 = vld [vmem:[#allocation3 + $0xa8] sm:$0xff]
      %v954 = vld [vmem:[#allocation3 + $0xb0] sm:$0xff]
      %v955 = vld [vmem:[#allocation3 + $0xb8] sm:$0xff]
      %v956 = vld [vmem:[#allocation3 + $0xc0] sm:$0xff]
      %v957 = vld [vmem:[#allocation3 + $0xc8] sm:$0xff]
      %v958 = vld [vmem:[#allocation3 + $0xd0] sm:$0xff]
      %v959 = vld [vmem:[#allocation3 + $0xd8] sm:$0xff]
      %v960 = vld [vmem:[#allocation3 + $0xe0] sm:$0xff]
      %v961 = vld [vmem:[#allocation3 + $0xe8] sm:$0xff]
      %v962 = vld [vmem:[#allocation3 + $0xf0] sm:$0xff]
      %v963 = vld [vmem:[#allocation3 + $0xf8] sm:$0xff]
      %v964 = vld [vmem:[#allocation3 + $0x100] sm:$0xff]
      %v965 = vld [vmem:[#allocation3 + $0x108] sm:$0xff]
      %v966 = vld [vmem:[#allocation3 + $0x110] sm:$0xff]
      %v967 = vld [vmem:[#allocation3 + $0x118] sm:$0xff]
      %v968 = vld [vmem:[#allocation3 + $0x120] sm:$0xff]
      %v969 = vld [vmem:[#allocation3 + $0x128] sm:$0xff]
      %v970 = vld [vmem:[#allocation3 + $0x130] sm:$0xff]
      %v971 = vld [vmem:[#allocation3 + $0x138] sm:$0xff]
      %v972 = vld [vmem:[#allocation3 + $0x140] sm:$0xff]
      %v973 = vld [vmem:[#allocation3 + $0x148] sm:$0xff]
      %v974 = vld [vmem:[#allocation3 + $0x150] sm:$0xff]
      %v975 = vld [vmem:[#allocation3 + $0x158] sm:$0xff]
      %v976 = vld [vmem:[#allocation3 + $0x160] sm:$0xff]
      %v977 = vld [vmem:[#allocation3 + $0x168] sm:$0xff]
      %v978 = vld [vmem:[#allocation3 + $0x170] sm:$0xff]
      %v979 = vld [vmem:[#allocation3 + $0x178] sm:$0xff]
      %v980 = vld [vmem:[#allocation3 + $0x180] sm:$0xff]
      %v981 = vld [vmem:[#allocation3 + $0x188] sm:$0xff]
      %v982 = vld [vmem:[#allocation3 + $0x190] sm:$0xff]
      %v983 = vld [vmem:[#allocation3 + $0x198] sm:$0xff]
      %v984 = vld [vmem:[#allocation3 + $0x1a0] sm:$0xff]
      %v985 = vld [vmem:[#allocation3 + $0x1a8] sm:$0xff]
      %v986 = vld [vmem:[#allocation3 + $0x1b0] sm:$0xff]
      %v987 = vld [vmem:[#allocation3 + $0x1b8] sm:$0xff]
      %v988 = vld [vmem:[#allocation3 + $0x1c0] sm:$0xff]
      %v989 = vld [vmem:[#allocation3 + $0x1c8] sm:$0xff]
      %v990 = vld [vmem:[#allocation3 + $0x1d0] sm:$0xff]
      %v991 = vld [vmem:[#allocation3 + $0x1d8] sm:$0xff]
      %v992 = vld [vmem:[#allocation3 + $0x1e0] sm:$0xff]
      %v993 = vld [vmem:[#allocation3 + $0x1e8] sm:$0xff]
      %v994 = vld [vmem:[#allocation3 + $0x1f0] sm:$0xff]
      %v995 = vld [vmem:[#allocation3 + $0x1f8] sm:$0xff]
      %v996 = vld [vmem:[#allocation3 + $0x200] sm:$0xff]
      %v997 = vld [vmem:[#allocation3 + $0x208] sm:$0xff]
      %v998 = vld [vmem:[#allocation3 + $0x210] sm:$0xff]
      %v999 = vld [vmem:[#allocation3 + $0x218] sm:$0xff]
      %v1000 = vld [vmem:[#allocation3 + $0x220] sm:$0xff]
      %v1001 = vld [vmem:[#allocation3 + $0x228] sm:$0xff]
      %v1002 = vld [vmem:[#allocation3 + $0x230] sm:$0xff]
      %v1003 = vld [vmem:[#allocation3 + $0x238] sm:$0xff]
      %v1004 = vld [vmem:[#allocation3 + $0x240] sm:$0xff]
      %v1005 = vld [vmem:[#allocation3 + $0x248] sm:$0xff]
      %v1006 = vld [vmem:[#allocation3 + $0x250] sm:$0xff]
      %v1007 = vld [vmem:[#allocation3 + $0x258] sm:$0xff]
      %v1008 = vld [vmem:[#allocation3 + $0x260] sm:$0xff]
      %v1009 = vld [vmem:[#allocation3 + $0x268] sm:$0xff]
      %v1010 = vld [vmem:[#allocation3 + $0x270] sm:$0xff]
      %v1011 = vld [vmem:[#allocation3 + $0x278] sm:$0xff]
      %v1012 = vld [vmem:[#allocation3 + $0x280] sm:$0xff]
      %v1013 = vld [vmem:[#allocation3 + $0x288] sm:$0xff]
      %v1014 = vld [vmem:[#allocation3 + $0x290] sm:$0xff]
      %v1015 = vld [vmem:[#allocation3 + $0x298] sm:$0xff]
      %v1016 = vld [vmem:[#allocation3 + $0x2a0] sm:$0xff]
      %v1017 = vld [vmem:[#allocation3 + $0x2a8] sm:$0xff]
      %v1018 = vld [vmem:[#allocation3 + $0x2b0] sm:$0xff]
      %v1019 = vld [vmem:[#allocation3 + $0x2b8] sm:$0xff]
      %v1020 = vld [vmem:[#allocation3 + $0x2c0] sm:$0xff]
      %v1021 = vld [vmem:[#allocation3 + $0x2c8] sm:$0xff]
      %v1022 = vld [vmem:[#allocation3 + $0x2d0] sm:$0xff]
      %v1023 = vld [vmem:[#allocation3 + $0x2d8] sm:$0xff]
      %v1024 = vld [vmem:[#allocation3 + $0x2e0] sm:$0xff]
      %v1025 = vld [vmem:[#allocation3 + $0x2e8] sm:$0xff]
      %v1026 = vld [vmem:[#allocation3 + $0x2f0] sm:$0xff]
      %v1027 = vld [vmem:[#allocation3 + $0x2f8] sm:$0xff]
      %v1028 = vld [vmem:[#allocation3 + $0x300] sm:$0xff]
      %v1029 = vld [vmem:[#allocation3 + $0x308] sm:$0xff]
      %v1030 = vld [vmem:[#allocation3 + $0x310] sm:$0xff]
      %v1031 = vld [vmem:[#allocation3 + $0x318] sm:$0xff]
      %v1032 = vld [vmem:[#allocation3 + $0x320] sm:$0xff]
      %v1033 = vld [vmem:[#allocation3 + $0x328] sm:$0xff]
      %v1034 = vld [vmem:[#allocation3 + $0x330] sm:$0xff]
      %v1035 = vld [vmem:[#allocation3 + $0x338] sm:$0xff]
      %v1036 = vld [vmem:[#allocation3 + $0x340] sm:$0xff]
      %v1037 = vld [vmem:[#allocation3 + $0x348] sm:$0xff]
      %v1038 = vld [vmem:[#allocation3 + $0x350] sm:$0xff]
      %v1039 = vld [vmem:[#allocation3 + $0x358] sm:$0xff]
      %v1040 = vld [vmem:[#allocation3 + $0x360] sm:$0xff]
      %v1041 = vld [vmem:[#allocation3 + $0x368] sm:$0xff]
      %v1042 = vld [vmem:[#allocation3 + $0x370] sm:$0xff]
      %v1043 = vld [vmem:[#allocation3 + $0x378] sm:$0xff]
      %v1044 = vld [vmem:[#allocation3 + $0x380] sm:$0xff]
      %v1045 = vld [vmem:[#allocation3 + $0x388] sm:$0xff]
      %v1046 = vld [vmem:[#allocation3 + $0x390] sm:$0xff]
      %v1047 = vld [vmem:[#allocation3 + $0x398] sm:$0xff]
      %v1048 = vld [vmem:[#allocation3 + $0x3a0] sm:$0xff]
      %v1049 = vld [vmem:[#allocation3 + $0x3a8] sm:$0xff]
      %v1050 = vld [vmem:[#allocation3 + $0x3b0] sm:$0xff]
      %v1051 = vld [vmem:[#allocation3 + $0x3b8] sm:$0xff]
      %v1052 = vld [vmem:[#allocation3 + $0x3c0] sm:$0xff]
      %v1053 = vld [vmem:[#allocation3 + $0x3c8] sm:$0xff]
      %v1054 = vld [vmem:[#allocation3 + $0x3d0] sm:$0xff]
      %v1055 = vld [vmem:[#allocation3 + $0x3d8] sm:$0xff]
      %v1056 = vld [vmem:[#allocation3 + $0x3e0] sm:$0xff]
      %v1057 = vld [vmem:[#allocation3 + $0x3e8] sm:$0xff]
      %v1058 = vld [vmem:[#allocation3 + $0x3f0] sm:$0xff]
      %v1059 = vld [vmem:[#allocation3 + $0x3f8] sm:$0xff]
      %v1060 = vld [vmem:[#allocation3 + $0x400] sm:$0xff]
      %v1061 = vld [vmem:[#allocation3 + $0x408] sm:$0xff]
      %v1062 = vld [vmem:[#allocation3 + $0x410] sm:$0xff]
      %v1063 = vld [vmem:[#allocation3 + $0x418] sm:$0xff]
      %v1064 = vld [vmem:[#allocation3 + $0x420] sm:$0xff]
      %v1065 = vld [vmem:[#allocation3 + $0x428] sm:$0xff]
      %v1066 = vld [vmem:[#allocation3 + $0x430] sm:$0xff]
      %v1067 = vld [vmem:[#allocation3 + $0x438] sm:$0xff]
      %v1068 = vld [vmem:[#allocation3 + $0x440] sm:$0xff]
      %v1069 = vld [vmem:[#allocation3 + $0x448] sm:$0xff]
      %v1070 = vld [vmem:[#allocation3 + $0x450] sm:$0xff]
      %v1071 = vld [vmem:[#allocation3 + $0x458] sm:$0xff]
      %v1072 = vld [vmem:[#allocation3 + $0x460] sm:$0xff]
      %v1073 = vld [vmem:[#allocation3 + $0x468] sm:$0xff]
      %v1074 = vld [vmem:[#allocation3 + $0x470] sm:$0xff]
      %v1075 = vld [vmem:[#allocation3 + $0x478] sm:$0xff]
      %v1076 = vld [vmem:[#allocation3 + $0x480] sm:$0xff]
      %v1077 = vld [vmem:[#allocation3 + $0x488] sm:$0xff]
      %v1078 = vld [vmem:[#allocation3 + $0x490] sm:$0xff]
      %v1079 = vld [vmem:[#allocation3 + $0x498] sm:$0xff]
      %v1080 = vld [vmem:[#allocation3 + $0x4a0] sm:$0xff]
      %v1081 = vld [vmem:[#allocation3 + $0x4a8] sm:$0xff]
      %v1082 = vld [vmem:[#allocation3 + $0x4b0] sm:$0xff]
      %v1083 = vld [vmem:[#allocation3 + $0x4b8] sm:$0xff]
      %v1084 = vld [vmem:[#allocation3 + $0x4c0] sm:$0xff]
      %v1085 = vld [vmem:[#allocation3 + $0x4c8] sm:$0xff]
      %v1086 = vld [vmem:[#allocation3 + $0x4d0] sm:$0xff]
      %v1087 = vld [vmem:[#allocation3 + $0x4d8] sm:$0xff]
      %v1088 = vld [vmem:[#allocation3 + $0x4e0] sm:$0xff]
      %v1089 = vld [vmem:[#allocation3 + $0x4e8] sm:$0xff]
      %v1090 = vld [vmem:[#allocation3 + $0x4f0] sm:$0xff]
      %v1091 = vld [vmem:[#allocation3 + $0x4f8] sm:$0xff]
      %v1092 = vld [vmem:[#allocation3 + $0x500] sm:$0xff]
      %v1093 = vld [vmem:[#allocation3 + $0x508] sm:$0xff]
      %v1094 = vld [vmem:[#allocation3 + $0x510] sm:$0xff]
      %v1095 = vld [vmem:[#allocation3 + $0x518] sm:$0xff]
      %v1096 = vld [vmem:[#allocation3 + $0x520] sm:$0xff]
      %v1097 = vld [vmem:[#allocation3 + $0x528] sm:$0xff]
      %v1098 = vld [vmem:[#allocation3 + $0x530] sm:$0xff]
      %v1099 = vld [vmem:[#allocation3 + $0x538] sm:$0xff]
      %v1100 = vld [vmem:[#allocation3 + $0x540] sm:$0xff]
      %v1101 = vld [vmem:[#allocation3 + $0x548] sm:$0xff]
      %v1102 = vld [vmem:[#allocation3 + $0x550] sm:$0xff]
      %v1103 = vld [vmem:[#allocation3 + $0x558] sm:$0xff]
      %v1104 = vld [vmem:[#allocation3 + $0x560] sm:$0xff]
      %v1105 = vld [vmem:[#allocation3 + $0x568] sm:$0xff]
      %v1106 = vld [vmem:[#allocation3 + $0x570] sm:$0xff]
      %v1107 = vld [vmem:[#allocation3 + $0x578] sm:$0xff]
      %v1108 = vld [vmem:[#allocation3 + $0x580] sm:$0xff]
      %v1109 = vld [vmem:[#allocation3 + $0x588] sm:$0xff]
      %v1110 = vld [vmem:[#allocation3 + $0x590] sm:$0xff]
      %v1111 = vld [vmem:[#allocation3 + $0x598] sm:$0xff]
      %v1112 = vld [vmem:[#allocation3 + $0x5a0] sm:$0xff]
      %v1113 = vld [vmem:[#allocation3 + $0x5a8] sm:$0xff]
      %v1114 = vld [vmem:[#allocation3 + $0x5b0] sm:$0xff]
      %v1115 = vld [vmem:[#allocation3 + $0x5b8] sm:$0xff]
      %v1116 = vld [vmem:[#allocation3 + $0x5c0] sm:$0xff]
      %v1117 = vld [vmem:[#allocation3 + $0x5c8] sm:$0xff]
      %v1118 = vld [vmem:[#allocation3 + $0x5d0] sm:$0xff]
      %v1119 = vld [vmem:[#allocation3 + $0x5d8] sm:$0xff]
      %v1120 = vld [vmem:[#allocation3 + $0x5e0] sm:$0xff]
      %v1121 = vld [vmem:[#allocation3 + $0x5e8] sm:$0xff]
      %v1122 = vld [vmem:[#allocation3 + $0x5f0] sm:$0xff]
      %v1123 = vld [vmem:[#allocation3 + $0x5f8] sm:$0xff]
      %v1124 = vld [vmem:[#allocation3 + $0x600] sm:$0xff]
      %v1125 = vld [vmem:[#allocation3 + $0x608] sm:$0xff]
      %v1126 = vld [vmem:[#allocation3 + $0x610] sm:$0xff]
      %v1127 = vld [vmem:[#allocation3 + $0x618] sm:$0xff]
      %v1128 = vld [vmem:[#allocation3 + $0x620] sm:$0xff]
      %v1129 = vld [vmem:[#allocation3 + $0x628] sm:$0xff]
      %v1130 = vld [vmem:[#allocation3 + $0x630] sm:$0xff]
      %v1131 = vld [vmem:[#allocation3 + $0x638] sm:$0xff]
      %v1132 = vld [vmem:[#allocation3 + $0x640] sm:$0xff]
      %v1133 = vld [vmem:[#allocation3 + $0x648] sm:$0xff]
      %v1134 = vld [vmem:[#allocation3 + $0x650] sm:$0xff]
      %v1135 = vld [vmem:[#allocation3 + $0x658] sm:$0xff]
      %v1136 = vld [vmem:[#allocation3 + $0x660] sm:$0xff]
      %v1137 = vld [vmem:[#allocation3 + $0x668] sm:$0xff]
      %v1138 = vld [vmem:[#allocation3 + $0x670] sm:$0xff]
      %v1139 = vld [vmem:[#allocation3 + $0x678] sm:$0xff]
      %v1140 = vld [vmem:[#allocation3 + $0x680] sm:$0xff]
      %v1141 = vld [vmem:[#allocation3 + $0x688] sm:$0xff]
      %v1142 = vld [vmem:[#allocation3 + $0x690] sm:$0xff]
      %v1143 = vld [vmem:[#allocation3 + $0x698] sm:$0xff]
      %v1144 = vld [vmem:[#allocation3 + $0x6a0] sm:$0xff]
      %v1145 = vld [vmem:[#allocation3 + $0x6a8] sm:$0xff]
      %v1146 = vld [vmem:[#allocation3 + $0x6b0] sm:$0xff]
      %v1147 = vld [vmem:[#allocation3 + $0x6b8] sm:$0xff]
      %v1148 = vld [vmem:[#allocation3 + $0x6c0] sm:$0xff]
      %v1149 = vld [vmem:[#allocation3 + $0x6c8] sm:$0xff]
      %v1150 = vld [vmem:[#allocation3 + $0x6d0] sm:$0xff]
      %v1151 = vld [vmem:[#allocation3 + $0x6d8] sm:$0xff]
      %v1152 = vld [vmem:[#allocation3 + $0x6e0] sm:$0xff]
      %v1153 = vld [vmem:[#allocation3 + $0x6e8] sm:$0xff]
      %v1154 = vld [vmem:[#allocation3 + $0x6f0] sm:$0xff]
      %v1155 = vld [vmem:[#allocation3 + $0x6f8] sm:$0xff]
      %v1156 = vld [vmem:[#allocation3 + $0x700] sm:$0xff]
      %v1157 = vld [vmem:[#allocation3 + $0x708] sm:$0xff]
      %v1158 = vld [vmem:[#allocation3 + $0x710] sm:$0xff]
      %v1159 = vld [vmem:[#allocation3 + $0x718] sm:$0xff]
      %v1160 = vld [vmem:[#allocation3 + $0x720] sm:$0xff]
      %v1161 = vld [vmem:[#allocation3 + $0x728] sm:$0xff]
      %v1162 = vld [vmem:[#allocation3 + $0x730] sm:$0xff]
      %v1163 = vld [vmem:[#allocation3 + $0x738] sm:$0xff]
      %v1164 = vld [vmem:[#allocation3 + $0x740] sm:$0xff]
      %v1165 = vld [vmem:[#allocation3 + $0x748] sm:$0xff]
      %v1166 = vld [vmem:[#allocation3 + $0x750] sm:$0xff]
      %v1167 = vld [vmem:[#allocation3 + $0x758] sm:$0xff]
      %v1168 = vld [vmem:[#allocation3 + $0x760] sm:$0xff]
      %v1169 = vld [vmem:[#allocation3 + $0x768] sm:$0xff]
      %v1170 = vld [vmem:[#allocation3 + $0x770] sm:$0xff]
      %v1171 = vld [vmem:[#allocation3 + $0x778] sm:$0xff]
      %v1172 = vld [vmem:[#allocation3 + $0x780] sm:$0xff]
      %v1173 = vld [vmem:[#allocation3 + $0x788] sm:$0xff]
      %v1174 = vld [vmem:[#allocation3 + $0x790] sm:$0xff]
      %v1175 = vld [vmem:[#allocation3 + $0x798] sm:$0xff]
      %v1176 = vld [vmem:[#allocation3 + $0x7a0] sm:$0xff]
      %v1177 = vld [vmem:[#allocation3 + $0x7a8] sm:$0xff]
      %v1178 = vld [vmem:[#allocation3 + $0x7b0] sm:$0xff]
      %v1179 = vld [vmem:[#allocation3 + $0x7b8] sm:$0xff]
      %v1180 = vld [vmem:[#allocation3 + $0x7c0] sm:$0xff]
      %v1181 = vld [vmem:[#allocation3 + $0x7c8] sm:$0xff]
      %v1182 = vld [vmem:[#allocation3 + $0x7d0] sm:$0xff]
      %v1183 = vld [vmem:[#allocation3 + $0x7d8] sm:$0xff]
      %v1184 = vld [vmem:[#allocation3 + $0x7e0] sm:$0xff]
      %v1185 = vld [vmem:[#allocation3 + $0x7e8] sm:$0xff]
      %v1186 = vld [vmem:[#allocation3 + $0x7f0] sm:$0xff]
      %v1187 = vld [vmem:[#allocation3 + $0x7f8] sm:$0xff]
      %v1188 = vld [vmem:[#allocation3 + $0x800] sm:$0xff]
      %v1189 = vld [vmem:[#allocation3 + $0x808] sm:$0xff]
      %v1190 = vld [vmem:[#allocation3 + $0x810] sm:$0xff]
      %v1191 = vld [vmem:[#allocation3 + $0x818] sm:$0xff]
      %v1192 = vld [vmem:[#allocation3 + $0x820] sm:$0xff]
      %v1193 = vld [vmem:[#allocation3 + $0x828] sm:$0xff]
      %v1194 = vld [vmem:[#allocation3 + $0x830] sm:$0xff]
      %v1195 = vld [vmem:[#allocation3 + $0x838] sm:$0xff]
      %v1196 = vld [vmem:[#allocation3 + $0x840] sm:$0xff]
      %v1197 = vld [vmem:[#allocation3 + $0x848] sm:$0xff]
      %v1198 = vld [vmem:[#allocation3 + $0x850] sm:$0xff]
      %v1199 = vld [vmem:[#allocation3 + $0x858] sm:$0xff]
      %v1200 = vld [vmem:[#allocation3 + $0x860] sm:$0xff]
      %v1201 = vld [vmem:[#allocation3 + $0x868] sm:$0xff]
      %v1202 = vld [vmem:[#allocation3 + $0x870] sm:$0xff]
      %v1203 = vld [vmem:[#allocation3 + $0x878] sm:$0xff]
      %v1204 = vld [vmem:[#allocation3 + $0x880] sm:$0xff]
      %v1205 = vld [vmem:[#allocation3 + $0x888] sm:$0xff]
      %v1206 = vld [vmem:[#allocation3 + $0x890] sm:$0xff]
      %v1207 = vld [vmem:[#allocation3 + $0x898] sm:$0xff]
      %v1208 = vld [vmem:[#allocation3 + $0x8a0] sm:$0xff]
      %v1209 = vld [vmem:[#allocation3 + $0x8a8] sm:$0xff]
      %v1210 = vld [vmem:[#allocation3 + $0x8b0] sm:$0xff]
      %v1211 = vld [vmem:[#allocation3 + $0x8b8] sm:$0xff]
      %v1212 = vld [vmem:[#allocation3 + $0x8c0] sm:$0xff]
      %v1213 = vld [vmem:[#allocation3 + $0x8c8] sm:$0xff]
      %v1214 = vld [vmem:[#allocation3 + $0x8d0] sm:$0xff]
      %v1215 = vld [vmem:[#allocation3 + $0x8d8] sm:$0xff]
      %v1216 = vld [vmem:[#allocation3 + $0x8e0] sm:$0xff]
      %v1217 = vld [vmem:[#allocation3 + $0x8e8] sm:$0xff]
      %v1218 = vld [vmem:[#allocation3 + $0x8f0] sm:$0xff]
      %v1219 = vld [vmem:[#allocation3 + $0x8f8] sm:$0xff]
      %v1220 = vld [vmem:[%s3] sm:$0xff]
      %v1221 = vld [vmem:[%s3 + $0x8] sm:$0xff]
      %v1222 = vld [vmem:[%s3 + $0x10] sm:$0xff]
      %v1223 = vld [vmem:[%s3 + $0x18] sm:$0xff]
      %v1224 = vld [vmem:[%s3 + $0x20] sm:$0xff]
      %v1225 = vld [vmem:[%s3 + $0x28] sm:$0xff]
      %v1226 = vld [vmem:[%s3 + $0x30] sm:$0xff]
      %v1227 = vld [vmem:[%s3 + $0x38] sm:$0xff]
      %v1228 = vld [vmem:[%s3 + $0x40] sm:$0xff]
      %v1229 = vld [vmem:[%s3 + $0x48] sm:$0xff]
      %v1230 = vld [vmem:[%s3 + $0x50] sm:$0xff]
      %v1231 = vld [vmem:[%s3 + $0x58] sm:$0xff]
      %v1232 = vld [vmem:[%s3 + $0x60] sm:$0xff]
      %v1233 = vld [vmem:[%s3 + $0x68] sm:$0xff]
      %v1234 = vld [vmem:[%s3 + $0x70] sm:$0xff]
      %v1235 = vld [vmem:[%s3 + $0x78] sm:$0xff]
      %v1236 = vld [vmem:[%s3 + $0x80] sm:$0xff]
      %v1237 = vld [vmem:[%s3 + $0x88] sm:$0xff]
      %v1238 = vld [vmem:[%s3 + $0x90] sm:$0xff]
      %v1239 = vld [vmem:[%s3 + $0x98] sm:$0xff]
      %v1240 = vld [vmem:[%s3 + $0xa0] sm:$0xff]
      %v1241 = vld [vmem:[%s3 + $0xa8] sm:$0xff]
      %v1242 = vld [vmem:[%s3 + $0xb0] sm:$0xff]
      %v1243 = vld [vmem:[%s3 + $0xb8] sm:$0xff]
      %v1244 = vld [vmem:[%s3 + $0xc0] sm:$0xff]
      %v1245 = vld [vmem:[%s3 + $0xc8] sm:$0xff]
      %v1246 = vld [vmem:[%s3 + $0xd0] sm:$0xff]
      %v1247 = vld [vmem:[%s3 + $0xd8] sm:$0xff]
      %v1248 = vld [vmem:[%s3 + $0xe0] sm:$0xff]
      %v1249 = vld [vmem:[%s3 + $0xe8] sm:$0xff]
      %v1250 = vld [vmem:[%s3 + $0xf0] sm:$0xff]
      %v1251 = vld [vmem:[%s3 + $0xf8] sm:$0xff]
      %v1252 = vld [vmem:[%s3 + $0x100] sm:$0xff]
      %v1253 = vld [vmem:[%s3 + $0x108] sm:$0xff]
      %v1254 = vld [vmem:[%s3 + $0x110] sm:$0xff]
      %v1255 = vld [vmem:[%s3 + $0x118] sm:$0xff]
      %v1256 = vld [vmem:[%s3 + $0x120] sm:$0xff]
      %v1257 = vld [vmem:[%s3 + $0x128] sm:$0xff]
      %v1258 = vld [vmem:[%s3 + $0x130] sm:$0xff]
      %v1259 = vld [vmem:[%s3 + $0x138] sm:$0xff]
      %v1260 = vld [vmem:[%s3 + $0x140] sm:$0xff]
      %v1261 = vld [vmem:[%s3 + $0x148] sm:$0xff]
      %v1262 = vld [vmem:[%s3 + $0x150] sm:$0xff]
      %v1263 = vld [vmem:[%s3 + $0x158] sm:$0xff]
      %v1264 = vld [vmem:[%s3 + $0x160] sm:$0xff]
      %v1265 = vld [vmem:[%s3 + $0x168] sm:$0xff]
      %v1266 = vld [vmem:[%s3 + $0x170] sm:$0xff]
      %v1267 = vld [vmem:[%s3 + $0x178] sm:$0xff]
      %v1268 = vld [vmem:[%s3 + $0x180] sm:$0xff]
      %v1269 = vld [vmem:[%s3 + $0x188] sm:$0xff]
      %v1270 = vld [vmem:[%s3 + $0x190] sm:$0xff]
      %v1271 = vld [vmem:[%s3 + $0x198] sm:$0xff]
      %v1272 = vld [vmem:[%s3 + $0x1a0] sm:$0xff]
      %v1273 = vld [vmem:[%s3 + $0x1a8] sm:$0xff]
      %v1274 = vld [vmem:[%s3 + $0x1b0] sm:$0xff]
      %v1275 = vld [vmem:[%s3 + $0x1b8] sm:$0xff]
      %v1276 = vld [vmem:[%s3 + $0x1c0] sm:$0xff]
      %v1277 = vld [vmem:[%s3 + $0x1c8] sm:$0xff]
      %v1278 = vld [vmem:[%s3 + $0x1d0] sm:$0xff]
      %v1279 = vld [vmem:[%s3 + $0x1d8] sm:$0xff]
      %v1280 = vld [vmem:[%s3 + $0x1e0] sm:$0xff]
      %v1281 = vld [vmem:[%s3 + $0x1e8] sm:$0xff]
      %v1282 = vld [vmem:[%s3 + $0x1f0] sm:$0xff]
      %v1283 = vld [vmem:[%s3 + $0x1f8] sm:$0xff]
      %v1284 = vld [vmem:[%s3 + $0x200] sm:$0xff]
      %v1285 = vld [vmem:[%s3 + $0x208] sm:$0xff]
      %v1286 = vld [vmem:[%s3 + $0x210] sm:$0xff]
      %v1287 = vld [vmem:[%s3 + $0x218] sm:$0xff]
      %v1288 = vld [vmem:[%s3 + $0x220] sm:$0xff]
      %v1289 = vld [vmem:[%s3 + $0x228] sm:$0xff]
      %v1290 = vld [vmem:[%s3 + $0x230] sm:$0xff]
      %v1291 = vld [vmem:[%s3 + $0x238] sm:$0xff]
      %v1292 = vld [vmem:[%s3 + $0x240] sm:$0xff]
      %v1293 = vld [vmem:[%s3 + $0x248] sm:$0xff]
      %v1294 = vld [vmem:[%s3 + $0x250] sm:$0xff]
      %v1295 = vld [vmem:[%s3 + $0x258] sm:$0xff]
      %v1296 = vld [vmem:[%s3 + $0x260] sm:$0xff]
      %v1297 = vld [vmem:[%s3 + $0x268] sm:$0xff]
      %v1298 = vld [vmem:[%s3 + $0x270] sm:$0xff]
      %v1299 = vld [vmem:[%s3 + $0x278] sm:$0xff]
      %v1300 = vld [vmem:[%s3 + $0x280] sm:$0xff]
      %v1301 = vld [vmem:[%s3 + $0x288] sm:$0xff]
      %v1302 = vld [vmem:[%s3 + $0x290] sm:$0xff]
      %v1303 = vld [vmem:[%s3 + $0x298] sm:$0xff]
      %v1304 = vld [vmem:[%s3 + $0x2a0] sm:$0xff]
      %v1305 = vld [vmem:[%s3 + $0x2a8] sm:$0xff]
      %v1306 = vld [vmem:[%s3 + $0x2b0] sm:$0xff]
      %v1307 = vld [vmem:[%s3 + $0x2b8] sm:$0xff]
      %v1308 = vld [vmem:[%s3 + $0x2c0] sm:$0xff]
      %v1309 = vld [vmem:[%s3 + $0x2c8] sm:$0xff]
      %v1310 = vld [vmem:[%s3 + $0x2d0] sm:$0xff]
      %v1311 = vld [vmem:[%s3 + $0x2d8] sm:$0xff]
      %v1312 = vld [vmem:[%s3 + $0x2e0] sm:$0xff]
      %v1313 = vld [vmem:[%s3 + $0x2e8] sm:$0xff]
      %v1314 = vld [vmem:[%s3 + $0x2f0] sm:$0xff]
      %v1315 = vld [vmem:[%s3 + $0x2f8] sm:$0xff]
      %v1316 = vld [vmem:[%s3 + $0x300] sm:$0xff]
      %v1317 = vld [vmem:[%s3 + $0x308] sm:$0xff]
      %v1318 = vld [vmem:[%s3 + $0x310] sm:$0xff]
      %v1319 = vld [vmem:[%s3 + $0x318] sm:$0xff]
      %v1320 = vld [vmem:[%s3 + $0x320] sm:$0xff]
      %v1321 = vld [vmem:[%s3 + $0x328] sm:$0xff]
      %v1322 = vld [vmem:[%s3 + $0x330] sm:$0xff]
      %v1323 = vld [vmem:[%s3 + $0x338] sm:$0xff]
      %v1324 = vld [vmem:[%s3 + $0x340] sm:$0xff]
      %v1325 = vld [vmem:[%s3 + $0x348] sm:$0xff]
      %v1326 = vld [vmem:[%s3 + $0x350] sm:$0xff]
      %v1327 = vld [vmem:[%s3 + $0x358] sm:$0xff]
      %v1328 = vld [vmem:[%s3 + $0x360] sm:$0xff]
      %v1329 = vld [vmem:[%s3 + $0x368] sm:$0xff]
      %v1330 = vld [vmem:[%s3 + $0x370] sm:$0xff]
      %v1331 = vld [vmem:[%s3 + $0x378] sm:$0xff]
      %v1332 = vld [vmem:[%s3 + $0x380] sm:$0xff]
      %v1333 = vld [vmem:[%s3 + $0x388] sm:$0xff]
      %v1334 = vld [vmem:[%s3 + $0x390] sm:$0xff]
      %v1335 = vld [vmem:[%s3 + $0x398] sm:$0xff]
      %v1336 = vld [vmem:[%s3 + $0x3a0] sm:$0xff]
      %v1337 = vld [vmem:[%s3 + $0x3a8] sm:$0xff]
      %v1338 = vld [vmem:[%s3 + $0x3b0] sm:$0xff]
      %v1339 = vld [vmem:[%s3 + $0x3b8] sm:$0xff]
      %v1340 = vld [vmem:[%s3 + $0x3c0] sm:$0xff]
      %v1341 = vld [vmem:[%s3 + $0x3c8] sm:$0xff]
      %v1342 = vld [vmem:[%s3 + $0x3d0] sm:$0xff]
      %v1343 = vld [vmem:[%s3 + $0x3d8] sm:$0xff]
      %v1344 = vld [vmem:[%s3 + $0x3e0] sm:$0xff]
      %v1345 = vld [vmem:[%s3 + $0x3e8] sm:$0xff]
      %v1346 = vld [vmem:[%s3 + $0x3f0] sm:$0xff]
      %v1347 = vld [vmem:[%s3 + $0x3f8] sm:$0xff]
      %v1348 = vld [vmem:[%s3 + $0x400] sm:$0xff]
      %v1349 = vld [vmem:[%s3 + $0x408] sm:$0xff]
      %v1350 = vld [vmem:[%s3 + $0x410] sm:$0xff]
      %v1351 = vld [vmem:[%s3 + $0x418] sm:$0xff]
      %v1352 = vld [vmem:[%s3 + $0x420] sm:$0xff]
      %v1353 = vld [vmem:[%s3 + $0x428] sm:$0xff]
      %v1354 = vld [vmem:[%s3 + $0x430] sm:$0xff]
      %v1355 = vld [vmem:[%s3 + $0x438] sm:$0xff]
      %v1356 = vld [vmem:[%s3 + $0x440] sm:$0xff]
      %v1357 = vld [vmem:[%s3 + $0x448] sm:$0xff]
      %v1358 = vld [vmem:[%s3 + $0x450] sm:$0xff]
      %v1359 = vld [vmem:[%s3 + $0x458] sm:$0xff]
      %v1360 = vld [vmem:[%s3 + $0x460] sm:$0xff]
      %v1361 = vld [vmem:[%s3 + $0x468] sm:$0xff]
      %v1362 = vld [vmem:[%s3 + $0x470] sm:$0xff]
      %v1363 = vld [vmem:[%s3 + $0x478] sm:$0xff]
      %1364 = vmatpush.msra.mxu0 %v1235
      %1365 = vmatpush.msra.mxu0 %v1234
      %1366 = vmatpush.msra.mxu0 %v1233
      %1367 = vmatpush.msra.mxu0 %v1232
      %1368 = vmatpush.msra.mxu0 %v1231
      %1369 = vmatpush.msra.mxu0 %v1230
      %1370 = vmatpush.msra.mxu0 %v1229
      %1371 = vmatpush.msra.mxu0 %v1228
      %1372 = vmatpush.msra.mxu0 %v1227
      %1373 = vmatpush.msra.mxu0 %v1226
      %1374 = vmatpush.msra.mxu0 %v1225
      %1375 = vmatpush.msra.mxu0 %v1224
      %1376 = vmatpush.msra.mxu0 %v1223
      %1377 = vmatpush.msra.mxu0 %v1222
      %1378 = vmatpush.msra.mxu0 %v1221
      %1379 = vmatpush.msra.mxu0 %v1220
      %1380 = vmatmul.f32.gmra.mxu0 %v932
      %v1381 = vpop.f32.mrf.mxu0
      %v1382 = vadd.f32 0.0, %v1381
      %1383 = vmatmul.f32.gmra.mxu0 %v941
      %v1384 = vpop.f32.mrf.mxu0
      %v1385 = vadd.f32 0.0, %v1384
      %1386 = vmatmul.f32.gmra.mxu0 %v950
      %v1387 = vpop.f32.mrf.mxu0
      %v1388 = vadd.f32 0.0, %v1387
      %1389 = vmatmul.f32.gmra.mxu0 %v959
      %v1390 = vpop.f32.mrf.mxu0
      %v1391 = vadd.f32 0.0, %v1390
      %1392 = vmatmul.f32.gmra.mxu0 %v968
      %v1393 = vpop.f32.mrf.mxu0
      %v1394 = vadd.f32 0.0, %v1393
      %1395 = vmatmul.f32.gmra.mxu0 %v977
      %v1396 = vpop.f32.mrf.mxu0
      %v1397 = vadd.f32 0.0, %v1396
      %1398 = vmatmul.f32.gmra.mxu0 %v986
      %v1399 = vpop.f32.mrf.mxu0
      %v1400 = vadd.f32 0.0, %v1399
      %1401 = vmatmul.f32.gmra.mxu0 %v995
      %v1402 = vpop.f32.mrf.mxu0
      %v1403 = vadd.f32 0.0, %v1402
      %1404 = vmatmul.f32.gmra.mxu0 %v1004
      %v1405 = vpop.f32.mrf.mxu0
      %v1406 = vadd.f32 0.0, %v1405
      %1407 = vmatmul.f32.gmra.mxu0 %v1013
      %v1408 = vpop.f32.mrf.mxu0
      %v1409 = vadd.f32 0.0, %v1408
      %1410 = vmatmul.f32.gmra.mxu0 %v1022
      %v1411 = vpop.f32.mrf.mxu0
      %v1412 = vadd.f32 0.0, %v1411
      %1413 = vmatmul.f32.gmra.mxu0 %v1031
      %v1414 = vpop.f32.mrf.mxu0
      %v1415 = vadd.f32 0.0, %v1414
      %1416 = vmatmul.f32.gmra.mxu0 %v1040
      %v1417 = vpop.f32.mrf.mxu0
      %v1418 = vadd.f32 0.0, %v1417
      %1419 = vmatmul.f32.gmra.mxu0 %v1049
      %v1420 = vpop.f32.mrf.mxu0
      %v1421 = vadd.f32 0.0, %v1420
      %1422 = vmatmul.f32.gmra.mxu0 %v1058
      %v1423 = vpop.f32.mrf.mxu0
      %v1424 = vadd.f32 0.0, %v1423
      %1425 = vmatmul.f32.gmra.mxu0 %v1067
      %v1426 = vpop.f32.mrf.mxu0
      %v1427 = vadd.f32 0.0, %v1426
      %1428 = vmatmul.f32.gmra.mxu0 %v1076
      %v1429 = vpop.f32.mrf.mxu0
      %v1430 = vadd.f32 0.0, %v1429
      %1431 = vmatmul.f32.gmra.mxu0 %v1085
      %v1432 = vpop.f32.mrf.mxu0
      %v1433 = vadd.f32 0.0, %v1432
      %1434 = vmatmul.f32.gmra.mxu0 %v1094
      %v1435 = vpop.f32.mrf.mxu0
      %v1436 = vadd.f32 0.0, %v1435
      %1437 = vmatmul.f32.gmra.mxu0 %v1103
      %v1438 = vpop.f32.mrf.mxu0
      %v1439 = vadd.f32 0.0, %v1438
      %1440 = vmatmul.f32.gmra.mxu0 %v1112
      %v1441 = vpop.f32.mrf.mxu0
      %v1442 = vadd.f32 0.0, %v1441
      %1443 = vmatmul.f32.gmra.mxu0 %v1121
      %v1444 = vpop.f32.mrf.mxu0
      %v1445 = vadd.f32 0.0, %v1444
      %1446 = vmatmul.f32.gmra.mxu0 %v1130
      %v1447 = vpop.f32.mrf.mxu0
      %v1448 = vadd.f32 0.0, %v1447
      %1449 = vmatmul.f32.gmra.mxu0 %v1139
      %v1450 = vpop.f32.mrf.mxu0
      %v1451 = vadd.f32 0.0, %v1450
      %1452 = vmatmul.f32.gmra.mxu0 %v1148
      %v1453 = vpop.f32.mrf.mxu0
      %v1454 = vadd.f32 0.0, %v1453
      %1455 = vmatmul.f32.gmra.mxu0 %v1157
      %v1456 = vpop.f32.mrf.mxu0
      %v1457 = vadd.f32 0.0, %v1456
      %1458 = vmatmul.f32.gmra.mxu0 %v1166
      %v1459 = vpop.f32.mrf.mxu0
      %v1460 = vadd.f32 0.0, %v1459
      %1461 = vmatmul.f32.gmra.mxu0 %v1175
      %v1462 = vpop.f32.mrf.mxu0
      %v1463 = vadd.f32 0.0, %v1462
      %1464 = vmatmul.f32.gmra.mxu0 %v1184
      %v1465 = vpop.f32.mrf.mxu0
      %v1466 = vadd.f32 0.0, %v1465
      %1467 = vmatmul.f32.gmra.mxu0 %v1193
      %v1468 = vpop.f32.mrf.mxu0
      %v1469 = vadd.f32 0.0, %v1468
      %1470 = vmatmul.f32.gmra.mxu0 %v1202
      %v1471 = vpop.f32.mrf.mxu0
      %v1472 = vadd.f32 0.0, %v1471
      %1473 = vmatmul.f32.gmra.mxu0 %v1211
      %v1474 = vpop.f32.mrf.mxu0
      %v1475 = vadd.f32 0.0, %v1474
      %1476 = vdwg.mxu0
      %1477 = vmatpush.msra.mxu0 %v1251
      %1478 = vmatpush.msra.mxu0 %v1250
      %1479 = vmatpush.msra.mxu0 %v1249
      %1480 = vmatpush.msra.mxu0 %v1248
      %1481 = vmatpush.msra.mxu0 %v1247
      %1482 = vmatpush.msra.mxu0 %v1246
      %1483 = vmatpush.msra.mxu0 %v1245
      %1484 = vmatpush.msra.mxu0 %v1244
      %1485 = vmatpush.msra.mxu0 %v1243
      %1486 = vmatpush.msra.mxu0 %v1242
      %1487 = vmatpush.msra.mxu0 %v1241
      %1488 = vmatpush.msra.mxu0 %v1240
      %1489 = vmatpush.msra.mxu0 %v1239
      %1490 = vmatpush.msra.mxu0 %v1238
      %1491 = vmatpush.msra.mxu0 %v1237
      %1492 = vmatpush.msra.mxu0 %v1236
      %1493 = vmatmul.f32.gmra.mxu0 %v933
      %v1494 = vpop.f32.mrf.mxu0
      %v1495 = vadd.f32 %v1382, %v1494
      %1496 = vmatmul.f32.gmra.mxu0 %v942
      %v1497 = vpop.f32.mrf.mxu0
      %v1498 = vadd.f32 %v1385, %v1497
      %1499 = vmatmul.f32.gmra.mxu0 %v951
      %v1500 = vpop.f32.mrf.mxu0
      %v1501 = vadd.f32 %v1388, %v1500
      %1502 = vmatmul.f32.gmra.mxu0 %v960
      %v1503 = vpop.f32.mrf.mxu0
      %v1504 = vadd.f32 %v1391, %v1503
      %1505 = vmatmul.f32.gmra.mxu0 %v969
      %v1506 = vpop.f32.mrf.mxu0
      %v1507 = vadd.f32 %v1394, %v1506
      %1508 = vmatmul.f32.gmra.mxu0 %v978
      %v1509 = vpop.f32.mrf.mxu0
      %v1510 = vadd.f32 %v1397, %v1509
      %1511 = vmatmul.f32.gmra.mxu0 %v987
      %v1512 = vpop.f32.mrf.mxu0
      %v1513 = vadd.f32 %v1400, %v1512
      %1514 = vmatmul.f32.gmra.mxu0 %v996
      %v1515 = vpop.f32.mrf.mxu0
      %v1516 = vadd.f32 %v1403, %v1515
      %1517 = vmatmul.f32.gmra.mxu0 %v1005
      %v1518 = vpop.f32.mrf.mxu0
      %v1519 = vadd.f32 %v1406, %v1518
      %1520 = vmatmul.f32.gmra.mxu0 %v1014
      %v1521 = vpop.f32.mrf.mxu0
      %v1522 = vadd.f32 %v1409, %v1521
      %1523 = vmatmul.f32.gmra.mxu0 %v1023
      %v1524 = vpop.f32.mrf.mxu0
      %v1525 = vadd.f32 %v1412, %v1524
      %1526 = vmatmul.f32.gmra.mxu0 %v1032
      %v1527 = vpop.f32.mrf.mxu0
      %v1528 = vadd.f32 %v1415, %v1527
      %1529 = vmatmul.f32.gmra.mxu0 %v1041
      %v1530 = vpop.f32.mrf.mxu0
      %v1531 = vadd.f32 %v1418, %v1530
      %1532 = vmatmul.f32.gmra.mxu0 %v1050
      %v1533 = vpop.f32.mrf.mxu0
      %v1534 = vadd.f32 %v1421, %v1533
      %1535 = vmatmul.f32.gmra.mxu0 %v1059
      %v1536 = vpop.f32.mrf.mxu0
      %v1537 = vadd.f32 %v1424, %v1536
      %1538 = vmatmul.f32.gmra.mxu0 %v1068
      %v1539 = vpop.f32.mrf.mxu0
      %v1540 = vadd.f32 %v1427, %v1539
      %1541 = vmatmul.f32.gmra.mxu0 %v1077
      %v1542 = vpop.f32.mrf.mxu0
      %v1543 = vadd.f32 %v1430, %v1542
      %1544 = vmatmul.f32.gmra.mxu0 %v1086
      %v1545 = vpop.f32.mrf.mxu0
      %v1546 = vadd.f32 %v1433, %v1545
      %1547 = vmatmul.f32.gmra.mxu0 %v1095
      %v1548 = vpop.f32.mrf.mxu0
      %v1549 = vadd.f32 %v1436, %v1548
      %1550 = vmatmul.f32.gmra.mxu0 %v1104
      %v1551 = vpop.f32.mrf.mxu0
      %v1552 = vadd.f32 %v1439, %v1551
      %1553 = vmatmul.f32.gmra.mxu0 %v1113
      %v1554 = vpop.f32.mrf.mxu0
      %v1555 = vadd.f32 %v1442, %v1554
      %1556 = vmatmul.f32.gmra.mxu0 %v1122
      %v1557 = vpop.f32.mrf.mxu0
      %v1558 = vadd.f32 %v1445, %v1557
      %1559 = vmatmul.f32.gmra.mxu0 %v1131
      %v1560 = vpop.f32.mrf.mxu0
      %v1561 = vadd.f32 %v1448, %v1560
      %1562 = vmatmul.f32.gmra.mxu0 %v1140
      %v1563 = vpop.f32.mrf.mxu0
      %v1564 = vadd.f32 %v1451, %v1563
      %1565 = vmatmul.f32.gmra.mxu0 %v1149
      %v1566 = vpop.f32.mrf.mxu0
      %v1567 = vadd.f32 %v1454, %v1566
      %1568 = vmatmul.f32.gmra.mxu0 %v1158
      %v1569 = vpop.f32.mrf.mxu0
      %v1570 = vadd.f32 %v1457, %v1569
      %1571 = vmatmul.f32.gmra.mxu0 %v1167
      %v1572 = vpop.f32.mrf.mxu0
      %v1573 = vadd.f32 %v1460, %v1572
      %1574 = vmatmul.f32.gmra.mxu0 %v1176
      %v1575 = vpop.f32.mrf.mxu0
      %v1576 = vadd.f32 %v1463, %v1575
      %1577 = vmatmul.f32.gmra.mxu0 %v1185
      %v1578 = vpop.f32.mrf.mxu0
      %v1579 = vadd.f32 %v1466, %v1578
      %1580 = vmatmul.f32.gmra.mxu0 %v1194
      %v1581 = vpop.f32.mrf.mxu0
      %v1582 = vadd.f32 %v1469, %v1581
      %1583 = vmatmul.f32.gmra.mxu0 %v1203
      %v1584 = vpop.f32.mrf.mxu0
      %v1585 = vadd.f32 %v1472, %v1584
      %1586 = vmatmul.f32.gmra.mxu0 %v1212
      %v1587 = vpop.f32.mrf.mxu0
      %v1588 = vadd.f32 %v1475, %v1587
      %1589 = vdwg.mxu0
      %1590 = vmatpush.msra.mxu0 %v1267
      %1591 = vmatpush.msra.mxu0 %v1266
      %1592 = vmatpush.msra.mxu0 %v1265
      %1593 = vmatpush.msra.mxu0 %v1264
      %1594 = vmatpush.msra.mxu0 %v1263
      %1595 = vmatpush.msra.mxu0 %v1262
      %1596 = vmatpush.msra.mxu0 %v1261
      %1597 = vmatpush.msra.mxu0 %v1260
      %1598 = vmatpush.msra.mxu0 %v1259
      %1599 = vmatpush.msra.mxu0 %v1258
      %1600 = vmatpush.msra.mxu0 %v1257
      %1601 = vmatpush.msra.mxu0 %v1256
      %1602 = vmatpush.msra.mxu0 %v1255
      %1603 = vmatpush.msra.mxu0 %v1254
      %1604 = vmatpush.msra.mxu0 %v1253
      %1605 = vmatpush.msra.mxu0 %v1252
      %1606 = vmatmul.f32.gmra.mxu0 %v934
      %v1607 = vpop.f32.mrf.mxu0
      %v1608 = vadd.f32 %v1495, %v1607
      %1609 = vmatmul.f32.gmra.mxu0 %v943
      %v1610 = vpop.f32.mrf.mxu0
      %v1611 = vadd.f32 %v1498, %v1610
      %1612 = vmatmul.f32.gmra.mxu0 %v952
      %v1613 = vpop.f32.mrf.mxu0
      %v1614 = vadd.f32 %v1501, %v1613
      %1615 = vmatmul.f32.gmra.mxu0 %v961
      %v1616 = vpop.f32.mrf.mxu0
      %v1617 = vadd.f32 %v1504, %v1616
      %1618 = vmatmul.f32.gmra.mxu0 %v970
      %v1619 = vpop.f32.mrf.mxu0
      %v1620 = vadd.f32 %v1507, %v1619
      %1621 = vmatmul.f32.gmra.mxu0 %v979
      %v1622 = vpop.f32.mrf.mxu0
      %v1623 = vadd.f32 %v1510, %v1622
      %1624 = vmatmul.f32.gmra.mxu0 %v988
      %v1625 = vpop.f32.mrf.mxu0
      %v1626 = vadd.f32 %v1513, %v1625
      %1627 = vmatmul.f32.gmra.mxu0 %v997
      %v1628 = vpop.f32.mrf.mxu0
      %v1629 = vadd.f32 %v1516, %v1628
      %1630 = vmatmul.f32.gmra.mxu0 %v1006
      %v1631 = vpop.f32.mrf.mxu0
      %v1632 = vadd.f32 %v1519, %v1631
      %1633 = vmatmul.f32.gmra.mxu0 %v1015
      %v1634 = vpop.f32.mrf.mxu0
      %v1635 = vadd.f32 %v1522, %v1634
      %1636 = vmatmul.f32.gmra.mxu0 %v1024
      %v1637 = vpop.f32.mrf.mxu0
      %v1638 = vadd.f32 %v1525, %v1637
      %1639 = vmatmul.f32.gmra.mxu0 %v1033
      %v1640 = vpop.f32.mrf.mxu0
      %v1641 = vadd.f32 %v1528, %v1640
      %1642 = vmatmul.f32.gmra.mxu0 %v1042
      %v1643 = vpop.f32.mrf.mxu0
      %v1644 = vadd.f32 %v1531, %v1643
      %1645 = vmatmul.f32.gmra.mxu0 %v1051
      %v1646 = vpop.f32.mrf.mxu0
      %v1647 = vadd.f32 %v1534, %v1646
      %1648 = vmatmul.f32.gmra.mxu0 %v1060
      %v1649 = vpop.f32.mrf.mxu0
      %v1650 = vadd.f32 %v1537, %v1649
      %1651 = vmatmul.f32.gmra.mxu0 %v1069
      %v1652 = vpop.f32.mrf.mxu0
      %v1653 = vadd.f32 %v1540, %v1652
      %1654 = vmatmul.f32.gmra.mxu0 %v1078
      %v1655 = vpop.f32.mrf.mxu0
      %v1656 = vadd.f32 %v1543, %v1655
      %1657 = vmatmul.f32.gmra.mxu0 %v1087
      %v1658 = vpop.f32.mrf.mxu0
      %v1659 = vadd.f32 %v1546, %v1658
      %1660 = vmatmul.f32.gmra.mxu0 %v1096
      %v1661 = vpop.f32.mrf.mxu0
      %v1662 = vadd.f32 %v1549, %v1661
      %1663 = vmatmul.f32.gmra.mxu0 %v1105
      %v1664 = vpop.f32.mrf.mxu0
      %v1665 = vadd.f32 %v1552, %v1664
      %1666 = vmatmul.f32.gmra.mxu0 %v1114
      %v1667 = vpop.f32.mrf.mxu0
      %v1668 = vadd.f32 %v1555, %v1667
      %1669 = vmatmul.f32.gmra.mxu0 %v1123
      %v1670 = vpop.f32.mrf.mxu0
      %v1671 = vadd.f32 %v1558, %v1670
      %1672 = vmatmul.f32.gmra.mxu0 %v1132
      %v1673 = vpop.f32.mrf.mxu0
      %v1674 = vadd.f32 %v1561, %v1673
      %1675 = vmatmul.f32.gmra.mxu0 %v1141
      %v1676 = vpop.f32.mrf.mxu0
      %v1677 = vadd.f32 %v1564, %v1676
      %1678 = vmatmul.f32.gmra.mxu0 %v1150
      %v1679 = vpop.f32.mrf.mxu0
      %v1680 = vadd.f32 %v1567, %v1679
      %1681 = vmatmul.f32.gmra.mxu0 %v1159
      %v1682 = vpop.f32.mrf.mxu0
      %v1683 = vadd.f32 %v1570, %v1682
      %1684 = vmatmul.f32.gmra.mxu0 %v1168
      %v1685 = vpop.f32.mrf.mxu0
      %v1686 = vadd.f32 %v1573, %v1685
      %1687 = vmatmul.f32.gmra.mxu0 %v1177
      %v1688 = vpop.f32.mrf.mxu0
      %v1689 = vadd.f32 %v1576, %v1688
      %1690 = vmatmul.f32.gmra.mxu0 %v1186
      %v1691 = vpop.f32.mrf.mxu0
      %v1692 = vadd.f32 %v1579, %v1691
      %1693 = vmatmul.f32.gmra.mxu0 %v1195
      %v1694 = vpop.f32.mrf.mxu0
      %v1695 = vadd.f32 %v1582, %v1694
      %1696 = vmatmul.f32.gmra.mxu0 %v1204
      %v1697 = vpop.f32.mrf.mxu0
      %v1698 = vadd.f32 %v1585, %v1697
      %1699 = vmatmul.f32.gmra.mxu0 %v1213
      %v1700 = vpop.f32.mrf.mxu0
      %v1701 = vadd.f32 %v1588, %v1700
      %1702 = vdwg.mxu0
      %1703 = vmatpush.msra.mxu0 %v1283
      %1704 = vmatpush.msra.mxu0 %v1282
      %1705 = vmatpush.msra.mxu0 %v1281
      %1706 = vmatpush.msra.mxu0 %v1280
      %1707 = vmatpush.msra.mxu0 %v1279
      %1708 = vmatpush.msra.mxu0 %v1278
      %1709 = vmatpush.msra.mxu0 %v1277
      %1710 = vmatpush.msra.mxu0 %v1276
      %1711 = vmatpush.msra.mxu0 %v1275
      %1712 = vmatpush.msra.mxu0 %v1274
      %1713 = vmatpush.msra.mxu0 %v1273
      %1714 = vmatpush.msra.mxu0 %v1272
      %1715 = vmatpush.msra.mxu0 %v1271
      %1716 = vmatpush.msra.mxu0 %v1270
      %1717 = vmatpush.msra.mxu0 %v1269
      %1718 = vmatpush.msra.mxu0 %v1268
      %1719 = vmatmul.f32.gmra.mxu0 %v935
      %v1720 = vpop.f32.mrf.mxu0
      %v1721 = vadd.f32 %v1608, %v1720
      %1722 = vmatmul.f32.gmra.mxu0 %v944
      %v1723 = vpop.f32.mrf.mxu0
      %v1724 = vadd.f32 %v1611, %v1723
      %1725 = vmatmul.f32.gmra.mxu0 %v953
      %v1726 = vpop.f32.mrf.mxu0
      %v1727 = vadd.f32 %v1614, %v1726
      %1728 = vmatmul.f32.gmra.mxu0 %v962
      %v1729 = vpop.f32.mrf.mxu0
      %v1730 = vadd.f32 %v1617, %v1729
      %1731 = vmatmul.f32.gmra.mxu0 %v971
      %v1732 = vpop.f32.mrf.mxu0
      %v1733 = vadd.f32 %v1620, %v1732
      %1734 = vmatmul.f32.gmra.mxu0 %v980
      %v1735 = vpop.f32.mrf.mxu0
      %v1736 = vadd.f32 %v1623, %v1735
      %1737 = vmatmul.f32.gmra.mxu0 %v989
      %v1738 = vpop.f32.mrf.mxu0
      %v1739 = vadd.f32 %v1626, %v1738
      %1740 = vmatmul.f32.gmra.mxu0 %v998
      %v1741 = vpop.f32.mrf.mxu0
      %v1742 = vadd.f32 %v1629, %v1741
      %1743 = vmatmul.f32.gmra.mxu0 %v1007
      %v1744 = vpop.f32.mrf.mxu0
      %v1745 = vadd.f32 %v1632, %v1744
      %1746 = vmatmul.f32.gmra.mxu0 %v1016
      %v1747 = vpop.f32.mrf.mxu0
      %v1748 = vadd.f32 %v1635, %v1747
      %1749 = vmatmul.f32.gmra.mxu0 %v1025
      %v1750 = vpop.f32.mrf.mxu0
      %v1751 = vadd.f32 %v1638, %v1750
      %1752 = vmatmul.f32.gmra.mxu0 %v1034
      %v1753 = vpop.f32.mrf.mxu0
      %v1754 = vadd.f32 %v1641, %v1753
      %1755 = vmatmul.f32.gmra.mxu0 %v1043
      %v1756 = vpop.f32.mrf.mxu0
      %v1757 = vadd.f32 %v1644, %v1756
      %1758 = vmatmul.f32.gmra.mxu0 %v1052
      %v1759 = vpop.f32.mrf.mxu0
      %v1760 = vadd.f32 %v1647, %v1759
      %1761 = vmatmul.f32.gmra.mxu0 %v1061
      %v1762 = vpop.f32.mrf.mxu0
      %v1763 = vadd.f32 %v1650, %v1762
      %1764 = vmatmul.f32.gmra.mxu0 %v1070
      %v1765 = vpop.f32.mrf.mxu0
      %v1766 = vadd.f32 %v1653, %v1765
      %1767 = vmatmul.f32.gmra.mxu0 %v1079
      %v1768 = vpop.f32.mrf.mxu0
      %v1769 = vadd.f32 %v1656, %v1768
      %1770 = vmatmul.f32.gmra.mxu0 %v1088
      %v1771 = vpop.f32.mrf.mxu0
      %v1772 = vadd.f32 %v1659, %v1771
      %1773 = vmatmul.f32.gmra.mxu0 %v1097
      %v1774 = vpop.f32.mrf.mxu0
      %v1775 = vadd.f32 %v1662, %v1774
      %1776 = vmatmul.f32.gmra.mxu0 %v1106
      %v1777 = vpop.f32.mrf.mxu0
      %v1778 = vadd.f32 %v1665, %v1777
      %1779 = vmatmul.f32.gmra.mxu0 %v1115
      %v1780 = vpop.f32.mrf.mxu0
      %v1781 = vadd.f32 %v1668, %v1780
      %1782 = vmatmul.f32.gmra.mxu0 %v1124
      %v1783 = vpop.f32.mrf.mxu0
      %v1784 = vadd.f32 %v1671, %v1783
      %1785 = vmatmul.f32.gmra.mxu0 %v1133
      %v1786 = vpop.f32.mrf.mxu0
      %v1787 = vadd.f32 %v1674, %v1786
      %1788 = vmatmul.f32.gmra.mxu0 %v1142
      %v1789 = vpop.f32.mrf.mxu0
      %v1790 = vadd.f32 %v1677, %v1789
      %1791 = vmatmul.f32.gmra.mxu0 %v1151
      %v1792 = vpop.f32.mrf.mxu0
      %v1793 = vadd.f32 %v1680, %v1792
      %1794 = vmatmul.f32.gmra.mxu0 %v1160
      %v1795 = vpop.f32.mrf.mxu0
      %v1796 = vadd.f32 %v1683, %v1795
      %1797 = vmatmul.f32.gmra.mxu0 %v1169
      %v1798 = vpop.f32.mrf.mxu0
      %v1799 = vadd.f32 %v1686, %v1798
      %1800 = vmatmul.f32.gmra.mxu0 %v1178
      %v1801 = vpop.f32.mrf.mxu0
      %v1802 = vadd.f32 %v1689, %v1801
      %1803 = vmatmul.f32.gmra.mxu0 %v1187
      %v1804 = vpop.f32.mrf.mxu0
      %v1805 = vadd.f32 %v1692, %v1804
      %1806 = vmatmul.f32.gmra.mxu0 %v1196
      %v1807 = vpop.f32.mrf.mxu0
      %v1808 = vadd.f32 %v1695, %v1807
      %1809 = vmatmul.f32.gmra.mxu0 %v1205
      %v1810 = vpop.f32.mrf.mxu0
      %v1811 = vadd.f32 %v1698, %v1810
      %1812 = vmatmul.f32.gmra.mxu0 %v1214
      %v1813 = vpop.f32.mrf.mxu0
      %v1814 = vadd.f32 %v1701, %v1813
      %1815 = vdwg.mxu0
      %1816 = vmatpush.msra.mxu0 %v1299
      %1817 = vmatpush.msra.mxu0 %v1298
      %1818 = vmatpush.msra.mxu0 %v1297
      %1819 = vmatpush.msra.mxu0 %v1296
      %1820 = vmatpush.msra.mxu0 %v1295
      %1821 = vmatpush.msra.mxu0 %v1294
      %1822 = vmatpush.msra.mxu0 %v1293
      %1823 = vmatpush.msra.mxu0 %v1292
      %1824 = vmatpush.msra.mxu0 %v1291
      %1825 = vmatpush.msra.mxu0 %v1290
      %1826 = vmatpush.msra.mxu0 %v1289
      %1827 = vmatpush.msra.mxu0 %v1288
      %1828 = vmatpush.msra.mxu0 %v1287
      %1829 = vmatpush.msra.mxu0 %v1286
      %1830 = vmatpush.msra.mxu0 %v1285
      %1831 = vmatpush.msra.mxu0 %v1284
      %1832 = vmatmul.f32.gmra.mxu0 %v936
      %v1833 = vpop.f32.mrf.mxu0
      %v1834 = vadd.f32 %v1721, %v1833
      %1835 = vmatmul.f32.gmra.mxu0 %v945
      %v1836 = vpop.f32.mrf.mxu0
      %v1837 = vadd.f32 %v1724, %v1836
      %1838 = vmatmul.f32.gmra.mxu0 %v954
      %v1839 = vpop.f32.mrf.mxu0
      %v1840 = vadd.f32 %v1727, %v1839
      %1841 = vmatmul.f32.gmra.mxu0 %v963
      %v1842 = vpop.f32.mrf.mxu0
      %v1843 = vadd.f32 %v1730, %v1842
      %1844 = vmatmul.f32.gmra.mxu0 %v972
      %v1845 = vpop.f32.mrf.mxu0
      %v1846 = vadd.f32 %v1733, %v1845
      %1847 = vmatmul.f32.gmra.mxu0 %v981
      %v1848 = vpop.f32.mrf.mxu0
      %v1849 = vadd.f32 %v1736, %v1848
      %1850 = vmatmul.f32.gmra.mxu0 %v990
      %v1851 = vpop.f32.mrf.mxu0
      %v1852 = vadd.f32 %v1739, %v1851
      %1853 = vmatmul.f32.gmra.mxu0 %v999
      %v1854 = vpop.f32.mrf.mxu0
      %v1855 = vadd.f32 %v1742, %v1854
      %1856 = vmatmul.f32.gmra.mxu0 %v1008
      %v1857 = vpop.f32.mrf.mxu0
      %v1858 = vadd.f32 %v1745, %v1857
      %1859 = vmatmul.f32.gmra.mxu0 %v1017
      %v1860 = vpop.f32.mrf.mxu0
      %v1861 = vadd.f32 %v1748, %v1860
      %1862 = vmatmul.f32.gmra.mxu0 %v1026
      %v1863 = vpop.f32.mrf.mxu0
      %v1864 = vadd.f32 %v1751, %v1863
      %1865 = vmatmul.f32.gmra.mxu0 %v1035
      %v1866 = vpop.f32.mrf.mxu0
      %v1867 = vadd.f32 %v1754, %v1866
      %1868 = vmatmul.f32.gmra.mxu0 %v1044
      %v1869 = vpop.f32.mrf.mxu0
      %v1870 = vadd.f32 %v1757, %v1869
      %1871 = vmatmul.f32.gmra.mxu0 %v1053
      %v1872 = vpop.f32.mrf.mxu0
      %v1873 = vadd.f32 %v1760, %v1872
      %1874 = vmatmul.f32.gmra.mxu0 %v1062
      %v1875 = vpop.f32.mrf.mxu0
      %v1876 = vadd.f32 %v1763, %v1875
      %1877 = vmatmul.f32.gmra.mxu0 %v1071
      %v1878 = vpop.f32.mrf.mxu0
      %v1879 = vadd.f32 %v1766, %v1878
      %1880 = vmatmul.f32.gmra.mxu0 %v1080
      %v1881 = vpop.f32.mrf.mxu0
      %v1882 = vadd.f32 %v1769, %v1881
      %1883 = vmatmul.f32.gmra.mxu0 %v1089
      %v1884 = vpop.f32.mrf.mxu0
      %v1885 = vadd.f32 %v1772, %v1884
      %1886 = vmatmul.f32.gmra.mxu0 %v1098
      %v1887 = vpop.f32.mrf.mxu0
      %v1888 = vadd.f32 %v1775, %v1887
      %1889 = vmatmul.f32.gmra.mxu0 %v1107
      %v1890 = vpop.f32.mrf.mxu0
      %v1891 = vadd.f32 %v1778, %v1890
      %1892 = vmatmul.f32.gmra.mxu0 %v1116
      %v1893 = vpop.f32.mrf.mxu0
      %v1894 = vadd.f32 %v1781, %v1893
      %1895 = vmatmul.f32.gmra.mxu0 %v1125
      %v1896 = vpop.f32.mrf.mxu0
      %v1897 = vadd.f32 %v1784, %v1896
      %1898 = vmatmul.f32.gmra.mxu0 %v1134
      %v1899 = vpop.f32.mrf.mxu0
      %v1900 = vadd.f32 %v1787, %v1899
      %1901 = vmatmul.f32.gmra.mxu0 %v1143
      %v1902 = vpop.f32.mrf.mxu0
      %v1903 = vadd.f32 %v1790, %v1902
      %1904 = vmatmul.f32.gmra.mxu0 %v1152
      %v1905 = vpop.f32.mrf.mxu0
      %v1906 = vadd.f32 %v1793, %v1905
      %1907 = vmatmul.f32.gmra.mxu0 %v1161
      %v1908 = vpop.f32.mrf.mxu0
      %v1909 = vadd.f32 %v1796, %v1908
      %1910 = vmatmul.f32.gmra.mxu0 %v1170
      %v1911 = vpop.f32.mrf.mxu0
      %v1912 = vadd.f32 %v1799, %v1911
      %1913 = vmatmul.f32.gmra.mxu0 %v1179
      %v1914 = vpop.f32.mrf.mxu0
      %v1915 = vadd.f32 %v1802, %v1914
      %1916 = vmatmul.f32.gmra.mxu0 %v1188
      %v1917 = vpop.f32.mrf.mxu0
      %v1918 = vadd.f32 %v1805, %v1917
      %1919 = vmatmul.f32.gmra.mxu0 %v1197
      %v1920 = vpop.f32.mrf.mxu0
      %v1921 = vadd.f32 %v1808, %v1920
      %1922 = vmatmul.f32.gmra.mxu0 %v1206
      %v1923 = vpop.f32.mrf.mxu0
      %v1924 = vadd.f32 %v1811, %v1923
      %1925 = vmatmul.f32.gmra.mxu0 %v1215
      %v1926 = vpop.f32.mrf.mxu0
      %v1927 = vadd.f32 %v1814, %v1926
      %1928 = vdwg.mxu0
      %1929 = vmatpush.msra.mxu0 %v1315
      %1930 = vmatpush.msra.mxu0 %v1314
      %1931 = vmatpush.msra.mxu0 %v1313
      %1932 = vmatpush.msra.mxu0 %v1312
      %1933 = vmatpush.msra.mxu0 %v1311
      %1934 = vmatpush.msra.mxu0 %v1310
      %1935 = vmatpush.msra.mxu0 %v1309
      %1936 = vmatpush.msra.mxu0 %v1308
      %1937 = vmatpush.msra.mxu0 %v1307
      %1938 = vmatpush.msra.mxu0 %v1306
      %1939 = vmatpush.msra.mxu0 %v1305
      %1940 = vmatpush.msra.mxu0 %v1304
      %1941 = vmatpush.msra.mxu0 %v1303
      %1942 = vmatpush.msra.mxu0 %v1302
      %1943 = vmatpush.msra.mxu0 %v1301
      %1944 = vmatpush.msra.mxu0 %v1300
      %1945 = vmatmul.f32.gmra.mxu0 %v937
      %v1946 = vpop.f32.mrf.mxu0
      %v1947 = vadd.f32 %v1834, %v1946
      %1948 = vmatmul.f32.gmra.mxu0 %v946
      %v1949 = vpop.f32.mrf.mxu0
      %v1950 = vadd.f32 %v1837, %v1949
      %1951 = vmatmul.f32.gmra.mxu0 %v955
      %v1952 = vpop.f32.mrf.mxu0
      %v1953 = vadd.f32 %v1840, %v1952
      %1954 = vmatmul.f32.gmra.mxu0 %v964
      %v1955 = vpop.f32.mrf.mxu0
      %v1956 = vadd.f32 %v1843, %v1955
      %1957 = vmatmul.f32.gmra.mxu0 %v973
      %v1958 = vpop.f32.mrf.mxu0
      %v1959 = vadd.f32 %v1846, %v1958
      %1960 = vmatmul.f32.gmra.mxu0 %v982
      %v1961 = vpop.f32.mrf.mxu0
      %v1962 = vadd.f32 %v1849, %v1961
      %1963 = vmatmul.f32.gmra.mxu0 %v991
      %v1964 = vpop.f32.mrf.mxu0
      %v1965 = vadd.f32 %v1852, %v1964
      %1966 = vmatmul.f32.gmra.mxu0 %v1000
      %v1967 = vpop.f32.mrf.mxu0
      %v1968 = vadd.f32 %v1855, %v1967
      %1969 = vmatmul.f32.gmra.mxu0 %v1009
      %v1970 = vpop.f32.mrf.mxu0
      %v1971 = vadd.f32 %v1858, %v1970
      %1972 = vmatmul.f32.gmra.mxu0 %v1018
      %v1973 = vpop.f32.mrf.mxu0
      %v1974 = vadd.f32 %v1861, %v1973
      %1975 = vmatmul.f32.gmra.mxu0 %v1027
      %v1976 = vpop.f32.mrf.mxu0
      %v1977 = vadd.f32 %v1864, %v1976
      %1978 = vmatmul.f32.gmra.mxu0 %v1036
      %v1979 = vpop.f32.mrf.mxu0
      %v1980 = vadd.f32 %v1867, %v1979
      %1981 = vmatmul.f32.gmra.mxu0 %v1045
      %v1982 = vpop.f32.mrf.mxu0
      %v1983 = vadd.f32 %v1870, %v1982
      %1984 = vmatmul.f32.gmra.mxu0 %v1054
      %v1985 = vpop.f32.mrf.mxu0
      %v1986 = vadd.f32 %v1873, %v1985
      %1987 = vmatmul.f32.gmra.mxu0 %v1063
      %v1988 = vpop.f32.mrf.mxu0
      %v1989 = vadd.f32 %v1876, %v1988
      %1990 = vmatmul.f32.gmra.mxu0 %v1072
      %v1991 = vpop.f32.mrf.mxu0
      %v1992 = vadd.f32 %v1879, %v1991
      %1993 = vmatmul.f32.gmra.mxu0 %v1081
      %v1994 = vpop.f32.mrf.mxu0
      %v1995 = vadd.f32 %v1882, %v1994
      %1996 = vmatmul.f32.gmra.mxu0 %v1090
      %v1997 = vpop.f32.mrf.mxu0
      %v1998 = vadd.f32 %v1885, %v1997
      %1999 = vmatmul.f32.gmra.mxu0 %v1099
      %v2000 = vpop.f32.mrf.mxu0
      %v2001 = vadd.f32 %v1888, %v2000
      %2002 = vmatmul.f32.gmra.mxu0 %v1108
      %v2003 = vpop.f32.mrf.mxu0
      %v2004 = vadd.f32 %v1891, %v2003
      %2005 = vmatmul.f32.gmra.mxu0 %v1117
      %v2006 = vpop.f32.mrf.mxu0
      %v2007 = vadd.f32 %v1894, %v2006
      %2008 = vmatmul.f32.gmra.mxu0 %v1126
      %v2009 = vpop.f32.mrf.mxu0
      %v2010 = vadd.f32 %v1897, %v2009
      %2011 = vmatmul.f32.gmra.mxu0 %v1135
      %v2012 = vpop.f32.mrf.mxu0
      %v2013 = vadd.f32 %v1900, %v2012
      %2014 = vmatmul.f32.gmra.mxu0 %v1144
      %v2015 = vpop.f32.mrf.mxu0
      %v2016 = vadd.f32 %v1903, %v2015
      %2017 = vmatmul.f32.gmra.mxu0 %v1153
      %v2018 = vpop.f32.mrf.mxu0
      %v2019 = vadd.f32 %v1906, %v2018
      %2020 = vmatmul.f32.gmra.mxu0 %v1162
      %v2021 = vpop.f32.mrf.mxu0
      %v2022 = vadd.f32 %v1909, %v2021
      %2023 = vmatmul.f32.gmra.mxu0 %v1171
      %v2024 = vpop.f32.mrf.mxu0
      %v2025 = vadd.f32 %v1912, %v2024
      %2026 = vmatmul.f32.gmra.mxu0 %v1180
      %v2027 = vpop.f32.mrf.mxu0
      %v2028 = vadd.f32 %v1915, %v2027
      %2029 = vmatmul.f32.gmra.mxu0 %v1189
      %v2030 = vpop.f32.mrf.mxu0
      %v2031 = vadd.f32 %v1918, %v2030
      %2032 = vmatmul.f32.gmra.mxu0 %v1198
      %v2033 = vpop.f32.mrf.mxu0
      %v2034 = vadd.f32 %v1921, %v2033
      %2035 = vmatmul.f32.gmra.mxu0 %v1207
      %v2036 = vpop.f32.mrf.mxu0
      %v2037 = vadd.f32 %v1924, %v2036
      %2038 = vmatmul.f32.gmra.mxu0 %v1216
      %v2039 = vpop.f32.mrf.mxu0
      %v2040 = vadd.f32 %v1927, %v2039
      %2041 = vdwg.mxu0
      %2042 = vmatpush.msra.mxu0 %v1331
      %2043 = vmatpush.msra.mxu0 %v1330
      %2044 = vmatpush.msra.mxu0 %v1329
      %2045 = vmatpush.msra.mxu0 %v1328
      %2046 = vmatpush.msra.mxu0 %v1327
      %2047 = vmatpush.msra.mxu0 %v1326
      %2048 = vmatpush.msra.mxu0 %v1325
      %2049 = vmatpush.msra.mxu0 %v1324
      %2050 = vmatpush.msra.mxu0 %v1323
      %2051 = vmatpush.msra.mxu0 %v1322
      %2052 = vmatpush.msra.mxu0 %v1321
      %2053 = vmatpush.msra.mxu0 %v1320
      %2054 = vmatpush.msra.mxu0 %v1319
      %2055 = vmatpush.msra.mxu0 %v1318
      %2056 = vmatpush.msra.mxu0 %v1317
      %2057 = vmatpush.msra.mxu0 %v1316
      %2058 = vmatmul.f32.gmra.mxu0 %v938
      %v2059 = vpop.f32.mrf.mxu0
      %v2060 = vadd.f32 %v1947, %v2059
      %2061 = vmatmul.f32.gmra.mxu0 %v947
      %v2062 = vpop.f32.mrf.mxu0
      %v2063 = vadd.f32 %v1950, %v2062
      %2064 = vmatmul.f32.gmra.mxu0 %v956
      %v2065 = vpop.f32.mrf.mxu0
      %v2066 = vadd.f32 %v1953, %v2065
      %2067 = vmatmul.f32.gmra.mxu0 %v965
      %v2068 = vpop.f32.mrf.mxu0
      %v2069 = vadd.f32 %v1956, %v2068
      %2070 = vmatmul.f32.gmra.mxu0 %v974
      %v2071 = vpop.f32.mrf.mxu0
      %v2072 = vadd.f32 %v1959, %v2071
      %2073 = vmatmul.f32.gmra.mxu0 %v983
      %v2074 = vpop.f32.mrf.mxu0
      %v2075 = vadd.f32 %v1962, %v2074
      %2076 = vmatmul.f32.gmra.mxu0 %v992
      %v2077 = vpop.f32.mrf.mxu0
      %v2078 = vadd.f32 %v1965, %v2077
      %2079 = vmatmul.f32.gmra.mxu0 %v1001
      %v2080 = vpop.f32.mrf.mxu0
      %v2081 = vadd.f32 %v1968, %v2080
      %2082 = vmatmul.f32.gmra.mxu0 %v1010
      %v2083 = vpop.f32.mrf.mxu0
      %v2084 = vadd.f32 %v1971, %v2083
      %2085 = vmatmul.f32.gmra.mxu0 %v1019
      %v2086 = vpop.f32.mrf.mxu0
      %v2087 = vadd.f32 %v1974, %v2086
      %2088 = vmatmul.f32.gmra.mxu0 %v1028
      %v2089 = vpop.f32.mrf.mxu0
      %v2090 = vadd.f32 %v1977, %v2089
      %2091 = vmatmul.f32.gmra.mxu0 %v1037
      %v2092 = vpop.f32.mrf.mxu0
      %v2093 = vadd.f32 %v1980, %v2092
      %2094 = vmatmul.f32.gmra.mxu0 %v1046
      %v2095 = vpop.f32.mrf.mxu0
      %v2096 = vadd.f32 %v1983, %v2095
      %2097 = vmatmul.f32.gmra.mxu0 %v1055
      %v2098 = vpop.f32.mrf.mxu0
      %v2099 = vadd.f32 %v1986, %v2098
      %2100 = vmatmul.f32.gmra.mxu0 %v1064
      %v2101 = vpop.f32.mrf.mxu0
      %v2102 = vadd.f32 %v1989, %v2101
      %2103 = vmatmul.f32.gmra.mxu0 %v1073
      %v2104 = vpop.f32.mrf.mxu0
      %v2105 = vadd.f32 %v1992, %v2104
      %2106 = vmatmul.f32.gmra.mxu0 %v1082
      %v2107 = vpop.f32.mrf.mxu0
      %v2108 = vadd.f32 %v1995, %v2107
      %2109 = vmatmul.f32.gmra.mxu0 %v1091
      %v2110 = vpop.f32.mrf.mxu0
      %v2111 = vadd.f32 %v1998, %v2110
      %2112 = vmatmul.f32.gmra.mxu0 %v1100
      %v2113 = vpop.f32.mrf.mxu0
      %v2114 = vadd.f32 %v2001, %v2113
      %2115 = vmatmul.f32.gmra.mxu0 %v1109
      %v2116 = vpop.f32.mrf.mxu0
      %v2117 = vadd.f32 %v2004, %v2116
      %2118 = vmatmul.f32.gmra.mxu0 %v1118
      %v2119 = vpop.f32.mrf.mxu0
      %v2120 = vadd.f32 %v2007, %v2119
      %2121 = vmatmul.f32.gmra.mxu0 %v1127
      %v2122 = vpop.f32.mrf.mxu0
      %v2123 = vadd.f32 %v2010, %v2122
      %2124 = vmatmul.f32.gmra.mxu0 %v1136
      %v2125 = vpop.f32.mrf.mxu0
      %v2126 = vadd.f32 %v2013, %v2125
      %2127 = vmatmul.f32.gmra.mxu0 %v1145
      %v2128 = vpop.f32.mrf.mxu0
      %v2129 = vadd.f32 %v2016, %v2128
      %2130 = vmatmul.f32.gmra.mxu0 %v1154
      %v2131 = vpop.f32.mrf.mxu0
      %v2132 = vadd.f32 %v2019, %v2131
      %2133 = vmatmul.f32.gmra.mxu0 %v1163
      %v2134 = vpop.f32.mrf.mxu0
      %v2135 = vadd.f32 %v2022, %v2134
      %2136 = vmatmul.f32.gmra.mxu0 %v1172
      %v2137 = vpop.f32.mrf.mxu0
      %v2138 = vadd.f32 %v2025, %v2137
      %2139 = vmatmul.f32.gmra.mxu0 %v1181
      %v2140 = vpop.f32.mrf.mxu0
      %v2141 = vadd.f32 %v2028, %v2140
      %2142 = vmatmul.f32.gmra.mxu0 %v1190
      %v2143 = vpop.f32.mrf.mxu0
      %v2144 = vadd.f32 %v2031, %v2143
      %2145 = vmatmul.f32.gmra.mxu0 %v1199
      %v2146 = vpop.f32.mrf.mxu0
      %v2147 = vadd.f32 %v2034, %v2146
      %2148 = vmatmul.f32.gmra.mxu0 %v1208
      %v2149 = vpop.f32.mrf.mxu0
      %v2150 = vadd.f32 %v2037, %v2149
      %2151 = vmatmul.f32.gmra.mxu0 %v1217
      %v2152 = vpop.f32.mrf.mxu0
      %v2153 = vadd.f32 %v2040, %v2152
      %2154 = vdwg.mxu0
      %2155 = vmatpush.msra.mxu0 %v1347
      %2156 = vmatpush.msra.mxu0 %v1346
      %2157 = vmatpush.msra.mxu0 %v1345
      %2158 = vmatpush.msra.mxu0 %v1344
      %2159 = vmatpush.msra.mxu0 %v1343
      %2160 = vmatpush.msra.mxu0 %v1342
      %2161 = vmatpush.msra.mxu0 %v1341
      %2162 = vmatpush.msra.mxu0 %v1340
      %2163 = vmatpush.msra.mxu0 %v1339
      %2164 = vmatpush.msra.mxu0 %v1338
      %2165 = vmatpush.msra.mxu0 %v1337
      %2166 = vmatpush.msra.mxu0 %v1336
      %2167 = vmatpush.msra.mxu0 %v1335
      %2168 = vmatpush.msra.mxu0 %v1334
      %2169 = vmatpush.msra.mxu0 %v1333
      %2170 = vmatpush.msra.mxu0 %v1332
      %2171 = vmatmul.f32.gmra.mxu0 %v939
      %v2172 = vpop.f32.mrf.mxu0
      %v2173 = vadd.f32 %v2060, %v2172
      %2174 = vmatmul.f32.gmra.mxu0 %v948
      %v2175 = vpop.f32.mrf.mxu0
      %v2176 = vadd.f32 %v2063, %v2175
      %2177 = vmatmul.f32.gmra.mxu0 %v957
      %v2178 = vpop.f32.mrf.mxu0
      %v2179 = vadd.f32 %v2066, %v2178
      %2180 = vmatmul.f32.gmra.mxu0 %v966
      %v2181 = vpop.f32.mrf.mxu0
      %v2182 = vadd.f32 %v2069, %v2181
      %2183 = vmatmul.f32.gmra.mxu0 %v975
      %v2184 = vpop.f32.mrf.mxu0
      %v2185 = vadd.f32 %v2072, %v2184
      %2186 = vmatmul.f32.gmra.mxu0 %v984
      %v2187 = vpop.f32.mrf.mxu0
      %v2188 = vadd.f32 %v2075, %v2187
      %2189 = vmatmul.f32.gmra.mxu0 %v993
      %v2190 = vpop.f32.mrf.mxu0
      %v2191 = vadd.f32 %v2078, %v2190
      %2192 = vmatmul.f32.gmra.mxu0 %v1002
      %v2193 = vpop.f32.mrf.mxu0
      %v2194 = vadd.f32 %v2081, %v2193
      %2195 = vmatmul.f32.gmra.mxu0 %v1011
      %v2196 = vpop.f32.mrf.mxu0
      %v2197 = vadd.f32 %v2084, %v2196
      %2198 = vmatmul.f32.gmra.mxu0 %v1020
      %v2199 = vpop.f32.mrf.mxu0
      %v2200 = vadd.f32 %v2087, %v2199
      %2201 = vmatmul.f32.gmra.mxu0 %v1029
      %v2202 = vpop.f32.mrf.mxu0
      %v2203 = vadd.f32 %v2090, %v2202
      %2204 = vmatmul.f32.gmra.mxu0 %v1038
      %v2205 = vpop.f32.mrf.mxu0
      %v2206 = vadd.f32 %v2093, %v2205
      %2207 = vmatmul.f32.gmra.mxu0 %v1047
      %v2208 = vpop.f32.mrf.mxu0
      %v2209 = vadd.f32 %v2096, %v2208
      %2210 = vmatmul.f32.gmra.mxu0 %v1056
      %v2211 = vpop.f32.mrf.mxu0
      %v2212 = vadd.f32 %v2099, %v2211
      %2213 = vmatmul.f32.gmra.mxu0 %v1065
      %v2214 = vpop.f32.mrf.mxu0
      %v2215 = vadd.f32 %v2102, %v2214
      %2216 = vmatmul.f32.gmra.mxu0 %v1074
      %v2217 = vpop.f32.mrf.mxu0
      %v2218 = vadd.f32 %v2105, %v2217
      %2219 = vmatmul.f32.gmra.mxu0 %v1083
      %v2220 = vpop.f32.mrf.mxu0
      %v2221 = vadd.f32 %v2108, %v2220
      %2222 = vmatmul.f32.gmra.mxu0 %v1092
      %v2223 = vpop.f32.mrf.mxu0
      %v2224 = vadd.f32 %v2111, %v2223
      %2225 = vmatmul.f32.gmra.mxu0 %v1101
      %v2226 = vpop.f32.mrf.mxu0
      %v2227 = vadd.f32 %v2114, %v2226
      %2228 = vmatmul.f32.gmra.mxu0 %v1110
      %v2229 = vpop.f32.mrf.mxu0
      %v2230 = vadd.f32 %v2117, %v2229
      %2231 = vmatmul.f32.gmra.mxu0 %v1119
      %v2232 = vpop.f32.mrf.mxu0
      %v2233 = vadd.f32 %v2120, %v2232
      %2234 = vmatmul.f32.gmra.mxu0 %v1128
      %v2235 = vpop.f32.mrf.mxu0
      %v2236 = vadd.f32 %v2123, %v2235
      %2237 = vmatmul.f32.gmra.mxu0 %v1137
      %v2238 = vpop.f32.mrf.mxu0
      %v2239 = vadd.f32 %v2126, %v2238
      %2240 = vmatmul.f32.gmra.mxu0 %v1146
      %v2241 = vpop.f32.mrf.mxu0
      %v2242 = vadd.f32 %v2129, %v2241
      %2243 = vmatmul.f32.gmra.mxu0 %v1155
      %v2244 = vpop.f32.mrf.mxu0
      %v2245 = vadd.f32 %v2132, %v2244
      %2246 = vmatmul.f32.gmra.mxu0 %v1164
      %v2247 = vpop.f32.mrf.mxu0
      %v2248 = vadd.f32 %v2135, %v2247
      %2249 = vmatmul.f32.gmra.mxu0 %v1173
      %v2250 = vpop.f32.mrf.mxu0
      %v2251 = vadd.f32 %v2138, %v2250
      %2252 = vmatmul.f32.gmra.mxu0 %v1182
      %v2253 = vpop.f32.mrf.mxu0
      %v2254 = vadd.f32 %v2141, %v2253
      %2255 = vmatmul.f32.gmra.mxu0 %v1191
      %v2256 = vpop.f32.mrf.mxu0
      %v2257 = vadd.f32 %v2144, %v2256
      %2258 = vmatmul.f32.gmra.mxu0 %v1200
      %v2259 = vpop.f32.mrf.mxu0
      %v2260 = vadd.f32 %v2147, %v2259
      %2261 = vmatmul.f32.gmra.mxu0 %v1209
      %v2262 = vpop.f32.mrf.mxu0
      %v2263 = vadd.f32 %v2150, %v2262
      %2264 = vmatmul.f32.gmra.mxu0 %v1218
      %v2265 = vpop.f32.mrf.mxu0
      %v2266 = vadd.f32 %v2153, %v2265
      %2267 = vdwg.mxu0
      %2268 = vmatpush.msra.mxu0 %v1363
      %2269 = vmatpush.msra.mxu0 %v1362
      %2270 = vmatpush.msra.mxu0 %v1361
      %2271 = vmatpush.msra.mxu0 %v1360
      %2272 = vmatpush.msra.mxu0 %v1359
      %2273 = vmatpush.msra.mxu0 %v1358
      %2274 = vmatpush.msra.mxu0 %v1357
      %2275 = vmatpush.msra.mxu0 %v1356
      %2276 = vmatpush.msra.mxu0 %v1355
      %2277 = vmatpush.msra.mxu0 %v1354
      %2278 = vmatpush.msra.mxu0 %v1353
      %2279 = vmatpush.msra.mxu0 %v1352
      %2280 = vmatpush.msra.mxu0 %v1351
      %2281 = vmatpush.msra.mxu0 %v1350
      %2282 = vmatpush.msra.mxu0 %v1349
      %2283 = vmatpush.msra.mxu0 %v1348
      %2284 = vmatmul.f32.gmra.mxu0 %v940
      %v2285 = vpop.f32.mrf.mxu0
      %v2286 = vadd.f32 %v2173, %v2285
      %2287 = vmatmul.f32.gmra.mxu0 %v949
      %v2288 = vpop.f32.mrf.mxu0
      %v2289 = vadd.f32 %v2176, %v2288
      %2290 = vmatmul.f32.gmra.mxu0 %v958
      %v2291 = vpop.f32.mrf.mxu0
      %v2292 = vadd.f32 %v2179, %v2291
      %2293 = vmatmul.f32.gmra.mxu0 %v967
      %v2294 = vpop.f32.mrf.mxu0
      %v2295 = vadd.f32 %v2182, %v2294
      %2296 = vmatmul.f32.gmra.mxu0 %v976
      %v2297 = vpop.f32.mrf.mxu0
      %v2298 = vadd.f32 %v2185, %v2297
      %2299 = vmatmul.f32.gmra.mxu0 %v985
      %v2300 = vpop.f32.mrf.mxu0
      %v2301 = vadd.f32 %v2188, %v2300
      %2302 = vmatmul.f32.gmra.mxu0 %v994
      %v2303 = vpop.f32.mrf.mxu0
      %v2304 = vadd.f32 %v2191, %v2303
      %2305 = vmatmul.f32.gmra.mxu0 %v1003
      %v2306 = vpop.f32.mrf.mxu0
      %v2307 = vadd.f32 %v2194, %v2306
      %2308 = vmatmul.f32.gmra.mxu0 %v1012
      %v2309 = vpop.f32.mrf.mxu0
      %v2310 = vadd.f32 %v2197, %v2309
      %2311 = vmatmul.f32.gmra.mxu0 %v1021
      %v2312 = vpop.f32.mrf.mxu0
      %v2313 = vadd.f32 %v2200, %v2312
      %2314 = vmatmul.f32.gmra.mxu0 %v1030
      %v2315 = vpop.f32.mrf.mxu0
      %v2316 = vadd.f32 %v2203, %v2315
      %2317 = vmatmul.f32.gmra.mxu0 %v1039
      %v2318 = vpop.f32.mrf.mxu0
      %v2319 = vadd.f32 %v2206, %v2318
      %2320 = vmatmul.f32.gmra.mxu0 %v1048
      %v2321 = vpop.f32.mrf.mxu0
      %v2322 = vadd.f32 %v2209, %v2321
      %2323 = vmatmul.f32.gmra.mxu0 %v1057
      %v2324 = vpop.f32.mrf.mxu0
      %v2325 = vadd.f32 %v2212, %v2324
      %2326 = vmatmul.f32.gmra.mxu0 %v1066
      %v2327 = vpop.f32.mrf.mxu0
      %v2328 = vadd.f32 %v2215, %v2327
      %2329 = vmatmul.f32.gmra.mxu0 %v1075
      %v2330 = vpop.f32.mrf.mxu0
      %v2331 = vadd.f32 %v2218, %v2330
      %2332 = vmatmul.f32.gmra.mxu0 %v1084
      %v2333 = vpop.f32.mrf.mxu0
      %v2334 = vadd.f32 %v2221, %v2333
      %2335 = vmatmul.f32.gmra.mxu0 %v1093
      %v2336 = vpop.f32.mrf.mxu0
      %v2337 = vadd.f32 %v2224, %v2336
      %2338 = vmatmul.f32.gmra.mxu0 %v1102
      %v2339 = vpop.f32.mrf.mxu0
      %v2340 = vadd.f32 %v2227, %v2339
      %2341 = vmatmul.f32.gmra.mxu0 %v1111
      %v2342 = vpop.f32.mrf.mxu0
      %v2343 = vadd.f32 %v2230, %v2342
      %2344 = vmatmul.f32.gmra.mxu0 %v1120
      %v2345 = vpop.f32.mrf.mxu0
      %v2346 = vadd.f32 %v2233, %v2345
      %2347 = vmatmul.f32.gmra.mxu0 %v1129
      %v2348 = vpop.f32.mrf.mxu0
      %v2349 = vadd.f32 %v2236, %v2348
      %2350 = vmatmul.f32.gmra.mxu0 %v1138
      %v2351 = vpop.f32.mrf.mxu0
      %v2352 = vadd.f32 %v2239, %v2351
      %2353 = vmatmul.f32.gmra.mxu0 %v1147
      %v2354 = vpop.f32.mrf.mxu0
      %v2355 = vadd.f32 %v2242, %v2354
      %2356 = vmatmul.f32.gmra.mxu0 %v1156
      %v2357 = vpop.f32.mrf.mxu0
      %v2358 = vadd.f32 %v2245, %v2357
      %2359 = vmatmul.f32.gmra.mxu0 %v1165
      %v2360 = vpop.f32.mrf.mxu0
      %v2361 = vadd.f32 %v2248, %v2360
      %2362 = vmatmul.f32.gmra.mxu0 %v1174
      %v2363 = vpop.f32.mrf.mxu0
      %v2364 = vadd.f32 %v2251, %v2363
      %2365 = vmatmul.f32.gmra.mxu0 %v1183
      %v2366 = vpop.f32.mrf.mxu0
      %v2367 = vadd.f32 %v2254, %v2366
      %2368 = vmatmul.f32.gmra.mxu0 %v1192
      %v2369 = vpop.f32.mrf.mxu0
      %v2370 = vadd.f32 %v2257, %v2369
      %2371 = vmatmul.f32.gmra.mxu0 %v1201
      %v2372 = vpop.f32.mrf.mxu0
      %v2373 = vadd.f32 %v2260, %v2372
      %2374 = vmatmul.f32.gmra.mxu0 %v1210
      %v2375 = vpop.f32.mrf.mxu0
      %v2376 = vadd.f32 %v2263, %v2375
      %2377 = vmatmul.f32.gmra.mxu0 %v1219
      %v2378 = vpop.f32.mrf.mxu0
      %v2379 = vadd.f32 %v2266, %v2378
      %2380 = vdwg.mxu0
      %2381 = vst [vmem:[%s231] sm:$0xff] %v2286
      %2382 = vst [vmem:[%s231 + $0x8] sm:$0xff] %v2289
      %2383 = vst [vmem:[%s231 + $0x10] sm:$0xff] %v2292
      %2384 = vst [vmem:[%s231 + $0x18] sm:$0xff] %v2295
      %2385 = vst [vmem:[%s231 + $0x20] sm:$0xff] %v2298
      %2386 = vst [vmem:[%s231 + $0x28] sm:$0xff] %v2301
      %2387 = vst [vmem:[%s231 + $0x30] sm:$0xff] %v2304
      %2388 = vst [vmem:[%s231 + $0x38] sm:$0xff] %v2307
      %2389 = vst [vmem:[%s231 + $0x40] sm:$0xff] %v2310
      %2390 = vst [vmem:[%s231 + $0x48] sm:$0xff] %v2313
      %2391 = vst [vmem:[%s231 + $0x50] sm:$0xff] %v2316
      %2392 = vst [vmem:[%s231 + $0x58] sm:$0xff] %v2319
      %2393 = vst [vmem:[%s231 + $0x60] sm:$0xff] %v2322
      %2394 = vst [vmem:[%s231 + $0x68] sm:$0xff] %v2325
      %2395 = vst [vmem:[%s231 + $0x70] sm:$0xff] %v2328
      %2396 = vst [vmem:[%s231 + $0x78] sm:$0xff] %v2331
      %2397 = vst [vmem:[%s231 + $0x80] sm:$0xff] %v2334
      %2398 = vst [vmem:[%s231 + $0x88] sm:$0xff] %v2337
      %2399 = vst [vmem:[%s231 + $0x90] sm:$0xff] %v2340
      %2400 = vst [vmem:[%s231 + $0x98] sm:$0xff] %v2343
      %2401 = vst [vmem:[%s231 + $0xa0] sm:$0xff] %v2346
      %2402 = vst [vmem:[%s231 + $0xa8] sm:$0xff] %v2349
      %2403 = vst [vmem:[%s231 + $0xb0] sm:$0xff] %v2352
      %2404 = vst [vmem:[%s231 + $0xb8] sm:$0xff] %v2355
      %2405 = vst [vmem:[%s231 + $0xc0] sm:$0xff] %v2358
      %2406 = vst [vmem:[%s231 + $0xc8] sm:$0xff] %v2361
      %2407 = vst [vmem:[%s231 + $0xd0] sm:$0xff] %v2364
      %2408 = vst [vmem:[%s231 + $0xd8] sm:$0xff] %v2367
      %2409 = vst [vmem:[%s231 + $0xe0] sm:$0xff] %v2370
      %2410 = vst [vmem:[%s231 + $0xe8] sm:$0xff] %v2373
      %2411 = vst [vmem:[%s231 + $0xf0] sm:$0xff] %v2376
      %2412 = vst [vmem:[%s231 + $0xf8] sm:$0xff] %v2379
      %v2413 = vadd.f32 %v2286, %v2289
      %v2414 = vadd.f32 %v2413, %v2292
      %v2415 = vadd.f32 %v2414, %v2295
      %v2416 = vadd.f32 %v2415, %v2298
      %v2417 = vadd.f32 %v2416, %v2301
      %v2418 = vadd.f32 %v2417, %v2304
      %v2419 = vadd.f32 %v2418, %v2307
      %v2420 = vadd.f32 %v2419, %v2310
      %v2421 = vadd.f32 %v2420, %v2313
      %v2422 = vadd.f32 %v2421, %v2316
      %v2423 = vadd.f32 %v2422, %v2319
      %v2424 = vadd.f32 %v2423, %v2322
      %v2425 = vadd.f32 %v2424, %v2325
      %v2426 = vadd.f32 %v2425, %v2328
      %v2427 = vadd.f32 %v2426, %v2331
      %v2428 = vadd.f32 %v2427, %v2334
      %v2429 = vadd.f32 %v2428, %v2337
      %v2430 = vadd.f32 %v2429, %v2340
      %v2431 = vadd.f32 %v2430, %v2343
      %v2432 = vadd.f32 %v2431, %v2346
      %v2433 = vadd.f32 %v2432, %v2349
      %v2434 = vadd.f32 %v2433, %v2352
      %v2435 = vadd.f32 %v2434, %v2355
      %v2436 = vadd.f32 %v2435, %v2358
      %v2437 = vadd.f32 %v2436, %v2361
      %v2438 = vadd.f32 %v2437, %v2364
      %v2439 = vadd.f32 %v2438, %v2367
      %v2440 = vadd.f32 %v2439, %v2370
      %v2441 = vadd.f32 %v2440, %v2373
      %v2442 = vadd.f32 %v2441, %v2376
      %v2443 = vadd.f32 %v2442, %v2379
      %v2444 = vrot.slane %v2443, 4
      %v2445 = vadd.f32 %v2443, %v2444
      %v2446 = vrot.slane %v2445, 2
      %v2447 = vadd.f32 %v2445, %v2446
      %v2448 = vrot.slane %v2447, 1
      %v2449 = vadd.f32 %v2447, %v2448
      %2450 = vst [vmem:[%s235] sm:$0x1] %v2449
      %v2451 = vmul.f32 %v2286, %v2286
      %v2452 = vmul.f32 %v2289, %v2289
      %v2453 = vmul.f32 %v2292, %v2292
      %v2454 = vmul.f32 %v2295, %v2295
      %v2455 = vmul.f32 %v2298, %v2298
      %v2456 = vmul.f32 %v2301, %v2301
      %v2457 = vmul.f32 %v2304, %v2304
      %v2458 = vmul.f32 %v2307, %v2307
      %v2459 = vmul.f32 %v2310, %v2310
      %v2460 = vmul.f32 %v2313, %v2313
      %v2461 = vmul.f32 %v2316, %v2316
      %v2462 = vmul.f32 %v2319, %v2319
      %v2463 = vmul.f32 %v2322, %v2322
      %v2464 = vmul.f32 %v2325, %v2325
      %v2465 = vmul.f32 %v2328, %v2328
      %v2466 = vmul.f32 %v2331, %v2331
      %v2467 = vmul.f32 %v2334, %v2334
      %v2468 = vmul.f32 %v2337, %v2337
      %v2469 = vmul.f32 %v2340, %v2340
      %v2470 = vmul.f32 %v2343, %v2343
      %v2471 = vmul.f32 %v2346, %v2346
      %v2472 = vmul.f32 %v2349, %v2349
      %v2473 = vmul.f32 %v2352, %v2352
      %v2474 = vmul.f32 %v2355, %v2355
      %v2475 = vmul.f32 %v2358, %v2358
      %v2476 = vmul.f32 %v2361, %v2361
      %v2477 = vmul.f32 %v2364, %v2364
      %v2478 = vmul.f32 %v2367, %v2367
      %v2479 = vmul.f32 %v2370, %v2370
      %v2480 = vmul.f32 %v2373, %v2373
      %v2481 = vmul.f32 %v2376, %v2376
      %v2482 = vmul.f32 %v2379, %v2379
      %v2483 = vadd.f32 %v2451, %v2452
      %v2484 = vadd.f32 %v2483, %v2453
      %v2485 = vadd.f32 %v2484, %v2454
      %v2486 = vadd.f32 %v2485, %v2455
      %v2487 = vadd.f32 %v2486, %v2456
      %v2488 = vadd.f32 %v2487, %v2457
      %v2489 = vadd.f32 %v2488, %v2458
      %v2490 = vadd.f32 %v2489, %v2459
      %v2491 = vadd.f32 %v2490, %v2460
      %v2492 = vadd.f32 %v2491, %v2461
      %v2493 = vadd.f32 %v2492, %v2462
      %v2494 = vadd.f32 %v2493, %v2463
      %v2495 = vadd.f32 %v2494, %v2464
      %v2496 = vadd.f32 %v2495, %v2465
      %v2497 = vadd.f32 %v2496, %v2466
      %v2498 = vadd.f32 %v2497, %v2467
      %v2499 = vadd.f32 %v2498, %v2468
      %v2500 = vadd.f32 %v2499, %v2469
      %v2501 = vadd.f32 %v2500, %v2470
      %v2502 = vadd.f32 %v2501, %v2471
      %v2503 = vadd.f32 %v2502, %v2472
      %v2504 = vadd.f32 %v2503, %v2473
      %v2505 = vadd.f32 %v2504, %v2474
      %v2506 = vadd.f32 %v2505, %v2475
      %v2507 = vadd.f32 %v2506, %v2476
      %v2508 = vadd.f32 %v2507, %v2477
      %v2509 = vadd.f32 %v2508, %v2478
      %v2510 = vadd.f32 %v2509, %v2479
      %v2511 = vadd.f32 %v2510, %v2480
      %v2512 = vadd.f32 %v2511, %v2481
      %v2513 = vadd.f32 %v2512, %v2482
      %v2514 = vrot.slane %v2513, 4
      %v2515 = vadd.f32 %v2513, %v2514
      %v2516 = vrot.slane %v2515, 2
      %v2517 = vadd.f32 %v2515, %v2516
      %v2518 = vrot.slane %v2517, 1
      %v2519 = vadd.f32 %v2517, %v2518
      %2520 = vst [vmem:[%s235 + $0x1] sm:$0x1] %v2519
      %p2521 = scmp.lt.s32.totalorder %s17, 1
      %s2522 = scalar_select %p2521, %s17, 1
      %s2523 = smul.addr %s2522, 32
      %s2524 = smul.addr %s2523, 8
      %s2525 = scalar_lea.vmem %s4, %s2524
      %p2526 = scmp.lt.s32.totalorder %s17, 1
      %s2527 = scalar_select %p2526, %s17, 1
      %s2528 = smul.addr %s2527, 2
      %s2529 = scalar_lea.vmem %s5, %s2528
      // Predicated region
      $region37: #{basic_block_forward.3} parent=35 // pred_check
        %p2530 = pneg %p124
      $region38: #{basic_block_forward.3} parent=35 // pred_check_branch
        %2532 = sbr.rel (%p2530) target = $region40
      $region39: #{basic_block_forward.3} parent=35 // pred_region
        _
      $region40: #{basic_block_forward.3} parent=35 // pred_fallthru
        _
      // Predicated region
      $region41: #{basic_block_forward.3} parent=35 // pred_check
        %p2533 = pneg %p150
      $region42: #{basic_block_forward.3} parent=35 // pred_check_branch
        %2535 = sbr.rel (%p2533) target = $region44
      $region43: #{basic_block_forward.3} parent=35 // pred_region
        _
      $region44: #{basic_block_forward.3} parent=35 // pred_fallthru
        _
    $region36: #{basic_block_forward.3} parent=5 // pred_fallthru
      _
    %p2536 = scmp.le.s32.totalorder 2, %s12
    // Predicated region
    $region45: #{basic_block_forward.3} parent=5 // pred_check
      %p2537 = pneg %p2536
    $region46: #{basic_block_forward.3} parent=5 // pred_check_branch
      %2539 = sbr.rel (%p2537) target = $region48
    $region47: #{basic_block_forward.3} parent=5 // pred_region
      %s2540 = ssub.s32 %s12, 2
      // Predicated region
      $region49: #{basic_block_forward.3} parent=47 // pred_check
        %p2541 = pneg %p130
      $region50: #{basic_block_forward.3} parent=47 // pred_check_branch
        %2543 = sbr.rel (%p2541) target = $region52
      $region51: #{basic_block_forward.3} parent=47 // pred_region
        %p2544 = scmp.lt.s32.totalorder %s18, 1
        %s2545 = scalar_select %p2544, %s18, 1
        %s2546 = smul.addr %s2545, 32
        %s2547 = smul.addr %s2546, 8
        %s2548 = scalar_lea.vmem %s4, %s2547
      $region52: #{basic_block_forward.3} parent=47 // pred_fallthru
        _
      // Predicated region
      $region53: #{basic_block_forward.3} parent=47 // pred_check
        %p2549 = pneg %p156
      $region54: #{basic_block_forward.3} parent=47 // pred_check_branch
        %2551 = sbr.rel (%p2549) target = $region56
      $region55: #{basic_block_forward.3} parent=47 // pred_region
        %p2552 = scmp.lt.s32.totalorder %s18, 1
        %s2553 = scalar_select %p2552, %s18, 1
        %s2554 = smul.addr %s2553, 2
        %s2555 = scalar_lea.vmem %s5, %s2554
      $region56: #{basic_block_forward.3} parent=47 // pred_fallthru
        _
    $region48: #{basic_block_forward.3} parent=5 // pred_fallthru
      _
  $region6: #{basic_block_forward.3} parent=0 // loop_footer
    %s16 = sadd.s32 1, %s12
  $region7: #{basic_block_forward.3} parent=0 // loop_footer_branch
    %11 = sbr.rel target = $region3
  $region8: #{basic_block_forward.3} parent=0 // loop_exit
    _

</llo_original>
